<compile_context>
chip_gen: v7x
topology: tpu7x:2x2x1
jax: 0.10.0
libtpu: 0.0.40
codegen_flags: <defaults>
</compile_context>

<pallas_src>
import jax
import jax.numpy as jnp
from jax.experimental import pallas as pl
from jax.experimental.pallas import tpu as pltpu

BN_EPS = 1e-5
MATMUL_DTYPE = jnp.bfloat16           # MXU path; accumulation stays f32
_VMEM_LIMIT = 48 * 1024 * 1024        # safe on v5e/v6e (128 MiB) and v7x (64 MiB)


def _pick_tile(n, target):
    """Largest divisor of n that is <= target (falls back to n)."""
    for t in range(min(n, target), 0, -1):
        if n % t == 0:
            return t
    return n


# ---------------------------------------------------------------------------
# ConvTranspose2d(k=2, s=2): stride == kernel -> every output pixel receives
# exactly one contribution.  Per ki in {0,1}:
#   acc_ki[(i,j), kj*Cout+o] = sum_c x[i,j,c] * w[c,o,ki,kj] + b[o]
# stored at out[(n, i, ki, j, kj*Cout+o)]; the wrapper reshape
# (N,H,2,W,2*Cout) -> (N,2H,2W,Cout) is a pure row-major reinterpretation (free).
# ---------------------------------------------------------------------------
def _upconv_kernel(x_ref, w_ref, b_ref, o_ref):
    # x_ref: (TH, W, Cin)   w_ref: (2, Cin, 2*Cout)   b_ref: (1, 2*Cout)
    # o_ref: (TH, 2, W, 2*Cout)
    TH, W, Cin = x_ref.shape
    x_flat = x_ref[...].reshape(TH * W, Cin)
    for ki in range(2):
        acc = jnp.dot(x_flat, w_ref[ki], preferred_element_type=jnp.float32)
        acc = acc + b_ref[...]
        o_ref[:, ki, :, :] = acc.reshape(TH, W, acc.shape[-1]).astype(o_ref.dtype)


def conv_transpose2x2_s2(x_nhwc, w, b, *, row_tile=32):
    # x_nhwc: (N, H, W, Cin); w: (Cin, Cout, 2, 2) [torch ConvTranspose2d]; b: (Cout,)
    N, H, W, Cin = x_nhwc.shape
    Cout = w.shape[1]
    TH = _pick_tile(H, row_tile)
    nr = H // TH

    # w2[ki, c, kj*Cout + o] = w[c, o, ki, kj]
    w2 = jnp.transpose(w, (2, 0, 3, 1)).reshape(2, Cin, 2 * Cout).astype(MATMUL_DTYPE)
    b2 = jnp.tile(b.astype(jnp.float32), 2).reshape(1, 2 * Cout)
    xb = x_nhwc.astype(MATMUL_DTYPE)

    out5 = pl.pallas_call(
        _upconv_kernel,
        grid=(N, nr),
        out_shape=jax.ShapeDtypeStruct((N, H, 2, W, 2 * Cout), MATMUL_DTYPE),
        in_specs=[
            pl.BlockSpec((None, TH, W, Cin), lambda n, r: (n, r, 0, 0)),
            pl.BlockSpec((2, Cin, 2 * Cout), lambda n, r: (0, 0, 0)),
            pl.BlockSpec((1, 2 * Cout), lambda n, r: (0, 0)),
        ],
        out_specs=pl.BlockSpec((None, TH, 2, W, 2 * Cout),
                               lambda n, r: (n, r, 0, 0, 0)),
        compiler_params=pltpu.CompilerParams(
            dimension_semantics=("parallel", "parallel"),
            vmem_limit_bytes=_VMEM_LIMIT),
    )(xb, w2, b2)

    # free (row-major) reshape to NHWC
    return out5.reshape(N, 2 * H, 2 * W, Cout)


# ---------------------------------------------------------------------------
# Fused (multi-input) Conv3x3(pad=1) + BatchNorm(eval) + ReLU, row-tiled.
# Each input group g supplies: main rows (TH, W+2, Cg), top halo row, bottom
# halo row (both (1, W+2, Cg), zeroed at the image border in-kernel).
# Channel-concat is realized by accumulating all groups into one f32 acc.
# ---------------------------------------------------------------------------
def _make_conv_kernel(n_groups):
    def kernel(*args):
        o_ref = args[-1]
        acts = args[:3 * n_groups]
        ws = args[3 * n_groups:4 * n_groups]
        scale_ref = args[4 * n_groups]
        shift_ref = args[4 * n_groups + 1]

        TH, W, Cout = o_ref.shape
        r = pl.program_id(1)
        nr = pl.num_programs(1)
        not_first = (r > 0).astype(acts[0].dtype)
        not_last = (r < nr - 1).astype(acts[0].dtype)

        acc = jnp.zeros((TH * W, Cout), jnp.float32)
        for g in range(n_groups):
            main = acts[3 * g][...]                       # (TH, W+2, Cg)
            top = acts[3 * g + 1][...] * not_first        # (1,  W+2, Cg)
            bot = acts[3 * g + 2][...] * not_last         # (1,  W+2, Cg)
            w_ref = ws[g]                                 # (9, Cg, Cout)
            # hoisted per-ky row views (padded rows r*TH+ky .. r*TH+ky+TH-1)
            rows = (
                jnp.concatenate([top, main[:TH - 1]], axis=0) if TH > 1 else top,
                main,
                jnp.concatenate([main[1:], bot], axis=0) if TH > 1 else bot,
            )
            for ky in range(3):
                patch = rows[ky]
                for kx in range(3):
                    p = patch[:, kx:kx + W, :].reshape(TH * W, -1)
                    acc = acc + jnp.dot(p, w_ref[ky * 3 + kx],
                                        preferred_element_type=jnp.float32)

        y = acc * scale_ref[...] + shift_ref[...]
        y = jnp.maximum(y, 0.0)
        o_ref[...] = y.reshape(TH, W, Cout).astype(o_ref.dtype)

    return kernel


def conv3x3_bn_relu(xs, ws, bias, gamma, beta, mean, var, *, out_dtype,
                    row_tile=32):
    # xs: list of NHWC inputs (same N,H,W; channels may differ) -- the implicit
    #     channel concat; ws: list of (9, Cg, Cout) weights (tap = ky*3+kx).
    N, H, W, _ = xs[0].shape
    Cout = ws[0].shape[-1]
    ng = len(xs)
    TH = _pick_tile(H, row_tile)
    nr = H // TH

    scale = (gamma / jnp.sqrt(var + BN_EPS)).astype(jnp.float32)   # fold BN (eval)
    shift = (beta + (bias - mean) * scale).astype(jnp.float32)
    scale2 = scale.reshape(1, Cout)
    shift2 = shift.reshape(1, Cout)

    inputs, in_specs = [], []
    for x in xs:
        xp = jnp.pad(x, ((0, 0), (0, 0), (1, 1), (0, 0))).astype(MATMUL_DTYPE)
        Cg = xp.shape[-1]
        in_specs += [
            pl.BlockSpec((None, TH, W + 2, Cg), lambda n, r: (n, r, 0, 0)),
            pl.BlockSpec((None, 1, W + 2, Cg),
                         lambda n, r: (n, jnp.maximum(r * TH - 1, 0), 0, 0)),
            pl.BlockSpec((None, 1, W + 2, Cg),
                         lambda n, r: (n, jnp.minimum(r * TH + TH, H - 1), 0, 0)),
        ]
        inputs += [xp, xp, xp]
    for w in ws:
        wc = w.astype(MATMUL_DTYPE)
        in_specs.append(pl.BlockSpec(wc.shape, lambda n, r: (0, 0, 0)))
        inputs.append(wc)
    in_specs += [pl.BlockSpec((1, Cout), lambda n, r: (0, 0))] * 2
    inputs += [scale2, shift2]

    return pl.pallas_call(
        _make_conv_kernel(ng),
        grid=(N, nr),
        out_shape=jax.ShapeDtypeStruct((N, H, W, Cout), out_dtype),
        in_specs=in_specs,
        out_specs=pl.BlockSpec((None, TH, W, Cout), lambda n, r: (n, r, 0, 0)),
        compiler_params=pltpu.CompilerParams(
            dimension_semantics=("parallel", "parallel"),
            vmem_limit_bytes=_VMEM_LIMIT),
    )(*inputs)


# ---------------------------------------------------------------------------
# Parameter init (deterministic, synthetic) and Up.forward
# ---------------------------------------------------------------------------
def init_up_params(key, in_ch, out_ch):
    c_half = in_ch // 2
    ks = jax.random.split(key, 10)
    p = {}
    # ConvTranspose2d(c_half, c_half, 2, stride=2)
    p["up_w"] = 0.1 * jax.random.normal(ks[0], (c_half, c_half, 2, 2), jnp.float32)
    p["up_b"] = 0.1 * jax.random.normal(ks[1], (c_half,), jnp.float32)
    # double_conv: Conv3x3(in_ch->out_ch)+BN+ReLU, Conv3x3(out_ch->out_ch)+BN+ReLU
    p["c1_w"] = 0.1 * jax.random.normal(ks[2], (9, in_ch, out_ch), jnp.float32)
    p["c1_b"] = 0.1 * jax.random.normal(ks[3], (out_ch,), jnp.float32)
    p["bn1_gamma"] = jnp.ones((out_ch,), jnp.float32)
    p["bn1_beta"] = jnp.zeros((out_ch,), jnp.float32)
    p["bn1_mean"] = 0.1 * jax.random.normal(ks[4], (out_ch,), jnp.float32)
    p["bn1_var"] = 1.0 + jnp.abs(jax.random.normal(ks[5], (out_ch,), jnp.float32))
    p["c2_w"] = 0.1 * jax.random.normal(ks[6], (9, out_ch, out_ch), jnp.float32)
    p["c2_b"] = 0.1 * jax.random.normal(ks[7], (out_ch,), jnp.float32)
    p["bn2_gamma"] = jnp.ones((out_ch,), jnp.float32)
    p["bn2_beta"] = jnp.zeros((out_ch,), jnp.float32)
    p["bn2_mean"] = 0.1 * jax.random.normal(ks[8], (out_ch,), jnp.float32)
    p["bn2_var"] = 1.0 + jnp.abs(jax.random.normal(ks[9], (out_ch,), jnp.float32))
    return p


def up_forward(params, x1_nchw, x2_nchw, *, row_tile=32):
    # NCHW in/out (PyTorch); NHWC (+bf16 matmuls) inside kernels.
    in_dtype = x1_nchw.dtype
    x1 = jnp.transpose(x1_nchw, (0, 2, 3, 1))
    x2 = jnp.transpose(x2_nchw, (0, 2, 3, 1))

    # x1 = self.up(x1)   (scatter fused into kernel output layout)
    x1 = conv_transpose2x2_s2(x1, params["up_w"], params["up_b"], row_tile=row_tile)

    # F.pad to match x2's spatial size (no-op / skipped when sizes already match)
    diffY = x2.shape[1] - x1.shape[1]
    diffX = x2.shape[2] - x1.shape[2]
    if diffY or diffX:
        x1 = jnp.pad(x1, ((0, 0),
                          (diffY // 2, diffY - diffY // 2),
                          (diffX // 2, diffX - diffX // 2),
                          (0, 0)))

    # torch.cat([x2, x1], dim=1) + first conv of double_conv, fused in one kernel
    C2 = x2.shape[-1]
    w1 = params["c1_w"]
    x = conv3x3_bn_relu([x2, x1], [w1[:, :C2, :], w1[:, C2:, :]],
                        params["c1_b"], params["bn1_gamma"], params["bn1_beta"],
                        params["bn1_mean"], params["bn1_var"],
                        out_dtype=MATMUL_DTYPE, row_tile=row_tile)
    x = conv3x3_bn_relu([x], [params["c2_w"]],
                        params["c2_b"], params["bn2_gamma"], params["bn2_beta"],
                        params["bn2_mean"], params["bn2_var"],
                        out_dtype=jnp.float32, row_tile=row_tile)

    return jnp.transpose(x, (0, 3, 1, 2)).astype(in_dtype)


# ---------------------------------------------------------------------------
# Pure-JAX reference (same bf16 rounding points) for a correctness check.
# ---------------------------------------------------------------------------
def _reference_up(params, x1_nchw, x2_nchw):
    bf = lambda a: a.astype(jnp.bfloat16).astype(jnp.float32)
    x1 = bf(jnp.transpose(x1_nchw, (0, 2, 3, 1)))
    x2 = bf(jnp.transpose(x2_nchw, (0, 2, 3, 1)))
    N, H, W, _ = x1.shape
    uw = bf(params["up_w"])
    Cup = uw.shape[1]
    t = jnp.einsum("nhwc,cokl->nhkwlo", x1, uw)
    x1u = bf(t.reshape(N, 2 * H, 2 * W, Cup) + params["up_b"])
    dY = x2.shape[1] - x1u.shape[1]
    dX = x2.shape[2] - x1u.shape[2]
    x1u = jnp.pad(x1u, ((0, 0), (dY // 2, dY - dY // 2),
                        (dX // 2, dX - dX // 2), (0, 0)))
    x = jnp.concatenate([x2, x1u], axis=-1)

    def conv_bn_relu(x, w, b, g, be, m, v):
        w4 = bf(w).reshape(3, 3, w.shape[1], w.shape[2])      # HWIO
        y = jax.lax.conv_general_dilated(
            x, w4, (1, 1), "SAME",
            dimension_numbers=("NHWC", "HWIO", "NHWC"))
        y = (y + b - m) / jnp.sqrt(v + BN_EPS) * g + be
        return jnp.maximum(y, 0.0)

    x = bf(conv_bn_relu(x, params["c1_w"], params["c1_b"], params["bn1_gamma"],
                        params["bn1_beta"], params["bn1_mean"], params["bn1_var"]))
    x = conv_bn_relu(x, params["c2_w"], params["c2_b"], params["bn2_gamma"],
                     params["bn2_beta"], params["bn2_mean"], params["bn2_var"])
    return jnp.transpose(x, (0, 3, 1, 2))


if __name__ == "__main__":
    key = jax.random.PRNGKey(0)
    k1, k2, kp = jax.random.split(key, 3)

    in_ch, out_ch = 8, 4
    N, H, W = 2, 8, 8
    # NCHW inputs, matching the PyTorch module's expectations
    x1 = jax.random.normal(k1, (N, in_ch // 2, H, W), jnp.float32)
    x2 = jax.random.normal(k2, (N, in_ch // 2, 2 * H, 2 * W), jnp.float32)

    params = init_up_params(kp, in_ch, out_ch)

    # row_tile=8 so the demo exercises multi-row-tile grids (halo path) too
    fwd = jax.jit(lambda p, a, b: up_forward(p, a, b, row_tile=8))
    out = fwd(params, x1, x2)
    jax.block_until_ready(out)

    assert out.shape == (N, out_ch, 2 * H, 2 * W), out.shape
    assert jnp.all(jnp.isfinite(out))

    ref = _reference_up(params, x1, x2)
    err = float(jnp.max(jnp.abs(out - ref)))
    assert err < 0.3, f"mismatch vs reference: max abs err = {err}"

    print("KERNEL_OK")
</pallas_src>

<mosaic_0001>
module attributes {stable_mosaic.version = 11 : i64} {
  func.func @_upconv_kernel(%arg0: i32, %arg1: i32, %arg2: memref<1x8x8x4xbf16, #tpu.memory_space<vmem>>, %arg3: memref<2x4x8xbf16, #tpu.memory_space<vmem>>, %arg4: memref<1x8xf32, #tpu.memory_space<vmem>>, %arg5: memref<1x8x2x8x8xbf16, #tpu.memory_space<vmem>>) attributes {dimension_semantics = [#tpu.dimension_semantics<parallel>, #tpu.dimension_semantics<parallel>], iteration_bounds = array<i64: 2, 1>, scalar_prefetch = 0 : i64, scratch_operands = 0 : i64, tpu.core_type = #tpu.core_type<tc>, window_params = [{transform_indices = @transform_0, window_bounds = array<i64: 1, 8, 8, 4>}, {pipeline_mode = #tpu.pipeline_mode<synchronous>, transform_indices = @transform_1, window_bounds = array<i64: 2, 4, 8>}, {pipeline_mode = #tpu.pipeline_mode<synchronous>, transform_indices = @transform_2, window_bounds = array<i64: 1, 8>}, {transform_indices = @transform_3, window_bounds = array<i64: 1, 8, 2, 8, 8>}]} {
    %c0 = arith.constant 0 : index
    %c0_0 = arith.constant 0 : index
    %c0_1 = arith.constant 0 : index
    %c0_2 = arith.constant 0 : index
    %0 = vector.load %arg2[%c0, %c0_0, %c0_1, %c0_2] : memref<1x8x8x4xbf16, #tpu.memory_space<vmem>>, vector<1x8x8x4xbf16>
    %1 = vector.shape_cast %0 : vector<1x8x8x4xbf16> to vector<8x8x4xbf16>
    %2 = vector.shape_cast %1 : vector<8x8x4xbf16> to vector<64x4xbf16>
    %c0_3 = arith.constant 0 : index
    %c0_4 = arith.constant 0 : index
    %c0_5 = arith.constant 0 : index
    %3 = vector.load %arg3[%c0_3, %c0_4, %c0_5] : memref<2x4x8xbf16, #tpu.memory_space<vmem>>, vector<1x4x8xbf16>
    %4 = vector.shape_cast %3 : vector<1x4x8xbf16> to vector<4x8xbf16>
    %cst = arith.constant dense<0.000000e+00> : vector<64x8xf32>
    %5 = tpu.matmul %2, %4, %cst {dimension_numbers = #tpu.dot_dimension_numbers<[1], [0], [0], [1], [0, 0, 1, 1], [], []>} : vector<64x4xbf16>, vector<4x8xbf16>, vector<64x8xf32> -> vector<64x8xf32>
    %c0_6 = arith.constant 0 : index
    %c0_7 = arith.constant 0 : index
    %6 = vector.load %arg4[%c0_6, %c0_7] : memref<1x8xf32, #tpu.memory_space<vmem>>, vector<1x8xf32>
    %7 = vector.broadcast %6 : vector<1x8xf32> to vector<64x8xf32>
    %8 = arith.addf %5, %7 : vector<64x8xf32>
    %9 = vector.shape_cast %8 : vector<64x8xf32> to vector<8x8x8xf32>
    %10 = arith.truncf %9 : vector<8x8x8xf32> to vector<8x8x8xbf16>
    %c0_8 = arith.constant 0 : index
    %c0_9 = arith.constant 0 : index
    %c0_10 = arith.constant 0 : index
    %c0_11 = arith.constant 0 : index
    %c0_12 = arith.constant 0 : index
    %11 = vector.load %arg5[%c0_8, %c0_9, %c0_10, %c0_11, %c0_12] : memref<1x8x2x8x8xbf16, #tpu.memory_space<vmem>>, vector<1x8x1x8x8xbf16>
    %12 = vector.shape_cast %11 : vector<1x8x1x8x8xbf16> to vector<8x8x8xbf16>
    %13 = vector.shape_cast %10 : vector<8x8x8xbf16> to vector<1x8x1x8x8xbf16>
    tpu.vector_store %arg5[%c0_8, %c0_9, %c0_10, %c0_11, %c0_12], %13 {strides = array<i32>} : memref<1x8x2x8x8xbf16, #tpu.memory_space<vmem>>, vector<1x8x1x8x8xbf16>,
    %c1 = arith.constant 1 : index
    %c0_13 = arith.constant 0 : index
    %c0_14 = arith.constant 0 : index
    %14 = vector.load %arg3[%c1, %c0_13, %c0_14] : memref<2x4x8xbf16, #tpu.memory_space<vmem>>, vector<1x4x8xbf16>
    %15 = vector.shape_cast %14 : vector<1x4x8xbf16> to vector<4x8xbf16>
    %cst_15 = arith.constant dense<0.000000e+00> : vector<64x8xf32>
    %16 = tpu.matmul %2, %15, %cst_15 {dimension_numbers = #tpu.dot_dimension_numbers<[1], [0], [0], [1], [0, 0, 1, 1], [], []>} : vector<64x4xbf16>, vector<4x8xbf16>, vector<64x8xf32> -> vector<64x8xf32>
    %c0_16 = arith.constant 0 : index
    %c0_17 = arith.constant 0 : index
    %17 = vector.load %arg4[%c0_16, %c0_17] : memref<1x8xf32, #tpu.memory_space<vmem>>, vector<1x8xf32>
    %18 = vector.broadcast %17 : vector<1x8xf32> to vector<64x8xf32>
    %19 = arith.addf %16, %18 : vector<64x8xf32>
    %20 = vector.shape_cast %19 : vector<64x8xf32> to vector<8x8x8xf32>
    %21 = arith.truncf %20 : vector<8x8x8xf32> to vector<8x8x8xbf16>
    %c0_18 = arith.constant 0 : index
    %c0_19 = arith.constant 0 : index
    %c1_20 = arith.constant 1 : index
    %c0_21 = arith.constant 0 : index
    %c0_22 = arith.constant 0 : index
    %22 = vector.load %arg5[%c0_18, %c0_19, %c1_20, %c0_21, %c0_22] : memref<1x8x2x8x8xbf16, #tpu.memory_space<vmem>>, vector<1x8x1x8x8xbf16>
    %23 = vector.shape_cast %22 : vector<1x8x1x8x8xbf16> to vector<8x8x8xbf16>
    %24 = vector.shape_cast %21 : vector<8x8x8xbf16> to vector<1x8x1x8x8xbf16>
    tpu.vector_store %arg5[%c0_18, %c0_19, %c1_20, %c0_21, %c0_22], %24 {strides = array<i32>} : memref<1x8x2x8x8xbf16, #tpu.memory_space<vmem>>, vector<1x8x1x8x8xbf16>,
    return
  }
  func.func @transform_0(%arg0: i32, %arg1: i32) -> (i32, i32, i32, i32) {
    %c0_i32 = arith.constant 0 : i32
    %c0_i32_0 = arith.constant 0 : i32
    %c0_i32_1 = arith.constant 0 : i32
    return %arg0, %arg1, %c0_i32, %c0_i32_0 : i32, i32, i32, i32
  }
  func.func @transform_1(%arg0: i32, %arg1: i32) -> (i32, i32, i32) {
    %c0_i32 = arith.constant 0 : i32
    %c0_i32_0 = arith.constant 0 : i32
    %c0_i32_1 = arith.constant 0 : i32
    %c0_i32_2 = arith.constant 0 : i32
    return %c0_i32, %c0_i32_0, %c0_i32_1 : i32, i32, i32
  }
  func.func @transform_2(%arg0: i32, %arg1: i32) -> (i32, i32) {
    %c0_i32 = arith.constant 0 : i32
    %c0_i32_0 = arith.constant 0 : i32
    %c0_i32_1 = arith.constant 0 : i32
    return %c0_i32, %c0_i32_0 : i32, i32
  }
  func.func @transform_3(%arg0: i32, %arg1: i32) -> (i32, i32, i32, i32, i32) {
    %c0_i32 = arith.constant 0 : i32
    %c0_i32_0 = arith.constant 0 : i32
    %c0_i32_1 = arith.constant 0 : i32
    %c0_i32_2 = arith.constant 0 : i32
    return %arg0, %arg1, %c0_i32, %c0_i32_0, %c0_i32_1 : i32, i32, i32, i32, i32
  }
}

module attributes {stable_mosaic.version = 11 : i64} {
  func.func @kernel(%arg0: i32, %arg1: i32, %arg2: memref<1x8x18x4xbf16, #tpu.memory_space<vmem>>, %arg3: memref<1x1x18x4xbf16, #tpu.memory_space<vmem>>, %arg4: memref<1x1x18x4xbf16, #tpu.memory_space<vmem>>, %arg5: memref<1x8x18x4xbf16, #tpu.memory_space<vmem>>, %arg6: memref<1x1x18x4xbf16, #tpu.memory_space<vmem>>, %arg7: memref<1x1x18x4xbf16, #tpu.memory_space<vmem>>, %arg8: memref<9x4x4xbf16, #tpu.memory_space<vmem>>, %arg9: memref<9x4x4xbf16, #tpu.memory_space<vmem>>, %arg10: memref<1x4xf32, #tpu.memory_space<vmem>>, %arg11: memref<1x4xf32, #tpu.memory_space<vmem>>, %arg12: memref<1x8x16x4xbf16, #tpu.memory_space<vmem>>) attributes {dimension_semantics = [#tpu.dimension_semantics<parallel>, #tpu.dimension_semantics<parallel>], iteration_bounds = array<i64: 2, 2>, scalar_prefetch = 0 : i64, scratch_operands = 0 : i64, tpu.core_type = #tpu.core_type<tc>, window_params = [{transform_indices = @transform_0, window_bounds = array<i64: 1, 8, 18, 4>}, {transform_indices = @transform_1, window_bounds = array<i64: 1, 1, 18, 4>}, {transform_indices = @transform_2, window_bounds = array<i64: 1, 1, 18, 4>}, {transform_indices = @transform_3, window_bounds = array<i64: 1, 8, 18, 4>}, {transform_indices = @transform_4, window_bounds = array<i64: 1, 1, 18, 4>}, {transform_indices = @transform_5, window_bounds = array<i64: 1, 1, 18, 4>}, {pipeline_mode = #tpu.pipeline_mode<synchronous>, transform_indices = @transform_6, window_bounds = array<i64: 9, 4, 4>}, {pipeline_mode = #tpu.pipeline_mode<synchronous>, transform_indices = @transform_7, window_bounds = array<i64: 9, 4, 4>}, {pipeline_mode = #tpu.pipeline_mode<synchronous>, transform_indices = @transform_8, window_bounds = array<i64: 1, 4>}, {pipeline_mode = #tpu.pipeline_mode<synchronous>, transform_indices = @transform_9, window_bounds = array<i64: 1, 4>}, {transform_indices = @transform_10, window_bounds = array<i64: 1, 8, 16, 4>}]} {
    %c0_i32 = arith.constant 0 : i32
    %0 = arith.cmpi sgt, %arg1, %c0_i32 : i32
    %1 = arith.extui %0 : i1 to i32
    %2 = arith.sitofp %1 : i32 to f32
    %3 = arith.truncf %2 : f32 to bf16
    %c1_i32 = arith.constant 1 : i32
    %4 = arith.cmpi slt, %arg1, %c1_i32 : i32
    %5 = arith.extui %4 : i1 to i32
    %6 = arith.sitofp %5 : i32 to f32
    %7 = arith.truncf %6 : f32 to bf16
    %cst = arith.constant 0.000000e+00 : f32
    %8 = vector.broadcast %cst : f32 to vector<128x4xf32>
    %c0 = arith.constant 0 : index
    %c0_0 = arith.constant 0 : index
    %c0_1 = arith.constant 0 : index
    %c0_2 = arith.constant 0 : index
    %9 = vector.load %arg2[%c0, %c0_0, %c0_1, %c0_2] : memref<1x8x18x4xbf16, #tpu.memory_space<vmem>>, vector<1x8x18x4xbf16>
    %10 = vector.shape_cast %9 : vector<1x8x18x4xbf16> to vector<8x18x4xbf16>
    %c0_3 = arith.constant 0 : index
    %c0_4 = arith.constant 0 : index
    %c0_5 = arith.constant 0 : index
    %c0_6 = arith.constant 0 : index
    %11 = vector.load %arg3[%c0_3, %c0_4, %c0_5, %c0_6] : memref<1x1x18x4xbf16, #tpu.memory_space<vmem>>, vector<1x1x18x4xbf16>
    %12 = vector.shape_cast %11 : vector<1x1x18x4xbf16> to vector<1x18x4xbf16>
    %13 = vector.broadcast %3 : bf16 to vector<1x18x4xbf16>
    %14 = arith.mulf %12, %13 : vector<1x18x4xbf16>
    %c0_7 = arith.constant 0 : index
    %c0_8 = arith.constant 0 : index
    %c0_9 = arith.constant 0 : index
    %c0_10 = arith.constant 0 : index
    %15 = vector.load %arg4[%c0_7, %c0_8, %c0_9, %c0_10] : memref<1x1x18x4xbf16, #tpu.memory_space<vmem>>, vector<1x1x18x4xbf16>
    %16 = vector.shape_cast %15 : vector<1x1x18x4xbf16> to vector<1x18x4xbf16>
    %17 = vector.broadcast %7 : bf16 to vector<1x18x4xbf16>
    %18 = arith.mulf %16, %17 : vector<1x18x4xbf16>
    %19 = vector.extract_strided_slice %10 {offsets = [0, 0, 0], sizes = [7, 18, 4], strides = [1, 1, 1]} : vector<8x18x4xbf16> to vector<7x18x4xbf16>
    %20 = tpu.concatenate %14, %19 in 0 : vector<1x18x4xbf16>, vector<7x18x4xbf16> -> vector<8x18x4xbf16>
    %21 = vector.extract_strided_slice %10 {offsets = [1, 0, 0], sizes = [7, 18, 4], strides = [1, 1, 1]} : vector<8x18x4xbf16> to vector<7x18x4xbf16>
    %22 = tpu.concatenate %21, %18 in 0 : vector<7x18x4xbf16>, vector<1x18x4xbf16> -> vector<8x18x4xbf16>
    %23 = vector.extract_strided_slice %20 {offsets = [0, 0, 0], sizes = [8, 16, 4], strides = [1, 1, 1]} : vector<8x18x4xbf16> to vector<8x16x4xbf16>
    %24 = vector.shape_cast %23 : vector<8x16x4xbf16> to vector<128x4xbf16>
    %c0_11 = arith.constant 0 : index
    %c0_12 = arith.constant 0 : index
    %c0_13 = arith.constant 0 : index
    %25 = vector.load %arg8[%c0_11, %c0_12, %c0_13] : memref<9x4x4xbf16, #tpu.memory_space<vmem>>, vector<1x4x4xbf16>
    %26 = vector.shape_cast %25 : vector<1x4x4xbf16> to vector<4x4xbf16>
    %cst_14 = arith.constant dense<0.000000e+00> : vector<128x4xf32>
    %27 = tpu.matmul %24, %26, %cst_14 {dimension_numbers = #tpu.dot_dimension_numbers<[1], [0], [0], [1], [0, 0, 1, 1], [], []>} : vector<128x4xbf16>, vector<4x4xbf16>, vector<128x4xf32> -> vector<128x4xf32>
    %28 = arith.addf %8, %27 : vector<128x4xf32>
    %29 = vector.extract_strided_slice %20 {offsets = [0, 1, 0], sizes = [8, 16, 4], strides = [1, 1, 1]} : vector<8x18x4xbf16> to vector<8x16x4xbf16>
    %30 = vector.shape_cast %29 : vector<8x16x4xbf16> to vector<128x4xbf16>
    %c1 = arith.constant 1 : index
    %c0_15 = arith.constant 0 : index
    %c0_16 = arith.constant 0 : index
    %31 = vector.load %arg8[%c1, %c0_15, %c0_16] : memref<9x4x4xbf16, #tpu.memory_space<vmem>>, vector<1x4x4xbf16>
    %32 = vector.shape_cast %31 : vector<1x4x4xbf16> to vector<4x4xbf16>
    %cst_17 = arith.constant dense<0.000000e+00> : vector<128x4xf32>
    %33 = tpu.matmul %30, %32, %cst_17 {dimension_numbers = #tpu.dot_dimension_numbers<[1], [0], [0], [1], [0, 0, 1, 1], [], []>} : vector<128x4xbf16>, vector<4x4xbf16>, vector<128x4xf32> -> vector<128x4xf32>
    %34 = arith.addf %28, %33 : vector<128x4xf32>
    %35 = vector.extract_strided_slice %20 {offsets = [0, 2, 0], sizes = [8, 16, 4], strides = [1, 1, 1]} : vector<8x18x4xbf16> to vector<8x16x4xbf16>
    %36 = vector.shape_cast %35 : vector<8x16x4xbf16> to vector<128x4xbf16>
    %c2 = arith.constant 2 : index
    %c0_18 = arith.constant 0 : index
    %c0_19 = arith.constant 0 : index
    %37 = vector.load %arg8[%c2, %c0_18, %c0_19] : memref<9x4x4xbf16, #tpu.memory_space<vmem>>, vector<1x4x4xbf16>
    %38 = vector.shape_cast %37 : vector<1x4x4xbf16> to vector<4x4xbf16>
    %cst_20 = arith.constant dense<0.000000e+00> : vector<128x4xf32>
    %39 = tpu.matmul %36, %38, %cst_20 {dimension_numbers = #tpu.dot_dimension_numbers<[1], [0], [0], [1], [0, 0, 1, 1], [], []>} : vector<128x4xbf16>, vector<4x4xbf16>, vector<128x4xf32> -> vector<128x4xf32>
    %40 = arith.addf %34, %39 : vector<128x4xf32>
    %41 = vector.extract_strided_slice %10 {offsets = [0, 0, 0], sizes = [8, 16, 4], strides = [1, 1, 1]} : vector<8x18x4xbf16> to vector<8x16x4xbf16>
    %42 = vector.shape_cast %41 : vector<8x16x4xbf16> to vector<128x4xbf16>
    %c3 = arith.constant 3 : index
    %c0_21 = arith.constant 0 : index
    %c0_22 = arith.constant 0 : index
    %43 = vector.load %arg8[%c3, %c0_21, %c0_22] : memref<9x4x4xbf16, #tpu.memory_space<vmem>>, vector<1x4x4xbf16>
    %44 = vector.shape_cast %43 : vector<1x4x4xbf16> to vector<4x4xbf16>
    %cst_23 = arith.constant dense<0.000000e+00> : vector<128x4xf32>
    %45 = tpu.matmul %42, %44, %cst_23 {dimension_numbers = #tpu.dot_dimension_numbers<[1], [0], [0], [1], [0, 0, 1, 1], [], []>} : vector<128x4xbf16>, vector<4x4xbf16>, vector<128x4xf32> -> vector<128x4xf32>
    %46 = arith.addf %40, %45 : vector<128x4xf32>
    %47 = vector.extract_strided_slice %10 {offsets = [0, 1, 0], sizes = [8, 16, 4], strides = [1, 1, 1]} : vector<8x18x4xbf16> to vector<8x16x4xbf16>
    %48 = vector.shape_cast %47 : vector<8x16x4xbf16> to vector<128x4xbf16>
    %c4 = arith.constant 4 : index
    %c0_24 = arith.constant 0 : index
    %c0_25 = arith.constant 0 : index
    %49 = vector.load %arg8[%c4, %c0_24, %c0_25] : memref<9x4x4xbf16, #tpu.memory_space<vmem>>, vector<1x4x4xbf16>
    %50 = vector.shape_cast %49 : vector<1x4x4xbf16> to vector<4x4xbf16>
    %cst_26 = arith.constant dense<0.000000e+00> : vector<128x4xf32>
    %51 = tpu.matmul %48, %50, %cst_26 {dimension_numbers = #tpu.dot_dimension_numbers<[1], [0], [0], [1], [0, 0, 1, 1], [], []>} : vector<128x4xbf16>, vector<4x4xbf16>, vector<128x4xf32> -> vector<128x4xf32>
    %52 = arith.addf %46, %51 : vector<128x4xf32>
    %53 = vector.extract_strided_slice %10 {offsets = [0, 2, 0], sizes = [8, 16, 4], strides = [1, 1, 1]} : vector<8x18x4xbf16> to vector<8x16x4xbf16>
    %54 = vector.shape_cast %53 : vector<8x16x4xbf16> to vector<128x4xbf16>
    %c5 = arith.constant 5 : index
    %c0_27 = arith.constant 0 : index
    %c0_28 = arith.constant 0 : index
    %55 = vector.load %arg8[%c5, %c0_27, %c0_28] : memref<9x4x4xbf16, #tpu.memory_space<vmem>>, vector<1x4x4xbf16>
    %56 = vector.shape_cast %55 : vector<1x4x4xbf16> to vector<4x4xbf16>
    %cst_29 = arith.constant dense<0.000000e+00> : vector<128x4xf32>
    %57 = tpu.matmul %54, %56, %cst_29 {dimension_numbers = #tpu.dot_dimension_numbers<[1], [0], [0], [1], [0, 0, 1, 1], [], []>} : vector<128x4xbf16>, vector<4x4xbf16>, vector<128x4xf32> -> vector<128x4xf32>
    %58 = arith.addf %52, %57 : vector<128x4xf32>
    %59 = vector.extract_strided_slice %22 {offsets = [0, 0, 0], sizes = [8, 16, 4], strides = [1, 1, 1]} : vector<8x18x4xbf16> to vector<8x16x4xbf16>
    %60 = vector.shape_cast %59 : vector<8x16x4xbf16> to vector<128x4xbf16>
    %c6 = arith.constant 6 : index
    %c0_30 = arith.constant 0 : index
    %c0_31 = arith.constant 0 : index
    %61 = vector.load %arg8[%c6, %c0_30, %c0_31] : memref<9x4x4xbf16, #tpu.memory_space<vmem>>, vector<1x4x4xbf16>
    %62 = vector.shape_cast %61 : vector<1x4x4xbf16> to vector<4x4xbf16>
    %cst_32 = arith.constant dense<0.000000e+00> : vector<128x4xf32>
    %63 = tpu.matmul %60, %62, %cst_32 {dimension_numbers = #tpu.dot_dimension_numbers<[1], [0], [0], [1], [0, 0, 1, 1], [], []>} : vector<128x4xbf16>, vector<4x4xbf16>, vector<128x4xf32> -> vector<128x4xf32>
    %64 = arith.addf %58, %63 : vector<128x4xf32>
    %65 = vector.extract_strided_slice %22 {offsets = [0, 1, 0], sizes = [8, 16, 4], strides = [1, 1, 1]} : vector<8x18x4xbf16> to vector<8x16x4xbf16>
    %66 = vector.shape_cast %65 : vector<8x16x4xbf16> to vector<128x4xbf16>
    %c7 = arith.constant 7 : index
    %c0_33 = arith.constant 0 : index
    %c0_34 = arith.constant 0 : index
    %67 = vector.load %arg8[%c7, %c0_33, %c0_34] : memref<9x4x4xbf16, #tpu.memory_space<vmem>>, vector<1x4x4xbf16>
    %68 = vector.shape_cast %67 : vector<1x4x4xbf16> to vector<4x4xbf16>
    %cst_35 = arith.constant dense<0.000000e+00> : vector<128x4xf32>
    %69 = tpu.matmul %66, %68, %cst_35 {dimension_numbers = #tpu.dot_dimension_numbers<[1], [0], [0], [1], [0, 0, 1, 1], [], []>} : vector<128x4xbf16>, vector<4x4xbf16>, vector<128x4xf32> -> vector<128x4xf32>
    %70 = arith.addf %64, %69 : vector<128x4xf32>
    %71 = vector.extract_strided_slice %22 {offsets = [0, 2, 0], sizes = [8, 16, 4], strides = [1, 1, 1]} : vector<8x18x4xbf16> to vector<8x16x4xbf16>
    %72 = vector.shape_cast %71 : vector<8x16x4xbf16> to vector<128x4xbf16>
    %c8 = arith.constant 8 : index
    %c0_36 = arith.constant 0 : index
    %c0_37 = arith.constant 0 : index
    %73 = vector.load %arg8[%c8, %c0_36, %c0_37] : memref<9x4x4xbf16, #tpu.memory_space<vmem>>, vector<1x4x4xbf16>
    %74 = vector.shape_cast %73 : vector<1x4x4xbf16> to vector<4x4xbf16>
    %cst_38 = arith.constant dense<0.000000e+00> : vector<128x4xf32>
    %75 = tpu.matmul %72, %74, %cst_38 {dimension_numbers = #tpu.dot_dimension_numbers<[1], [0], [0], [1], [0, 0, 1, 1], [], []>} : vector<128x4xbf16>, vector<4x4xbf16>, vector<128x4xf32> -> vector<128x4xf32>
    %76 = arith.addf %70, %75 : vector<128x4xf32>
    %c0_39 = arith.constant 0 : index
    %c0_40 = arith.constant 0 : index
    %c0_41 = arith.constant 0 : index
    %c0_42 = arith.constant 0 : index
    %77 = vector.load %arg5[%c0_39, %c0_40, %c0_41, %c0_42] : memref<1x8x18x4xbf16, #tpu.memory_space<vmem>>, vector<1x8x18x4xbf16>
    %78 = vector.shape_cast %77 : vector<1x8x18x4xbf16> to vector<8x18x4xbf16>
    %c0_43 = arith.constant 0 : index
    %c0_44 = arith.constant 0 : index
    %c0_45 = arith.constant 0 : index
    %c0_46 = arith.constant 0 : index
    %79 = vector.load %arg6[%c0_43, %c0_44, %c0_45, %c0_46] : memref<1x1x18x4xbf16, #tpu.memory_space<vmem>>, vector<1x1x18x4xbf16>
    %80 = vector.shape_cast %79 : vector<1x1x18x4xbf16> to vector<1x18x4xbf16>
    %81 = vector.broadcast %3 : bf16 to vector<1x18x4xbf16>
    %82 = arith.mulf %80, %81 : vector<1x18x4xbf16>
    %c0_47 = arith.constant 0 : index
    %c0_48 = arith.constant 0 : index
    %c0_49 = arith.constant 0 : index
    %c0_50 = arith.constant 0 : index
    %83 = vector.load %arg7[%c0_47, %c0_48, %c0_49, %c0_50] : memref<1x1x18x4xbf16, #tpu.memory_space<vmem>>, vector<1x1x18x4xbf16>
    %84 = vector.shape_cast %83 : vector<1x1x18x4xbf16> to vector<1x18x4xbf16>
    %85 = vector.broadcast %7 : bf16 to vector<1x18x4xbf16>
    %86 = arith.mulf %84, %85 : vector<1x18x4xbf16>
    %87 = vector.extract_strided_slice %78 {offsets = [0, 0, 0], sizes = [7, 18, 4], strides = [1, 1, 1]} : vector<8x18x4xbf16> to vector<7x18x4xbf16>
    %88 = tpu.concatenate %82, %87 in 0 : vector<1x18x4xbf16>, vector<7x18x4xbf16> -> vector<8x18x4xbf16>
    %89 = vector.extract_strided_slice %78 {offsets = [1, 0, 0], sizes = [7, 18, 4], strides = [1, 1, 1]} : vector<8x18x4xbf16> to vector<7x18x4xbf16>
    %90 = tpu.concatenate %89, %86 in 0 : vector<7x18x4xbf16>, vector<1x18x4xbf16> -> vector<8x18x4xbf16>
    %91 = vector.extract_strided_slice %88 {offsets = [0, 0, 0], sizes = [8, 16, 4], strides = [1, 1, 1]} : vector<8x18x4xbf16> to vector<8x16x4xbf16>
    %92 = vector.shape_cast %91 : vector<8x16x4xbf16> to vector<128x4xbf16>
    %c0_51 = arith.constant 0 : index
    %c0_52 = arith.constant 0 : index
    %c0_53 = arith.constant 0 : index
    %93 = vector.load %arg9[%c0_51, %c0_52, %c0_53] : memref<9x4x4xbf16, #tpu.memory_space<vmem>>, vector<1x4x4xbf16>
    %94 = vector.shape_cast %93 : vector<1x4x4xbf16> to vector<4x4xbf16>
    %cst_54 = arith.constant dense<0.000000e+00> : vector<128x4xf32>
    %95 = tpu.matmul %92, %94, %cst_54 {dimension_numbers = #tpu.dot_dimension_numbers<[1], [0], [0], [1], [0, 0, 1, 1], [], []>} : vector<128x4xbf16>, vector<4x4xbf16>, vector<128x4xf32> -> vector<128x4xf32>
    %96 = arith.addf %76, %95 : vector<128x4xf32>
    %97 = vector.extract_strided_slice %88 {offsets = [0, 1, 0], sizes = [8, 16, 4], strides = [1, 1, 1]} : vector<8x18x4xbf16> to vector<8x16x4xbf16>
    %98 = vector.shape_cast %97 : vector<8x16x4xbf16> to vector<128x4xbf16>
    %c1_55 = arith.constant 1 : index
    %c0_56 = arith.constant 0 : index
    %c0_57 = arith.constant 0 : index
    %99 = vector.load %arg9[%c1_55, %c0_56, %c0_57] : memref<9x4x4xbf16, #tpu.memory_space<vmem>>, vector<1x4x4xbf16>
    %100 = vector.shape_cast %99 : vector<1x4x4xbf16> to vector<4x4xbf16>
    %cst_58 = arith.constant dense<0.000000e+00> : vector<128x4xf32>
    %101 = tpu.matmul %98, %100, %cst_58 {dimension_numbers = #tpu.dot_dimension_numbers<[1], [0], [0], [1], [0, 0, 1, 1], [], []>} : vector<128x4xbf16>, vector<4x4xbf16>, vector<128x4xf32> -> vector<128x4xf32>
    %102 = arith.addf %96, %101 : vector<128x4xf32>
    %103 = vector.extract_strided_slice %88 {offsets = [0, 2, 0], sizes = [8, 16, 4], strides = [1, 1, 1]} : vector<8x18x4xbf16> to vector<8x16x4xbf16>
    %104 = vector.shape_cast %103 : vector<8x16x4xbf16> to vector<128x4xbf16>
    %c2_59 = arith.constant 2 : index
    %c0_60 = arith.constant 0 : index
    %c0_61 = arith.constant 0 : index
    %105 = vector.load %arg9[%c2_59, %c0_60, %c0_61] : memref<9x4x4xbf16, #tpu.memory_space<vmem>>, vector<1x4x4xbf16>
    %106 = vector.shape_cast %105 : vector<1x4x4xbf16> to vector<4x4xbf16>
    %cst_62 = arith.constant dense<0.000000e+00> : vector<128x4xf32>
    %107 = tpu.matmul %104, %106, %cst_62 {dimension_numbers = #tpu.dot_dimension_numbers<[1], [0], [0], [1], [0, 0, 1, 1], [], []>} : vector<128x4xbf16>, vector<4x4xbf16>, vector<128x4xf32> -> vector<128x4xf32>
    %108 = arith.addf %102, %107 : vector<128x4xf32>
    %109 = vector.extract_strided_slice %78 {offsets = [0, 0, 0], sizes = [8, 16, 4], strides = [1, 1, 1]} : vector<8x18x4xbf16> to vector<8x16x4xbf16>
    %110 = vector.shape_cast %109 : vector<8x16x4xbf16> to vector<128x4xbf16>
    %c3_63 = arith.constant 3 : index
    %c0_64 = arith.constant 0 : index
    %c0_65 = arith.constant 0 : index
    %111 = vector.load %arg9[%c3_63, %c0_64, %c0_65] : memref<9x4x4xbf16, #tpu.memory_space<vmem>>, vector<1x4x4xbf16>
    %112 = vector.shape_cast %111 : vector<1x4x4xbf16> to vector<4x4xbf16>
    %cst_66 = arith.constant dense<0.000000e+00> : vector<128x4xf32>
    %113 = tpu.matmul %110, %112, %cst_66 {dimension_numbers = #tpu.dot_dimension_numbers<[1], [0], [0], [1], [0, 0, 1, 1], [], []>} : vector<128x4xbf16>, vector<4x4xbf16>, vector<128x4xf32> -> vector<128x4xf32>
    %114 = arith.addf %108, %113 : vector<128x4xf32>
    %115 = vector.extract_strided_slice %78 {offsets = [0, 1, 0], sizes = [8, 16, 4], strides = [1, 1, 1]} : vector<8x18x4xbf16> to vector<8x16x4xbf16>
    %116 = vector.shape_cast %115 : vector<8x16x4xbf16> to vector<128x4xbf16>
    %c4_67 = arith.constant 4 : index
    %c0_68 = arith.constant 0 : index
    %c0_69 = arith.constant 0 : index
    %117 = vector.load %arg9[%c4_67, %c0_68, %c0_69] : memref<9x4x4xbf16, #tpu.memory_space<vmem>>, vector<1x4x4xbf16>
    %118 = vector.shape_cast %117 : vector<1x4x4xbf16> to vector<4x4xbf16>
    %cst_70 = arith.constant dense<0.000000e+00> : vector<128x4xf32>
    %119 = tpu.matmul %116, %118, %cst_70 {dimension_numbers = #tpu.dot_dimension_numbers<[1], [0], [0], [1], [0, 0, 1, 1], [], []>} : vector<128x4xbf16>, vector<4x4xbf16>, vector<128x4xf32> -> vector<128x4xf32>
    %120 = arith.addf %114, %119 : vector<128x4xf32>
    %121 = vector.extract_strided_slice %78 {offsets = [0, 2, 0], sizes = [8, 16, 4], strides = [1, 1, 1]} : vector<8x18x4xbf16> to vector<8x16x4xbf16>
    %122 = vector.shape_cast %121 : vector<8x16x4xbf16> to vector<128x4xbf16>
    %c5_71 = arith.constant 5 : index
    %c0_72 = arith.constant 0 : index
    %c0_73 = arith.constant 0 : index
    %123 = vector.load %arg9[%c5_71, %c0_72, %c0_73] : memref<9x4x4xbf16, #tpu.memory_space<vmem>>, vector<1x4x4xbf16>
    %124 = vector.shape_cast %123 : vector<1x4x4xbf16> to vector<4x4xbf16>
    %cst_74 = arith.constant dense<0.000000e+00> : vector<128x4xf32>
    %125 = tpu.matmul %122, %124, %cst_74 {dimension_numbers = #tpu.dot_dimension_numbers<[1], [0], [0], [1], [0, 0, 1, 1], [], []>} : vector<128x4xbf16>, vector<4x4xbf16>, vector<128x4xf32> -> vector<128x4xf32>
    %126 = arith.addf %120, %125 : vector<128x4xf32>
    %127 = vector.extract_strided_slice %90 {offsets = [0, 0, 0], sizes = [8, 16, 4], strides = [1, 1, 1]} : vector<8x18x4xbf16> to vector<8x16x4xbf16>
    %128 = vector.shape_cast %127 : vector<8x16x4xbf16> to vector<128x4xbf16>
    %c6_75 = arith.constant 6 : index
    %c0_76 = arith.constant 0 : index
    %c0_77 = arith.constant 0 : index
    %129 = vector.load %arg9[%c6_75, %c0_76, %c0_77] : memref<9x4x4xbf16, #tpu.memory_space<vmem>>, vector<1x4x4xbf16>
    %130 = vector.shape_cast %129 : vector<1x4x4xbf16> to vector<4x4xbf16>
    %cst_78 = arith.constant dense<0.000000e+00> : vector<128x4xf32>
    %131 = tpu.matmul %128, %130, %cst_78 {dimension_numbers = #tpu.dot_dimension_numbers<[1], [0], [0], [1], [0, 0, 1, 1], [], []>} : vector<128x4xbf16>, vector<4x4xbf16>, vector<128x4xf32> -> vector<128x4xf32>
    %132 = arith.addf %126, %131 : vector<128x4xf32>
    %133 = vector.extract_strided_slice %90 {offsets = [0, 1, 0], sizes = [8, 16, 4], strides = [1, 1, 1]} : vector<8x18x4xbf16> to vector<8x16x4xbf16>
    %134 = vector.shape_cast %133 : vector<8x16x4xbf16> to vector<128x4xbf16>
    %c7_79 = arith.constant 7 : index
    %c0_80 = arith.constant 0 : index
    %c0_81 = arith.constant 0 : index
    %135 = vector.load %arg9[%c7_79, %c0_80, %c0_81] : memref<9x4x4xbf16, #tpu.memory_space<vmem>>, vector<1x4x4xbf16>
    %136 = vector.shape_cast %135 : vector<1x4x4xbf16> to vector<4x4xbf16>
    %cst_82 = arith.constant dense<0.000000e+00> : vector<128x4xf32>
    %137 = tpu.matmul %134, %136, %cst_82 {dimension_numbers = #tpu.dot_dimension_numbers<[1], [0], [0], [1], [0, 0, 1, 1], [], []>} : vector<128x4xbf16>, vector<4x4xbf16>, vector<128x4xf32> -> vector<128x4xf32>
    %138 = arith.addf %132, %137 : vector<128x4xf32>
    %139 = vector.extract_strided_slice %90 {offsets = [0, 2, 0], sizes = [8, 16, 4], strides = [1, 1, 1]} : vector<8x18x4xbf16> to vector<8x16x4xbf16>
    %140 = vector.shape_cast %139 : vector<8x16x4xbf16> to vector<128x4xbf16>
    %c8_83 = arith.constant 8 : index
    %c0_84 = arith.constant 0 : index
    %c0_85 = arith.constant 0 : index
    %141 = vector.load %arg9[%c8_83, %c0_84, %c0_85] : memref<9x4x4xbf16, #tpu.memory_space<vmem>>, vector<1x4x4xbf16>
    %142 = vector.shape_cast %141 : vector<1x4x4xbf16> to vector<4x4xbf16>
    %cst_86 = arith.constant dense<0.000000e+00> : vector<128x4xf32>
    %143 = tpu.matmul %140, %142, %cst_86 {dimension_numbers = #tpu.dot_dimension_numbers<[1], [0], [0], [1], [0, 0, 1, 1], [], []>} : vector<128x4xbf16>, vector<4x4xbf16>, vector<128x4xf32> -> vector<128x4xf32>
    %144 = arith.addf %138, %143 : vector<128x4xf32>
    %c0_87 = arith.constant 0 : index
    %c0_88 = arith.constant 0 : index
    %145 = vector.load %arg10[%c0_87, %c0_88] : memref<1x4xf32, #tpu.memory_space<vmem>>, vector<1x4xf32>
    %146 = vector.broadcast %145 : vector<1x4xf32> to vector<128x4xf32>
    %147 = arith.mulf %144, %146 : vector<128x4xf32>
    %c0_89 = arith.constant 0 : index
    %c0_90 = arith.constant 0 : index
    %148 = vector.load %arg11[%c0_89, %c0_90] : memref<1x4xf32, #tpu.memory_space<vmem>>, vector<1x4xf32>
    %149 = vector.broadcast %148 : vector<1x4xf32> to vector<128x4xf32>
    %150 = arith.addf %147, %149 : vector<128x4xf32>
    %cst_91 = arith.constant 0.000000e+00 : f32
    %151 = vector.broadcast %cst_91 : f32 to vector<128x4xf32>
    %152 = arith.maximumf %150, %151 : vector<128x4xf32>
    %153 = vector.shape_cast %152 : vector<128x4xf32> to vector<8x16x4xf32>
    %154 = arith.truncf %153 : vector<8x16x4xf32> to vector<8x16x4xbf16>
    %c0_92 = arith.constant 0 : index
    %c0_93 = arith.constant 0 : index
    %c0_94 = arith.constant 0 : index
    %c0_95 = arith.constant 0 : index
    %155 = vector.load %arg12[%c0_92, %c0_93, %c0_94, %c0_95] : memref<1x8x16x4xbf16, #tpu.memory_space<vmem>>, vector<1x8x16x4xbf16>
    %156 = vector.shape_cast %155 : vector<1x8x16x4xbf16> to vector<8x16x4xbf16>
    %157 = vector.shape_cast %154 : vector<8x16x4xbf16> to vector<1x8x16x4xbf16>
    tpu.vector_store %arg12[%c0_92, %c0_93, %c0_94, %c0_95], %157 {strides = array<i32>} : memref<1x8x16x4xbf16, #tpu.memory_space<vmem>>, vector<1x8x16x4xbf16>,
    return
  }
  func.func @transform_0(%arg0: i32, %arg1: i32) -> (i32, i32, i32, i32) {
    %c0_i32 = arith.constant 0 : i32
    %c0_i32_0 = arith.constant 0 : i32
    %c0_i32_1 = arith.constant 0 : i32
    return %arg0, %arg1, %c0_i32, %c0_i32_0 : i32, i32, i32, i32
  }
  func.func @transform_1(%arg0: i32, %arg1: i32) -> (i32, i32, i32, i32) {
    %c8_i32 = arith.constant 8 : i32
    %0 = arith.muli %arg1, %c8_i32 : i32
    %c1_i32 = arith.constant 1 : i32
    %1 = arith.subi %0, %c1_i32 : i32
    %c0_i32 = arith.constant 0 : i32
    %2 = arith.maxsi %1, %c0_i32 : i32
    %c0_i32_0 = arith.constant 0 : i32
    %c0_i32_1 = arith.constant 0 : i32
    %c0_i32_2 = arith.constant 0 : i32
    return %arg0, %2, %c0_i32_0, %c0_i32_1 : i32, i32, i32, i32
  }
  func.func @transform_2(%arg0: i32, %arg1: i32) -> (i32, i32, i32, i32) {
    %c8_i32 = arith.constant 8 : i32
    %0 = arith.muli %arg1, %c8_i32 : i32
    %c8_i32_0 = arith.constant 8 : i32
    %1 = arith.addi %0, %c8_i32_0 : i32
    %c15_i32 = arith.constant 15 : i32
    %2 = arith.minsi %1, %c15_i32 : i32
    %c0_i32 = arith.constant 0 : i32
    %c0_i32_1 = arith.constant 0 : i32
    %c0_i32_2 = arith.constant 0 : i32
    return %arg0, %2, %c0_i32, %c0_i32_1 : i32, i32, i32, i32
  }
  func.func @transform_3(%arg0: i32, %arg1: i32) -> (i32, i32, i32, i32) {
    %c0_i32 = arith.constant 0 : i32
    %c0_i32_0 = arith.constant 0 : i32
    %c0_i32_1 = arith.constant 0 : i32
    return %arg0, %arg1, %c0_i32, %c0_i32_0 : i32, i32, i32, i32
  }
  func.func @transform_4(%arg0: i32, %arg1: i32) -> (i32, i32, i32, i32) {
    %c8_i32 = arith.constant 8 : i32
    %0 = arith.muli %arg1, %c8_i32 : i32
    %c1_i32 = arith.constant 1 : i32
    %1 = arith.subi %0, %c1_i32 : i32
    %c0_i32 = arith.constant 0 : i32
    %2 = arith.maxsi %1, %c0_i32 : i32
    %c0_i32_0 = arith.constant 0 : i32
    %c0_i32_1 = arith.constant 0 : i32
    %c0_i32_2 = arith.constant 0 : i32
    return %arg0, %2, %c0_i32_0, %c0_i32_1 : i32, i32, i32, i32
  }
  func.func @transform_5(%arg0: i32, %arg1: i32) -> (i32, i32, i32, i32) {
    %c8_i32 = arith.constant 8 : i32
    %0 = arith.muli %arg1, %c8_i32 : i32
    %c8_i32_0 = arith.constant 8 : i32
    %1 = arith.addi %0, %c8_i32_0 : i32
    %c15_i32 = arith.constant 15 : i32
    %2 = arith.minsi %1, %c15_i32 : i32
    %c0_i32 = arith.constant 0 : i32
    %c0_i32_1 = arith.constant 0 : i32
    %c0_i32_2 = arith.constant 0 : i32
    return %arg0, %2, %c0_i32, %c0_i32_1 : i32, i32, i32, i32
  }
  func.func @transform_6(%arg0: i32, %arg1: i32) -> (i32, i32, i32) {
    %c0_i32 = arith.constant 0 : i32
    %c0_i32_0 = arith.constant 0 : i32
    %c0_i32_1 = arith.constant 0 : i32
    %c0_i32_2 = arith.constant 0 : i32
    return %c0_i32, %c0_i32_0, %c0_i32_1 : i32, i32, i32
  }
  func.func @transform_7(%arg0: i32, %arg1: i32) -> (i32, i32, i32) {
    %c0_i32 = arith.constant 0 : i32
    %c0_i32_0 = arith.constant 0 : i32
    %c0_i32_1 = arith.constant 0 : i32
    %c0_i32_2 = arith.constant 0 : i32
    return %c0_i32, %c0_i32_0, %c0_i32_1 : i32, i32, i32
  }
  func.func @transform_8(%arg0: i32, %arg1: i32) -> (i32, i32) {
    %c0_i32 = arith.constant 0 : i32
    %c0_i32_0 = arith.constant 0 : i32
    %c0_i32_1 = arith.constant 0 : i32
    return %c0_i32, %c0_i32_0 : i32, i32
  }
  func.func @transform_9(%arg0: i32, %arg1: i32) -> (i32, i32) {
    %c0_i32 = arith.constant 0 : i32
    %c0_i32_0 = arith.constant 0 : i32
    %c0_i32_1 = arith.constant 0 : i32
    return %c0_i32, %c0_i32_0 : i32, i32
  }
  func.func @transform_10(%arg0: i32, %arg1: i32) -> (i32, i32, i32, i32) {
    %c0_i32 = arith.constant 0 : i32
    %c0_i32_0 = arith.constant 0 : i32
    %c0_i32_1 = arith.constant 0 : i32
    return %arg0, %arg1, %c0_i32, %c0_i32_0 : i32, i32, i32, i32
  }
}

module attributes {stable_mosaic.version = 11 : i64} {
  func.func @kernel(%arg0: i32, %arg1: i32, %arg2: memref<1x8x18x4xbf16, #tpu.memory_space<vmem>>, %arg3: memref<1x1x18x4xbf16, #tpu.memory_space<vmem>>, %arg4: memref<1x1x18x4xbf16, #tpu.memory_space<vmem>>, %arg5: memref<9x4x4xbf16, #tpu.memory_space<vmem>>, %arg6: memref<1x4xf32, #tpu.memory_space<vmem>>, %arg7: memref<1x4xf32, #tpu.memory_space<vmem>>, %arg8: memref<1x8x16x4xf32, #tpu.memory_space<vmem>>) attributes {dimension_semantics = [#tpu.dimension_semantics<parallel>, #tpu.dimension_semantics<parallel>], iteration_bounds = array<i64: 2, 2>, scalar_prefetch = 0 : i64, scratch_operands = 0 : i64, tpu.core_type = #tpu.core_type<tc>, window_params = [{transform_indices = @transform_0, window_bounds = array<i64: 1, 8, 18, 4>}, {transform_indices = @transform_1, window_bounds = array<i64: 1, 1, 18, 4>}, {transform_indices = @transform_2, window_bounds = array<i64: 1, 1, 18, 4>}, {pipeline_mode = #tpu.pipeline_mode<synchronous>, transform_indices = @transform_3, window_bounds = array<i64: 9, 4, 4>}, {pipeline_mode = #tpu.pipeline_mode<synchronous>, transform_indices = @transform_4, window_bounds = array<i64: 1, 4>}, {pipeline_mode = #tpu.pipeline_mode<synchronous>, transform_indices = @transform_5, window_bounds = array<i64: 1, 4>}, {transform_indices = @transform_6, window_bounds = array<i64: 1, 8, 16, 4>}]} {
    %c0_i32 = arith.constant 0 : i32
    %0 = arith.cmpi sgt, %arg1, %c0_i32 : i32
    %1 = arith.extui %0 : i1 to i32
    %2 = arith.sitofp %1 : i32 to f32
    %3 = arith.truncf %2 : f32 to bf16
    %c1_i32 = arith.constant 1 : i32
    %4 = arith.cmpi slt, %arg1, %c1_i32 : i32
    %5 = arith.extui %4 : i1 to i32
    %6 = arith.sitofp %5 : i32 to f32
    %7 = arith.truncf %6 : f32 to bf16
    %cst = arith.constant 0.000000e+00 : f32
    %8 = vector.broadcast %cst : f32 to vector<128x4xf32>
    %c0 = arith.constant 0 : index
    %c0_0 = arith.constant 0 : index
    %c0_1 = arith.constant 0 : index
    %c0_2 = arith.constant 0 : index
    %9 = vector.load %arg2[%c0, %c0_0, %c0_1, %c0_2] : memref<1x8x18x4xbf16, #tpu.memory_space<vmem>>, vector<1x8x18x4xbf16>
    %10 = vector.shape_cast %9 : vector<1x8x18x4xbf16> to vector<8x18x4xbf16>
    %c0_3 = arith.constant 0 : index
    %c0_4 = arith.constant 0 : index
    %c0_5 = arith.constant 0 : index
    %c0_6 = arith.constant 0 : index
    %11 = vector.load %arg3[%c0_3, %c0_4, %c0_5, %c0_6] : memref<1x1x18x4xbf16, #tpu.memory_space<vmem>>, vector<1x1x18x4xbf16>
    %12 = vector.shape_cast %11 : vector<1x1x18x4xbf16> to vector<1x18x4xbf16>
    %13 = vector.broadcast %3 : bf16 to vector<1x18x4xbf16>
    %14 = arith.mulf %12, %13 : vector<1x18x4xbf16>
    %c0_7 = arith.constant 0 : index
    %c0_8 = arith.constant 0 : index
    %c0_9 = arith.constant 0 : index
    %c0_10 = arith.constant 0 : index
    %15 = vector.load %arg4[%c0_7, %c0_8, %c0_9, %c0_10] : memref<1x1x18x4xbf16, #tpu.memory_space<vmem>>, vector<1x1x18x4xbf16>
    %16 = vector.shape_cast %15 : vector<1x1x18x4xbf16> to vector<1x18x4xbf16>
    %17 = vector.broadcast %7 : bf16 to vector<1x18x4xbf16>
    %18 = arith.mulf %16, %17 : vector<1x18x4xbf16>
    %19 = vector.extract_strided_slice %10 {offsets = [0, 0, 0], sizes = [7, 18, 4], strides = [1, 1, 1]} : vector<8x18x4xbf16> to vector<7x18x4xbf16>
    %20 = tpu.concatenate %14, %19 in 0 : vector<1x18x4xbf16>, vector<7x18x4xbf16> -> vector<8x18x4xbf16>
    %21 = vector.extract_strided_slice %10 {offsets = [1, 0, 0], sizes = [7, 18, 4], strides = [1, 1, 1]} : vector<8x18x4xbf16> to vector<7x18x4xbf16>
    %22 = tpu.concatenate %21, %18 in 0 : vector<7x18x4xbf16>, vector<1x18x4xbf16> -> vector<8x18x4xbf16>
    %23 = vector.extract_strided_slice %20 {offsets = [0, 0, 0], sizes = [8, 16, 4], strides = [1, 1, 1]} : vector<8x18x4xbf16> to vector<8x16x4xbf16>
    %24 = vector.shape_cast %23 : vector<8x16x4xbf16> to vector<128x4xbf16>
    %c0_11 = arith.constant 0 : index
    %c0_12 = arith.constant 0 : index
    %c0_13 = arith.constant 0 : index
    %25 = vector.load %arg5[%c0_11, %c0_12, %c0_13] : memref<9x4x4xbf16, #tpu.memory_space<vmem>>, vector<1x4x4xbf16>
    %26 = vector.shape_cast %25 : vector<1x4x4xbf16> to vector<4x4xbf16>
    %cst_14 = arith.constant dense<0.000000e+00> : vector<128x4xf32>
    %27 = tpu.matmul %24, %26, %cst_14 {dimension_numbers = #tpu.dot_dimension_numbers<[1], [0], [0], [1], [0, 0, 1, 1], [], []>} : vector<128x4xbf16>, vector<4x4xbf16>, vector<128x4xf32> -> vector<128x4xf32>
    %28 = arith.addf %8, %27 : vector<128x4xf32>
    %29 = vector.extract_strided_slice %20 {offsets = [0, 1, 0], sizes = [8, 16, 4], strides = [1, 1, 1]} : vector<8x18x4xbf16> to vector<8x16x4xbf16>
    %30 = vector.shape_cast %29 : vector<8x16x4xbf16> to vector<128x4xbf16>
    %c1 = arith.constant 1 : index
    %c0_15 = arith.constant 0 : index
    %c0_16 = arith.constant 0 : index
    %31 = vector.load %arg5[%c1, %c0_15, %c0_16] : memref<9x4x4xbf16, #tpu.memory_space<vmem>>, vector<1x4x4xbf16>
    %32 = vector.shape_cast %31 : vector<1x4x4xbf16> to vector<4x4xbf16>
    %cst_17 = arith.constant dense<0.000000e+00> : vector<128x4xf32>
    %33 = tpu.matmul %30, %32, %cst_17 {dimension_numbers = #tpu.dot_dimension_numbers<[1], [0], [0], [1], [0, 0, 1, 1], [], []>} : vector<128x4xbf16>, vector<4x4xbf16>, vector<128x4xf32> -> vector<128x4xf32>
    %34 = arith.addf %28, %33 : vector<128x4xf32>
    %35 = vector.extract_strided_slice %20 {offsets = [0, 2, 0], sizes = [8, 16, 4], strides = [1, 1, 1]} : vector<8x18x4xbf16> to vector<8x16x4xbf16>
    %36 = vector.shape_cast %35 : vector<8x16x4xbf16> to vector<128x4xbf16>
    %c2 = arith.constant 2 : index
    %c0_18 = arith.constant 0 : index
    %c0_19 = arith.constant 0 : index
    %37 = vector.load %arg5[%c2, %c0_18, %c0_19] : memref<9x4x4xbf16, #tpu.memory_space<vmem>>, vector<1x4x4xbf16>
    %38 = vector.shape_cast %37 : vector<1x4x4xbf16> to vector<4x4xbf16>
    %cst_20 = arith.constant dense<0.000000e+00> : vector<128x4xf32>
    %39 = tpu.matmul %36, %38, %cst_20 {dimension_numbers = #tpu.dot_dimension_numbers<[1], [0], [0], [1], [0, 0, 1, 1], [], []>} : vector<128x4xbf16>, vector<4x4xbf16>, vector<128x4xf32> -> vector<128x4xf32>
    %40 = arith.addf %34, %39 : vector<128x4xf32>
    %41 = vector.extract_strided_slice %10 {offsets = [0, 0, 0], sizes = [8, 16, 4], strides = [1, 1, 1]} : vector<8x18x4xbf16> to vector<8x16x4xbf16>
    %42 = vector.shape_cast %41 : vector<8x16x4xbf16> to vector<128x4xbf16>
    %c3 = arith.constant 3 : index
    %c0_21 = arith.constant 0 : index
    %c0_22 = arith.constant 0 : index
    %43 = vector.load %arg5[%c3, %c0_21, %c0_22] : memref<9x4x4xbf16, #tpu.memory_space<vmem>>, vector<1x4x4xbf16>
    %44 = vector.shape_cast %43 : vector<1x4x4xbf16> to vector<4x4xbf16>
    %cst_23 = arith.constant dense<0.000000e+00> : vector<128x4xf32>
    %45 = tpu.matmul %42, %44, %cst_23 {dimension_numbers = #tpu.dot_dimension_numbers<[1], [0], [0], [1], [0, 0, 1, 1], [], []>} : vector<128x4xbf16>, vector<4x4xbf16>, vector<128x4xf32> -> vector<128x4xf32>
    %46 = arith.addf %40, %45 : vector<128x4xf32>
    %47 = vector.extract_strided_slice %10 {offsets = [0, 1, 0], sizes = [8, 16, 4], strides = [1, 1, 1]} : vector<8x18x4xbf16> to vector<8x16x4xbf16>
    %48 = vector.shape_cast %47 : vector<8x16x4xbf16> to vector<128x4xbf16>
    %c4 = arith.constant 4 : index
    %c0_24 = arith.constant 0 : index
    %c0_25 = arith.constant 0 : index
    %49 = vector.load %arg5[%c4, %c0_24, %c0_25] : memref<9x4x4xbf16, #tpu.memory_space<vmem>>, vector<1x4x4xbf16>
    %50 = vector.shape_cast %49 : vector<1x4x4xbf16> to vector<4x4xbf16>
    %cst_26 = arith.constant dense<0.000000e+00> : vector<128x4xf32>
    %51 = tpu.matmul %48, %50, %cst_26 {dimension_numbers = #tpu.dot_dimension_numbers<[1], [0], [0], [1], [0, 0, 1, 1], [], []>} : vector<128x4xbf16>, vector<4x4xbf16>, vector<128x4xf32> -> vector<128x4xf32>
    %52 = arith.addf %46, %51 : vector<128x4xf32>
    %53 = vector.extract_strided_slice %10 {offsets = [0, 2, 0], sizes = [8, 16, 4], strides = [1, 1, 1]} : vector<8x18x4xbf16> to vector<8x16x4xbf16>
    %54 = vector.shape_cast %53 : vector<8x16x4xbf16> to vector<128x4xbf16>
    %c5 = arith.constant 5 : index
    %c0_27 = arith.constant 0 : index
    %c0_28 = arith.constant 0 : index
    %55 = vector.load %arg5[%c5, %c0_27, %c0_28] : memref<9x4x4xbf16, #tpu.memory_space<vmem>>, vector<1x4x4xbf16>
    %56 = vector.shape_cast %55 : vector<1x4x4xbf16> to vector<4x4xbf16>
    %cst_29 = arith.constant dense<0.000000e+00> : vector<128x4xf32>
    %57 = tpu.matmul %54, %56, %cst_29 {dimension_numbers = #tpu.dot_dimension_numbers<[1], [0], [0], [1], [0, 0, 1, 1], [], []>} : vector<128x4xbf16>, vector<4x4xbf16>, vector<128x4xf32> -> vector<128x4xf32>
    %58 = arith.addf %52, %57 : vector<128x4xf32>
    %59 = vector.extract_strided_slice %22 {offsets = [0, 0, 0], sizes = [8, 16, 4], strides = [1, 1, 1]} : vector<8x18x4xbf16> to vector<8x16x4xbf16>
    %60 = vector.shape_cast %59 : vector<8x16x4xbf16> to vector<128x4xbf16>
    %c6 = arith.constant 6 : index
    %c0_30 = arith.constant 0 : index
    %c0_31 = arith.constant 0 : index
    %61 = vector.load %arg5[%c6, %c0_30, %c0_31] : memref<9x4x4xbf16, #tpu.memory_space<vmem>>, vector<1x4x4xbf16>
    %62 = vector.shape_cast %61 : vector<1x4x4xbf16> to vector<4x4xbf16>
    %cst_32 = arith.constant dense<0.000000e+00> : vector<128x4xf32>
    %63 = tpu.matmul %60, %62, %cst_32 {dimension_numbers = #tpu.dot_dimension_numbers<[1], [0], [0], [1], [0, 0, 1, 1], [], []>} : vector<128x4xbf16>, vector<4x4xbf16>, vector<128x4xf32> -> vector<128x4xf32>
    %64 = arith.addf %58, %63 : vector<128x4xf32>
    %65 = vector.extract_strided_slice %22 {offsets = [0, 1, 0], sizes = [8, 16, 4], strides = [1, 1, 1]} : vector<8x18x4xbf16> to vector<8x16x4xbf16>
    %66 = vector.shape_cast %65 : vector<8x16x4xbf16> to vector<128x4xbf16>
    %c7 = arith.constant 7 : index
    %c0_33 = arith.constant 0 : index
    %c0_34 = arith.constant 0 : index
    %67 = vector.load %arg5[%c7, %c0_33, %c0_34] : memref<9x4x4xbf16, #tpu.memory_space<vmem>>, vector<1x4x4xbf16>
    %68 = vector.shape_cast %67 : vector<1x4x4xbf16> to vector<4x4xbf16>
    %cst_35 = arith.constant dense<0.000000e+00> : vector<128x4xf32>
    %69 = tpu.matmul %66, %68, %cst_35 {dimension_numbers = #tpu.dot_dimension_numbers<[1], [0], [0], [1], [0, 0, 1, 1], [], []>} : vector<128x4xbf16>, vector<4x4xbf16>, vector<128x4xf32> -> vector<128x4xf32>
    %70 = arith.addf %64, %69 : vector<128x4xf32>
    %71 = vector.extract_strided_slice %22 {offsets = [0, 2, 0], sizes = [8, 16, 4], strides = [1, 1, 1]} : vector<8x18x4xbf16> to vector<8x16x4xbf16>
    %72 = vector.shape_cast %71 : vector<8x16x4xbf16> to vector<128x4xbf16>
    %c8 = arith.constant 8 : index
    %c0_36 = arith.constant 0 : index
    %c0_37 = arith.constant 0 : index
    %73 = vector.load %arg5[%c8, %c0_36, %c0_37] : memref<9x4x4xbf16, #tpu.memory_space<vmem>>, vector<1x4x4xbf16>
    %74 = vector.shape_cast %73 : vector<1x4x4xbf16> to vector<4x4xbf16>
    %cst_38 = arith.constant dense<0.000000e+00> : vector<128x4xf32>
    %75 = tpu.matmul %72, %74, %cst_38 {dimension_numbers = #tpu.dot_dimension_numbers<[1], [0], [0], [1], [0, 0, 1, 1], [], []>} : vector<128x4xbf16>, vector<4x4xbf16>, vector<128x4xf32> -> vector<128x4xf32>
    %76 = arith.addf %70, %75 : vector<128x4xf32>
    %c0_39 = arith.constant 0 : index
    %c0_40 = arith.constant 0 : index
    %77 = vector.load %arg6[%c0_39, %c0_40] : memref<1x4xf32, #tpu.memory_space<vmem>>, vector<1x4xf32>
    %78 = vector.broadcast %77 : vector<1x4xf32> to vector<128x4xf32>
    %79 = arith.mulf %76, %78 : vector<128x4xf32>
    %c0_41 = arith.constant 0 : index
    %c0_42 = arith.constant 0 : index
    %80 = vector.load %arg7[%c0_41, %c0_42] : memref<1x4xf32, #tpu.memory_space<vmem>>, vector<1x4xf32>
    %81 = vector.broadcast %80 : vector<1x4xf32> to vector<128x4xf32>
    %82 = arith.addf %79, %81 : vector<128x4xf32>
    %cst_43 = arith.constant 0.000000e+00 : f32
    %83 = vector.broadcast %cst_43 : f32 to vector<128x4xf32>
    %84 = arith.maximumf %82, %83 : vector<128x4xf32>
    %85 = vector.shape_cast %84 : vector<128x4xf32> to vector<8x16x4xf32>
    %c0_44 = arith.constant 0 : index
    %c0_45 = arith.constant 0 : index
    %c0_46 = arith.constant 0 : index
    %c0_47 = arith.constant 0 : index
    %86 = vector.load %arg8[%c0_44, %c0_45, %c0_46, %c0_47] : memref<1x8x16x4xf32, #tpu.memory_space<vmem>>, vector<1x8x16x4xf32>
    %87 = vector.shape_cast %86 : vector<1x8x16x4xf32> to vector<8x16x4xf32>
    %88 = vector.shape_cast %85 : vector<8x16x4xf32> to vector<1x8x16x4xf32>
    tpu.vector_store %arg8[%c0_44, %c0_45, %c0_46, %c0_47], %88 {strides = array<i32>} : memref<1x8x16x4xf32, #tpu.memory_space<vmem>>, vector<1x8x16x4xf32>,
    return
  }
  func.func @transform_0(%arg0: i32, %arg1: i32) -> (i32, i32, i32, i32) {
    %c0_i32 = arith.constant 0 : i32
    %c0_i32_0 = arith.constant 0 : i32
    %c0_i32_1 = arith.constant 0 : i32
    return %arg0, %arg1, %c0_i32, %c0_i32_0 : i32, i32, i32, i32
  }
  func.func @transform_1(%arg0: i32, %arg1: i32) -> (i32, i32, i32, i32) {
    %c8_i32 = arith.constant 8 : i32
    %0 = arith.muli %arg1, %c8_i32 : i32
    %c1_i32 = arith.constant 1 : i32
    %1 = arith.subi %0, %c1_i32 : i32
    %c0_i32 = arith.constant 0 : i32
    %2 = arith.maxsi %1, %c0_i32 : i32
    %c0_i32_0 = arith.constant 0 : i32
    %c0_i32_1 = arith.constant 0 : i32
    %c0_i32_2 = arith.constant 0 : i32
    return %arg0, %2, %c0_i32_0, %c0_i32_1 : i32, i32, i32, i32
  }
  func.func @transform_2(%arg0: i32, %arg1: i32) -> (i32, i32, i32, i32) {
    %c8_i32 = arith.constant 8 : i32
    %0 = arith.muli %arg1, %c8_i32 : i32
    %c8_i32_0 = arith.constant 8 : i32
    %1 = arith.addi %0, %c8_i32_0 : i32
    %c15_i32 = arith.constant 15 : i32
    %2 = arith.minsi %1, %c15_i32 : i32
    %c0_i32 = arith.constant 0 : i32
    %c0_i32_1 = arith.constant 0 : i32
    %c0_i32_2 = arith.constant 0 : i32
    return %arg0, %2, %c0_i32, %c0_i32_1 : i32, i32, i32, i32
  }
  func.func @transform_3(%arg0: i32, %arg1: i32) -> (i32, i32, i32) {
    %c0_i32 = arith.constant 0 : i32
    %c0_i32_0 = arith.constant 0 : i32
    %c0_i32_1 = arith.constant 0 : i32
    %c0_i32_2 = arith.constant 0 : i32
    return %c0_i32, %c0_i32_0, %c0_i32_1 : i32, i32, i32
  }
  func.func @transform_4(%arg0: i32, %arg1: i32) -> (i32, i32) {
    %c0_i32 = arith.constant 0 : i32
    %c0_i32_0 = arith.constant 0 : i32
    %c0_i32_1 = arith.constant 0 : i32
    return %c0_i32, %c0_i32_0 : i32, i32
  }
  func.func @transform_5(%arg0: i32, %arg1: i32) -> (i32, i32) {
    %c0_i32 = arith.constant 0 : i32
    %c0_i32_0 = arith.constant 0 : i32
    %c0_i32_1 = arith.constant 0 : i32
    return %c0_i32, %c0_i32_0 : i32, i32
  }
  func.func @transform_6(%arg0: i32, %arg1: i32) -> (i32, i32, i32, i32) {
    %c0_i32 = arith.constant 0 : i32
    %c0_i32_0 = arith.constant 0 : i32
    %c0_i32_1 = arith.constant 0 : i32
    return %arg0, %arg1, %c0_i32, %c0_i32_0 : i32, i32, i32, i32
  }
}

</mosaic_0001>

<llo_original>
// kernel: tile.9
$region0: #{tile.9}
  %s0 = inlined_call_operand.vmem [shape: f32[2,4], index: 0, kind: input, shape index: {}]
  %s1 = inlined_call_operand.vmem [shape: f32[1,8], index: 1, kind: output, shape index: {}]
  $region1: #{tile.9} parent=0
    #allocation0 [shape = 'u8[4096]{0}', space=vmem, size = 0x1000, scoped, tag = 'scoped mem for output reshape']
    #allocation1 [shape = 'u8[4096]{0}', space=vmem, size = 0x1000, scoped, tag = 'scoped mem for input reshape']
    %s3 = sshllo.u32 0, 2
    %v4 = vld [vmem:[%s0] sm:%s3]
    %5 = vst [vmem:[#allocation1] sm:%s3] %v4
    %v6 = vld [vmem:[#allocation1] sm:$0x1]
    %vm7 = vcmask 31744
    %8 = vst.msk [vmem:[#allocation0] sm:$0x1] %vm7, %v6
    %s9 = scalar_lea.vmem [#allocation1], 1
    %v10 = vld [vmem:[%s9] sm:$0x1]
    %11 = vrot.lane.b32.xlu0 %v10, 4
    %v12 = vpop.permute.xlu0 %11
    %vm13 = vcmask 64544
    %14 = vst.msk [vmem:[#allocation0] sm:$0x1] %vm13, %v12
    %s16 = sshllo.u32 0, 1
    %v18 = vld [vmem:[#allocation0] sm:%s16]
    %s19 = sshllo.u32 0, 1
    %20 = vst [vmem:[%s1] sm:%s19] %v18

// kernel: tile.8
$region0: #{tile.8}
  #allocation0 [shape = 's32[1]{0}', space=sflag, size = 0x4, scoped, tag = 'scoped memory for tile.8']
  %s0 = inlined_call_operand.vmem [shape: f32[4], index: 0, kind: input, shape index: {}]
  %s1 = inlined_call_operand.vmem [shape: f32[2,4], index: 1, kind: output, shape index: {}]
  // Predicated region
  $region2: #{tile.8} parent=0 // pred_check
    _
  $region3: #{tile.8} parent=0 // pred_check_branch
    %3 = sbr.rel (0) target = $region5
  $region4: #{tile.8} parent=0 // pred_region
    _
  $region5: #{tile.8} parent=0 // pred_fallthru
    _
  %v4 = vld [vmem:[%s0] ss:$0 sm:$0xff]
  %5 = vst [vmem:[%s1] sm:$0x3] %v4

// kernel: _lambda_.3
$region0: #{_lambda_.3}
  #allocation0 [shape = 'u32[]', space=smem, size = 0x4, offset = 0x4, fixed_abs, tag = 'smem constant byte address 0x4 - core index']
  #allocation1 [shape = 'u32[144,128]{1,0:T(1,128)}', space=vmem, size = 0x12000, scoped, tag = 'internal scratch']
  %s0 = inlined_call_operand.vmem [shape: bf16[2,8,8,4], index: 0, kind: input, shape index: {}]
  %s1 = inlined_call_operand.vmem [shape: bf16[2,4,8], index: 1, kind: input, shape index: {}]
  %s2 = inlined_call_operand.vmem [shape: f32[1,8], index: 2, kind: input, shape index: {}]
  %s3 = inlined_call_operand.vmem [shape: bf16[2,8,2,8,8], index: 3, kind: output, shape index: {}]
  %s4 = sld [smem:[#allocation0]]
  $region45: #{_lambda_.3} parent=0
    _
  %s6 = ssub.s32 1, %s4
  %s7 = scalar_select 0, %s6, %s4
  loop: start=0, step=1, limit=4
  $region2: #{_lambda_.3} parent=0 // loop_pre_header
    _
  $region3: #{_lambda_.3} parent=0 // loop_header
    %s9 = sphi 0, %s13
    %p10 = scmp.ge.s32.totalorder %s9, 4
    %s16 = sphi 0, %s28
    %s17 = sphi 0, %s24
    %s18 = sphi 0, %s16
    %s19 = sphi 0, %s17
    %s20 = sphi 0, %s18
    %s21 = sphi 0, %s19
    %s33 = sphi 0, %s35
    %s36 = sphi 0, %s33
    %s37 = sphi 0, %s36
    %s53 = sphi 0, %s37
    %s57 = sphi 0, %s57
    %s59 = sphi 0, %s57
    %s60 = sphi 0, %s59
    %s74 = sphi 0, %s60
    %s78 = sphi 0, %s78
    %s80 = sphi 0, %s78
    %s81 = sphi 0, %s80
    %s95 = sphi 0, %s81
    %s103 = sphi 0, %s105
    %s106 = sphi 0, %s103
    %s107 = sphi 0, %s106
    %s123 = sphi 0, %s107
  $region4: #{_lambda_.3} parent=0 // loop_header_branch
    %12 = sbr.rel (%p10) target = $region8
  $region5: #{_lambda_.3} parent=0 // loop_body
    %s14 = ssub.s32 %s9, 1
    %s15 = ssub.s32 %s9, 2
    %s22 = sadd.s32 1, %s17
    %p23 = scmp.ge.s32.totalorder %s22, 1
    %s24 = scalar_select %p23, 0, %s22
    %s25 = sadd.s32 1, %s16
    %s26 = scalar_select %p23, %s25, %s16
    %p27 = scmp.ge.s32.totalorder %s26, 2
    %s28 = scalar_select %p27, 0, %s26
    %s29 = ssub.s32 %s16, %s28
    %s30 = ssub.s32 %s17, %s24
    %s31 = sor.u32 %s29, %s30
    %p32 = scmp.eq.s32.totalorder %s31, 0
    %s34 = sadd.s32 %s33, 1
    %s35 = scalar_select %p32, %s33, %s34
    %p38 = pneg %p32
    %p39 = scmp.eq.s32.totalorder %s9, 1
    %p40 = por %p38, %p39
    %p41 = scmp.ne.s32.totalorder %s33, %s36
    %p42 = scmp.eq.s32.totalorder %s9, 0
    %p43 = por %p41, %p42
    %p44 = scmp.ne.s32.totalorder %s33, %s36
    %p45 = scmp.eq.s32.totalorder %s14, 1
    %p46 = por %p44, %p45
    %p47 = scmp.ne.s32.totalorder %s36, %s37
    %p48 = scmp.eq.s32.totalorder %s14, 0
    %p49 = por %p47, %p48
    %p50 = scmp.ne.s32.totalorder %s36, %s37
    %p51 = scmp.eq.s32.totalorder %s15, 1
    %p52 = por %p50, %p51
    %p54 = scmp.ne.s32.totalorder %s37, %s53
    %p55 = scmp.eq.s32.totalorder %s15, 0
    %p56 = por %p54, %p55
    %s58 = sadd.s32 %s57, 1
    %p61 = scmp.eq.s32.totalorder %s9, 1
    %p62 = scmp.ne.s32.totalorder %s57, %s59
    %p63 = scmp.eq.s32.totalorder %s9, 0
    %p64 = por %p62, %p63
    %p65 = scmp.ne.s32.totalorder %s57, %s59
    %p66 = scmp.eq.s32.totalorder %s14, 1
    %p67 = por %p65, %p66
    %p68 = scmp.ne.s32.totalorder %s59, %s60
    %p69 = scmp.eq.s32.totalorder %s14, 0
    %p70 = por %p68, %p69
    %p71 = scmp.ne.s32.totalorder %s59, %s60
    %p72 = scmp.eq.s32.totalorder %s15, 1
    %p73 = por %p71, %p72
    %p75 = scmp.ne.s32.totalorder %s60, %s74
    %p76 = scmp.eq.s32.totalorder %s15, 0
    %p77 = por %p75, %p76
    %s79 = sadd.s32 %s78, 1
    %p82 = scmp.eq.s32.totalorder %s9, 1
    %p83 = scmp.ne.s32.totalorder %s78, %s80
    %p84 = scmp.eq.s32.totalorder %s9, 0
    %p85 = por %p83, %p84
    %p86 = scmp.ne.s32.totalorder %s78, %s80
    %p87 = scmp.eq.s32.totalorder %s14, 1
    %p88 = por %p86, %p87
    %p89 = scmp.ne.s32.totalorder %s80, %s81
    %p90 = scmp.eq.s32.totalorder %s14, 0
    %p91 = por %p89, %p90
    %p92 = scmp.ne.s32.totalorder %s80, %s81
    %p93 = scmp.eq.s32.totalorder %s15, 1
    %p94 = por %p92, %p93
    %p96 = scmp.ne.s32.totalorder %s81, %s95
    %p97 = scmp.eq.s32.totalorder %s15, 0
    %p98 = por %p96, %p97
    %s99 = ssub.s32 %s16, %s28
    %s100 = ssub.s32 %s17, %s24
    %s101 = sor.u32 %s99, %s100
    %p102 = scmp.eq.s32.totalorder %s101, 0
    %s104 = sadd.s32 %s103, 1
    %s105 = scalar_select %p102, %s103, %s104
    %p108 = pneg %p102
    %p109 = scmp.eq.s32.totalorder %s9, 1
    %p110 = por %p108, %p109
    %p111 = scmp.ne.s32.totalorder %s103, %s106
    %p112 = scmp.eq.s32.totalorder %s9, 0
    %p113 = por %p111, %p112
    %p114 = scmp.ne.s32.totalorder %s103, %s106
    %p115 = scmp.eq.s32.totalorder %s14, 1
    %p116 = por %p114, %p115
    %p117 = scmp.ne.s32.totalorder %s106, %s107
    %p118 = scmp.eq.s32.totalorder %s14, 0
    %p119 = por %p117, %p118
    %p120 = scmp.ne.s32.totalorder %s106, %s107
    %p121 = scmp.eq.s32.totalorder %s15, 1
    %p122 = por %p120, %p121
    %p124 = scmp.ne.s32.totalorder %s107, %s123
    %p125 = scmp.eq.s32.totalorder %s15, 0
    %p126 = por %p124, %p125
    %p127 = scmp.le.s32.totalorder 1, %s9
    %p128 = scmp.lt.s32.totalorder %s9, 3
    %p129 = pnand %p127, %p128
    %p130 = pneg %p129
    // Predicated region
    $region9: #{_lambda_.3} parent=5 // pred_check
      _
    $region10: #{_lambda_.3} parent=5 // pred_check_branch
      %132 = sbr.rel (%p129) target = $region12
    $region11: #{_lambda_.3} parent=5 // pred_region
      %s133 = ssub.s32 %s9, 1
      // Predicated region
      $region13: #{_lambda_.3} parent=11 // pred_check
        %p134 = pneg %p70
      $region14: #{_lambda_.3} parent=11 // pred_check_branch
        %136 = sbr.rel (%p134) target = $region16
      $region15: #{_lambda_.3} parent=11 // pred_region
        _
      $region16: #{_lambda_.3} parent=11 // pred_fallthru
        _
      // Predicated region
      $region17: #{_lambda_.3} parent=11 // pred_check
        %p137 = pneg %p91
      $region18: #{_lambda_.3} parent=11 // pred_check_branch
        %139 = sbr.rel (%p137) target = $region20
      $region19: #{_lambda_.3} parent=11 // pred_region
        _
      $region20: #{_lambda_.3} parent=11 // pred_fallthru
        _
    $region12: #{_lambda_.3} parent=5 // pred_fallthru
      _
    %p140 = scmp.lt.s32.totalorder %s9, 2
    // Predicated region
    $region21: #{_lambda_.3} parent=5 // pred_check
      %p141 = pneg %p140
    $region22: #{_lambda_.3} parent=5 // pred_check_branch
      %143 = sbr.rel (%p141) target = $region24
    $region23: #{_lambda_.3} parent=5 // pred_region
      // Predicated region
      $region25: #{_lambda_.3} parent=23 // pred_check
        %p144 = pneg %p43
      $region26: #{_lambda_.3} parent=23 // pred_check_branch
        %146 = sbr.rel (%p144) target = $region28
      $region27: #{_lambda_.3} parent=23 // pred_region
        %s147 = smul.u32 8, %s17
        %p148 = scmp.lt.s32.totalorder %s16, 1
        %s149 = scalar_select %p148, %s16, 1
        %p150 = scmp.lt.s32.totalorder %s147, 7
        %s151 = scalar_select %p150, %s147, 7
        %s152 = smul.addr %s149, 8
        %s153 = sadd.s32 %s151, %s152
        %s154 = smul.addr %s153, 4
        %s155 = scalar_lea.vmem %s0, %s154
        %s156 = smul.u32 8, %s17
      $region28: #{_lambda_.3} parent=23 // pred_fallthru
        _
    $region24: #{_lambda_.3} parent=5 // pred_fallthru
      _
    %p157 = scmp.le.s32.totalorder 1, %s9
    %p158 = scmp.lt.s32.totalorder %s9, 3
    %p159 = pnand %p157, %p158
    %p160 = pneg %p159
    // Predicated region
    $region29: #{_lambda_.3} parent=5 // pred_check
      _
    $region30: #{_lambda_.3} parent=5 // pred_check_branch
      %162 = sbr.rel (%p159) target = $region32
    $region31: #{_lambda_.3} parent=5 // pred_region
      %s163 = ssub.s32 %s9, 1
      %s164 = smul.u32 8, %s19
      %p165 = scmp.lt.s32.totalorder %s18, 1
      %s166 = scalar_select %p165, %s18, 1
      %p167 = scmp.lt.s32.totalorder %s164, 7
      %s168 = scalar_select %p167, %s164, 7
      %s169 = smul.addr %s166, 8
      %s170 = sadd.s32 %s168, %s169
      %s171 = smul.addr %s170, 4
      %s172 = scalar_lea.vmem %s0, %s171
      %p173 = pneg %p49
      %p174 = pneg %p46
      %p175 = pneg %p70
      %p176 = pneg %p67
      %p177 = pneg %p91
      %p178 = pneg %p88
      %p179 = pneg %p119
      %p180 = pneg %p116
      %s181 = smul.u32 8, %s19
      %p182 = scmp.lt.s32.totalorder %s18, 1
      %s183 = scalar_select %p182, %s18, 1
      %p184 = scmp.lt.s32.totalorder %s181, 7
      %s185 = scalar_select %p184, %s181, 7
      %s186 = smul.addr %s185, 2
      %s187 = smul.addr %s183, 16
      %s188 = sadd.s32 %s186, %s187
      %s189 = smul.addr %s188, 4
      %s190 = scalar_lea.vmem %s3, %s189
      %s191 = smul.u32 8, %s19
      %p192 = scmp.lt.s32.totalorder %s18, 1
      %s193 = scalar_select %p192, %s18, 1
      %p194 = scmp.lt.s32.totalorder %s191, 7
      %s195 = scalar_select %p194, %s191, 7
      %s196 = smul.addr %s193, 8
      %s197 = sadd.s32 %s195, %s196
      %s198 = smul.addr %s197, 4
      %s199 = scalar_lea.vmem %s0, %s198
      %s200 = smul.u32 8, %s19
      %s201 = smul.u32 8, %s19
      %p202 = scmp.lt.s32.totalorder %s18, 1
      %s203 = scalar_select %p202, %s18, 1
      %p204 = scmp.lt.s32.totalorder %s201, 7
      %s205 = scalar_select %p204, %s201, 7
      %s206 = smul.addr %s205, 2
      %s207 = smul.addr %s203, 16
      %s208 = sadd.s32 %s206, %s207
      %s209 = smul.addr %s208, 4
      %s210 = scalar_lea.vmem %s3, %s209
      %s211 = smul.u32 8, %s19
      %v213 = vld [vmem:[%s199] sm:$0xf]
      %v214 = vld [vmem:[%s199 + $0x4] sm:$0xf]
      %v215 = vld [vmem:[%s199 + $0x8] sm:$0xf]
      %v216 = vld [vmem:[%s199 + $0xc] sm:$0xf]
      %v217 = vld [vmem:[%s199 + $0x10] sm:$0xf]
      %v218 = vld [vmem:[%s199 + $0x14] sm:$0xf]
      %v219 = vld [vmem:[%s199 + $0x18] sm:$0xf]
      %v220 = vld [vmem:[%s199 + $0x1c] sm:$0xf]
      %v221 = vld [vmem:[%s1] sm:$0x3]
      %v222 = vld [vmem:[%s2] sm:$0x1]
      %v224 = vlaneseq
      %v225 = vshrl.u32 %v224, 7
      %v226 = vsub.s32 0, %v225
      %v227 = vrot.slane %v222, %v226
      %v237 = vunpack.c.l.b16 %v213
      %v238 = vunpack.c.l.b16 %v214
      %v239 = vunpack.c.l.b16 %v215
      %v240 = vunpack.c.l.b16 %v216
      %v241 = vunpack.c.l.b16 %v217
      %v242 = vunpack.c.l.b16 %v218
      %v243 = vunpack.c.l.b16 %v219
      %v244 = vunpack.c.l.b16 %v220
      %v245 = vpack.c.b16 %v238, %v237
      %v246 = vpack.c.b16 %v240, %v239
      %v247 = vpack.c.b16 %v242, %v241
      %v248 = vpack.c.b16 %v244, %v243
      %vm249 = vcmask 31744
      %v251 = vsel %vm249, %v245, 0
      %v254 = vsel %vm249, %v246, 0
      %v257 = vsel %vm249, %v247, 0
      %v260 = vsel %vm249, %v248, 0
      %vm262 = vcmask 1041408
      %v264 = vsel %vm262, %v221, 0
      %266 = vmatprep.subr.bf16.mxu0 0
      %267 = vmatpush1.bf16.msra.mxu0 %v264
      %268 = vmatprep.subr.bf16.mxu0 0
      %269 = vmatpush1.bf16.msra.mxu0 0
      %270 = vmatprep.subr.bf16.mxu0 0
      %271 = vmatpush1.bf16.msra.mxu0 0
      %272 = vmatprep.subr.bf16.mxu0 0
      %273 = vmatpush1.bf16.msra.mxu0 0
      %274 = vmatprep.subr.bf16.mxu0 0
      %275 = vmatpush1.bf16.msra.mxu0 0
      %276 = vmatprep.subr.bf16.mxu0 0
      %277 = vmatpush1.bf16.msra.mxu0 0
      %278 = vmatprep.subr.bf16.mxu0 0
      %279 = vmatpush1.bf16.msra.mxu0 0
      %280 = vmatprep.subr.bf16.mxu0 0
      %281 = vmatpush1.bf16.msra.mxu0 0
      %282 = vmatprep.subr.bf16.mxu0 0
      %283 = vmatpush1.bf16.msra.mxu0 0
      %284 = vmatprep.subr.bf16.mxu0 0
      %285 = vmatpush1.bf16.msra.mxu0 0
      %286 = vmatprep.subr.bf16.mxu0 0
      %287 = vmatpush1.bf16.msra.mxu0 0
      %288 = vmatprep.subr.bf16.mxu0 0
      %289 = vmatpush1.bf16.msra.mxu0 0
      %290 = vmatprep.subr.bf16.mxu0 0
      %291 = vmatpush1.bf16.msra.mxu0 0
      %292 = vmatprep.subr.bf16.mxu0 0
      %293 = vmatpush1.bf16.msra.mxu0 0
      %294 = vmatprep.subr.bf16.mxu0 0
      %295 = vmatpush1.bf16.msra.mxu0 0
      %296 = vmatprep.subr.bf16.mxu0 0
      %297 = vmatpush1.bf16.msra.mxu0 0
      %298 = vmatprep.mubr.bf16.mxu0 0
      %299 = vmatmul.mubr.bf16.gmra.mrb[0].mxu0 %v251
      %v300 = vpop.f32.mrb[0].mxu0
      %v301 = vadd.f32 %v227, %v300
      %v302 = vpop.f32.mrb[0].mxu0
      %v303 = vpop.f32.mrb[0].mxu0
      %v304 = vadd.f32 %v227, %v303
      %v305 = vpop.f32.mrb[0].mxu0
      %306 = vmatprep.mubr.bf16.mxu0 0
      %307 = vmatmul.mubr.bf16.gmra.mrb[0].mxu0 %v254
      %v308 = vpop.f32.mrb[0].mxu0
      %v309 = vadd.f32 %v227, %v308
      %v310 = vpop.f32.mrb[0].mxu0
      %v311 = vpop.f32.mrb[0].mxu0
      %v312 = vadd.f32 %v227, %v311
      %v313 = vpop.f32.mrb[0].mxu0
      %314 = vmatprep.mubr.bf16.mxu0 0
      %315 = vmatmul.mubr.bf16.gmra.mrb[0].mxu0 %v257
      %v316 = vpop.f32.mrb[0].mxu0
      %v317 = vadd.f32 %v227, %v316
      %v318 = vpop.f32.mrb[0].mxu0
      %v319 = vpop.f32.mrb[0].mxu0
      %v320 = vadd.f32 %v227, %v319
      %v321 = vpop.f32.mrb[0].mxu0
      %322 = vmatprep.mubr.bf16.mxu0 0
      %323 = vmatmul.mubr.bf16.gmra.mrb[0].mxu0 %v260
      %v324 = vpop.f32.mrb[0].mxu0
      %v325 = vadd.f32 %v227, %v324
      %v326 = vpop.f32.mrb[0].mxu0
      %v327 = vpop.f32.mrb[0].mxu0
      %v328 = vadd.f32 %v227, %v327
      %v329 = vpop.f32.mrb[0].mxu0
      %330 = vdwg.mxu0
      %v331 = vpack.c.bf16 %v301, %v301
      %v332 = vpack.c.bf16 %v304, %v304
      %v333 = vpack.c.bf16 %v309, %v309
      %v334 = vpack.c.bf16 %v312, %v312
      %v335 = vpack.c.bf16 %v317, %v317
      %v336 = vpack.c.bf16 %v320, %v320
      %v337 = vpack.c.bf16 %v325, %v325
      %v338 = vpack.c.bf16 %v328, %v328
      %vm339 = vcmask 60416
      %340 = vst.msk [vmem:[%s210] sm:$0xf] %vm339, %v331
      %341 = vst.msk [vmem:[%s210 + $0x8] sm:$0xf] %vm339, %v332
      %342 = vst.msk [vmem:[%s210 + $0x10] sm:$0xf] %vm339, %v333
      %343 = vst.msk [vmem:[%s210 + $0x18] sm:$0xf] %vm339, %v334
      %344 = vst.msk [vmem:[%s210 + $0x20] sm:$0xf] %vm339, %v335
      %345 = vst.msk [vmem:[%s210 + $0x28] sm:$0xf] %vm339, %v336
      %346 = vst.msk [vmem:[%s210 + $0x30] sm:$0xf] %vm339, %v337
      %347 = vst.msk [vmem:[%s210 + $0x38] sm:$0xf] %vm339, %v338
      %s348 = scalar_lea.vmem %s1, 2
      %v349 = vld [vmem:[%s348] sm:$0x3]
      %v350 = vld [vmem:[%s2] sm:$0x1]
      %v352 = vlaneseq
      %v353 = vshrl.u32 %v352, 7
      %v354 = vsub.s32 0, %v353
      %v355 = vrot.slane %v350, %v354
      %v358 = vsel %vm262, %v349, 0
      %360 = vmatprep.subr.bf16.mxu0 0
      %361 = vmatpush1.bf16.msra.mxu0 %v358
      %362 = vmatprep.subr.bf16.mxu0 0
      %363 = vmatpush1.bf16.msra.mxu0 0
      %364 = vmatprep.subr.bf16.mxu0 0
      %365 = vmatpush1.bf16.msra.mxu0 0
      %366 = vmatprep.subr.bf16.mxu0 0
      %367 = vmatpush1.bf16.msra.mxu0 0
      %368 = vmatprep.subr.bf16.mxu0 0
      %369 = vmatpush1.bf16.msra.mxu0 0
      %370 = vmatprep.subr.bf16.mxu0 0
      %371 = vmatpush1.bf16.msra.mxu0 0
      %372 = vmatprep.subr.bf16.mxu0 0
      %373 = vmatpush1.bf16.msra.mxu0 0
      %374 = vmatprep.subr.bf16.mxu0 0
      %375 = vmatpush1.bf16.msra.mxu0 0
      %376 = vmatprep.subr.bf16.mxu0 0
      %377 = vmatpush1.bf16.msra.mxu0 0
      %378 = vmatprep.subr.bf16.mxu0 0
      %379 = vmatpush1.bf16.msra.mxu0 0
      %380 = vmatprep.subr.bf16.mxu0 0
      %381 = vmatpush1.bf16.msra.mxu0 0
      %382 = vmatprep.subr.bf16.mxu0 0
      %383 = vmatpush1.bf16.msra.mxu0 0
      %384 = vmatprep.subr.bf16.mxu0 0
      %385 = vmatpush1.bf16.msra.mxu0 0
      %386 = vmatprep.subr.bf16.mxu0 0
      %387 = vmatpush1.bf16.msra.mxu0 0
      %388 = vmatprep.subr.bf16.mxu0 0
      %389 = vmatpush1.bf16.msra.mxu0 0
      %390 = vmatprep.subr.bf16.mxu0 0
      %391 = vmatpush1.bf16.msra.mxu0 0
      %392 = vmatprep.mubr.bf16.mxu0 0
      %393 = vmatmul.mubr.bf16.gmra.mrb[0].mxu0 %v251
      %v394 = vpop.f32.mrb[0].mxu0
      %v395 = vadd.f32 %v355, %v394
      %v396 = vpop.f32.mrb[0].mxu0
      %v397 = vpop.f32.mrb[0].mxu0
      %v398 = vadd.f32 %v355, %v397
      %v399 = vpop.f32.mrb[0].mxu0
      %400 = vmatprep.mubr.bf16.mxu0 0
      %401 = vmatmul.mubr.bf16.gmra.mrb[0].mxu0 %v254
      %v402 = vpop.f32.mrb[0].mxu0
      %v403 = vadd.f32 %v355, %v402
      %v404 = vpop.f32.mrb[0].mxu0
      %v405 = vpop.f32.mrb[0].mxu0
      %v406 = vadd.f32 %v355, %v405
      %v407 = vpop.f32.mrb[0].mxu0
      %408 = vmatprep.mubr.bf16.mxu0 0
      %409 = vmatmul.mubr.bf16.gmra.mrb[0].mxu0 %v257
      %v410 = vpop.f32.mrb[0].mxu0
      %v411 = vadd.f32 %v355, %v410
      %v412 = vpop.f32.mrb[0].mxu0
      %v413 = vpop.f32.mrb[0].mxu0
      %v414 = vadd.f32 %v355, %v413
      %v415 = vpop.f32.mrb[0].mxu0
      %416 = vmatprep.mubr.bf16.mxu0 0
      %417 = vmatmul.mubr.bf16.gmra.mrb[0].mxu0 %v260
      %v418 = vpop.f32.mrb[0].mxu0
      %v419 = vadd.f32 %v355, %v418
      %v420 = vpop.f32.mrb[0].mxu0
      %v421 = vpop.f32.mrb[0].mxu0
      %v422 = vadd.f32 %v355, %v421
      %v423 = vpop.f32.mrb[0].mxu0
      %424 = vdwg.mxu0
      %v425 = vpack.c.bf16 %v395, %v395
      %v426 = vpack.c.bf16 %v398, %v398
      %v427 = vpack.c.bf16 %v403, %v403
      %v428 = vpack.c.bf16 %v406, %v406
      %v429 = vpack.c.bf16 %v411, %v411
      %v430 = vpack.c.bf16 %v414, %v414
      %v431 = vpack.c.bf16 %v419, %v419
      %v432 = vpack.c.bf16 %v422, %v422
      %s433 = scalar_lea.vmem %s210, 4
      %434 = vst.msk [vmem:[%s433] sm:$0xf] %vm339, %v425
      %435 = vst.msk [vmem:[%s433 + $0x8] sm:$0xf] %vm339, %v426
      %436 = vst.msk [vmem:[%s433 + $0x10] sm:$0xf] %vm339, %v427
      %437 = vst.msk [vmem:[%s433 + $0x18] sm:$0xf] %vm339, %v428
      %438 = vst.msk [vmem:[%s433 + $0x20] sm:$0xf] %vm339, %v429
      %439 = vst.msk [vmem:[%s433 + $0x28] sm:$0xf] %vm339, %v430
      %440 = vst.msk [vmem:[%s433 + $0x30] sm:$0xf] %vm339, %v431
      %441 = vst.msk [vmem:[%s433 + $0x38] sm:$0xf] %vm339, %v432
      %s442 = smul.u32 8, %s19
      %p443 = scmp.lt.s32.totalorder %s18, 1
      %s444 = scalar_select %p443, %s18, 1
      %p445 = scmp.lt.s32.totalorder %s442, 7
      %s446 = scalar_select %p445, %s442, 7
      %s447 = smul.addr %s446, 2
      %s448 = smul.addr %s444, 16
      %s449 = sadd.s32 %s447, %s448
      %s450 = smul.addr %s449, 4
      %s451 = scalar_lea.vmem %s3, %s450
      // Predicated region
      $region33: #{_lambda_.3} parent=31 // pred_check
        %p452 = pneg %p116
      $region34: #{_lambda_.3} parent=31 // pred_check_branch
        %454 = sbr.rel (%p452) target = $region36
      $region35: #{_lambda_.3} parent=31 // pred_region
        %s455 = smul.u32 8, %s19
      $region36: #{_lambda_.3} parent=31 // pred_fallthru
        _
    $region32: #{_lambda_.3} parent=5 // pred_fallthru
      _
    %p456 = scmp.le.s32.totalorder 2, %s9
    // Predicated region
    $region37: #{_lambda_.3} parent=5 // pred_check
      %p457 = pneg %p456
    $region38: #{_lambda_.3} parent=5 // pred_check_branch
      %459 = sbr.rel (%p457) target = $region40
    $region39: #{_lambda_.3} parent=5 // pred_region
      %s460 = ssub.s32 %s9, 2
      // Predicated region
      $region41: #{_lambda_.3} parent=39 // pred_check
        %p461 = pneg %p122
      $region42: #{_lambda_.3} parent=39 // pred_check_branch
        %463 = sbr.rel (%p461) target = $region44
      $region43: #{_lambda_.3} parent=39 // pred_region
        %s464 = smul.u32 8, %s21
        %p465 = scmp.lt.s32.totalorder %s20, 1
        %s466 = scalar_select %p465, %s20, 1
        %p467 = scmp.lt.s32.totalorder %s464, 7
        %s468 = scalar_select %p467, %s464, 7
        %s469 = smul.addr %s468, 2
        %s470 = smul.addr %s466, 16
        %s471 = sadd.s32 %s469, %s470
        %s472 = smul.addr %s471, 4
        %s473 = scalar_lea.vmem %s3, %s472
      $region44: #{_lambda_.3} parent=39 // pred_fallthru
        _
    $region40: #{_lambda_.3} parent=5 // pred_fallthru
      _
  $region6: #{_lambda_.3} parent=0 // loop_footer
    %s13 = sadd.s32 1, %s9
  $region7: #{_lambda_.3} parent=0 // loop_footer_branch
    %8 = sbr.rel target = $region3
  $region8: #{_lambda_.3} parent=0 // loop_exit
    _

// kernel: _lambda_.5
$region0: #{_lambda_.5}
  #allocation0 [shape = 'u32[]', space=smem, size = 0x4, offset = 0x4, fixed_abs, tag = 'smem constant byte address 0x4 - core index']
  #allocation1 [shape = 'u32[144,128]{1,0:T(1,128)}', space=vmem, size = 0x12000, scoped, tag = 'internal scratch']
  %s0 = inlined_call_operand.vmem [shape: bf16[2,16,18,4], index: 0, kind: input, shape index: {}, may-alias: {0,1,2}]
  %s1 = inlined_call_operand.vmem [shape: bf16[2,16,18,4], index: 1, kind: input, shape index: {}, may-alias: {0,1,2}]
  %s2 = inlined_call_operand.vmem [shape: bf16[2,16,18,4], index: 2, kind: input, shape index: {}, may-alias: {0,1,2}]
  %s3 = inlined_call_operand.vmem [shape: bf16[9,4,4], index: 3, kind: input, shape index: {}]
  %s4 = inlined_call_operand.vmem [shape: f32[1,4], index: 4, kind: input, shape index: {}]
  %s5 = inlined_call_operand.vmem [shape: f32[1,4], index: 5, kind: input, shape index: {}]
  %s6 = inlined_call_operand.vmem [shape: f32[2,16,16,4], index: 6, kind: output, shape index: {}]
  %s7 = sld [smem:[#allocation0]]
  $region57: #{_lambda_.5} parent=0
    _
  %s9 = ssub.s32 1, %s7
  %s10 = scalar_select 0, %s9, %s7
  loop: start=0, step=1, limit=6
  $region2: #{_lambda_.5} parent=0 // loop_pre_header
    _
  $region3: #{_lambda_.5} parent=0 // loop_header
    %s12 = sphi 0, %s16
    %p13 = scmp.ge.s32.totalorder %s12, 6
    %s19 = sphi 0, %s31
    %s20 = sphi 0, %s27
    %s21 = sphi 0, %s19
    %s22 = sphi 0, %s20
    %s23 = sphi 0, %s21
    %s24 = sphi 0, %s22
    %s36 = sphi 0, %s38
    %s39 = sphi 0, %s36
    %s40 = sphi 0, %s39
    %s56 = sphi 0, %s40
    %s72 = sphi 0, %s74
    %s75 = sphi 0, %s72
    %s76 = sphi 0, %s75
    %s92 = sphi 0, %s76
    %s108 = sphi 0, %s110
    %s111 = sphi 0, %s108
    %s112 = sphi 0, %s111
    %s128 = sphi 0, %s112
    %s132 = sphi 0, %s132
    %s134 = sphi 0, %s132
    %s135 = sphi 0, %s134
    %s149 = sphi 0, %s135
    %s153 = sphi 0, %s153
    %s155 = sphi 0, %s153
    %s156 = sphi 0, %s155
    %s170 = sphi 0, %s156
    %s174 = sphi 0, %s174
    %s176 = sphi 0, %s174
    %s177 = sphi 0, %s176
    %s191 = sphi 0, %s177
    %s199 = sphi 0, %s201
    %s202 = sphi 0, %s199
    %s203 = sphi 0, %s202
    %s219 = sphi 0, %s203
  $region4: #{_lambda_.5} parent=0 // loop_header_branch
    %15 = sbr.rel (%p13) target = $region8
  $region5: #{_lambda_.5} parent=0 // loop_body
    %s17 = ssub.s32 %s12, 1
    %s18 = ssub.s32 %s12, 2
    %s25 = sadd.s32 1, %s20
    %p26 = scmp.ge.s32.totalorder %s25, 2
    %s27 = scalar_select %p26, 0, %s25
    %s28 = sadd.s32 1, %s19
    %s29 = scalar_select %p26, %s28, %s19
    %p30 = scmp.ge.s32.totalorder %s29, 2
    %s31 = scalar_select %p30, 0, %s29
    %s32 = ssub.s32 %s19, %s31
    %s33 = ssub.s32 %s20, %s27
    %s34 = sor.u32 %s32, %s33
    %p35 = scmp.eq.s32.totalorder %s34, 0
    %s37 = sadd.s32 %s36, 1
    %s38 = scalar_select %p35, %s36, %s37
    %p41 = pneg %p35
    %p42 = scmp.eq.s32.totalorder %s12, 3
    %p43 = por %p41, %p42
    %p44 = scmp.ne.s32.totalorder %s36, %s39
    %p45 = scmp.eq.s32.totalorder %s12, 0
    %p46 = por %p44, %p45
    %p47 = scmp.ne.s32.totalorder %s36, %s39
    %p48 = scmp.eq.s32.totalorder %s17, 3
    %p49 = por %p47, %p48
    %p50 = scmp.ne.s32.totalorder %s39, %s40
    %p51 = scmp.eq.s32.totalorder %s17, 0
    %p52 = por %p50, %p51
    %p53 = scmp.ne.s32.totalorder %s39, %s40
    %p54 = scmp.eq.s32.totalorder %s18, 3
    %p55 = por %p53, %p54
    %p57 = scmp.ne.s32.totalorder %s40, %s56
    %p58 = scmp.eq.s32.totalorder %s18, 0
    %p59 = por %p57, %p58
    %s60 = smul.u32 %s20, 8
    %s61 = ssub.s32 %s60, 1
    %p62 = scmp.gt.s32.totalorder %s61, 0
    %s63 = scalar_select %p62, %s61, 0
    %s64 = smul.u32 %s27, 8
    %s65 = ssub.s32 %s64, 1
    %p66 = scmp.gt.s32.totalorder %s65, 0
    %s67 = scalar_select %p66, %s65, 0
    %s68 = ssub.s32 %s19, %s31
    %s69 = ssub.s32 %s63, %s67
    %s70 = sor.u32 %s68, %s69
    %p71 = scmp.eq.s32.totalorder %s70, 0
    %s73 = sadd.s32 %s72, 1
    %s74 = scalar_select %p71, %s72, %s73
    %p77 = pneg %p71
    %p78 = scmp.eq.s32.totalorder %s12, 3
    %p79 = por %p77, %p78
    %p80 = scmp.ne.s32.totalorder %s72, %s75
    %p81 = scmp.eq.s32.totalorder %s12, 0
    %p82 = por %p80, %p81
    %p83 = scmp.ne.s32.totalorder %s72, %s75
    %p84 = scmp.eq.s32.totalorder %s17, 3
    %p85 = por %p83, %p84
    %p86 = scmp.ne.s32.totalorder %s75, %s76
    %p87 = scmp.eq.s32.totalorder %s17, 0
    %p88 = por %p86, %p87
    %p89 = scmp.ne.s32.totalorder %s75, %s76
    %p90 = scmp.eq.s32.totalorder %s18, 3
    %p91 = por %p89, %p90
    %p93 = scmp.ne.s32.totalorder %s76, %s92
    %p94 = scmp.eq.s32.totalorder %s18, 0
    %p95 = por %p93, %p94
    %s96 = smul.u32 %s20, 8
    %s97 = sadd.s32 %s96, 8
    %p98 = scmp.lt.s32.totalorder %s97, 15
    %s99 = scalar_select %p98, %s97, 15
    %s100 = smul.u32 %s27, 8
    %s101 = sadd.s32 %s100, 8
    %p102 = scmp.lt.s32.totalorder %s101, 15
    %s103 = scalar_select %p102, %s101, 15
    %s104 = ssub.s32 %s19, %s31
    %s105 = ssub.s32 %s99, %s103
    %s106 = sor.u32 %s104, %s105
    %p107 = scmp.eq.s32.totalorder %s106, 0
    %s109 = sadd.s32 %s108, 1
    %s110 = scalar_select %p107, %s108, %s109
    %p113 = pneg %p107
    %p114 = scmp.eq.s32.totalorder %s12, 3
    %p115 = por %p113, %p114
    %p116 = scmp.ne.s32.totalorder %s108, %s111
    %p117 = scmp.eq.s32.totalorder %s12, 0
    %p118 = por %p116, %p117
    %p119 = scmp.ne.s32.totalorder %s108, %s111
    %p120 = scmp.eq.s32.totalorder %s17, 3
    %p121 = por %p119, %p120
    %p122 = scmp.ne.s32.totalorder %s111, %s112
    %p123 = scmp.eq.s32.totalorder %s17, 0
    %p124 = por %p122, %p123
    %p125 = scmp.ne.s32.totalorder %s111, %s112
    %p126 = scmp.eq.s32.totalorder %s18, 3
    %p127 = por %p125, %p126
    %p129 = scmp.ne.s32.totalorder %s112, %s128
    %p130 = scmp.eq.s32.totalorder %s18, 0
    %p131 = por %p129, %p130
    %s133 = sadd.s32 %s132, 1
    %p136 = scmp.eq.s32.totalorder %s12, 3
    %p137 = scmp.ne.s32.totalorder %s132, %s134
    %p138 = scmp.eq.s32.totalorder %s12, 0
    %p139 = por %p137, %p138
    %p140 = scmp.ne.s32.totalorder %s132, %s134
    %p141 = scmp.eq.s32.totalorder %s17, 3
    %p142 = por %p140, %p141
    %p143 = scmp.ne.s32.totalorder %s134, %s135
    %p144 = scmp.eq.s32.totalorder %s17, 0
    %p145 = por %p143, %p144
    %p146 = scmp.ne.s32.totalorder %s134, %s135
    %p147 = scmp.eq.s32.totalorder %s18, 3
    %p148 = por %p146, %p147
    %p150 = scmp.ne.s32.totalorder %s135, %s149
    %p151 = scmp.eq.s32.totalorder %s18, 0
    %p152 = por %p150, %p151
    %s154 = sadd.s32 %s153, 1
    %p157 = scmp.eq.s32.totalorder %s12, 3
    %p158 = scmp.ne.s32.totalorder %s153, %s155
    %p159 = scmp.eq.s32.totalorder %s12, 0
    %p160 = por %p158, %p159
    %p161 = scmp.ne.s32.totalorder %s153, %s155
    %p162 = scmp.eq.s32.totalorder %s17, 3
    %p163 = por %p161, %p162
    %p164 = scmp.ne.s32.totalorder %s155, %s156
    %p165 = scmp.eq.s32.totalorder %s17, 0
    %p166 = por %p164, %p165
    %p167 = scmp.ne.s32.totalorder %s155, %s156
    %p168 = scmp.eq.s32.totalorder %s18, 3
    %p169 = por %p167, %p168
    %p171 = scmp.ne.s32.totalorder %s156, %s170
    %p172 = scmp.eq.s32.totalorder %s18, 0
    %p173 = por %p171, %p172
    %s175 = sadd.s32 %s174, 1
    %p178 = scmp.eq.s32.totalorder %s12, 3
    %p179 = scmp.ne.s32.totalorder %s174, %s176
    %p180 = scmp.eq.s32.totalorder %s12, 0
    %p181 = por %p179, %p180
    %p182 = scmp.ne.s32.totalorder %s174, %s176
    %p183 = scmp.eq.s32.totalorder %s17, 3
    %p184 = por %p182, %p183
    %p185 = scmp.ne.s32.totalorder %s176, %s177
    %p186 = scmp.eq.s32.totalorder %s17, 0
    %p187 = por %p185, %p186
    %p188 = scmp.ne.s32.totalorder %s176, %s177
    %p189 = scmp.eq.s32.totalorder %s18, 3
    %p190 = por %p188, %p189
    %p192 = scmp.ne.s32.totalorder %s177, %s191
    %p193 = scmp.eq.s32.totalorder %s18, 0
    %p194 = por %p192, %p193
    %s195 = ssub.s32 %s19, %s31
    %s196 = ssub.s32 %s20, %s27
    %s197 = sor.u32 %s195, %s196
    %p198 = scmp.eq.s32.totalorder %s197, 0
    %s200 = sadd.s32 %s199, 1
    %s201 = scalar_select %p198, %s199, %s200
    %p204 = pneg %p198
    %p205 = scmp.eq.s32.totalorder %s12, 3
    %p206 = por %p204, %p205
    %p207 = scmp.ne.s32.totalorder %s199, %s202
    %p208 = scmp.eq.s32.totalorder %s12, 0
    %p209 = por %p207, %p208
    %p210 = scmp.ne.s32.totalorder %s199, %s202
    %p211 = scmp.eq.s32.totalorder %s17, 3
    %p212 = por %p210, %p211
    %p213 = scmp.ne.s32.totalorder %s202, %s203
    %p214 = scmp.eq.s32.totalorder %s17, 0
    %p215 = por %p213, %p214
    %p216 = scmp.ne.s32.totalorder %s202, %s203
    %p217 = scmp.eq.s32.totalorder %s18, 3
    %p218 = por %p216, %p217
    %p220 = scmp.ne.s32.totalorder %s203, %s219
    %p221 = scmp.eq.s32.totalorder %s18, 0
    %p222 = por %p220, %p221
    %p223 = scmp.le.s32.totalorder 1, %s12
    %p224 = scmp.lt.s32.totalorder %s12, 5
    %p225 = pnand %p223, %p224
    %p226 = pneg %p225
    // Predicated region
    $region9: #{_lambda_.5} parent=5 // pred_check
      _
    $region10: #{_lambda_.5} parent=5 // pred_check_branch
      %228 = sbr.rel (%p225) target = $region12
    $region11: #{_lambda_.5} parent=5 // pred_region
      %s229 = ssub.s32 %s12, 1
      // Predicated region
      $region13: #{_lambda_.5} parent=11 // pred_check
        %p230 = pneg %p145
      $region14: #{_lambda_.5} parent=11 // pred_check_branch
        %232 = sbr.rel (%p230) target = $region16
      $region15: #{_lambda_.5} parent=11 // pred_region
        _
      $region16: #{_lambda_.5} parent=11 // pred_fallthru
        _
      // Predicated region
      $region17: #{_lambda_.5} parent=11 // pred_check
        %p233 = pneg %p166
      $region18: #{_lambda_.5} parent=11 // pred_check_branch
        %235 = sbr.rel (%p233) target = $region20
      $region19: #{_lambda_.5} parent=11 // pred_region
        _
      $region20: #{_lambda_.5} parent=11 // pred_fallthru
        _
      // Predicated region
      $region21: #{_lambda_.5} parent=11 // pred_check
        %p236 = pneg %p187
      $region22: #{_lambda_.5} parent=11 // pred_check_branch
        %238 = sbr.rel (%p236) target = $region24
      $region23: #{_lambda_.5} parent=11 // pred_region
        _
      $region24: #{_lambda_.5} parent=11 // pred_fallthru
        _
    $region12: #{_lambda_.5} parent=5 // pred_fallthru
      _
    %p239 = scmp.lt.s32.totalorder %s12, 4
    // Predicated region
    $region25: #{_lambda_.5} parent=5 // pred_check
      %p240 = pneg %p239
    $region26: #{_lambda_.5} parent=5 // pred_check_branch
      %242 = sbr.rel (%p240) target = $region28
    $region27: #{_lambda_.5} parent=5 // pred_region
      // Predicated region
      $region29: #{_lambda_.5} parent=27 // pred_check
        %p243 = pneg %p46
      $region30: #{_lambda_.5} parent=27 // pred_check_branch
        %245 = sbr.rel (%p243) target = $region32
      $region31: #{_lambda_.5} parent=27 // pred_region
        %s246 = smul.u32 8, %s20
        %p247 = scmp.lt.s32.totalorder %s19, 1
        %s248 = scalar_select %p247, %s19, 1
        %p249 = scmp.lt.s32.totalorder %s246, 15
        %s250 = scalar_select %p249, %s246, 15
        %s251 = smul.addr %s250, 3
        %s252 = smul.addr %s248, 48
        %s253 = sadd.s32 %s251, %s252
        %s254 = smul.addr %s253, 4
        %s255 = scalar_lea.vmem %s0, %s254
        %s256 = smul.u32 8, %s20
      $region32: #{_lambda_.5} parent=27 // pred_fallthru
        _
      // Predicated region
      $region33: #{_lambda_.5} parent=27 // pred_check
        %p257 = pneg %p82
      $region34: #{_lambda_.5} parent=27 // pred_check_branch
        %259 = sbr.rel (%p257) target = $region36
      $region35: #{_lambda_.5} parent=27 // pred_region
        %s260 = smul.u32 %s20, 8
        %s261 = ssub.s32 %s260, 1
        %p262 = scmp.gt.s32.totalorder %s261, 0
        %s263 = scalar_select %p262, %s261, 0
        %p264 = scmp.lt.s32.totalorder %s19, 1
        %s265 = scalar_select %p264, %s19, 1
        %p266 = scmp.lt.s32.totalorder %s263, 15
        %s267 = scalar_select %p266, %s263, 15
        %s268 = smul.addr %s267, 3
        %s269 = smul.addr %s265, 48
        %s270 = sadd.s32 %s268, %s269
        %s271 = smul.addr %s270, 4
        %s272 = scalar_lea.vmem %s1, %s271
        %s273 = smul.u32 %s20, 8
        %s274 = ssub.s32 %s273, 1
        %p275 = scmp.gt.s32.totalorder %s274, 0
        %s276 = scalar_select %p275, %s274, 0
      $region36: #{_lambda_.5} parent=27 // pred_fallthru
        _
      // Predicated region
      $region37: #{_lambda_.5} parent=27 // pred_check
        %p277 = pneg %p118
      $region38: #{_lambda_.5} parent=27 // pred_check_branch
        %279 = sbr.rel (%p277) target = $region40
      $region39: #{_lambda_.5} parent=27 // pred_region
        %s280 = smul.u32 %s20, 8
        %s281 = sadd.s32 %s280, 8
        %p282 = scmp.lt.s32.totalorder %s281, 15
        %s283 = scalar_select %p282, %s281, 15
        %p284 = scmp.lt.s32.totalorder %s19, 1
        %s285 = scalar_select %p284, %s19, 1
        %p286 = scmp.lt.s32.totalorder %s283, 15
        %s287 = scalar_select %p286, %s283, 15
        %s288 = smul.addr %s287, 3
        %s289 = smul.addr %s285, 48
        %s290 = sadd.s32 %s288, %s289
        %s291 = smul.addr %s290, 4
        %s292 = scalar_lea.vmem %s2, %s291
        %s293 = smul.u32 %s20, 8
        %s294 = sadd.s32 %s293, 8
        %p295 = scmp.lt.s32.totalorder %s294, 15
        %s296 = scalar_select %p295, %s294, 15
      $region40: #{_lambda_.5} parent=27 // pred_fallthru
        _
    $region28: #{_lambda_.5} parent=5 // pred_fallthru
      _
    %p297 = scmp.le.s32.totalorder 1, %s12
    %p298 = scmp.lt.s32.totalorder %s12, 5
    %p299 = pnand %p297, %p298
    %p300 = pneg %p299
    // Predicated region
    $region41: #{_lambda_.5} parent=5 // pred_check
      _
    $region42: #{_lambda_.5} parent=5 // pred_check_branch
      %302 = sbr.rel (%p299) target = $region44
    $region43: #{_lambda_.5} parent=5 // pred_region
      %s303 = ssub.s32 %s12, 1
      %s304 = smul.u32 8, %s22
      %p305 = scmp.lt.s32.totalorder %s21, 1
      %s306 = scalar_select %p305, %s21, 1
      %p307 = scmp.lt.s32.totalorder %s304, 15
      %s308 = scalar_select %p307, %s304, 15
      %s309 = smul.addr %s308, 3
      %s310 = smul.addr %s306, 48
      %s311 = sadd.s32 %s309, %s310
      %s312 = smul.addr %s311, 4
      %s313 = scalar_lea.vmem %s0, %s312
      %p314 = pneg %p52
      %p315 = pneg %p49
      %s316 = smul.u32 %s22, 8
      %s317 = ssub.s32 %s316, 1
      %p318 = scmp.gt.s32.totalorder %s317, 0
      %s319 = scalar_select %p318, %s317, 0
      %p320 = scmp.lt.s32.totalorder %s21, 1
      %s321 = scalar_select %p320, %s21, 1
      %p322 = scmp.lt.s32.totalorder %s319, 15
      %s323 = scalar_select %p322, %s319, 15
      %s324 = smul.addr %s323, 3
      %s325 = smul.addr %s321, 48
      %s326 = sadd.s32 %s324, %s325
      %s327 = smul.addr %s326, 4
      %s328 = scalar_lea.vmem %s1, %s327
      %p329 = pneg %p88
      %p330 = pneg %p85
      %s331 = smul.u32 %s22, 8
      %s332 = sadd.s32 %s331, 8
      %p333 = scmp.lt.s32.totalorder %s332, 15
      %s334 = scalar_select %p333, %s332, 15
      %p335 = scmp.lt.s32.totalorder %s21, 1
      %s336 = scalar_select %p335, %s21, 1
      %p337 = scmp.lt.s32.totalorder %s334, 15
      %s338 = scalar_select %p337, %s334, 15
      %s339 = smul.addr %s338, 3
      %s340 = smul.addr %s336, 48
      %s341 = sadd.s32 %s339, %s340
      %s342 = smul.addr %s341, 4
      %s343 = scalar_lea.vmem %s2, %s342
      %p344 = pneg %p124
      %p345 = pneg %p121
      %p346 = pneg %p145
      %p347 = pneg %p142
      %p348 = pneg %p166
      %p349 = pneg %p163
      %p350 = pneg %p187
      %p351 = pneg %p184
      %p352 = pneg %p215
      %p353 = pneg %p212
      %s354 = smul.u32 8, %s22
      %p355 = scmp.lt.s32.totalorder %s21, 1
      %s356 = scalar_select %p355, %s21, 1
      %p357 = scmp.lt.s32.totalorder %s354, 15
      %s358 = scalar_select %p357, %s354, 15
      %s359 = smul.addr %s358, 2
      %s360 = smul.addr %s356, 32
      %s361 = sadd.s32 %s359, %s360
      %s362 = smul.addr %s361, 8
      %s363 = scalar_lea.vmem %s6, %s362
      %s364 = smul.u32 8, %s22
      %p365 = scmp.lt.s32.totalorder %s21, 1
      %s366 = scalar_select %p365, %s21, 1
      %p367 = scmp.lt.s32.totalorder %s364, 15
      %s368 = scalar_select %p367, %s364, 15
      %s369 = smul.addr %s368, 3
      %s370 = smul.addr %s366, 48
      %s371 = sadd.s32 %s369, %s370
      %s372 = smul.addr %s371, 4
      %s373 = scalar_lea.vmem %s0, %s372
      %s374 = smul.u32 8, %s22
      %s375 = smul.u32 %s22, 8
      %s376 = ssub.s32 %s375, 1
      %p377 = scmp.gt.s32.totalorder %s376, 0
      %s378 = scalar_select %p377, %s376, 0
      %p379 = scmp.lt.s32.totalorder %s21, 1
      %s380 = scalar_select %p379, %s21, 1
      %p381 = scmp.lt.s32.totalorder %s378, 15
      %s382 = scalar_select %p381, %s378, 15
      %s383 = smul.addr %s382, 3
      %s384 = smul.addr %s380, 48
      %s385 = sadd.s32 %s383, %s384
      %s386 = smul.addr %s385, 4
      %s387 = scalar_lea.vmem %s1, %s386
      %s388 = smul.u32 %s22, 8
      %s389 = ssub.s32 %s388, 1
      %p390 = scmp.gt.s32.totalorder %s389, 0
      %s391 = scalar_select %p390, %s389, 0
      %s392 = smul.u32 %s22, 8
      %s393 = sadd.s32 %s392, 8
      %p394 = scmp.lt.s32.totalorder %s393, 15
      %s395 = scalar_select %p394, %s393, 15
      %p396 = scmp.lt.s32.totalorder %s21, 1
      %s397 = scalar_select %p396, %s21, 1
      %p398 = scmp.lt.s32.totalorder %s395, 15
      %s399 = scalar_select %p398, %s395, 15
      %s400 = smul.addr %s399, 3
      %s401 = smul.addr %s397, 48
      %s402 = sadd.s32 %s400, %s401
      %s403 = smul.addr %s402, 4
      %s404 = scalar_lea.vmem %s2, %s403
      %s405 = smul.u32 %s22, 8
      %s406 = sadd.s32 %s405, 8
      %p407 = scmp.lt.s32.totalorder %s406, 15
      %s408 = scalar_select %p407, %s406, 15
      %s409 = smul.u32 8, %s22
      %p410 = scmp.lt.s32.totalorder %s21, 1
      %s411 = scalar_select %p410, %s21, 1
      %p412 = scmp.lt.s32.totalorder %s409, 15
      %s413 = scalar_select %p412, %s409, 15
      %s414 = smul.addr %s413, 2
      %s415 = smul.addr %s411, 32
      %s416 = sadd.s32 %s414, %s415
      %s417 = smul.addr %s416, 8
      %s418 = scalar_lea.vmem %s6, %s417
      %s419 = smul.u32 8, %s22
      %p421 = scmp.gt.s32.totalorder %s22, 0
      %s422 = scalar_select %p421, 1, 0
      %s423 = scvt.s32.f32 %s422
      %p425 = scmp.ne.f32.partialorder %s423, %s423
      %s426 = sshrl.u32 %s423, 16
      %s427 = sand.u32 %s426, 1
      %s428 = sadd.s32 32767, %s427
      %s429 = sadd.s32 %s423, %s428
      %s430 = sand.u32 %s429, 4294901760
      %s431 = scalar_select %p425, 2143289344, %s430
      %s433 = sshrl.u32 %s431, 16
      %p434 = scmp.lt.s32.totalorder %s22, 1
      %s435 = scalar_select %p434, 1, 0
      %s436 = scvt.s32.f32 %s435
      %p438 = scmp.ne.f32.partialorder %s436, %s436
      %s439 = sshrl.u32 %s436, 16
      %s440 = sand.u32 %s439, 1
      %s441 = sadd.s32 32767, %s440
      %s442 = sadd.s32 %s436, %s441
      %s443 = sand.u32 %s442, 4294901760
      %s444 = scalar_select %p438, 2143289344, %s443
      %s446 = sshrl.u32 %s444, 16
      %v447 = vld [vmem:[%s373] sm:$0xf]
      %v448 = vld [vmem:[%s373 + $0x4] sm:$0xf]
      %v449 = vld [vmem:[%s373 + $0x8] sm:$0x1]
      %v450 = vld [vmem:[%s373 + $0xc] sm:$0xf]
      %v451 = vld [vmem:[%s373 + $0x10] sm:$0xf]
      %v452 = vld [vmem:[%s373 + $0x14] sm:$0x1]
      %v453 = vld [vmem:[%s373 + $0x18] sm:$0xf]
      %v454 = vld [vmem:[%s373 + $0x1c] sm:$0xf]
      %v455 = vld [vmem:[%s373 + $0x20] sm:$0x1]
      %v456 = vld [vmem:[%s373 + $0x24] sm:$0xf]
      %v457 = vld [vmem:[%s373 + $0x28] sm:$0xf]
      %v458 = vld [vmem:[%s373 + $0x2c] sm:$0x1]
      %v459 = vld [vmem:[%s373 + $0x30] sm:$0xf]
      %v460 = vld [vmem:[%s373 + $0x34] sm:$0xf]
      %v461 = vld [vmem:[%s373 + $0x38] sm:$0x1]
      %v462 = vld [vmem:[%s373 + $0x3c] sm:$0xf]
      %v463 = vld [vmem:[%s373 + $0x40] sm:$0xf]
      %v464 = vld [vmem:[%s373 + $0x44] sm:$0x1]
      %v465 = vld [vmem:[%s373 + $0x48] sm:$0xf]
      %v466 = vld [vmem:[%s373 + $0x4c] sm:$0xf]
      %v467 = vld [vmem:[%s373 + $0x50] sm:$0x1]
      %v468 = vld [vmem:[%s373 + $0x54] sm:$0xf]
      %v469 = vld [vmem:[%s373 + $0x58] sm:$0xf]
      %v470 = vld [vmem:[%s373 + $0x5c] sm:$0x1]
      %v471 = vld [vmem:[%s387] sm:$0xf]
      %v472 = vld [vmem:[%s387 + $0x4] sm:$0xf]
      %v473 = vld [vmem:[%s387 + $0x8] sm:$0x1]
      %s474 = sshll.u32 %s433, 16
      %s475 = sor.u32 %s433, %s474
      %v476 = vstv %s475
      %v478 = vmul.bf16 %v471, %v476
      %v479 = vmul.bf16 %v472, %v476
      %v480 = vmul.bf16 %v473, %v476
      %v481 = vld [vmem:[%s404] sm:$0xf]
      %v482 = vld [vmem:[%s404 + $0x4] sm:$0xf]
      %v483 = vld [vmem:[%s404 + $0x8] sm:$0x1]
      %s484 = sshll.u32 %s446, 16
      %s485 = sor.u32 %s446, %s484
      %v486 = vstv %s485
      %v488 = vmul.bf16 %v481, %v486
      %v489 = vmul.bf16 %v482, %v486
      %v490 = vmul.bf16 %v483, %v486
      %v491 = vld [vmem:[%s3] sm:$0x3]
      %vm492 = vsmask.f32 3328
      %vm493 = vsmask.f32 7440
      %vm494 = vmor %vm492, %vm493
      %v496 = vshrl.u32 %v478, 16
      %v498 = vrot.slane %v496, 4
      %v499 = vshll.u32 %v478, 16
      %v501 = vrot.slane %v499, 5
      %v502 = vor.u32 %v498, %v501
      %v503 = vrot.slane %v502, 4
      %v505 = vshll.u32 %v479, 16
      %v507 = vrot.slane %v505, 5
      %v508 = vsel %vm494, %v503, %v507
      %v509 = vshrl.u32 %v479, 16
      %v511 = vrot.slane %v509, 4
      %v512 = vor.u32 %v511, %v507
      %v513 = vrot.slane %v512, 4
      %v515 = vshll.u32 %v480, 16
      %v517 = vrot.slane %v515, 5
      %v518 = vsel %vm494, %v513, %v517
      %v520 = vshrl.u32 %v447, 16
      %v522 = vrot.slane %v520, 4
      %v523 = vshll.u32 %v447, 16
      %v525 = vrot.slane %v523, 5
      %v526 = vor.u32 %v522, %v525
      %v527 = vrot.slane %v526, 4
      %v529 = vshll.u32 %v448, 16
      %v531 = vrot.slane %v529, 5
      %v532 = vsel %vm494, %v527, %v531
      %v533 = vshrl.u32 %v448, 16
      %v535 = vrot.slane %v533, 4
      %v536 = vor.u32 %v535, %v531
      %v537 = vrot.slane %v536, 4
      %v539 = vshll.u32 %v449, 16
      %v541 = vrot.slane %v539, 5
      %v542 = vsel %vm494, %v537, %v541
      %v544 = vshrl.u32 %v450, 16
      %v546 = vrot.slane %v544, 4
      %v547 = vshll.u32 %v450, 16
      %v549 = vrot.slane %v547, 5
      %v550 = vor.u32 %v546, %v549
      %v551 = vrot.slane %v550, 4
      %v553 = vshll.u32 %v451, 16
      %v555 = vrot.slane %v553, 5
      %v556 = vsel %vm494, %v551, %v555
      %v557 = vshrl.u32 %v451, 16
      %v559 = vrot.slane %v557, 4
      %v560 = vor.u32 %v559, %v555
      %v561 = vrot.slane %v560, 4
      %v563 = vshll.u32 %v452, 16
      %v565 = vrot.slane %v563, 5
      %v566 = vsel %vm494, %v561, %v565
      %v568 = vshrl.u32 %v453, 16
      %v570 = vrot.slane %v568, 4
      %v571 = vshll.u32 %v453, 16
      %v573 = vrot.slane %v571, 5
      %v574 = vor.u32 %v570, %v573
      %v575 = vrot.slane %v574, 4
      %v577 = vshll.u32 %v454, 16
      %v579 = vrot.slane %v577, 5
      %v580 = vsel %vm494, %v575, %v579
      %v581 = vshrl.u32 %v454, 16
      %v583 = vrot.slane %v581, 4
      %v584 = vor.u32 %v583, %v579
      %v585 = vrot.slane %v584, 4
      %v587 = vshll.u32 %v455, 16
      %v589 = vrot.slane %v587, 5
      %v590 = vsel %vm494, %v585, %v589
      %v592 = vshrl.u32 %v456, 16
      %v594 = vrot.slane %v592, 4
      %v595 = vshll.u32 %v456, 16
      %v597 = vrot.slane %v595, 5
      %v598 = vor.u32 %v594, %v597
      %v599 = vrot.slane %v598, 4
      %v601 = vshll.u32 %v457, 16
      %v603 = vrot.slane %v601, 5
      %v604 = vsel %vm494, %v599, %v603
      %v605 = vshrl.u32 %v457, 16
      %v607 = vrot.slane %v605, 4
      %v608 = vor.u32 %v607, %v603
      %v609 = vrot.slane %v608, 4
      %v611 = vshll.u32 %v458, 16
      %v613 = vrot.slane %v611, 5
      %v614 = vsel %vm494, %v609, %v613
      %v616 = vshrl.u32 %v459, 16
      %v618 = vrot.slane %v616, 4
      %v619 = vshll.u32 %v459, 16
      %v621 = vrot.slane %v619, 5
      %v622 = vor.u32 %v618, %v621
      %v623 = vrot.slane %v622, 4
      %v625 = vshll.u32 %v460, 16
      %v627 = vrot.slane %v625, 5
      %v628 = vsel %vm494, %v623, %v627
      %v629 = vshrl.u32 %v460, 16
      %v631 = vrot.slane %v629, 4
      %v632 = vor.u32 %v631, %v627
      %v633 = vrot.slane %v632, 4
      %v635 = vshll.u32 %v461, 16
      %v637 = vrot.slane %v635, 5
      %v638 = vsel %vm494, %v633, %v637
      %v640 = vshrl.u32 %v462, 16
      %v642 = vrot.slane %v640, 4
      %v643 = vshll.u32 %v462, 16
      %v645 = vrot.slane %v643, 5
      %v646 = vor.u32 %v642, %v645
      %v647 = vrot.slane %v646, 4
      %v649 = vshll.u32 %v463, 16
      %v651 = vrot.slane %v649, 5
      %v652 = vsel %vm494, %v647, %v651
      %v653 = vshrl.u32 %v463, 16
      %v655 = vrot.slane %v653, 4
      %v656 = vor.u32 %v655, %v651
      %v657 = vrot.slane %v656, 4
      %v659 = vshll.u32 %v464, 16
      %v661 = vrot.slane %v659, 5
      %v662 = vsel %vm494, %v657, %v661
      %v664 = vshrl.u32 %v465, 16
      %v666 = vrot.slane %v664, 4
      %v667 = vshll.u32 %v465, 16
      %v669 = vrot.slane %v667, 5
      %v670 = vor.u32 %v666, %v669
      %v671 = vrot.slane %v670, 4
      %v673 = vshll.u32 %v466, 16
      %v675 = vrot.slane %v673, 5
      %v676 = vsel %vm494, %v671, %v675
      %v677 = vshrl.u32 %v466, 16
      %v679 = vrot.slane %v677, 4
      %v680 = vor.u32 %v679, %v675
      %v681 = vrot.slane %v680, 4
      %v683 = vshll.u32 %v467, 16
      %v685 = vrot.slane %v683, 5
      %v686 = vsel %vm494, %v681, %v685
      %s687 = scalar_lea.vmem %s3, 2
      %v688 = vld [vmem:[%s687] sm:$0x3]
      %v689 = vunpack.c.l.b16 %v508
      %v690 = vunpack.c.l.b16 %v518
      %v691 = vunpack.c.l.b16 %v532
      %v692 = vunpack.c.l.b16 %v542
      %v693 = vunpack.c.l.b16 %v556
      %v694 = vunpack.c.l.b16 %v566
      %v695 = vunpack.c.l.b16 %v580
      %v696 = vunpack.c.l.b16 %v590
      %v697 = vunpack.c.l.b16 %v604
      %v698 = vunpack.c.l.b16 %v614
      %v699 = vunpack.c.l.b16 %v628
      %v700 = vunpack.c.l.b16 %v638
      %v701 = vunpack.c.l.b16 %v652
      %v702 = vunpack.c.l.b16 %v662
      %v703 = vunpack.c.l.b16 %v676
      %v704 = vunpack.c.l.b16 %v686
      %v705 = vpack.c.b16 %v690, %v689
      %v706 = vpack.c.b16 %v692, %v691
      %v707 = vpack.c.b16 %v694, %v693
      %v708 = vpack.c.b16 %v696, %v695
      %v709 = vpack.c.b16 %v698, %v697
      %v710 = vpack.c.b16 %v700, %v699
      %v711 = vpack.c.b16 %v702, %v701
      %v712 = vpack.c.b16 %v704, %v703
      %vm713 = vcmask 31744
      %v715 = vsel %vm713, %v705, 0
      %v718 = vsel %vm713, %v706, 0
      %v721 = vsel %vm713, %v707, 0
      %v724 = vsel %vm713, %v708, 0
      %v727 = vsel %vm713, %v709, 0
      %v730 = vsel %vm713, %v710, 0
      %v733 = vsel %vm713, %v711, 0
      %v736 = vsel %vm713, %v712, 0
      %vm738 = vcmask 1041408
      %v740 = vsel %vm738, %v688, 0
      %742 = vmatprep.subr.bf16.mxu0 0
      %743 = vmatpush1.bf16.msra.mxu0 %v740
      %744 = vmatprep.subr.bf16.mxu0 0
      %745 = vmatpush1.bf16.msra.mxu0 0
      %746 = vmatprep.subr.bf16.mxu0 0
      %747 = vmatpush1.bf16.msra.mxu0 0
      %748 = vmatprep.subr.bf16.mxu0 0
      %749 = vmatpush1.bf16.msra.mxu0 0
      %750 = vmatprep.subr.bf16.mxu0 0
      %751 = vmatpush1.bf16.msra.mxu0 0
      %752 = vmatprep.subr.bf16.mxu0 0
      %753 = vmatpush1.bf16.msra.mxu0 0
      %754 = vmatprep.subr.bf16.mxu0 0
      %755 = vmatpush1.bf16.msra.mxu0 0
      %756 = vmatprep.subr.bf16.mxu0 0
      %757 = vmatpush1.bf16.msra.mxu0 0
      %758 = vmatprep.subr.bf16.mxu0 0
      %759 = vmatpush1.bf16.msra.mxu0 0
      %760 = vmatprep.subr.bf16.mxu0 0
      %761 = vmatpush1.bf16.msra.mxu0 0
      %762 = vmatprep.subr.bf16.mxu0 0
      %763 = vmatpush1.bf16.msra.mxu0 0
      %764 = vmatprep.subr.bf16.mxu0 0
      %765 = vmatpush1.bf16.msra.mxu0 0
      %766 = vmatprep.subr.bf16.mxu0 0
      %767 = vmatpush1.bf16.msra.mxu0 0
      %768 = vmatprep.subr.bf16.mxu0 0
      %769 = vmatpush1.bf16.msra.mxu0 0
      %770 = vmatprep.subr.bf16.mxu0 0
      %771 = vmatpush1.bf16.msra.mxu0 0
      %772 = vmatprep.subr.bf16.mxu0 0
      %773 = vmatpush1.bf16.msra.mxu0 0
      %774 = vmatprep.mubr.bf16.mxu0 0
      %775 = vmatmul.mubr.bf16.gmra.mrb[0].mxu0 %v715
      %v776 = vpop.f32.mrb[0].mxu0
      %v777 = vadd.f32 0.0, %v776
      %v778 = vpop.f32.mrb[0].mxu0
      %v779 = vpop.f32.mrb[0].mxu0
      %v780 = vadd.f32 0.0, %v779
      %v781 = vpop.f32.mrb[0].mxu0
      %782 = vmatprep.mubr.bf16.mxu0 0
      %783 = vmatmul.mubr.bf16.gmra.mrb[0].mxu0 %v718
      %v784 = vpop.f32.mrb[0].mxu0
      %v785 = vadd.f32 0.0, %v784
      %v786 = vpop.f32.mrb[0].mxu0
      %v787 = vpop.f32.mrb[0].mxu0
      %v788 = vadd.f32 0.0, %v787
      %v789 = vpop.f32.mrb[0].mxu0
      %790 = vmatprep.mubr.bf16.mxu0 0
      %791 = vmatmul.mubr.bf16.gmra.mrb[0].mxu0 %v721
      %v792 = vpop.f32.mrb[0].mxu0
      %v793 = vadd.f32 0.0, %v792
      %v794 = vpop.f32.mrb[0].mxu0
      %v795 = vpop.f32.mrb[0].mxu0
      %v796 = vadd.f32 0.0, %v795
      %v797 = vpop.f32.mrb[0].mxu0
      %798 = vmatprep.mubr.bf16.mxu0 0
      %799 = vmatmul.mubr.bf16.gmra.mrb[0].mxu0 %v724
      %v800 = vpop.f32.mrb[0].mxu0
      %v801 = vadd.f32 0.0, %v800
      %v802 = vpop.f32.mrb[0].mxu0
      %v803 = vpop.f32.mrb[0].mxu0
      %v804 = vadd.f32 0.0, %v803
      %v805 = vpop.f32.mrb[0].mxu0
      %806 = vmatprep.mubr.bf16.mxu0 0
      %807 = vmatmul.mubr.bf16.gmra.mrb[0].mxu0 %v727
      %v808 = vpop.f32.mrb[0].mxu0
      %v809 = vadd.f32 0.0, %v808
      %v810 = vpop.f32.mrb[0].mxu0
      %v811 = vpop.f32.mrb[0].mxu0
      %v812 = vadd.f32 0.0, %v811
      %v813 = vpop.f32.mrb[0].mxu0
      %814 = vmatprep.mubr.bf16.mxu0 0
      %815 = vmatmul.mubr.bf16.gmra.mrb[0].mxu0 %v730
      %v816 = vpop.f32.mrb[0].mxu0
      %v817 = vadd.f32 0.0, %v816
      %v818 = vpop.f32.mrb[0].mxu0
      %v819 = vpop.f32.mrb[0].mxu0
      %v820 = vadd.f32 0.0, %v819
      %v821 = vpop.f32.mrb[0].mxu0
      %822 = vmatprep.mubr.bf16.mxu0 0
      %823 = vmatmul.mubr.bf16.gmra.mrb[0].mxu0 %v733
      %v824 = vpop.f32.mrb[0].mxu0
      %v825 = vadd.f32 0.0, %v824
      %v826 = vpop.f32.mrb[0].mxu0
      %v827 = vpop.f32.mrb[0].mxu0
      %v828 = vadd.f32 0.0, %v827
      %v829 = vpop.f32.mrb[0].mxu0
      %830 = vmatprep.mubr.bf16.mxu0 0
      %831 = vmatmul.mubr.bf16.gmra.mrb[0].mxu0 %v736
      %v832 = vpop.f32.mrb[0].mxu0
      %v833 = vadd.f32 0.0, %v832
      %v834 = vpop.f32.mrb[0].mxu0
      %v835 = vpop.f32.mrb[0].mxu0
      %v836 = vadd.f32 0.0, %v835
      %v837 = vpop.f32.mrb[0].mxu0
      %838 = vdwg.mxu0
      %v855 = vunpack.c.l.b16 %v478
      %v856 = vunpack.c.l.b16 %v479
      %v857 = vunpack.c.l.b16 %v447
      %v858 = vunpack.c.l.b16 %v448
      %v859 = vunpack.c.l.b16 %v450
      %v860 = vunpack.c.l.b16 %v451
      %v861 = vunpack.c.l.b16 %v453
      %v862 = vunpack.c.l.b16 %v454
      %v863 = vunpack.c.l.b16 %v456
      %v864 = vunpack.c.l.b16 %v457
      %v865 = vunpack.c.l.b16 %v459
      %v866 = vunpack.c.l.b16 %v460
      %v867 = vunpack.c.l.b16 %v462
      %v868 = vunpack.c.l.b16 %v463
      %v869 = vunpack.c.l.b16 %v465
      %v870 = vunpack.c.l.b16 %v466
      %v871 = vpack.c.b16 %v856, %v855
      %v872 = vpack.c.b16 %v858, %v857
      %v873 = vpack.c.b16 %v860, %v859
      %v874 = vpack.c.b16 %v862, %v861
      %v875 = vpack.c.b16 %v864, %v863
      %v876 = vpack.c.b16 %v866, %v865
      %v877 = vpack.c.b16 %v868, %v867
      %v878 = vpack.c.b16 %v870, %v869
      %v880 = vsel %vm713, %v871, 0
      %v883 = vsel %vm713, %v872, 0
      %v886 = vsel %vm713, %v873, 0
      %v889 = vsel %vm713, %v874, 0
      %v892 = vsel %vm713, %v875, 0
      %v895 = vsel %vm713, %v876, 0
      %v898 = vsel %vm713, %v877, 0
      %v901 = vsel %vm713, %v878, 0
      %v904 = vsel %vm738, %v491, 0
      %906 = vmatprep.subr.bf16.mxu0 0
      %907 = vmatpush1.bf16.msra.mxu0 %v904
      %908 = vmatprep.subr.bf16.mxu0 0
      %909 = vmatpush1.bf16.msra.mxu0 0
      %910 = vmatprep.subr.bf16.mxu0 0
      %911 = vmatpush1.bf16.msra.mxu0 0
      %912 = vmatprep.subr.bf16.mxu0 0
      %913 = vmatpush1.bf16.msra.mxu0 0
      %914 = vmatprep.subr.bf16.mxu0 0
      %915 = vmatpush1.bf16.msra.mxu0 0
      %916 = vmatprep.subr.bf16.mxu0 0
      %917 = vmatpush1.bf16.msra.mxu0 0
      %918 = vmatprep.subr.bf16.mxu0 0
      %919 = vmatpush1.bf16.msra.mxu0 0
      %920 = vmatprep.subr.bf16.mxu0 0
      %921 = vmatpush1.bf16.msra.mxu0 0
      %922 = vmatprep.subr.bf16.mxu0 0
      %923 = vmatpush1.bf16.msra.mxu0 0
      %924 = vmatprep.subr.bf16.mxu0 0
      %925 = vmatpush1.bf16.msra.mxu0 0
      %926 = vmatprep.subr.bf16.mxu0 0
      %927 = vmatpush1.bf16.msra.mxu0 0
      %928 = vmatprep.subr.bf16.mxu0 0
      %929 = vmatpush1.bf16.msra.mxu0 0
      %930 = vmatprep.subr.bf16.mxu0 0
      %931 = vmatpush1.bf16.msra.mxu0 0
      %932 = vmatprep.subr.bf16.mxu0 0
      %933 = vmatpush1.bf16.msra.mxu0 0
      %934 = vmatprep.subr.bf16.mxu0 0
      %935 = vmatpush1.bf16.msra.mxu0 0
      %936 = vmatprep.subr.bf16.mxu0 0
      %937 = vmatpush1.bf16.msra.mxu0 0
      %938 = vmatprep.mubr.bf16.mxu0 0
      %939 = vmatmul.mubr.bf16.gmra.mrb[0].mxu0 %v880
      %v940 = vpop.f32.mrb[0].mxu0
      %v941 = vadd.f32 %v777, %v940
      %v942 = vpop.f32.mrb[0].mxu0
      %v943 = vpop.f32.mrb[0].mxu0
      %v944 = vadd.f32 %v780, %v943
      %v945 = vpop.f32.mrb[0].mxu0
      %946 = vmatprep.mubr.bf16.mxu0 0
      %947 = vmatmul.mubr.bf16.gmra.mrb[0].mxu0 %v883
      %v948 = vpop.f32.mrb[0].mxu0
      %v949 = vadd.f32 %v785, %v948
      %v950 = vpop.f32.mrb[0].mxu0
      %v951 = vpop.f32.mrb[0].mxu0
      %v952 = vadd.f32 %v788, %v951
      %v953 = vpop.f32.mrb[0].mxu0
      %954 = vmatprep.mubr.bf16.mxu0 0
      %955 = vmatmul.mubr.bf16.gmra.mrb[0].mxu0 %v886
      %v956 = vpop.f32.mrb[0].mxu0
      %v957 = vadd.f32 %v793, %v956
      %v958 = vpop.f32.mrb[0].mxu0
      %v959 = vpop.f32.mrb[0].mxu0
      %v960 = vadd.f32 %v796, %v959
      %v961 = vpop.f32.mrb[0].mxu0
      %962 = vmatprep.mubr.bf16.mxu0 0
      %963 = vmatmul.mubr.bf16.gmra.mrb[0].mxu0 %v889
      %v964 = vpop.f32.mrb[0].mxu0
      %v965 = vadd.f32 %v801, %v964
      %v966 = vpop.f32.mrb[0].mxu0
      %v967 = vpop.f32.mrb[0].mxu0
      %v968 = vadd.f32 %v804, %v967
      %v969 = vpop.f32.mrb[0].mxu0
      %970 = vmatprep.mubr.bf16.mxu0 0
      %971 = vmatmul.mubr.bf16.gmra.mrb[0].mxu0 %v892
      %v972 = vpop.f32.mrb[0].mxu0
      %v973 = vadd.f32 %v809, %v972
      %v974 = vpop.f32.mrb[0].mxu0
      %v975 = vpop.f32.mrb[0].mxu0
      %v976 = vadd.f32 %v812, %v975
      %v977 = vpop.f32.mrb[0].mxu0
      %978 = vmatprep.mubr.bf16.mxu0 0
      %979 = vmatmul.mubr.bf16.gmra.mrb[0].mxu0 %v895
      %v980 = vpop.f32.mrb[0].mxu0
      %v981 = vadd.f32 %v817, %v980
      %v982 = vpop.f32.mrb[0].mxu0
      %v983 = vpop.f32.mrb[0].mxu0
      %v984 = vadd.f32 %v820, %v983
      %v985 = vpop.f32.mrb[0].mxu0
      %986 = vmatprep.mubr.bf16.mxu0 0
      %987 = vmatmul.mubr.bf16.gmra.mrb[0].mxu0 %v898
      %v988 = vpop.f32.mrb[0].mxu0
      %v989 = vadd.f32 %v825, %v988
      %v990 = vpop.f32.mrb[0].mxu0
      %v991 = vpop.f32.mrb[0].mxu0
      %v992 = vadd.f32 %v828, %v991
      %v993 = vpop.f32.mrb[0].mxu0
      %994 = vmatprep.mubr.bf16.mxu0 0
      %995 = vmatmul.mubr.bf16.gmra.mrb[0].mxu0 %v901
      %v996 = vpop.f32.mrb[0].mxu0
      %v997 = vadd.f32 %v833, %v996
      %v998 = vpop.f32.mrb[0].mxu0
      %v999 = vpop.f32.mrb[0].mxu0
      %v1000 = vadd.f32 %v836, %v999
      %v1001 = vpop.f32.mrb[0].mxu0
      %1002 = vdwg.mxu0
      %vm1011 = vcmask 1042432
      %vm1012 = vcmask 1046532
      %vm1013 = vmor %vm1011, %vm1012
      %v1014 = vrot.slane %v478, 5
      %v1015 = vrot.slane %v1014, 4
      %v1016 = vrot.slane %v479, 5
      %v1017 = vsel %vm1013, %v1015, %v1016
      %v1018 = vrot.slane %v1016, 4
      %v1019 = vrot.slane %v480, 5
      %v1020 = vsel %vm1013, %v1018, %v1019
      %v1021 = vrot.slane %v447, 5
      %v1022 = vrot.slane %v1021, 4
      %v1023 = vrot.slane %v448, 5
      %v1024 = vsel %vm1013, %v1022, %v1023
      %v1025 = vrot.slane %v1023, 4
      %v1026 = vrot.slane %v449, 5
      %v1027 = vsel %vm1013, %v1025, %v1026
      %v1028 = vrot.slane %v450, 5
      %v1029 = vrot.slane %v1028, 4
      %v1030 = vrot.slane %v451, 5
      %v1031 = vsel %vm1013, %v1029, %v1030
      %v1032 = vrot.slane %v1030, 4
      %v1033 = vrot.slane %v452, 5
      %v1034 = vsel %vm1013, %v1032, %v1033
      %v1035 = vrot.slane %v453, 5
      %v1036 = vrot.slane %v1035, 4
      %v1037 = vrot.slane %v454, 5
      %v1038 = vsel %vm1013, %v1036, %v1037
      %v1039 = vrot.slane %v1037, 4
      %v1040 = vrot.slane %v455, 5
      %v1041 = vsel %vm1013, %v1039, %v1040
      %v1042 = vrot.slane %v456, 5
      %v1043 = vrot.slane %v1042, 4
      %v1044 = vrot.slane %v457, 5
      %v1045 = vsel %vm1013, %v1043, %v1044
      %v1046 = vrot.slane %v1044, 4
      %v1047 = vrot.slane %v458, 5
      %v1048 = vsel %vm1013, %v1046, %v1047
      %v1049 = vrot.slane %v459, 5
      %v1050 = vrot.slane %v1049, 4
      %v1051 = vrot.slane %v460, 5
      %v1052 = vsel %vm1013, %v1050, %v1051
      %v1053 = vrot.slane %v1051, 4
      %v1054 = vrot.slane %v461, 5
      %v1055 = vsel %vm1013, %v1053, %v1054
      %v1056 = vrot.slane %v462, 5
      %v1057 = vrot.slane %v1056, 4
      %v1058 = vrot.slane %v463, 5
      %v1059 = vsel %vm1013, %v1057, %v1058
      %v1060 = vrot.slane %v1058, 4
      %v1061 = vrot.slane %v464, 5
      %v1062 = vsel %vm1013, %v1060, %v1061
      %v1063 = vrot.slane %v465, 5
      %v1064 = vrot.slane %v1063, 4
      %v1065 = vrot.slane %v466, 5
      %v1066 = vsel %vm1013, %v1064, %v1065
      %v1067 = vrot.slane %v1065, 4
      %v1068 = vrot.slane %v467, 5
      %v1069 = vsel %vm1013, %v1067, %v1068
      %s1070 = scalar_lea.vmem %s3, 4
      %v1071 = vld [vmem:[%s1070] sm:$0x3]
      %v1072 = vunpack.c.l.b16 %v1017
      %v1073 = vunpack.c.l.b16 %v1020
      %v1074 = vunpack.c.l.b16 %v1024
      %v1075 = vunpack.c.l.b16 %v1027
      %v1076 = vunpack.c.l.b16 %v1031
      %v1077 = vunpack.c.l.b16 %v1034
      %v1078 = vunpack.c.l.b16 %v1038
      %v1079 = vunpack.c.l.b16 %v1041
      %v1080 = vunpack.c.l.b16 %v1045
      %v1081 = vunpack.c.l.b16 %v1048
      %v1082 = vunpack.c.l.b16 %v1052
      %v1083 = vunpack.c.l.b16 %v1055
      %v1084 = vunpack.c.l.b16 %v1059
      %v1085 = vunpack.c.l.b16 %v1062
      %v1086 = vunpack.c.l.b16 %v1066
      %v1087 = vunpack.c.l.b16 %v1069
      %v1088 = vpack.c.b16 %v1073, %v1072
      %v1089 = vpack.c.b16 %v1075, %v1074
      %v1090 = vpack.c.b16 %v1077, %v1076
      %v1091 = vpack.c.b16 %v1079, %v1078
      %v1092 = vpack.c.b16 %v1081, %v1080
      %v1093 = vpack.c.b16 %v1083, %v1082
      %v1094 = vpack.c.b16 %v1085, %v1084
      %v1095 = vpack.c.b16 %v1087, %v1086
      %v1097 = vsel %vm713, %v1088, 0
      %v1100 = vsel %vm713, %v1089, 0
      %v1103 = vsel %vm713, %v1090, 0
      %v1106 = vsel %vm713, %v1091, 0
      %v1109 = vsel %vm713, %v1092, 0
      %v1112 = vsel %vm713, %v1093, 0
      %v1115 = vsel %vm713, %v1094, 0
      %v1118 = vsel %vm713, %v1095, 0
      %v1121 = vsel %vm738, %v1071, 0
      %1123 = vmatprep.subr.bf16.mxu0 0
      %1124 = vmatpush1.bf16.msra.mxu0 %v1121
      %1125 = vmatprep.subr.bf16.mxu0 0
      %1126 = vmatpush1.bf16.msra.mxu0 0
      %1127 = vmatprep.subr.bf16.mxu0 0
      %1128 = vmatpush1.bf16.msra.mxu0 0
      %1129 = vmatprep.subr.bf16.mxu0 0
      %1130 = vmatpush1.bf16.msra.mxu0 0
      %1131 = vmatprep.subr.bf16.mxu0 0
      %1132 = vmatpush1.bf16.msra.mxu0 0
      %1133 = vmatprep.subr.bf16.mxu0 0
      %1134 = vmatpush1.bf16.msra.mxu0 0
      %1135 = vmatprep.subr.bf16.mxu0 0
      %1136 = vmatpush1.bf16.msra.mxu0 0
      %1137 = vmatprep.subr.bf16.mxu0 0
      %1138 = vmatpush1.bf16.msra.mxu0 0
      %1139 = vmatprep.subr.bf16.mxu0 0
      %1140 = vmatpush1.bf16.msra.mxu0 0
      %1141 = vmatprep.subr.bf16.mxu0 0
      %1142 = vmatpush1.bf16.msra.mxu0 0
      %1143 = vmatprep.subr.bf16.mxu0 0
      %1144 = vmatpush1.bf16.msra.mxu0 0
      %1145 = vmatprep.subr.bf16.mxu0 0
      %1146 = vmatpush1.bf16.msra.mxu0 0
      %1147 = vmatprep.subr.bf16.mxu0 0
      %1148 = vmatpush1.bf16.msra.mxu0 0
      %1149 = vmatprep.subr.bf16.mxu0 0
      %1150 = vmatpush1.bf16.msra.mxu0 0
      %1151 = vmatprep.subr.bf16.mxu0 0
      %1152 = vmatpush1.bf16.msra.mxu0 0
      %1153 = vmatprep.subr.bf16.mxu0 0
      %1154 = vmatpush1.bf16.msra.mxu0 0
      %1155 = vmatprep.mubr.bf16.mxu0 0
      %1156 = vmatmul.mubr.bf16.gmra.mrb[0].mxu0 %v1097
      %v1157 = vpop.f32.mrb[0].mxu0
      %v1158 = vadd.f32 0.0, %v1157
      %v1159 = vpop.f32.mrb[0].mxu0
      %v1160 = vpop.f32.mrb[0].mxu0
      %v1161 = vadd.f32 0.0, %v1160
      %v1162 = vpop.f32.mrb[0].mxu0
      %1163 = vmatprep.mubr.bf16.mxu0 0
      %1164 = vmatmul.mubr.bf16.gmra.mrb[0].mxu0 %v1100
      %v1165 = vpop.f32.mrb[0].mxu0
      %v1166 = vadd.f32 0.0, %v1165
      %v1167 = vpop.f32.mrb[0].mxu0
      %v1168 = vpop.f32.mrb[0].mxu0
      %v1169 = vadd.f32 0.0, %v1168
      %v1170 = vpop.f32.mrb[0].mxu0
      %1171 = vmatprep.mubr.bf16.mxu0 0
      %1172 = vmatmul.mubr.bf16.gmra.mrb[0].mxu0 %v1103
      %v1173 = vpop.f32.mrb[0].mxu0
      %v1174 = vadd.f32 0.0, %v1173
      %v1175 = vpop.f32.mrb[0].mxu0
      %v1176 = vpop.f32.mrb[0].mxu0
      %v1177 = vadd.f32 0.0, %v1176
      %v1178 = vpop.f32.mrb[0].mxu0
      %1179 = vmatprep.mubr.bf16.mxu0 0
      %1180 = vmatmul.mubr.bf16.gmra.mrb[0].mxu0 %v1106
      %v1181 = vpop.f32.mrb[0].mxu0
      %v1182 = vadd.f32 0.0, %v1181
      %v1183 = vpop.f32.mrb[0].mxu0
      %v1184 = vpop.f32.mrb[0].mxu0
      %v1185 = vadd.f32 0.0, %v1184
      %v1186 = vpop.f32.mrb[0].mxu0
      %1187 = vmatprep.mubr.bf16.mxu0 0
      %1188 = vmatmul.mubr.bf16.gmra.mrb[0].mxu0 %v1109
      %v1189 = vpop.f32.mrb[0].mxu0
      %v1190 = vadd.f32 0.0, %v1189
      %v1191 = vpop.f32.mrb[0].mxu0
      %v1192 = vpop.f32.mrb[0].mxu0
      %v1193 = vadd.f32 0.0, %v1192
      %v1194 = vpop.f32.mrb[0].mxu0
      %1195 = vmatprep.mubr.bf16.mxu0 0
      %1196 = vmatmul.mubr.bf16.gmra.mrb[0].mxu0 %v1112
      %v1197 = vpop.f32.mrb[0].mxu0
      %v1198 = vadd.f32 0.0, %v1197
      %v1199 = vpop.f32.mrb[0].mxu0
      %v1200 = vpop.f32.mrb[0].mxu0
      %v1201 = vadd.f32 0.0, %v1200
      %v1202 = vpop.f32.mrb[0].mxu0
      %1203 = vmatprep.mubr.bf16.mxu0 0
      %1204 = vmatmul.mubr.bf16.gmra.mrb[0].mxu0 %v1115
      %v1205 = vpop.f32.mrb[0].mxu0
      %v1206 = vadd.f32 0.0, %v1205
      %v1207 = vpop.f32.mrb[0].mxu0
      %v1208 = vpop.f32.mrb[0].mxu0
      %v1209 = vadd.f32 0.0, %v1208
      %v1210 = vpop.f32.mrb[0].mxu0
      %1211 = vmatprep.mubr.bf16.mxu0 0
      %1212 = vmatmul.mubr.bf16.gmra.mrb[0].mxu0 %v1118
      %v1213 = vpop.f32.mrb[0].mxu0
      %v1214 = vadd.f32 0.0, %v1213
      %v1215 = vpop.f32.mrb[0].mxu0
      %v1216 = vpop.f32.mrb[0].mxu0
      %v1217 = vadd.f32 0.0, %v1216
      %v1218 = vpop.f32.mrb[0].mxu0
      %1219 = vdwg.mxu0
      %v1220 = vadd.f32 %v941, %v1158
      %v1221 = vadd.f32 %v944, %v1161
      %v1222 = vadd.f32 %v949, %v1166
      %v1223 = vadd.f32 %v952, %v1169
      %v1224 = vadd.f32 %v957, %v1174
      %v1225 = vadd.f32 %v960, %v1177
      %v1226 = vadd.f32 %v965, %v1182
      %v1227 = vadd.f32 %v968, %v1185
      %v1228 = vadd.f32 %v973, %v1190
      %v1229 = vadd.f32 %v976, %v1193
      %v1230 = vadd.f32 %v981, %v1198
      %v1231 = vadd.f32 %v984, %v1201
      %v1232 = vadd.f32 %v989, %v1206
      %v1233 = vadd.f32 %v992, %v1209
      %v1234 = vadd.f32 %v997, %v1214
      %v1235 = vadd.f32 %v1000, %v1217
      %s1236 = scalar_lea.vmem %s3, 6
      %v1237 = vld [vmem:[%s1236] sm:$0x3]
      %v1240 = vunpack.c.l.b16 %v468
      %v1241 = vunpack.c.l.b16 %v469
      %v1242 = vpack.c.b16 %v1241, %v1240
      %v1244 = vsel %vm713, %v1242, 0
      %v1247 = vsel %vm738, %v1237, 0
      %1249 = vmatprep.subr.bf16.mxu0 0
      %1250 = vmatpush1.bf16.msra.mxu0 %v1247
      %1251 = vmatprep.subr.bf16.mxu0 0
      %1252 = vmatpush1.bf16.msra.mxu0 0
      %1253 = vmatprep.subr.bf16.mxu0 0
      %1254 = vmatpush1.bf16.msra.mxu0 0
      %1255 = vmatprep.subr.bf16.mxu0 0
      %1256 = vmatpush1.bf16.msra.mxu0 0
      %1257 = vmatprep.subr.bf16.mxu0 0
      %1258 = vmatpush1.bf16.msra.mxu0 0
      %1259 = vmatprep.subr.bf16.mxu0 0
      %1260 = vmatpush1.bf16.msra.mxu0 0
      %1261 = vmatprep.subr.bf16.mxu0 0
      %1262 = vmatpush1.bf16.msra.mxu0 0
      %1263 = vmatprep.subr.bf16.mxu0 0
      %1264 = vmatpush1.bf16.msra.mxu0 0
      %1265 = vmatprep.subr.bf16.mxu0 0
      %1266 = vmatpush1.bf16.msra.mxu0 0
      %1267 = vmatprep.subr.bf16.mxu0 0
      %1268 = vmatpush1.bf16.msra.mxu0 0
      %1269 = vmatprep.subr.bf16.mxu0 0
      %1270 = vmatpush1.bf16.msra.mxu0 0
      %1271 = vmatprep.subr.bf16.mxu0 0
      %1272 = vmatpush1.bf16.msra.mxu0 0
      %1273 = vmatprep.subr.bf16.mxu0 0
      %1274 = vmatpush1.bf16.msra.mxu0 0
      %1275 = vmatprep.subr.bf16.mxu0 0
      %1276 = vmatpush1.bf16.msra.mxu0 0
      %1277 = vmatprep.subr.bf16.mxu0 0
      %1278 = vmatpush1.bf16.msra.mxu0 0
      %1279 = vmatprep.subr.bf16.mxu0 0
      %1280 = vmatpush1.bf16.msra.mxu0 0
      %1281 = vmatprep.mubr.bf16.mxu0 0
      %1282 = vmatmul.mubr.bf16.gmra.mrb[0].mxu0 %v883
      %v1283 = vpop.f32.mrb[0].mxu0
      %v1284 = vadd.f32 0.0, %v1283
      %v1285 = vpop.f32.mrb[0].mxu0
      %v1286 = vpop.f32.mrb[0].mxu0
      %v1287 = vadd.f32 0.0, %v1286
      %v1288 = vpop.f32.mrb[0].mxu0
      %1289 = vmatprep.mubr.bf16.mxu0 0
      %1290 = vmatmul.mubr.bf16.gmra.mrb[0].mxu0 %v886
      %v1291 = vpop.f32.mrb[0].mxu0
      %v1292 = vadd.f32 0.0, %v1291
      %v1293 = vpop.f32.mrb[0].mxu0
      %v1294 = vpop.f32.mrb[0].mxu0
      %v1295 = vadd.f32 0.0, %v1294
      %v1296 = vpop.f32.mrb[0].mxu0
      %1297 = vmatprep.mubr.bf16.mxu0 0
      %1298 = vmatmul.mubr.bf16.gmra.mrb[0].mxu0 %v889
      %v1299 = vpop.f32.mrb[0].mxu0
      %v1300 = vadd.f32 0.0, %v1299
      %v1301 = vpop.f32.mrb[0].mxu0
      %v1302 = vpop.f32.mrb[0].mxu0
      %v1303 = vadd.f32 0.0, %v1302
      %v1304 = vpop.f32.mrb[0].mxu0
      %1305 = vmatprep.mubr.bf16.mxu0 0
      %1306 = vmatmul.mubr.bf16.gmra.mrb[0].mxu0 %v892
      %v1307 = vpop.f32.mrb[0].mxu0
      %v1308 = vadd.f32 0.0, %v1307
      %v1309 = vpop.f32.mrb[0].mxu0
      %v1310 = vpop.f32.mrb[0].mxu0
      %v1311 = vadd.f32 0.0, %v1310
      %v1312 = vpop.f32.mrb[0].mxu0
      %1313 = vmatprep.mubr.bf16.mxu0 0
      %1314 = vmatmul.mubr.bf16.gmra.mrb[0].mxu0 %v895
      %v1315 = vpop.f32.mrb[0].mxu0
      %v1316 = vadd.f32 0.0, %v1315
      %v1317 = vpop.f32.mrb[0].mxu0
      %v1318 = vpop.f32.mrb[0].mxu0
      %v1319 = vadd.f32 0.0, %v1318
      %v1320 = vpop.f32.mrb[0].mxu0
      %1321 = vmatprep.mubr.bf16.mxu0 0
      %1322 = vmatmul.mubr.bf16.gmra.mrb[0].mxu0 %v898
      %v1323 = vpop.f32.mrb[0].mxu0
      %v1324 = vadd.f32 0.0, %v1323
      %v1325 = vpop.f32.mrb[0].mxu0
      %v1326 = vpop.f32.mrb[0].mxu0
      %v1327 = vadd.f32 0.0, %v1326
      %v1328 = vpop.f32.mrb[0].mxu0
      %1329 = vmatprep.mubr.bf16.mxu0 0
      %1330 = vmatmul.mubr.bf16.gmra.mrb[0].mxu0 %v901
      %v1331 = vpop.f32.mrb[0].mxu0
      %v1332 = vadd.f32 0.0, %v1331
      %v1333 = vpop.f32.mrb[0].mxu0
      %v1334 = vpop.f32.mrb[0].mxu0
      %v1335 = vadd.f32 0.0, %v1334
      %v1336 = vpop.f32.mrb[0].mxu0
      %1337 = vmatprep.mubr.bf16.mxu0 0
      %1338 = vmatmul.mubr.bf16.gmra.mrb[0].mxu0 %v1244
      %v1339 = vpop.f32.mrb[0].mxu0
      %v1340 = vadd.f32 0.0, %v1339
      %v1341 = vpop.f32.mrb[0].mxu0
      %v1342 = vpop.f32.mrb[0].mxu0
      %v1343 = vadd.f32 0.0, %v1342
      %v1344 = vpop.f32.mrb[0].mxu0
      %1345 = vdwg.mxu0
      %v1346 = vadd.f32 %v1220, %v1284
      %v1347 = vadd.f32 %v1221, %v1287
      %v1348 = vadd.f32 %v1222, %v1292
      %v1349 = vadd.f32 %v1223, %v1295
      %v1350 = vadd.f32 %v1224, %v1300
      %v1351 = vadd.f32 %v1225, %v1303
      %v1352 = vadd.f32 %v1226, %v1308
      %v1353 = vadd.f32 %v1227, %v1311
      %v1354 = vadd.f32 %v1228, %v1316
      %v1355 = vadd.f32 %v1229, %v1319
      %v1356 = vadd.f32 %v1230, %v1324
      %v1357 = vadd.f32 %v1231, %v1327
      %v1358 = vadd.f32 %v1232, %v1332
      %v1359 = vadd.f32 %v1233, %v1335
      %v1360 = vadd.f32 %v1234, %v1340
      %v1361 = vadd.f32 %v1235, %v1343
      %v1363 = vshrl.u32 %v468, 16
      %v1365 = vrot.slane %v1363, 4
      %v1366 = vshll.u32 %v468, 16
      %v1368 = vrot.slane %v1366, 5
      %v1369 = vor.u32 %v1365, %v1368
      %v1370 = vrot.slane %v1369, 4
      %v1372 = vshll.u32 %v469, 16
      %v1374 = vrot.slane %v1372, 5
      %v1375 = vsel %vm494, %v1370, %v1374
      %v1376 = vshrl.u32 %v469, 16
      %v1378 = vrot.slane %v1376, 4
      %v1379 = vor.u32 %v1378, %v1374
      %v1380 = vrot.slane %v1379, 4
      %v1382 = vshll.u32 %v470, 16
      %v1384 = vrot.slane %v1382, 5
      %v1385 = vsel %vm494, %v1380, %v1384
      %s1386 = scalar_lea.vmem %s3, 8
      %v1387 = vld [vmem:[%s1386] sm:$0x3]
      %v1388 = vunpack.c.l.b16 %v1375
      %v1389 = vunpack.c.l.b16 %v1385
      %v1390 = vpack.c.b16 %v1389, %v1388
      %v1392 = vsel %vm713, %v1390, 0
      %v1395 = vsel %vm738, %v1387, 0
      %1397 = vmatprep.subr.bf16.mxu0 0
      %1398 = vmatpush1.bf16.msra.mxu0 %v1395
      %1399 = vmatprep.subr.bf16.mxu0 0
      %1400 = vmatpush1.bf16.msra.mxu0 0
      %1401 = vmatprep.subr.bf16.mxu0 0
      %1402 = vmatpush1.bf16.msra.mxu0 0
      %1403 = vmatprep.subr.bf16.mxu0 0
      %1404 = vmatpush1.bf16.msra.mxu0 0
      %1405 = vmatprep.subr.bf16.mxu0 0
      %1406 = vmatpush1.bf16.msra.mxu0 0
      %1407 = vmatprep.subr.bf16.mxu0 0
      %1408 = vmatpush1.bf16.msra.mxu0 0
      %1409 = vmatprep.subr.bf16.mxu0 0
      %1410 = vmatpush1.bf16.msra.mxu0 0
      %1411 = vmatprep.subr.bf16.mxu0 0
      %1412 = vmatpush1.bf16.msra.mxu0 0
      %1413 = vmatprep.subr.bf16.mxu0 0
      %1414 = vmatpush1.bf16.msra.mxu0 0
      %1415 = vmatprep.subr.bf16.mxu0 0
      %1416 = vmatpush1.bf16.msra.mxu0 0
      %1417 = vmatprep.subr.bf16.mxu0 0
      %1418 = vmatpush1.bf16.msra.mxu0 0
      %1419 = vmatprep.subr.bf16.mxu0 0
      %1420 = vmatpush1.bf16.msra.mxu0 0
      %1421 = vmatprep.subr.bf16.mxu0 0
      %1422 = vmatpush1.bf16.msra.mxu0 0
      %1423 = vmatprep.subr.bf16.mxu0 0
      %1424 = vmatpush1.bf16.msra.mxu0 0
      %1425 = vmatprep.subr.bf16.mxu0 0
      %1426 = vmatpush1.bf16.msra.mxu0 0
      %1427 = vmatprep.subr.bf16.mxu0 0
      %1428 = vmatpush1.bf16.msra.mxu0 0
      %1429 = vmatprep.mubr.bf16.mxu0 0
      %1430 = vmatmul.mubr.bf16.gmra.mrb[0].mxu0 %v718
      %v1431 = vpop.f32.mrb[0].mxu0
      %v1432 = vadd.f32 0.0, %v1431
      %v1433 = vpop.f32.mrb[0].mxu0
      %v1434 = vpop.f32.mrb[0].mxu0
      %v1435 = vadd.f32 0.0, %v1434
      %v1436 = vpop.f32.mrb[0].mxu0
      %1437 = vmatprep.mubr.bf16.mxu0 0
      %1438 = vmatmul.mubr.bf16.gmra.mrb[0].mxu0 %v721
      %v1439 = vpop.f32.mrb[0].mxu0
      %v1440 = vadd.f32 0.0, %v1439
      %v1441 = vpop.f32.mrb[0].mxu0
      %v1442 = vpop.f32.mrb[0].mxu0
      %v1443 = vadd.f32 0.0, %v1442
      %v1444 = vpop.f32.mrb[0].mxu0
      %1445 = vmatprep.mubr.bf16.mxu0 0
      %1446 = vmatmul.mubr.bf16.gmra.mrb[0].mxu0 %v724
      %v1447 = vpop.f32.mrb[0].mxu0
      %v1448 = vadd.f32 0.0, %v1447
      %v1449 = vpop.f32.mrb[0].mxu0
      %v1450 = vpop.f32.mrb[0].mxu0
      %v1451 = vadd.f32 0.0, %v1450
      %v1452 = vpop.f32.mrb[0].mxu0
      %1453 = vmatprep.mubr.bf16.mxu0 0
      %1454 = vmatmul.mubr.bf16.gmra.mrb[0].mxu0 %v727
      %v1455 = vpop.f32.mrb[0].mxu0
      %v1456 = vadd.f32 0.0, %v1455
      %v1457 = vpop.f32.mrb[0].mxu0
      %v1458 = vpop.f32.mrb[0].mxu0
      %v1459 = vadd.f32 0.0, %v1458
      %v1460 = vpop.f32.mrb[0].mxu0
      %1461 = vmatprep.mubr.bf16.mxu0 0
      %1462 = vmatmul.mubr.bf16.gmra.mrb[0].mxu0 %v730
      %v1463 = vpop.f32.mrb[0].mxu0
      %v1464 = vadd.f32 0.0, %v1463
      %v1465 = vpop.f32.mrb[0].mxu0
      %v1466 = vpop.f32.mrb[0].mxu0
      %v1467 = vadd.f32 0.0, %v1466
      %v1468 = vpop.f32.mrb[0].mxu0
      %1469 = vmatprep.mubr.bf16.mxu0 0
      %1470 = vmatmul.mubr.bf16.gmra.mrb[0].mxu0 %v733
      %v1471 = vpop.f32.mrb[0].mxu0
      %v1472 = vadd.f32 0.0, %v1471
      %v1473 = vpop.f32.mrb[0].mxu0
      %v1474 = vpop.f32.mrb[0].mxu0
      %v1475 = vadd.f32 0.0, %v1474
      %v1476 = vpop.f32.mrb[0].mxu0
      %1477 = vmatprep.mubr.bf16.mxu0 0
      %1478 = vmatmul.mubr.bf16.gmra.mrb[0].mxu0 %v736
      %v1479 = vpop.f32.mrb[0].mxu0
      %v1480 = vadd.f32 0.0, %v1479
      %v1481 = vpop.f32.mrb[0].mxu0
      %v1482 = vpop.f32.mrb[0].mxu0
      %v1483 = vadd.f32 0.0, %v1482
      %v1484 = vpop.f32.mrb[0].mxu0
      %1485 = vmatprep.mubr.bf16.mxu0 0
      %1486 = vmatmul.mubr.bf16.gmra.mrb[0].mxu0 %v1392
      %v1487 = vpop.f32.mrb[0].mxu0
      %v1488 = vadd.f32 0.0, %v1487
      %v1489 = vpop.f32.mrb[0].mxu0
      %v1490 = vpop.f32.mrb[0].mxu0
      %v1491 = vadd.f32 0.0, %v1490
      %v1492 = vpop.f32.mrb[0].mxu0
      %1493 = vdwg.mxu0
      %v1494 = vadd.f32 %v1346, %v1432
      %v1495 = vadd.f32 %v1347, %v1435
      %v1496 = vadd.f32 %v1348, %v1440
      %v1497 = vadd.f32 %v1349, %v1443
      %v1498 = vadd.f32 %v1350, %v1448
      %v1499 = vadd.f32 %v1351, %v1451
      %v1500 = vadd.f32 %v1352, %v1456
      %v1501 = vadd.f32 %v1353, %v1459
      %v1502 = vadd.f32 %v1354, %v1464
      %v1503 = vadd.f32 %v1355, %v1467
      %v1504 = vadd.f32 %v1356, %v1472
      %v1505 = vadd.f32 %v1357, %v1475
      %v1506 = vadd.f32 %v1358, %v1480
      %v1507 = vadd.f32 %v1359, %v1483
      %v1508 = vadd.f32 %v1360, %v1488
      %v1509 = vadd.f32 %v1361, %v1491
      %v1511 = vrot.slane %v468, 5
      %v1512 = vrot.slane %v1511, 4
      %v1513 = vrot.slane %v469, 5
      %v1514 = vsel %vm1013, %v1512, %v1513
      %v1515 = vrot.slane %v1513, 4
      %v1516 = vrot.slane %v470, 5
      %v1517 = vsel %vm1013, %v1515, %v1516
      %s1518 = scalar_lea.vmem %s3, 10
      %v1519 = vld [vmem:[%s1518] sm:$0x3]
      %v1520 = vunpack.c.l.b16 %v1514
      %v1521 = vunpack.c.l.b16 %v1517
      %v1522 = vpack.c.b16 %v1521, %v1520
      %v1524 = vsel %vm713, %v1522, 0
      %v1527 = vsel %vm738, %v1519, 0
      %1529 = vmatprep.subr.bf16.mxu0 0
      %1530 = vmatpush1.bf16.msra.mxu0 %v1527
      %1531 = vmatprep.subr.bf16.mxu0 0
      %1532 = vmatpush1.bf16.msra.mxu0 0
      %1533 = vmatprep.subr.bf16.mxu0 0
      %1534 = vmatpush1.bf16.msra.mxu0 0
      %1535 = vmatprep.subr.bf16.mxu0 0
      %1536 = vmatpush1.bf16.msra.mxu0 0
      %1537 = vmatprep.subr.bf16.mxu0 0
      %1538 = vmatpush1.bf16.msra.mxu0 0
      %1539 = vmatprep.subr.bf16.mxu0 0
      %1540 = vmatpush1.bf16.msra.mxu0 0
      %1541 = vmatprep.subr.bf16.mxu0 0
      %1542 = vmatpush1.bf16.msra.mxu0 0
      %1543 = vmatprep.subr.bf16.mxu0 0
      %1544 = vmatpush1.bf16.msra.mxu0 0
      %1545 = vmatprep.subr.bf16.mxu0 0
      %1546 = vmatpush1.bf16.msra.mxu0 0
      %1547 = vmatprep.subr.bf16.mxu0 0
      %1548 = vmatpush1.bf16.msra.mxu0 0
      %1549 = vmatprep.subr.bf16.mxu0 0
      %1550 = vmatpush1.bf16.msra.mxu0 0
      %1551 = vmatprep.subr.bf16.mxu0 0
      %1552 = vmatpush1.bf16.msra.mxu0 0
      %1553 = vmatprep.subr.bf16.mxu0 0
      %1554 = vmatpush1.bf16.msra.mxu0 0
      %1555 = vmatprep.subr.bf16.mxu0 0
      %1556 = vmatpush1.bf16.msra.mxu0 0
      %1557 = vmatprep.subr.bf16.mxu0 0
      %1558 = vmatpush1.bf16.msra.mxu0 0
      %1559 = vmatprep.subr.bf16.mxu0 0
      %1560 = vmatpush1.bf16.msra.mxu0 0
      %1561 = vmatprep.mubr.bf16.mxu0 0
      %1562 = vmatmul.mubr.bf16.gmra.mrb[0].mxu0 %v1100
      %v1563 = vpop.f32.mrb[0].mxu0
      %v1564 = vadd.f32 0.0, %v1563
      %v1565 = vpop.f32.mrb[0].mxu0
      %v1566 = vpop.f32.mrb[0].mxu0
      %v1567 = vadd.f32 0.0, %v1566
      %v1568 = vpop.f32.mrb[0].mxu0
      %1569 = vmatprep.mubr.bf16.mxu0 0
      %1570 = vmatmul.mubr.bf16.gmra.mrb[0].mxu0 %v1103
      %v1571 = vpop.f32.mrb[0].mxu0
      %v1572 = vadd.f32 0.0, %v1571
      %v1573 = vpop.f32.mrb[0].mxu0
      %v1574 = vpop.f32.mrb[0].mxu0
      %v1575 = vadd.f32 0.0, %v1574
      %v1576 = vpop.f32.mrb[0].mxu0
      %1577 = vmatprep.mubr.bf16.mxu0 0
      %1578 = vmatmul.mubr.bf16.gmra.mrb[0].mxu0 %v1106
      %v1579 = vpop.f32.mrb[0].mxu0
      %v1580 = vadd.f32 0.0, %v1579
      %v1581 = vpop.f32.mrb[0].mxu0
      %v1582 = vpop.f32.mrb[0].mxu0
      %v1583 = vadd.f32 0.0, %v1582
      %v1584 = vpop.f32.mrb[0].mxu0
      %1585 = vmatprep.mubr.bf16.mxu0 0
      %1586 = vmatmul.mubr.bf16.gmra.mrb[0].mxu0 %v1109
      %v1587 = vpop.f32.mrb[0].mxu0
      %v1588 = vadd.f32 0.0, %v1587
      %v1589 = vpop.f32.mrb[0].mxu0
      %v1590 = vpop.f32.mrb[0].mxu0
      %v1591 = vadd.f32 0.0, %v1590
      %v1592 = vpop.f32.mrb[0].mxu0
      %1593 = vmatprep.mubr.bf16.mxu0 0
      %1594 = vmatmul.mubr.bf16.gmra.mrb[0].mxu0 %v1112
      %v1595 = vpop.f32.mrb[0].mxu0
      %v1596 = vadd.f32 0.0, %v1595
      %v1597 = vpop.f32.mrb[0].mxu0
      %v1598 = vpop.f32.mrb[0].mxu0
      %v1599 = vadd.f32 0.0, %v1598
      %v1600 = vpop.f32.mrb[0].mxu0
      %1601 = vmatprep.mubr.bf16.mxu0 0
      %1602 = vmatmul.mubr.bf16.gmra.mrb[0].mxu0 %v1115
      %v1603 = vpop.f32.mrb[0].mxu0
      %v1604 = vadd.f32 0.0, %v1603
      %v1605 = vpop.f32.mrb[0].mxu0
      %v1606 = vpop.f32.mrb[0].mxu0
      %v1607 = vadd.f32 0.0, %v1606
      %v1608 = vpop.f32.mrb[0].mxu0
      %1609 = vmatprep.mubr.bf16.mxu0 0
      %1610 = vmatmul.mubr.bf16.gmra.mrb[0].mxu0 %v1118
      %v1611 = vpop.f32.mrb[0].mxu0
      %v1612 = vadd.f32 0.0, %v1611
      %v1613 = vpop.f32.mrb[0].mxu0
      %v1614 = vpop.f32.mrb[0].mxu0
      %v1615 = vadd.f32 0.0, %v1614
      %v1616 = vpop.f32.mrb[0].mxu0
      %1617 = vmatprep.mubr.bf16.mxu0 0
      %1618 = vmatmul.mubr.bf16.gmra.mrb[0].mxu0 %v1524
      %v1619 = vpop.f32.mrb[0].mxu0
      %v1620 = vadd.f32 0.0, %v1619
      %v1621 = vpop.f32.mrb[0].mxu0
      %v1622 = vpop.f32.mrb[0].mxu0
      %v1623 = vadd.f32 0.0, %v1622
      %v1624 = vpop.f32.mrb[0].mxu0
      %1625 = vdwg.mxu0
      %v1626 = vadd.f32 %v1494, %v1564
      %v1627 = vadd.f32 %v1495, %v1567
      %v1628 = vadd.f32 %v1496, %v1572
      %v1629 = vadd.f32 %v1497, %v1575
      %v1630 = vadd.f32 %v1498, %v1580
      %v1631 = vadd.f32 %v1499, %v1583
      %v1632 = vadd.f32 %v1500, %v1588
      %v1633 = vadd.f32 %v1501, %v1591
      %v1634 = vadd.f32 %v1502, %v1596
      %v1635 = vadd.f32 %v1503, %v1599
      %v1636 = vadd.f32 %v1504, %v1604
      %v1637 = vadd.f32 %v1505, %v1607
      %v1638 = vadd.f32 %v1506, %v1612
      %v1639 = vadd.f32 %v1507, %v1615
      %v1640 = vadd.f32 %v1508, %v1620
      %v1641 = vadd.f32 %v1509, %v1623
      %s1642 = scalar_lea.vmem %s3, 12
      %v1643 = vld [vmem:[%s1642] sm:$0x3]
      %v1646 = vunpack.c.l.b16 %v488
      %v1647 = vunpack.c.l.b16 %v489
      %v1648 = vpack.c.b16 %v1647, %v1646
      %v1650 = vsel %vm713, %v1648, 0
      %v1653 = vsel %vm738, %v1643, 0
      %1655 = vmatprep.subr.bf16.mxu0 0
      %1656 = vmatpush1.bf16.msra.mxu0 %v1653
      %1657 = vmatprep.subr.bf16.mxu0 0
      %1658 = vmatpush1.bf16.msra.mxu0 0
      %1659 = vmatprep.subr.bf16.mxu0 0
      %1660 = vmatpush1.bf16.msra.mxu0 0
      %1661 = vmatprep.subr.bf16.mxu0 0
      %1662 = vmatpush1.bf16.msra.mxu0 0
      %1663 = vmatprep.subr.bf16.mxu0 0
      %1664 = vmatpush1.bf16.msra.mxu0 0
      %1665 = vmatprep.subr.bf16.mxu0 0
      %1666 = vmatpush1.bf16.msra.mxu0 0
      %1667 = vmatprep.subr.bf16.mxu0 0
      %1668 = vmatpush1.bf16.msra.mxu0 0
      %1669 = vmatprep.subr.bf16.mxu0 0
      %1670 = vmatpush1.bf16.msra.mxu0 0
      %1671 = vmatprep.subr.bf16.mxu0 0
      %1672 = vmatpush1.bf16.msra.mxu0 0
      %1673 = vmatprep.subr.bf16.mxu0 0
      %1674 = vmatpush1.bf16.msra.mxu0 0
      %1675 = vmatprep.subr.bf16.mxu0 0
      %1676 = vmatpush1.bf16.msra.mxu0 0
      %1677 = vmatprep.subr.bf16.mxu0 0
      %1678 = vmatpush1.bf16.msra.mxu0 0
      %1679 = vmatprep.subr.bf16.mxu0 0
      %1680 = vmatpush1.bf16.msra.mxu0 0
      %1681 = vmatprep.subr.bf16.mxu0 0
      %1682 = vmatpush1.bf16.msra.mxu0 0
      %1683 = vmatprep.subr.bf16.mxu0 0
      %1684 = vmatpush1.bf16.msra.mxu0 0
      %1685 = vmatprep.subr.bf16.mxu0 0
      %1686 = vmatpush1.bf16.msra.mxu0 0
      %1687 = vmatprep.mubr.bf16.mxu0 0
      %1688 = vmatmul.mubr.bf16.gmra.mrb[0].mxu0 %v886
      %v1689 = vpop.f32.mrb[0].mxu0
      %v1690 = vadd.f32 0.0, %v1689
      %v1691 = vpop.f32.mrb[0].mxu0
      %v1692 = vpop.f32.mrb[0].mxu0
      %v1693 = vadd.f32 0.0, %v1692
      %v1694 = vpop.f32.mrb[0].mxu0
      %1695 = vmatprep.mubr.bf16.mxu0 0
      %1696 = vmatmul.mubr.bf16.gmra.mrb[0].mxu0 %v889
      %v1697 = vpop.f32.mrb[0].mxu0
      %v1698 = vadd.f32 0.0, %v1697
      %v1699 = vpop.f32.mrb[0].mxu0
      %v1700 = vpop.f32.mrb[0].mxu0
      %v1701 = vadd.f32 0.0, %v1700
      %v1702 = vpop.f32.mrb[0].mxu0
      %1703 = vmatprep.mubr.bf16.mxu0 0
      %1704 = vmatmul.mubr.bf16.gmra.mrb[0].mxu0 %v892
      %v1705 = vpop.f32.mrb[0].mxu0
      %v1706 = vadd.f32 0.0, %v1705
      %v1707 = vpop.f32.mrb[0].mxu0
      %v1708 = vpop.f32.mrb[0].mxu0
      %v1709 = vadd.f32 0.0, %v1708
      %v1710 = vpop.f32.mrb[0].mxu0
      %1711 = vmatprep.mubr.bf16.mxu0 0
      %1712 = vmatmul.mubr.bf16.gmra.mrb[0].mxu0 %v895
      %v1713 = vpop.f32.mrb[0].mxu0
      %v1714 = vadd.f32 0.0, %v1713
      %v1715 = vpop.f32.mrb[0].mxu0
      %v1716 = vpop.f32.mrb[0].mxu0
      %v1717 = vadd.f32 0.0, %v1716
      %v1718 = vpop.f32.mrb[0].mxu0
      %1719 = vmatprep.mubr.bf16.mxu0 0
      %1720 = vmatmul.mubr.bf16.gmra.mrb[0].mxu0 %v898
      %v1721 = vpop.f32.mrb[0].mxu0
      %v1722 = vadd.f32 0.0, %v1721
      %v1723 = vpop.f32.mrb[0].mxu0
      %v1724 = vpop.f32.mrb[0].mxu0
      %v1725 = vadd.f32 0.0, %v1724
      %v1726 = vpop.f32.mrb[0].mxu0
      %1727 = vmatprep.mubr.bf16.mxu0 0
      %1728 = vmatmul.mubr.bf16.gmra.mrb[0].mxu0 %v901
      %v1729 = vpop.f32.mrb[0].mxu0
      %v1730 = vadd.f32 0.0, %v1729
      %v1731 = vpop.f32.mrb[0].mxu0
      %v1732 = vpop.f32.mrb[0].mxu0
      %v1733 = vadd.f32 0.0, %v1732
      %v1734 = vpop.f32.mrb[0].mxu0
      %1735 = vmatprep.mubr.bf16.mxu0 0
      %1736 = vmatmul.mubr.bf16.gmra.mrb[0].mxu0 %v1244
      %v1737 = vpop.f32.mrb[0].mxu0
      %v1738 = vadd.f32 0.0, %v1737
      %v1739 = vpop.f32.mrb[0].mxu0
      %v1740 = vpop.f32.mrb[0].mxu0
      %v1741 = vadd.f32 0.0, %v1740
      %v1742 = vpop.f32.mrb[0].mxu0
      %1743 = vmatprep.mubr.bf16.mxu0 0
      %1744 = vmatmul.mubr.bf16.gmra.mrb[0].mxu0 %v1650
      %v1745 = vpop.f32.mrb[0].mxu0
      %v1746 = vadd.f32 0.0, %v1745
      %v1747 = vpop.f32.mrb[0].mxu0
      %v1748 = vpop.f32.mrb[0].mxu0
      %v1749 = vadd.f32 0.0, %v1748
      %v1750 = vpop.f32.mrb[0].mxu0
      %1751 = vdwg.mxu0
      %v1752 = vadd.f32 %v1626, %v1690
      %v1753 = vadd.f32 %v1627, %v1693
      %v1754 = vadd.f32 %v1628, %v1698
      %v1755 = vadd.f32 %v1629, %v1701
      %v1756 = vadd.f32 %v1630, %v1706
      %v1757 = vadd.f32 %v1631, %v1709
      %v1758 = vadd.f32 %v1632, %v1714
      %v1759 = vadd.f32 %v1633, %v1717
      %v1760 = vadd.f32 %v1634, %v1722
      %v1761 = vadd.f32 %v1635, %v1725
      %v1762 = vadd.f32 %v1636, %v1730
      %v1763 = vadd.f32 %v1637, %v1733
      %v1764 = vadd.f32 %v1638, %v1738
      %v1765 = vadd.f32 %v1639, %v1741
      %v1766 = vadd.f32 %v1640, %v1746
      %v1767 = vadd.f32 %v1641, %v1749
      %v1769 = vshrl.u32 %v488, 16
      %v1771 = vrot.slane %v1769, 4
      %v1772 = vshll.u32 %v488, 16
      %v1774 = vrot.slane %v1772, 5
      %v1775 = vor.u32 %v1771, %v1774
      %v1776 = vrot.slane %v1775, 4
      %v1778 = vshll.u32 %v489, 16
      %v1780 = vrot.slane %v1778, 5
      %v1781 = vsel %vm494, %v1776, %v1780
      %v1782 = vshrl.u32 %v489, 16
      %v1784 = vrot.slane %v1782, 4
      %v1785 = vor.u32 %v1784, %v1780
      %v1786 = vrot.slane %v1785, 4
      %v1788 = vshll.u32 %v490, 16
      %v1790 = vrot.slane %v1788, 5
      %v1791 = vsel %vm494, %v1786, %v1790
      %s1792 = scalar_lea.vmem %s3, 14
      %v1793 = vld [vmem:[%s1792] sm:$0x3]
      %v1794 = vunpack.c.l.b16 %v1781
      %v1795 = vunpack.c.l.b16 %v1791
      %v1796 = vpack.c.b16 %v1795, %v1794
      %v1798 = vsel %vm713, %v1796, 0
      %v1801 = vsel %vm738, %v1793, 0
      %1803 = vmatprep.subr.bf16.mxu0 0
      %1804 = vmatpush1.bf16.msra.mxu0 %v1801
      %1805 = vmatprep.subr.bf16.mxu0 0
      %1806 = vmatpush1.bf16.msra.mxu0 0
      %1807 = vmatprep.subr.bf16.mxu0 0
      %1808 = vmatpush1.bf16.msra.mxu0 0
      %1809 = vmatprep.subr.bf16.mxu0 0
      %1810 = vmatpush1.bf16.msra.mxu0 0
      %1811 = vmatprep.subr.bf16.mxu0 0
      %1812 = vmatpush1.bf16.msra.mxu0 0
      %1813 = vmatprep.subr.bf16.mxu0 0
      %1814 = vmatpush1.bf16.msra.mxu0 0
      %1815 = vmatprep.subr.bf16.mxu0 0
      %1816 = vmatpush1.bf16.msra.mxu0 0
      %1817 = vmatprep.subr.bf16.mxu0 0
      %1818 = vmatpush1.bf16.msra.mxu0 0
      %1819 = vmatprep.subr.bf16.mxu0 0
      %1820 = vmatpush1.bf16.msra.mxu0 0
      %1821 = vmatprep.subr.bf16.mxu0 0
      %1822 = vmatpush1.bf16.msra.mxu0 0
      %1823 = vmatprep.subr.bf16.mxu0 0
      %1824 = vmatpush1.bf16.msra.mxu0 0
      %1825 = vmatprep.subr.bf16.mxu0 0
      %1826 = vmatpush1.bf16.msra.mxu0 0
      %1827 = vmatprep.subr.bf16.mxu0 0
      %1828 = vmatpush1.bf16.msra.mxu0 0
      %1829 = vmatprep.subr.bf16.mxu0 0
      %1830 = vmatpush1.bf16.msra.mxu0 0
      %1831 = vmatprep.subr.bf16.mxu0 0
      %1832 = vmatpush1.bf16.msra.mxu0 0
      %1833 = vmatprep.subr.bf16.mxu0 0
      %1834 = vmatpush1.bf16.msra.mxu0 0
      %1835 = vmatprep.mubr.bf16.mxu0 0
      %1836 = vmatmul.mubr.bf16.gmra.mrb[0].mxu0 %v721
      %v1837 = vpop.f32.mrb[0].mxu0
      %v1838 = vadd.f32 0.0, %v1837
      %v1839 = vpop.f32.mrb[0].mxu0
      %v1840 = vpop.f32.mrb[0].mxu0
      %v1841 = vadd.f32 0.0, %v1840
      %v1842 = vpop.f32.mrb[0].mxu0
      %1843 = vmatprep.mubr.bf16.mxu0 0
      %1844 = vmatmul.mubr.bf16.gmra.mrb[0].mxu0 %v724
      %v1845 = vpop.f32.mrb[0].mxu0
      %v1846 = vadd.f32 0.0, %v1845
      %v1847 = vpop.f32.mrb[0].mxu0
      %v1848 = vpop.f32.mrb[0].mxu0
      %v1849 = vadd.f32 0.0, %v1848
      %v1850 = vpop.f32.mrb[0].mxu0
      %1851 = vmatprep.mubr.bf16.mxu0 0
      %1852 = vmatmul.mubr.bf16.gmra.mrb[0].mxu0 %v727
      %v1853 = vpop.f32.mrb[0].mxu0
      %v1854 = vadd.f32 0.0, %v1853
      %v1855 = vpop.f32.mrb[0].mxu0
      %v1856 = vpop.f32.mrb[0].mxu0
      %v1857 = vadd.f32 0.0, %v1856
      %v1858 = vpop.f32.mrb[0].mxu0
      %1859 = vmatprep.mubr.bf16.mxu0 0
      %1860 = vmatmul.mubr.bf16.gmra.mrb[0].mxu0 %v730
      %v1861 = vpop.f32.mrb[0].mxu0
      %v1862 = vadd.f32 0.0, %v1861
      %v1863 = vpop.f32.mrb[0].mxu0
      %v1864 = vpop.f32.mrb[0].mxu0
      %v1865 = vadd.f32 0.0, %v1864
      %v1866 = vpop.f32.mrb[0].mxu0
      %1867 = vmatprep.mubr.bf16.mxu0 0
      %1868 = vmatmul.mubr.bf16.gmra.mrb[0].mxu0 %v733
      %v1869 = vpop.f32.mrb[0].mxu0
      %v1870 = vadd.f32 0.0, %v1869
      %v1871 = vpop.f32.mrb[0].mxu0
      %v1872 = vpop.f32.mrb[0].mxu0
      %v1873 = vadd.f32 0.0, %v1872
      %v1874 = vpop.f32.mrb[0].mxu0
      %1875 = vmatprep.mubr.bf16.mxu0 0
      %1876 = vmatmul.mubr.bf16.gmra.mrb[0].mxu0 %v736
      %v1877 = vpop.f32.mrb[0].mxu0
      %v1878 = vadd.f32 0.0, %v1877
      %v1879 = vpop.f32.mrb[0].mxu0
      %v1880 = vpop.f32.mrb[0].mxu0
      %v1881 = vadd.f32 0.0, %v1880
      %v1882 = vpop.f32.mrb[0].mxu0
      %1883 = vmatprep.mubr.bf16.mxu0 0
      %1884 = vmatmul.mubr.bf16.gmra.mrb[0].mxu0 %v1392
      %v1885 = vpop.f32.mrb[0].mxu0
      %v1886 = vadd.f32 0.0, %v1885
      %v1887 = vpop.f32.mrb[0].mxu0
      %v1888 = vpop.f32.mrb[0].mxu0
      %v1889 = vadd.f32 0.0, %v1888
      %v1890 = vpop.f32.mrb[0].mxu0
      %1891 = vmatprep.mubr.bf16.mxu0 0
      %1892 = vmatmul.mubr.bf16.gmra.mrb[0].mxu0 %v1798
      %v1893 = vpop.f32.mrb[0].mxu0
      %v1894 = vadd.f32 0.0, %v1893
      %v1895 = vpop.f32.mrb[0].mxu0
      %v1896 = vpop.f32.mrb[0].mxu0
      %v1897 = vadd.f32 0.0, %v1896
      %v1898 = vpop.f32.mrb[0].mxu0
      %1899 = vdwg.mxu0
      %v1900 = vadd.f32 %v1752, %v1838
      %v1901 = vadd.f32 %v1753, %v1841
      %v1902 = vadd.f32 %v1754, %v1846
      %v1903 = vadd.f32 %v1755, %v1849
      %v1904 = vadd.f32 %v1756, %v1854
      %v1905 = vadd.f32 %v1757, %v1857
      %v1906 = vadd.f32 %v1758, %v1862
      %v1907 = vadd.f32 %v1759, %v1865
      %v1908 = vadd.f32 %v1760, %v1870
      %v1909 = vadd.f32 %v1761, %v1873
      %v1910 = vadd.f32 %v1762, %v1878
      %v1911 = vadd.f32 %v1763, %v1881
      %v1912 = vadd.f32 %v1764, %v1886
      %v1913 = vadd.f32 %v1765, %v1889
      %v1914 = vadd.f32 %v1766, %v1894
      %v1915 = vadd.f32 %v1767, %v1897
      %v1917 = vrot.slane %v488, 5
      %v1918 = vrot.slane %v1917, 4
      %v1919 = vrot.slane %v489, 5
      %v1920 = vsel %vm1013, %v1918, %v1919
      %v1921 = vrot.slane %v1919, 4
      %v1922 = vrot.slane %v490, 5
      %v1923 = vsel %vm1013, %v1921, %v1922
      %s1924 = scalar_lea.vmem %s3, 16
      %v1925 = vld [vmem:[%s1924] sm:$0x3]
      %v1926 = vunpack.c.l.b16 %v1920
      %v1927 = vunpack.c.l.b16 %v1923
      %v1928 = vpack.c.b16 %v1927, %v1926
      %v1930 = vsel %vm713, %v1928, 0
      %v1933 = vsel %vm738, %v1925, 0
      %1935 = vmatprep.subr.bf16.mxu0 0
      %1936 = vmatpush1.bf16.msra.mxu0 %v1933
      %1937 = vmatprep.subr.bf16.mxu0 0
      %1938 = vmatpush1.bf16.msra.mxu0 0
      %1939 = vmatprep.subr.bf16.mxu0 0
      %1940 = vmatpush1.bf16.msra.mxu0 0
      %1941 = vmatprep.subr.bf16.mxu0 0
      %1942 = vmatpush1.bf16.msra.mxu0 0
      %1943 = vmatprep.subr.bf16.mxu0 0
      %1944 = vmatpush1.bf16.msra.mxu0 0
      %1945 = vmatprep.subr.bf16.mxu0 0
      %1946 = vmatpush1.bf16.msra.mxu0 0
      %1947 = vmatprep.subr.bf16.mxu0 0
      %1948 = vmatpush1.bf16.msra.mxu0 0
      %1949 = vmatprep.subr.bf16.mxu0 0
      %1950 = vmatpush1.bf16.msra.mxu0 0
      %1951 = vmatprep.subr.bf16.mxu0 0
      %1952 = vmatpush1.bf16.msra.mxu0 0
      %1953 = vmatprep.subr.bf16.mxu0 0
      %1954 = vmatpush1.bf16.msra.mxu0 0
      %1955 = vmatprep.subr.bf16.mxu0 0
      %1956 = vmatpush1.bf16.msra.mxu0 0
      %1957 = vmatprep.subr.bf16.mxu0 0
      %1958 = vmatpush1.bf16.msra.mxu0 0
      %1959 = vmatprep.subr.bf16.mxu0 0
      %1960 = vmatpush1.bf16.msra.mxu0 0
      %1961 = vmatprep.subr.bf16.mxu0 0
      %1962 = vmatpush1.bf16.msra.mxu0 0
      %1963 = vmatprep.subr.bf16.mxu0 0
      %1964 = vmatpush1.bf16.msra.mxu0 0
      %1965 = vmatprep.subr.bf16.mxu0 0
      %1966 = vmatpush1.bf16.msra.mxu0 0
      %1967 = vmatprep.mubr.bf16.mxu0 0
      %1968 = vmatmul.mubr.bf16.gmra.mrb[0].mxu0 %v1103
      %v1969 = vpop.f32.mrb[0].mxu0
      %v1970 = vadd.f32 0.0, %v1969
      %v1971 = vpop.f32.mrb[0].mxu0
      %v1972 = vpop.f32.mrb[0].mxu0
      %v1973 = vadd.f32 0.0, %v1972
      %v1974 = vpop.f32.mrb[0].mxu0
      %1975 = vmatprep.mubr.bf16.mxu0 0
      %1976 = vmatmul.mubr.bf16.gmra.mrb[0].mxu0 %v1106
      %v1977 = vpop.f32.mrb[0].mxu0
      %v1978 = vadd.f32 0.0, %v1977
      %v1979 = vpop.f32.mrb[0].mxu0
      %v1980 = vpop.f32.mrb[0].mxu0
      %v1981 = vadd.f32 0.0, %v1980
      %v1982 = vpop.f32.mrb[0].mxu0
      %1983 = vmatprep.mubr.bf16.mxu0 0
      %1984 = vmatmul.mubr.bf16.gmra.mrb[0].mxu0 %v1109
      %v1985 = vpop.f32.mrb[0].mxu0
      %v1986 = vadd.f32 0.0, %v1985
      %v1987 = vpop.f32.mrb[0].mxu0
      %v1988 = vpop.f32.mrb[0].mxu0
      %v1989 = vadd.f32 0.0, %v1988
      %v1990 = vpop.f32.mrb[0].mxu0
      %1991 = vmatprep.mubr.bf16.mxu0 0
      %1992 = vmatmul.mubr.bf16.gmra.mrb[0].mxu0 %v1112
      %v1993 = vpop.f32.mrb[0].mxu0
      %v1994 = vadd.f32 0.0, %v1993
      %v1995 = vpop.f32.mrb[0].mxu0
      %v1996 = vpop.f32.mrb[0].mxu0
      %v1997 = vadd.f32 0.0, %v1996
      %v1998 = vpop.f32.mrb[0].mxu0
      %1999 = vmatprep.mubr.bf16.mxu0 0
      %2000 = vmatmul.mubr.bf16.gmra.mrb[0].mxu0 %v1115
      %v2001 = vpop.f32.mrb[0].mxu0
      %v2002 = vadd.f32 0.0, %v2001
      %v2003 = vpop.f32.mrb[0].mxu0
      %v2004 = vpop.f32.mrb[0].mxu0
      %v2005 = vadd.f32 0.0, %v2004
      %v2006 = vpop.f32.mrb[0].mxu0
      %2007 = vmatprep.mubr.bf16.mxu0 0
      %2008 = vmatmul.mubr.bf16.gmra.mrb[0].mxu0 %v1118
      %v2009 = vpop.f32.mrb[0].mxu0
      %v2010 = vadd.f32 0.0, %v2009
      %v2011 = vpop.f32.mrb[0].mxu0
      %v2012 = vpop.f32.mrb[0].mxu0
      %v2013 = vadd.f32 0.0, %v2012
      %v2014 = vpop.f32.mrb[0].mxu0
      %2015 = vmatprep.mubr.bf16.mxu0 0
      %2016 = vmatmul.mubr.bf16.gmra.mrb[0].mxu0 %v1524
      %v2017 = vpop.f32.mrb[0].mxu0
      %v2018 = vadd.f32 0.0, %v2017
      %v2019 = vpop.f32.mrb[0].mxu0
      %v2020 = vpop.f32.mrb[0].mxu0
      %v2021 = vadd.f32 0.0, %v2020
      %v2022 = vpop.f32.mrb[0].mxu0
      %2023 = vmatprep.mubr.bf16.mxu0 0
      %2024 = vmatmul.mubr.bf16.gmra.mrb[0].mxu0 %v1930
      %v2025 = vpop.f32.mrb[0].mxu0
      %v2026 = vadd.f32 0.0, %v2025
      %v2027 = vpop.f32.mrb[0].mxu0
      %v2028 = vpop.f32.mrb[0].mxu0
      %v2029 = vadd.f32 0.0, %v2028
      %v2030 = vpop.f32.mrb[0].mxu0
      %2031 = vdwg.mxu0
      %v2032 = vadd.f32 %v1900, %v1970
      %v2033 = vadd.f32 %v1901, %v1973
      %v2034 = vadd.f32 %v1902, %v1978
      %v2035 = vadd.f32 %v1903, %v1981
      %v2036 = vadd.f32 %v1904, %v1986
      %v2037 = vadd.f32 %v1905, %v1989
      %v2038 = vadd.f32 %v1906, %v1994
      %v2039 = vadd.f32 %v1907, %v1997
      %v2040 = vadd.f32 %v1908, %v2002
      %v2041 = vadd.f32 %v1909, %v2005
      %v2042 = vadd.f32 %v1910, %v2010
      %v2043 = vadd.f32 %v1911, %v2013
      %v2044 = vadd.f32 %v1912, %v2018
      %v2045 = vadd.f32 %v1913, %v2021
      %v2046 = vadd.f32 %v1914, %v2026
      %v2047 = vadd.f32 %v1915, %v2029
      %v2048 = vld [vmem:[%s4] sm:$0x1]
      %v2050 = vlaneseq
      %v2051 = vshrl.u32 %v2050, 7
      %v2052 = vsub.s32 0, %v2051
      %v2053 = vrot.slane %v2048, %v2052
      %v2055 = vmul.f32 %v2032, %v2053
      %v2056 = vmul.f32 %v2033, %v2053
      %v2057 = vmul.f32 %v2034, %v2053
      %v2058 = vmul.f32 %v2035, %v2053
      %v2059 = vmul.f32 %v2036, %v2053
      %v2060 = vmul.f32 %v2037, %v2053
      %v2061 = vmul.f32 %v2038, %v2053
      %v2062 = vmul.f32 %v2039, %v2053
      %v2063 = vmul.f32 %v2040, %v2053
      %v2064 = vmul.f32 %v2041, %v2053
      %v2065 = vmul.f32 %v2042, %v2053
      %v2066 = vmul.f32 %v2043, %v2053
      %v2067 = vmul.f32 %v2044, %v2053
      %v2068 = vmul.f32 %v2045, %v2053
      %v2069 = vmul.f32 %v2046, %v2053
      %v2070 = vmul.f32 %v2047, %v2053
      %v2071 = vld [vmem:[%s5] sm:$0x1]
      %v2073 = vlaneseq
      %v2074 = vshrl.u32 %v2073, 7
      %v2075 = vsub.s32 0, %v2074
      %v2076 = vrot.slane %v2071, %v2075
      %v2078 = vadd.f32 %v2055, %v2076
      %v2079 = vadd.f32 %v2056, %v2076
      %v2080 = vadd.f32 %v2057, %v2076
      %v2081 = vadd.f32 %v2058, %v2076
      %v2082 = vadd.f32 %v2059, %v2076
      %v2083 = vadd.f32 %v2060, %v2076
      %v2084 = vadd.f32 %v2061, %v2076
      %v2085 = vadd.f32 %v2062, %v2076
      %v2086 = vadd.f32 %v2063, %v2076
      %v2087 = vadd.f32 %v2064, %v2076
      %v2088 = vadd.f32 %v2065, %v2076
      %v2089 = vadd.f32 %v2066, %v2076
      %v2090 = vadd.f32 %v2067, %v2076
      %v2091 = vadd.f32 %v2068, %v2076
      %v2092 = vadd.f32 %v2069, %v2076
      %v2093 = vadd.f32 %v2070, %v2076
      %v2094 = vmax.f32 %v2078, 0.0
      %v2095 = vmax.f32 %v2079, 0.0
      %v2096 = vmax.f32 %v2080, 0.0
      %v2097 = vmax.f32 %v2081, 0.0
      %v2098 = vmax.f32 %v2082, 0.0
      %v2099 = vmax.f32 %v2083, 0.0
      %v2100 = vmax.f32 %v2084, 0.0
      %v2101 = vmax.f32 %v2085, 0.0
      %v2102 = vmax.f32 %v2086, 0.0
      %v2103 = vmax.f32 %v2087, 0.0
      %v2104 = vmax.f32 %v2088, 0.0
      %v2105 = vmax.f32 %v2089, 0.0
      %v2106 = vmax.f32 %v2090, 0.0
      %v2107 = vmax.f32 %v2091, 0.0
      %v2108 = vmax.f32 %v2092, 0.0
      %v2109 = vmax.f32 %v2093, 0.0
      %2110 = vst.msk [vmem:[%s418] sm:$0xff] %vm713, %v2094
      %2111 = vst.msk [vmem:[%s418 + $0x8] sm:$0xff] %vm713, %v2095
      %2112 = vst.msk [vmem:[%s418 + $0x10] sm:$0xff] %vm713, %v2096
      %2113 = vst.msk [vmem:[%s418 + $0x18] sm:$0xff] %vm713, %v2097
      %2114 = vst.msk [vmem:[%s418 + $0x20] sm:$0xff] %vm713, %v2098
      %2115 = vst.msk [vmem:[%s418 + $0x28] sm:$0xff] %vm713, %v2099
      %2116 = vst.msk [vmem:[%s418 + $0x30] sm:$0xff] %vm713, %v2100
      %2117 = vst.msk [vmem:[%s418 + $0x38] sm:$0xff] %vm713, %v2101
      %2118 = vst.msk [vmem:[%s418 + $0x40] sm:$0xff] %vm713, %v2102
      %2119 = vst.msk [vmem:[%s418 + $0x48] sm:$0xff] %vm713, %v2103
      %2120 = vst.msk [vmem:[%s418 + $0x50] sm:$0xff] %vm713, %v2104
      %2121 = vst.msk [vmem:[%s418 + $0x58] sm:$0xff] %vm713, %v2105
      %2122 = vst.msk [vmem:[%s418 + $0x60] sm:$0xff] %vm713, %v2106
      %2123 = vst.msk [vmem:[%s418 + $0x68] sm:$0xff] %vm713, %v2107
      %2124 = vst.msk [vmem:[%s418 + $0x70] sm:$0xff] %vm713, %v2108
      %2125 = vst.msk [vmem:[%s418 + $0x78] sm:$0xff] %vm713, %v2109
      %s2126 = smul.u32 8, %s22
      %p2127 = scmp.lt.s32.totalorder %s21, 1
      %s2128 = scalar_select %p2127, %s21, 1
      %p2129 = scmp.lt.s32.totalorder %s2126, 15
      %s2130 = scalar_select %p2129, %s2126, 15
      %s2131 = smul.addr %s2130, 2
      %s2132 = smul.addr %s2128, 32
      %s2133 = sadd.s32 %s2131, %s2132
      %s2134 = smul.addr %s2133, 8
      %s2135 = scalar_lea.vmem %s6, %s2134
      // Predicated region
      $region45: #{_lambda_.5} parent=43 // pred_check
        %p2136 = pneg %p212
      $region46: #{_lambda_.5} parent=43 // pred_check_branch
        %2138 = sbr.rel (%p2136) target = $region48
      $region47: #{_lambda_.5} parent=43 // pred_region
        %s2139 = smul.u32 8, %s22
      $region48: #{_lambda_.5} parent=43 // pred_fallthru
        _
    $region44: #{_lambda_.5} parent=5 // pred_fallthru
      _
    %p2140 = scmp.le.s32.totalorder 2, %s12
    // Predicated region
    $region49: #{_lambda_.5} parent=5 // pred_check
      %p2141 = pneg %p2140
    $region50: #{_lambda_.5} parent=5 // pred_check_branch
      %2143 = sbr.rel (%p2141) target = $region52
    $region51: #{_lambda_.5} parent=5 // pred_region
      %s2144 = ssub.s32 %s12, 2
      // Predicated region
      $region53: #{_lambda_.5} parent=51 // pred_check
        %p2145 = pneg %p218
      $region54: #{_lambda_.5} parent=51 // pred_check_branch
        %2147 = sbr.rel (%p2145) target = $region56
      $region55: #{_lambda_.5} parent=51 // pred_region
        %s2148 = smul.u32 8, %s24
        %p2149 = scmp.lt.s32.totalorder %s23, 1
        %s2150 = scalar_select %p2149, %s23, 1
        %p2151 = scmp.lt.s32.totalorder %s2148, 15
        %s2152 = scalar_select %p2151, %s2148, 15
        %s2153 = smul.addr %s2152, 2
        %s2154 = smul.addr %s2150, 32
        %s2155 = sadd.s32 %s2153, %s2154
        %s2156 = smul.addr %s2155, 8
        %s2157 = scalar_lea.vmem %s6, %s2156
      $region56: #{_lambda_.5} parent=51 // pred_fallthru
        _
    $region52: #{_lambda_.5} parent=5 // pred_fallthru
      _
  $region6: #{_lambda_.5} parent=0 // loop_footer
    %s16 = sadd.s32 1, %s12
  $region7: #{_lambda_.5} parent=0 // loop_footer_branch
    %11 = sbr.rel target = $region3
  $region8: #{_lambda_.5} parent=0 // loop_exit
    _

// kernel: _lambda_.4
$region0: #{_lambda_.4}
  #allocation0 [shape = 'u32[]', space=smem, size = 0x4, offset = 0x4, fixed_abs, tag = 'smem constant byte address 0x4 - core index']
  #allocation1 [shape = 'u32[144,128]{1,0:T(1,128)}', space=vmem, size = 0x12000, scoped, tag = 'internal scratch']
  %s0 = inlined_call_operand.vmem [shape: bf16[2,16,18,4], index: 0, kind: input, shape index: {}, may-alias: {0,1,2}]
  %s1 = inlined_call_operand.vmem [shape: bf16[2,16,18,4], index: 1, kind: input, shape index: {}, may-alias: {0,1,2}]
  %s2 = inlined_call_operand.vmem [shape: bf16[2,16,18,4], index: 2, kind: input, shape index: {}, may-alias: {0,1,2}]
  %s3 = inlined_call_operand.vmem [shape: bf16[2,16,18,4], index: 3, kind: input, shape index: {}, may-alias: {3,4,5}]
  %s4 = inlined_call_operand.vmem [shape: bf16[2,16,18,4], index: 4, kind: input, shape index: {}, may-alias: {3,4,5}]
  %s5 = inlined_call_operand.vmem [shape: bf16[2,16,18,4], index: 5, kind: input, shape index: {}, may-alias: {3,4,5}]
  %s6 = inlined_call_operand.vmem [shape: bf16[9,4,4], index: 6, kind: input, shape index: {}]
  %s7 = inlined_call_operand.vmem [shape: bf16[9,4,4], index: 7, kind: input, shape index: {}]
  %s8 = inlined_call_operand.vmem [shape: f32[1,4], index: 8, kind: input, shape index: {}]
  %s9 = inlined_call_operand.vmem [shape: f32[1,4], index: 9, kind: input, shape index: {}]
  %s10 = inlined_call_operand.vmem [shape: bf16[2,16,16,4], index: 10, kind: output, shape index: {}]
  %s11 = sld [smem:[#allocation0]]
  $region73: #{_lambda_.4} parent=0
    _
  %s13 = ssub.s32 1, %s11
  %s14 = scalar_select 0, %s13, %s11
  loop: start=0, step=1, limit=6
  $region2: #{_lambda_.4} parent=0 // loop_pre_header
    _
  $region3: #{_lambda_.4} parent=0 // loop_header
    %s16 = sphi 0, %s20
    %p17 = scmp.ge.s32.totalorder %s16, 6
    %s23 = sphi 0, %s35
    %s24 = sphi 0, %s31
    %s25 = sphi 0, %s23
    %s26 = sphi 0, %s24
    %s27 = sphi 0, %s25
    %s28 = sphi 0, %s26
    %s40 = sphi 0, %s42
    %s43 = sphi 0, %s40
    %s44 = sphi 0, %s43
    %s60 = sphi 0, %s44
    %s76 = sphi 0, %s78
    %s79 = sphi 0, %s76
    %s80 = sphi 0, %s79
    %s96 = sphi 0, %s80
    %s112 = sphi 0, %s114
    %s115 = sphi 0, %s112
    %s116 = sphi 0, %s115
    %s132 = sphi 0, %s116
    %s140 = sphi 0, %s142
    %s143 = sphi 0, %s140
    %s144 = sphi 0, %s143
    %s160 = sphi 0, %s144
    %s176 = sphi 0, %s178
    %s179 = sphi 0, %s176
    %s180 = sphi 0, %s179
    %s196 = sphi 0, %s180
    %s212 = sphi 0, %s214
    %s215 = sphi 0, %s212
    %s216 = sphi 0, %s215
    %s232 = sphi 0, %s216
    %s236 = sphi 0, %s236
    %s238 = sphi 0, %s236
    %s239 = sphi 0, %s238
    %s253 = sphi 0, %s239
    %s257 = sphi 0, %s257
    %s259 = sphi 0, %s257
    %s260 = sphi 0, %s259
    %s274 = sphi 0, %s260
    %s278 = sphi 0, %s278
    %s280 = sphi 0, %s278
    %s281 = sphi 0, %s280
    %s295 = sphi 0, %s281
    %s299 = sphi 0, %s299
    %s301 = sphi 0, %s299
    %s302 = sphi 0, %s301
    %s316 = sphi 0, %s302
    %s324 = sphi 0, %s326
    %s327 = sphi 0, %s324
    %s328 = sphi 0, %s327
    %s344 = sphi 0, %s328
  $region4: #{_lambda_.4} parent=0 // loop_header_branch
    %19 = sbr.rel (%p17) target = $region8
  $region5: #{_lambda_.4} parent=0 // loop_body
    %s21 = ssub.s32 %s16, 1
    %s22 = ssub.s32 %s16, 2
    %s29 = sadd.s32 1, %s24
    %p30 = scmp.ge.s32.totalorder %s29, 2
    %s31 = scalar_select %p30, 0, %s29
    %s32 = sadd.s32 1, %s23
    %s33 = scalar_select %p30, %s32, %s23
    %p34 = scmp.ge.s32.totalorder %s33, 2
    %s35 = scalar_select %p34, 0, %s33
    %s36 = ssub.s32 %s23, %s35
    %s37 = ssub.s32 %s24, %s31
    %s38 = sor.u32 %s36, %s37
    %p39 = scmp.eq.s32.totalorder %s38, 0
    %s41 = sadd.s32 %s40, 1
    %s42 = scalar_select %p39, %s40, %s41
    %p45 = pneg %p39
    %p46 = scmp.eq.s32.totalorder %s16, 3
    %p47 = por %p45, %p46
    %p48 = scmp.ne.s32.totalorder %s40, %s43
    %p49 = scmp.eq.s32.totalorder %s16, 0
    %p50 = por %p48, %p49
    %p51 = scmp.ne.s32.totalorder %s40, %s43
    %p52 = scmp.eq.s32.totalorder %s21, 3
    %p53 = por %p51, %p52
    %p54 = scmp.ne.s32.totalorder %s43, %s44
    %p55 = scmp.eq.s32.totalorder %s21, 0
    %p56 = por %p54, %p55
    %p57 = scmp.ne.s32.totalorder %s43, %s44
    %p58 = scmp.eq.s32.totalorder %s22, 3
    %p59 = por %p57, %p58
    %p61 = scmp.ne.s32.totalorder %s44, %s60
    %p62 = scmp.eq.s32.totalorder %s22, 0
    %p63 = por %p61, %p62
    %s64 = smul.u32 %s24, 8
    %s65 = ssub.s32 %s64, 1
    %p66 = scmp.gt.s32.totalorder %s65, 0
    %s67 = scalar_select %p66, %s65, 0
    %s68 = smul.u32 %s31, 8
    %s69 = ssub.s32 %s68, 1
    %p70 = scmp.gt.s32.totalorder %s69, 0
    %s71 = scalar_select %p70, %s69, 0
    %s72 = ssub.s32 %s23, %s35
    %s73 = ssub.s32 %s67, %s71
    %s74 = sor.u32 %s72, %s73
    %p75 = scmp.eq.s32.totalorder %s74, 0
    %s77 = sadd.s32 %s76, 1
    %s78 = scalar_select %p75, %s76, %s77
    %p81 = pneg %p75
    %p82 = scmp.eq.s32.totalorder %s16, 3
    %p83 = por %p81, %p82
    %p84 = scmp.ne.s32.totalorder %s76, %s79
    %p85 = scmp.eq.s32.totalorder %s16, 0
    %p86 = por %p84, %p85
    %p87 = scmp.ne.s32.totalorder %s76, %s79
    %p88 = scmp.eq.s32.totalorder %s21, 3
    %p89 = por %p87, %p88
    %p90 = scmp.ne.s32.totalorder %s79, %s80
    %p91 = scmp.eq.s32.totalorder %s21, 0
    %p92 = por %p90, %p91
    %p93 = scmp.ne.s32.totalorder %s79, %s80
    %p94 = scmp.eq.s32.totalorder %s22, 3
    %p95 = por %p93, %p94
    %p97 = scmp.ne.s32.totalorder %s80, %s96
    %p98 = scmp.eq.s32.totalorder %s22, 0
    %p99 = por %p97, %p98
    %s100 = smul.u32 %s24, 8
    %s101 = sadd.s32 %s100, 8
    %p102 = scmp.lt.s32.totalorder %s101, 15
    %s103 = scalar_select %p102, %s101, 15
    %s104 = smul.u32 %s31, 8
    %s105 = sadd.s32 %s104, 8
    %p106 = scmp.lt.s32.totalorder %s105, 15
    %s107 = scalar_select %p106, %s105, 15
    %s108 = ssub.s32 %s23, %s35
    %s109 = ssub.s32 %s103, %s107
    %s110 = sor.u32 %s108, %s109
    %p111 = scmp.eq.s32.totalorder %s110, 0
    %s113 = sadd.s32 %s112, 1
    %s114 = scalar_select %p111, %s112, %s113
    %p117 = pneg %p111
    %p118 = scmp.eq.s32.totalorder %s16, 3
    %p119 = por %p117, %p118
    %p120 = scmp.ne.s32.totalorder %s112, %s115
    %p121 = scmp.eq.s32.totalorder %s16, 0
    %p122 = por %p120, %p121
    %p123 = scmp.ne.s32.totalorder %s112, %s115
    %p124 = scmp.eq.s32.totalorder %s21, 3
    %p125 = por %p123, %p124
    %p126 = scmp.ne.s32.totalorder %s115, %s116
    %p127 = scmp.eq.s32.totalorder %s21, 0
    %p128 = por %p126, %p127
    %p129 = scmp.ne.s32.totalorder %s115, %s116
    %p130 = scmp.eq.s32.totalorder %s22, 3
    %p131 = por %p129, %p130
    %p133 = scmp.ne.s32.totalorder %s116, %s132
    %p134 = scmp.eq.s32.totalorder %s22, 0
    %p135 = por %p133, %p134
    %s136 = ssub.s32 %s23, %s35
    %s137 = ssub.s32 %s24, %s31
    %s138 = sor.u32 %s136, %s137
    %p139 = scmp.eq.s32.totalorder %s138, 0
    %s141 = sadd.s32 %s140, 1
    %s142 = scalar_select %p139, %s140, %s141
    %p145 = pneg %p139
    %p146 = scmp.eq.s32.totalorder %s16, 3
    %p147 = por %p145, %p146
    %p148 = scmp.ne.s32.totalorder %s140, %s143
    %p149 = scmp.eq.s32.totalorder %s16, 0
    %p150 = por %p148, %p149
    %p151 = scmp.ne.s32.totalorder %s140, %s143
    %p152 = scmp.eq.s32.totalorder %s21, 3
    %p153 = por %p151, %p152
    %p154 = scmp.ne.s32.totalorder %s143, %s144
    %p155 = scmp.eq.s32.totalorder %s21, 0
    %p156 = por %p154, %p155
    %p157 = scmp.ne.s32.totalorder %s143, %s144
    %p158 = scmp.eq.s32.totalorder %s22, 3
    %p159 = por %p157, %p158
    %p161 = scmp.ne.s32.totalorder %s144, %s160
    %p162 = scmp.eq.s32.totalorder %s22, 0
    %p163 = por %p161, %p162
    %s164 = smul.u32 %s24, 8
    %s165 = ssub.s32 %s164, 1
    %p166 = scmp.gt.s32.totalorder %s165, 0
    %s167 = scalar_select %p166, %s165, 0
    %s168 = smul.u32 %s31, 8
    %s169 = ssub.s32 %s168, 1
    %p170 = scmp.gt.s32.totalorder %s169, 0
    %s171 = scalar_select %p170, %s169, 0
    %s172 = ssub.s32 %s23, %s35
    %s173 = ssub.s32 %s167, %s171
    %s174 = sor.u32 %s172, %s173
    %p175 = scmp.eq.s32.totalorder %s174, 0
    %s177 = sadd.s32 %s176, 1
    %s178 = scalar_select %p175, %s176, %s177
    %p181 = pneg %p175
    %p182 = scmp.eq.s32.totalorder %s16, 3
    %p183 = por %p181, %p182
    %p184 = scmp.ne.s32.totalorder %s176, %s179
    %p185 = scmp.eq.s32.totalorder %s16, 0
    %p186 = por %p184, %p185
    %p187 = scmp.ne.s32.totalorder %s176, %s179
    %p188 = scmp.eq.s32.totalorder %s21, 3
    %p189 = por %p187, %p188
    %p190 = scmp.ne.s32.totalorder %s179, %s180
    %p191 = scmp.eq.s32.totalorder %s21, 0
    %p192 = por %p190, %p191
    %p193 = scmp.ne.s32.totalorder %s179, %s180
    %p194 = scmp.eq.s32.totalorder %s22, 3
    %p195 = por %p193, %p194
    %p197 = scmp.ne.s32.totalorder %s180, %s196
    %p198 = scmp.eq.s32.totalorder %s22, 0
    %p199 = por %p197, %p198
    %s200 = smul.u32 %s24, 8
    %s201 = sadd.s32 %s200, 8
    %p202 = scmp.lt.s32.totalorder %s201, 15
    %s203 = scalar_select %p202, %s201, 15
    %s204 = smul.u32 %s31, 8
    %s205 = sadd.s32 %s204, 8
    %p206 = scmp.lt.s32.totalorder %s205, 15
    %s207 = scalar_select %p206, %s205, 15
    %s208 = ssub.s32 %s23, %s35
    %s209 = ssub.s32 %s203, %s207
    %s210 = sor.u32 %s208, %s209
    %p211 = scmp.eq.s32.totalorder %s210, 0
    %s213 = sadd.s32 %s212, 1
    %s214 = scalar_select %p211, %s212, %s213
    %p217 = pneg %p211
    %p218 = scmp.eq.s32.totalorder %s16, 3
    %p219 = por %p217, %p218
    %p220 = scmp.ne.s32.totalorder %s212, %s215
    %p221 = scmp.eq.s32.totalorder %s16, 0
    %p222 = por %p220, %p221
    %p223 = scmp.ne.s32.totalorder %s212, %s215
    %p224 = scmp.eq.s32.totalorder %s21, 3
    %p225 = por %p223, %p224
    %p226 = scmp.ne.s32.totalorder %s215, %s216
    %p227 = scmp.eq.s32.totalorder %s21, 0
    %p228 = por %p226, %p227
    %p229 = scmp.ne.s32.totalorder %s215, %s216
    %p230 = scmp.eq.s32.totalorder %s22, 3
    %p231 = por %p229, %p230
    %p233 = scmp.ne.s32.totalorder %s216, %s232
    %p234 = scmp.eq.s32.totalorder %s22, 0
    %p235 = por %p233, %p234
    %s237 = sadd.s32 %s236, 1
    %p240 = scmp.eq.s32.totalorder %s16, 3
    %p241 = scmp.ne.s32.totalorder %s236, %s238
    %p242 = scmp.eq.s32.totalorder %s16, 0
    %p243 = por %p241, %p242
    %p244 = scmp.ne.s32.totalorder %s236, %s238
    %p245 = scmp.eq.s32.totalorder %s21, 3
    %p246 = por %p244, %p245
    %p247 = scmp.ne.s32.totalorder %s238, %s239
    %p248 = scmp.eq.s32.totalorder %s21, 0
    %p249 = por %p247, %p248
    %p250 = scmp.ne.s32.totalorder %s238, %s239
    %p251 = scmp.eq.s32.totalorder %s22, 3
    %p252 = por %p250, %p251
    %p254 = scmp.ne.s32.totalorder %s239, %s253
    %p255 = scmp.eq.s32.totalorder %s22, 0
    %p256 = por %p254, %p255
    %s258 = sadd.s32 %s257, 1
    %p261 = scmp.eq.s32.totalorder %s16, 3
    %p262 = scmp.ne.s32.totalorder %s257, %s259
    %p263 = scmp.eq.s32.totalorder %s16, 0
    %p264 = por %p262, %p263
    %p265 = scmp.ne.s32.totalorder %s257, %s259
    %p266 = scmp.eq.s32.totalorder %s21, 3
    %p267 = por %p265, %p266
    %p268 = scmp.ne.s32.totalorder %s259, %s260
    %p269 = scmp.eq.s32.totalorder %s21, 0
    %p270 = por %p268, %p269
    %p271 = scmp.ne.s32.totalorder %s259, %s260
    %p272 = scmp.eq.s32.totalorder %s22, 3
    %p273 = por %p271, %p272
    %p275 = scmp.ne.s32.totalorder %s260, %s274
    %p276 = scmp.eq.s32.totalorder %s22, 0
    %p277 = por %p275, %p276
    %s279 = sadd.s32 %s278, 1
    %p282 = scmp.eq.s32.totalorder %s16, 3
    %p283 = scmp.ne.s32.totalorder %s278, %s280
    %p284 = scmp.eq.s32.totalorder %s16, 0
    %p285 = por %p283, %p284
    %p286 = scmp.ne.s32.totalorder %s278, %s280
    %p287 = scmp.eq.s32.totalorder %s21, 3
    %p288 = por %p286, %p287
    %p289 = scmp.ne.s32.totalorder %s280, %s281
    %p290 = scmp.eq.s32.totalorder %s21, 0
    %p291 = por %p289, %p290
    %p292 = scmp.ne.s32.totalorder %s280, %s281
    %p293 = scmp.eq.s32.totalorder %s22, 3
    %p294 = por %p292, %p293
    %p296 = scmp.ne.s32.totalorder %s281, %s295
    %p297 = scmp.eq.s32.totalorder %s22, 0
    %p298 = por %p296, %p297
    %s300 = sadd.s32 %s299, 1
    %p303 = scmp.eq.s32.totalorder %s16, 3
    %p304 = scmp.ne.s32.totalorder %s299, %s301
    %p305 = scmp.eq.s32.totalorder %s16, 0
    %p306 = por %p304, %p305
    %p307 = scmp.ne.s32.totalorder %s299, %s301
    %p308 = scmp.eq.s32.totalorder %s21, 3
    %p309 = por %p307, %p308
    %p310 = scmp.ne.s32.totalorder %s301, %s302
    %p311 = scmp.eq.s32.totalorder %s21, 0
    %p312 = por %p310, %p311
    %p313 = scmp.ne.s32.totalorder %s301, %s302
    %p314 = scmp.eq.s32.totalorder %s22, 3
    %p315 = por %p313, %p314
    %p317 = scmp.ne.s32.totalorder %s302, %s316
    %p318 = scmp.eq.s32.totalorder %s22, 0
    %p319 = por %p317, %p318
    %s320 = ssub.s32 %s23, %s35
    %s321 = ssub.s32 %s24, %s31
    %s322 = sor.u32 %s320, %s321
    %p323 = scmp.eq.s32.totalorder %s322, 0
    %s325 = sadd.s32 %s324, 1
    %s326 = scalar_select %p323, %s324, %s325
    %p329 = pneg %p323
    %p330 = scmp.eq.s32.totalorder %s16, 3
    %p331 = por %p329, %p330
    %p332 = scmp.ne.s32.totalorder %s324, %s327
    %p333 = scmp.eq.s32.totalorder %s16, 0
    %p334 = por %p332, %p333
    %p335 = scmp.ne.s32.totalorder %s324, %s327
    %p336 = scmp.eq.s32.totalorder %s21, 3
    %p337 = por %p335, %p336
    %p338 = scmp.ne.s32.totalorder %s327, %s328
    %p339 = scmp.eq.s32.totalorder %s21, 0
    %p340 = por %p338, %p339
    %p341 = scmp.ne.s32.totalorder %s327, %s328
    %p342 = scmp.eq.s32.totalorder %s22, 3
    %p343 = por %p341, %p342
    %p345 = scmp.ne.s32.totalorder %s328, %s344
    %p346 = scmp.eq.s32.totalorder %s22, 0
    %p347 = por %p345, %p346
    %p348 = scmp.le.s32.totalorder 1, %s16
    %p349 = scmp.lt.s32.totalorder %s16, 5
    %p350 = pnand %p348, %p349
    %p351 = pneg %p350
    // Predicated region
    $region9: #{_lambda_.4} parent=5 // pred_check
      _
    $region10: #{_lambda_.4} parent=5 // pred_check_branch
      %353 = sbr.rel (%p350) target = $region12
    $region11: #{_lambda_.4} parent=5 // pred_region
      %s354 = ssub.s32 %s16, 1
      // Predicated region
      $region13: #{_lambda_.4} parent=11 // pred_check
        %p355 = pneg %p249
      $region14: #{_lambda_.4} parent=11 // pred_check_branch
        %357 = sbr.rel (%p355) target = $region16
      $region15: #{_lambda_.4} parent=11 // pred_region
        _
      $region16: #{_lambda_.4} parent=11 // pred_fallthru
        _
      // Predicated region
      $region17: #{_lambda_.4} parent=11 // pred_check
        %p358 = pneg %p270
      $region18: #{_lambda_.4} parent=11 // pred_check_branch
        %360 = sbr.rel (%p358) target = $region20
      $region19: #{_lambda_.4} parent=11 // pred_region
        _
      $region20: #{_lambda_.4} parent=11 // pred_fallthru
        _
      // Predicated region
      $region21: #{_lambda_.4} parent=11 // pred_check
        %p361 = pneg %p291
      $region22: #{_lambda_.4} parent=11 // pred_check_branch
        %363 = sbr.rel (%p361) target = $region24
      $region23: #{_lambda_.4} parent=11 // pred_region
        _
      $region24: #{_lambda_.4} parent=11 // pred_fallthru
        _
      // Predicated region
      $region25: #{_lambda_.4} parent=11 // pred_check
        %p364 = pneg %p312
      $region26: #{_lambda_.4} parent=11 // pred_check_branch
        %366 = sbr.rel (%p364) target = $region28
      $region27: #{_lambda_.4} parent=11 // pred_region
        _
      $region28: #{_lambda_.4} parent=11 // pred_fallthru
        _
    $region12: #{_lambda_.4} parent=5 // pred_fallthru
      _
    %p367 = scmp.lt.s32.totalorder %s16, 4
    // Predicated region
    $region29: #{_lambda_.4} parent=5 // pred_check
      %p368 = pneg %p367
    $region30: #{_lambda_.4} parent=5 // pred_check_branch
      %370 = sbr.rel (%p368) target = $region32
    $region31: #{_lambda_.4} parent=5 // pred_region
      // Predicated region
      $region33: #{_lambda_.4} parent=31 // pred_check
        %p371 = pneg %p50
      $region34: #{_lambda_.4} parent=31 // pred_check_branch
        %373 = sbr.rel (%p371) target = $region36
      $region35: #{_lambda_.4} parent=31 // pred_region
        %s374 = smul.u32 8, %s24
        %p375 = scmp.lt.s32.totalorder %s23, 1
        %s376 = scalar_select %p375, %s23, 1
        %p377 = scmp.lt.s32.totalorder %s374, 15
        %s378 = scalar_select %p377, %s374, 15
        %s379 = smul.addr %s378, 3
        %s380 = smul.addr %s376, 48
        %s381 = sadd.s32 %s379, %s380
        %s382 = smul.addr %s381, 4
        %s383 = scalar_lea.vmem %s0, %s382
        %s384 = smul.u32 8, %s24
      $region36: #{_lambda_.4} parent=31 // pred_fallthru
        _
      // Predicated region
      $region37: #{_lambda_.4} parent=31 // pred_check
        %p385 = pneg %p86
      $region38: #{_lambda_.4} parent=31 // pred_check_branch
        %387 = sbr.rel (%p385) target = $region40
      $region39: #{_lambda_.4} parent=31 // pred_region
        %s388 = smul.u32 %s24, 8
        %s389 = ssub.s32 %s388, 1
        %p390 = scmp.gt.s32.totalorder %s389, 0
        %s391 = scalar_select %p390, %s389, 0
        %p392 = scmp.lt.s32.totalorder %s23, 1
        %s393 = scalar_select %p392, %s23, 1
        %p394 = scmp.lt.s32.totalorder %s391, 15
        %s395 = scalar_select %p394, %s391, 15
        %s396 = smul.addr %s395, 3
        %s397 = smul.addr %s393, 48
        %s398 = sadd.s32 %s396, %s397
        %s399 = smul.addr %s398, 4
        %s400 = scalar_lea.vmem %s1, %s399
        %s401 = smul.u32 %s24, 8
        %s402 = ssub.s32 %s401, 1
        %p403 = scmp.gt.s32.totalorder %s402, 0
        %s404 = scalar_select %p403, %s402, 0
      $region40: #{_lambda_.4} parent=31 // pred_fallthru
        _
      // Predicated region
      $region41: #{_lambda_.4} parent=31 // pred_check
        %p405 = pneg %p122
      $region42: #{_lambda_.4} parent=31 // pred_check_branch
        %407 = sbr.rel (%p405) target = $region44
      $region43: #{_lambda_.4} parent=31 // pred_region
        %s408 = smul.u32 %s24, 8
        %s409 = sadd.s32 %s408, 8
        %p410 = scmp.lt.s32.totalorder %s409, 15
        %s411 = scalar_select %p410, %s409, 15
        %p412 = scmp.lt.s32.totalorder %s23, 1
        %s413 = scalar_select %p412, %s23, 1
        %p414 = scmp.lt.s32.totalorder %s411, 15
        %s415 = scalar_select %p414, %s411, 15
        %s416 = smul.addr %s415, 3
        %s417 = smul.addr %s413, 48
        %s418 = sadd.s32 %s416, %s417
        %s419 = smul.addr %s418, 4
        %s420 = scalar_lea.vmem %s2, %s419
        %s421 = smul.u32 %s24, 8
        %s422 = sadd.s32 %s421, 8
        %p423 = scmp.lt.s32.totalorder %s422, 15
        %s424 = scalar_select %p423, %s422, 15
      $region44: #{_lambda_.4} parent=31 // pred_fallthru
        _
      // Predicated region
      $region45: #{_lambda_.4} parent=31 // pred_check
        %p425 = pneg %p150
      $region46: #{_lambda_.4} parent=31 // pred_check_branch
        %427 = sbr.rel (%p425) target = $region48
      $region47: #{_lambda_.4} parent=31 // pred_region
        %s428 = smul.u32 8, %s24
        %p429 = scmp.lt.s32.totalorder %s23, 1
        %s430 = scalar_select %p429, %s23, 1
        %p431 = scmp.lt.s32.totalorder %s428, 15
        %s432 = scalar_select %p431, %s428, 15
        %s433 = smul.addr %s432, 3
        %s434 = smul.addr %s430, 48
        %s435 = sadd.s32 %s433, %s434
        %s436 = smul.addr %s435, 4
        %s437 = scalar_lea.vmem %s3, %s436
        %s438 = smul.u32 8, %s24
      $region48: #{_lambda_.4} parent=31 // pred_fallthru
        _
      // Predicated region
      $region49: #{_lambda_.4} parent=31 // pred_check
        %p439 = pneg %p186
      $region50: #{_lambda_.4} parent=31 // pred_check_branch
        %441 = sbr.rel (%p439) target = $region52
      $region51: #{_lambda_.4} parent=31 // pred_region
        %s442 = smul.u32 %s24, 8
        %s443 = ssub.s32 %s442, 1
        %p444 = scmp.gt.s32.totalorder %s443, 0
        %s445 = scalar_select %p444, %s443, 0
        %p446 = scmp.lt.s32.totalorder %s23, 1
        %s447 = scalar_select %p446, %s23, 1
        %p448 = scmp.lt.s32.totalorder %s445, 15
        %s449 = scalar_select %p448, %s445, 15
        %s450 = smul.addr %s449, 3
        %s451 = smul.addr %s447, 48
        %s452 = sadd.s32 %s450, %s451
        %s453 = smul.addr %s452, 4
        %s454 = scalar_lea.vmem %s4, %s453
        %s455 = smul.u32 %s24, 8
        %s456 = ssub.s32 %s455, 1
        %p457 = scmp.gt.s32.totalorder %s456, 0
        %s458 = scalar_select %p457, %s456, 0
      $region52: #{_lambda_.4} parent=31 // pred_fallthru
        _
      // Predicated region
      $region53: #{_lambda_.4} parent=31 // pred_check
        %p459 = pneg %p222
      $region54: #{_lambda_.4} parent=31 // pred_check_branch
        %461 = sbr.rel (%p459) target = $region56
      $region55: #{_lambda_.4} parent=31 // pred_region
        %s462 = smul.u32 %s24, 8
        %s463 = sadd.s32 %s462, 8
        %p464 = scmp.lt.s32.totalorder %s463, 15
        %s465 = scalar_select %p464, %s463, 15
        %p466 = scmp.lt.s32.totalorder %s23, 1
        %s467 = scalar_select %p466, %s23, 1
        %p468 = scmp.lt.s32.totalorder %s465, 15
        %s469 = scalar_select %p468, %s465, 15
        %s470 = smul.addr %s469, 3
        %s471 = smul.addr %s467, 48
        %s472 = sadd.s32 %s470, %s471
        %s473 = smul.addr %s472, 4
        %s474 = scalar_lea.vmem %s5, %s473
        %s475 = smul.u32 %s24, 8
        %s476 = sadd.s32 %s475, 8
        %p477 = scmp.lt.s32.totalorder %s476, 15
        %s478 = scalar_select %p477, %s476, 15
      $region56: #{_lambda_.4} parent=31 // pred_fallthru
        _
    $region32: #{_lambda_.4} parent=5 // pred_fallthru
      _
    %p479 = scmp.le.s32.totalorder 1, %s16
    %p480 = scmp.lt.s32.totalorder %s16, 5
    %p481 = pnand %p479, %p480
    %p482 = pneg %p481
    // Predicated region
    $region57: #{_lambda_.4} parent=5 // pred_check
      _
    $region58: #{_lambda_.4} parent=5 // pred_check_branch
      %484 = sbr.rel (%p481) target = $region60
    $region59: #{_lambda_.4} parent=5 // pred_region
      %s485 = ssub.s32 %s16, 1
      %s486 = smul.u32 8, %s26
      %p487 = scmp.lt.s32.totalorder %s25, 1
      %s488 = scalar_select %p487, %s25, 1
      %p489 = scmp.lt.s32.totalorder %s486, 15
      %s490 = scalar_select %p489, %s486, 15
      %s491 = smul.addr %s490, 3
      %s492 = smul.addr %s488, 48
      %s493 = sadd.s32 %s491, %s492
      %s494 = smul.addr %s493, 4
      %s495 = scalar_lea.vmem %s0, %s494
      %p496 = pneg %p56
      %p497 = pneg %p53
      %s498 = smul.u32 %s26, 8
      %s499 = ssub.s32 %s498, 1
      %p500 = scmp.gt.s32.totalorder %s499, 0
      %s501 = scalar_select %p500, %s499, 0
      %p502 = scmp.lt.s32.totalorder %s25, 1
      %s503 = scalar_select %p502, %s25, 1
      %p504 = scmp.lt.s32.totalorder %s501, 15
      %s505 = scalar_select %p504, %s501, 15
      %s506 = smul.addr %s505, 3
      %s507 = smul.addr %s503, 48
      %s508 = sadd.s32 %s506, %s507
      %s509 = smul.addr %s508, 4
      %s510 = scalar_lea.vmem %s1, %s509
      %p511 = pneg %p92
      %p512 = pneg %p89
      %s513 = smul.u32 %s26, 8
      %s514 = sadd.s32 %s513, 8
      %p515 = scmp.lt.s32.totalorder %s514, 15
      %s516 = scalar_select %p515, %s514, 15
      %p517 = scmp.lt.s32.totalorder %s25, 1
      %s518 = scalar_select %p517, %s25, 1
      %p519 = scmp.lt.s32.totalorder %s516, 15
      %s520 = scalar_select %p519, %s516, 15
      %s521 = smul.addr %s520, 3
      %s522 = smul.addr %s518, 48
      %s523 = sadd.s32 %s521, %s522
      %s524 = smul.addr %s523, 4
      %s525 = scalar_lea.vmem %s2, %s524
      %p526 = pneg %p128
      %p527 = pneg %p125
      %s528 = smul.u32 8, %s26
      %p529 = scmp.lt.s32.totalorder %s25, 1
      %s530 = scalar_select %p529, %s25, 1
      %p531 = scmp.lt.s32.totalorder %s528, 15
      %s532 = scalar_select %p531, %s528, 15
      %s533 = smul.addr %s532, 3
      %s534 = smul.addr %s530, 48
      %s535 = sadd.s32 %s533, %s534
      %s536 = smul.addr %s535, 4
      %s537 = scalar_lea.vmem %s3, %s536
      %p538 = pneg %p156
      %p539 = pneg %p153
      %s540 = smul.u32 %s26, 8
      %s541 = ssub.s32 %s540, 1
      %p542 = scmp.gt.s32.totalorder %s541, 0
      %s543 = scalar_select %p542, %s541, 0
      %p544 = scmp.lt.s32.totalorder %s25, 1
      %s545 = scalar_select %p544, %s25, 1
      %p546 = scmp.lt.s32.totalorder %s543, 15
      %s547 = scalar_select %p546, %s543, 15
      %s548 = smul.addr %s547, 3
      %s549 = smul.addr %s545, 48
      %s550 = sadd.s32 %s548, %s549
      %s551 = smul.addr %s550, 4
      %s552 = scalar_lea.vmem %s4, %s551
      %p553 = pneg %p192
      %p554 = pneg %p189
      %s555 = smul.u32 %s26, 8
      %s556 = sadd.s32 %s555, 8
      %p557 = scmp.lt.s32.totalorder %s556, 15
      %s558 = scalar_select %p557, %s556, 15
      %p559 = scmp.lt.s32.totalorder %s25, 1
      %s560 = scalar_select %p559, %s25, 1
      %p561 = scmp.lt.s32.totalorder %s558, 15
      %s562 = scalar_select %p561, %s558, 15
      %s563 = smul.addr %s562, 3
      %s564 = smul.addr %s560, 48
      %s565 = sadd.s32 %s563, %s564
      %s566 = smul.addr %s565, 4
      %s567 = scalar_lea.vmem %s5, %s566
      %p568 = pneg %p228
      %p569 = pneg %p225
      %p570 = pneg %p249
      %p571 = pneg %p246
      %p572 = pneg %p270
      %p573 = pneg %p267
      %p574 = pneg %p291
      %p575 = pneg %p288
      %p576 = pneg %p312
      %p577 = pneg %p309
      %p578 = pneg %p340
      %p579 = pneg %p337
      %s580 = smul.u32 8, %s26
      %p581 = scmp.lt.s32.totalorder %s25, 1
      %s582 = scalar_select %p581, %s25, 1
      %p583 = scmp.lt.s32.totalorder %s580, 15
      %s584 = scalar_select %p583, %s580, 15
      %s585 = smul.addr %s584, 2
      %s586 = smul.addr %s582, 32
      %s587 = sadd.s32 %s585, %s586
      %s588 = smul.addr %s587, 4
      %s589 = scalar_lea.vmem %s10, %s588
      %s590 = smul.u32 8, %s26
      %p591 = scmp.lt.s32.totalorder %s25, 1
      %s592 = scalar_select %p591, %s25, 1
      %p593 = scmp.lt.s32.totalorder %s590, 15
      %s594 = scalar_select %p593, %s590, 15
      %s595 = smul.addr %s594, 3
      %s596 = smul.addr %s592, 48
      %s597 = sadd.s32 %s595, %s596
      %s598 = smul.addr %s597, 4
      %s599 = scalar_lea.vmem %s0, %s598
      %s600 = smul.u32 8, %s26
      %s601 = smul.u32 %s26, 8
      %s602 = ssub.s32 %s601, 1
      %p603 = scmp.gt.s32.totalorder %s602, 0
      %s604 = scalar_select %p603, %s602, 0
      %p605 = scmp.lt.s32.totalorder %s25, 1
      %s606 = scalar_select %p605, %s25, 1
      %p607 = scmp.lt.s32.totalorder %s604, 15
      %s608 = scalar_select %p607, %s604, 15
      %s609 = smul.addr %s608, 3
      %s610 = smul.addr %s606, 48
      %s611 = sadd.s32 %s609, %s610
      %s612 = smul.addr %s611, 4
      %s613 = scalar_lea.vmem %s1, %s612
      %s614 = smul.u32 %s26, 8
      %s615 = ssub.s32 %s614, 1
      %p616 = scmp.gt.s32.totalorder %s615, 0
      %s617 = scalar_select %p616, %s615, 0
      %s618 = smul.u32 %s26, 8
      %s619 = sadd.s32 %s618, 8
      %p620 = scmp.lt.s32.totalorder %s619, 15
      %s621 = scalar_select %p620, %s619, 15
      %p622 = scmp.lt.s32.totalorder %s25, 1
      %s623 = scalar_select %p622, %s25, 1
      %p624 = scmp.lt.s32.totalorder %s621, 15
      %s625 = scalar_select %p624, %s621, 15
      %s626 = smul.addr %s625, 3
      %s627 = smul.addr %s623, 48
      %s628 = sadd.s32 %s626, %s627
      %s629 = smul.addr %s628, 4
      %s630 = scalar_lea.vmem %s2, %s629
      %s631 = smul.u32 %s26, 8
      %s632 = sadd.s32 %s631, 8
      %p633 = scmp.lt.s32.totalorder %s632, 15
      %s634 = scalar_select %p633, %s632, 15
      %s635 = smul.u32 8, %s26
      %p636 = scmp.lt.s32.totalorder %s25, 1
      %s637 = scalar_select %p636, %s25, 1
      %p638 = scmp.lt.s32.totalorder %s635, 15
      %s639 = scalar_select %p638, %s635, 15
      %s640 = smul.addr %s639, 3
      %s641 = smul.addr %s637, 48
      %s642 = sadd.s32 %s640, %s641
      %s643 = smul.addr %s642, 4
      %s644 = scalar_lea.vmem %s3, %s643
      %s645 = smul.u32 8, %s26
      %s646 = smul.u32 %s26, 8
      %s647 = ssub.s32 %s646, 1
      %p648 = scmp.gt.s32.totalorder %s647, 0
      %s649 = scalar_select %p648, %s647, 0
      %p650 = scmp.lt.s32.totalorder %s25, 1
      %s651 = scalar_select %p650, %s25, 1
      %p652 = scmp.lt.s32.totalorder %s649, 15
      %s653 = scalar_select %p652, %s649, 15
      %s654 = smul.addr %s653, 3
      %s655 = smul.addr %s651, 48
      %s656 = sadd.s32 %s654, %s655
      %s657 = smul.addr %s656, 4
      %s658 = scalar_lea.vmem %s4, %s657
      %s659 = smul.u32 %s26, 8
      %s660 = ssub.s32 %s659, 1
      %p661 = scmp.gt.s32.totalorder %s660, 0
      %s662 = scalar_select %p661, %s660, 0
      %s663 = smul.u32 %s26, 8
      %s664 = sadd.s32 %s663, 8
      %p665 = scmp.lt.s32.totalorder %s664, 15
      %s666 = scalar_select %p665, %s664, 15
      %p667 = scmp.lt.s32.totalorder %s25, 1
      %s668 = scalar_select %p667, %s25, 1
      %p669 = scmp.lt.s32.totalorder %s666, 15
      %s670 = scalar_select %p669, %s666, 15
      %s671 = smul.addr %s670, 3
      %s672 = smul.addr %s668, 48
      %s673 = sadd.s32 %s671, %s672
      %s674 = smul.addr %s673, 4
      %s675 = scalar_lea.vmem %s5, %s674
      %s676 = smul.u32 %s26, 8
      %s677 = sadd.s32 %s676, 8
      %p678 = scmp.lt.s32.totalorder %s677, 15
      %s679 = scalar_select %p678, %s677, 15
      %s680 = smul.u32 8, %s26
      %p681 = scmp.lt.s32.totalorder %s25, 1
      %s682 = scalar_select %p681, %s25, 1
      %p683 = scmp.lt.s32.totalorder %s680, 15
      %s684 = scalar_select %p683, %s680, 15
      %s685 = smul.addr %s684, 2
      %s686 = smul.addr %s682, 32
      %s687 = sadd.s32 %s685, %s686
      %s688 = smul.addr %s687, 4
      %s689 = scalar_lea.vmem %s10, %s688
      %s690 = smul.u32 8, %s26
      %p692 = scmp.gt.s32.totalorder %s26, 0
      %s693 = scalar_select %p692, 1, 0
      %s694 = scvt.s32.f32 %s693
      %p696 = scmp.ne.f32.partialorder %s694, %s694
      %s697 = sshrl.u32 %s694, 16
      %s698 = sand.u32 %s697, 1
      %s699 = sadd.s32 32767, %s698
      %s700 = sadd.s32 %s694, %s699
      %s701 = sand.u32 %s700, 4294901760
      %s702 = scalar_select %p696, 2143289344, %s701
      %s704 = sshrl.u32 %s702, 16
      %p705 = scmp.lt.s32.totalorder %s26, 1
      %s706 = scalar_select %p705, 1, 0
      %s707 = scvt.s32.f32 %s706
      %p709 = scmp.ne.f32.partialorder %s707, %s707
      %s710 = sshrl.u32 %s707, 16
      %s711 = sand.u32 %s710, 1
      %s712 = sadd.s32 32767, %s711
      %s713 = sadd.s32 %s707, %s712
      %s714 = sand.u32 %s713, 4294901760
      %s715 = scalar_select %p709, 2143289344, %s714
      %s717 = sshrl.u32 %s715, 16
      %v718 = vld [vmem:[%s599] sm:$0xf]
      %v719 = vld [vmem:[%s599 + $0x4] sm:$0xf]
      %v720 = vld [vmem:[%s599 + $0x8] sm:$0x1]
      %v721 = vld [vmem:[%s599 + $0xc] sm:$0xf]
      %v722 = vld [vmem:[%s599 + $0x10] sm:$0xf]
      %v723 = vld [vmem:[%s599 + $0x14] sm:$0x1]
      %v724 = vld [vmem:[%s599 + $0x18] sm:$0xf]
      %v725 = vld [vmem:[%s599 + $0x1c] sm:$0xf]
      %v726 = vld [vmem:[%s599 + $0x20] sm:$0x1]
      %v727 = vld [vmem:[%s599 + $0x24] sm:$0xf]
      %v728 = vld [vmem:[%s599 + $0x28] sm:$0xf]
      %v729 = vld [vmem:[%s599 + $0x2c] sm:$0x1]
      %v730 = vld [vmem:[%s599 + $0x30] sm:$0xf]
      %v731 = vld [vmem:[%s599 + $0x34] sm:$0xf]
      %v732 = vld [vmem:[%s599 + $0x38] sm:$0x1]
      %v733 = vld [vmem:[%s599 + $0x3c] sm:$0xf]
      %v734 = vld [vmem:[%s599 + $0x40] sm:$0xf]
      %v735 = vld [vmem:[%s599 + $0x44] sm:$0x1]
      %v736 = vld [vmem:[%s599 + $0x48] sm:$0xf]
      %v737 = vld [vmem:[%s599 + $0x4c] sm:$0xf]
      %v738 = vld [vmem:[%s599 + $0x50] sm:$0x1]
      %v739 = vld [vmem:[%s599 + $0x54] sm:$0xf]
      %v740 = vld [vmem:[%s599 + $0x58] sm:$0xf]
      %v741 = vld [vmem:[%s599 + $0x5c] sm:$0x1]
      %v742 = vld [vmem:[%s613] sm:$0xf]
      %v743 = vld [vmem:[%s613 + $0x4] sm:$0xf]
      %v744 = vld [vmem:[%s613 + $0x8] sm:$0x1]
      %s745 = sshll.u32 %s704, 16
      %s746 = sor.u32 %s704, %s745
      %v747 = vstv %s746
      %v749 = vmul.bf16 %v742, %v747
      %v750 = vmul.bf16 %v743, %v747
      %v751 = vmul.bf16 %v744, %v747
      %v752 = vld [vmem:[%s630] sm:$0xf]
      %v753 = vld [vmem:[%s630 + $0x4] sm:$0xf]
      %v754 = vld [vmem:[%s630 + $0x8] sm:$0x1]
      %s755 = sshll.u32 %s717, 16
      %s756 = sor.u32 %s717, %s755
      %v757 = vstv %s756
      %v759 = vmul.bf16 %v752, %v757
      %v760 = vmul.bf16 %v753, %v757
      %v761 = vmul.bf16 %v754, %v757
      %v762 = vld [vmem:[%s6] sm:$0x3]
      %vm763 = vsmask.f32 3328
      %vm764 = vsmask.f32 7440
      %vm765 = vmor %vm763, %vm764
      %v767 = vshrl.u32 %v749, 16
      %v769 = vrot.slane %v767, 4
      %v770 = vshll.u32 %v749, 16
      %v772 = vrot.slane %v770, 5
      %v773 = vor.u32 %v769, %v772
      %v774 = vrot.slane %v773, 4
      %v776 = vshll.u32 %v750, 16
      %v778 = vrot.slane %v776, 5
      %v779 = vsel %vm765, %v774, %v778
      %v780 = vshrl.u32 %v750, 16
      %v782 = vrot.slane %v780, 4
      %v783 = vor.u32 %v782, %v778
      %v784 = vrot.slane %v783, 4
      %v786 = vshll.u32 %v751, 16
      %v788 = vrot.slane %v786, 5
      %v789 = vsel %vm765, %v784, %v788
      %v791 = vshrl.u32 %v718, 16
      %v793 = vrot.slane %v791, 4
      %v794 = vshll.u32 %v718, 16
      %v796 = vrot.slane %v794, 5
      %v797 = vor.u32 %v793, %v796
      %v798 = vrot.slane %v797, 4
      %v800 = vshll.u32 %v719, 16
      %v802 = vrot.slane %v800, 5
      %v803 = vsel %vm765, %v798, %v802
      %v804 = vshrl.u32 %v719, 16
      %v806 = vrot.slane %v804, 4
      %v807 = vor.u32 %v806, %v802
      %v808 = vrot.slane %v807, 4
      %v810 = vshll.u32 %v720, 16
      %v812 = vrot.slane %v810, 5
      %v813 = vsel %vm765, %v808, %v812
      %v815 = vshrl.u32 %v721, 16
      %v817 = vrot.slane %v815, 4
      %v818 = vshll.u32 %v721, 16
      %v820 = vrot.slane %v818, 5
      %v821 = vor.u32 %v817, %v820
      %v822 = vrot.slane %v821, 4
      %v824 = vshll.u32 %v722, 16
      %v826 = vrot.slane %v824, 5
      %v827 = vsel %vm765, %v822, %v826
      %v828 = vshrl.u32 %v722, 16
      %v830 = vrot.slane %v828, 4
      %v831 = vor.u32 %v830, %v826
      %v832 = vrot.slane %v831, 4
      %v834 = vshll.u32 %v723, 16
      %v836 = vrot.slane %v834, 5
      %v837 = vsel %vm765, %v832, %v836
      %v839 = vshrl.u32 %v724, 16
      %v841 = vrot.slane %v839, 4
      %v842 = vshll.u32 %v724, 16
      %v844 = vrot.slane %v842, 5
      %v845 = vor.u32 %v841, %v844
      %v846 = vrot.slane %v845, 4
      %v848 = vshll.u32 %v725, 16
      %v850 = vrot.slane %v848, 5
      %v851 = vsel %vm765, %v846, %v850
      %v852 = vshrl.u32 %v725, 16
      %v854 = vrot.slane %v852, 4
      %v855 = vor.u32 %v854, %v850
      %v856 = vrot.slane %v855, 4
      %v858 = vshll.u32 %v726, 16
      %v860 = vrot.slane %v858, 5
      %v861 = vsel %vm765, %v856, %v860
      %v863 = vshrl.u32 %v727, 16
      %v865 = vrot.slane %v863, 4
      %v866 = vshll.u32 %v727, 16
      %v868 = vrot.slane %v866, 5
      %v869 = vor.u32 %v865, %v868
      %v870 = vrot.slane %v869, 4
      %v872 = vshll.u32 %v728, 16
      %v874 = vrot.slane %v872, 5
      %v875 = vsel %vm765, %v870, %v874
      %v876 = vshrl.u32 %v728, 16
      %v878 = vrot.slane %v876, 4
      %v879 = vor.u32 %v878, %v874
      %v880 = vrot.slane %v879, 4
      %v882 = vshll.u32 %v729, 16
      %v884 = vrot.slane %v882, 5
      %v885 = vsel %vm765, %v880, %v884
      %v887 = vshrl.u32 %v730, 16
      %v889 = vrot.slane %v887, 4
      %v890 = vshll.u32 %v730, 16
      %v892 = vrot.slane %v890, 5
      %v893 = vor.u32 %v889, %v892
      %v894 = vrot.slane %v893, 4
      %v896 = vshll.u32 %v731, 16
      %v898 = vrot.slane %v896, 5
      %v899 = vsel %vm765, %v894, %v898
      %v900 = vshrl.u32 %v731, 16
      %v902 = vrot.slane %v900, 4
      %v903 = vor.u32 %v902, %v898
      %v904 = vrot.slane %v903, 4
      %v906 = vshll.u32 %v732, 16
      %v908 = vrot.slane %v906, 5
      %v909 = vsel %vm765, %v904, %v908
      %v911 = vshrl.u32 %v733, 16
      %v913 = vrot.slane %v911, 4
      %v914 = vshll.u32 %v733, 16
      %v916 = vrot.slane %v914, 5
      %v917 = vor.u32 %v913, %v916
      %v918 = vrot.slane %v917, 4
      %v920 = vshll.u32 %v734, 16
      %v922 = vrot.slane %v920, 5
      %v923 = vsel %vm765, %v918, %v922
      %v924 = vshrl.u32 %v734, 16
      %v926 = vrot.slane %v924, 4
      %v927 = vor.u32 %v926, %v922
      %v928 = vrot.slane %v927, 4
      %v930 = vshll.u32 %v735, 16
      %v932 = vrot.slane %v930, 5
      %v933 = vsel %vm765, %v928, %v932
      %v935 = vshrl.u32 %v736, 16
      %v937 = vrot.slane %v935, 4
      %v938 = vshll.u32 %v736, 16
      %v940 = vrot.slane %v938, 5
      %v941 = vor.u32 %v937, %v940
      %v942 = vrot.slane %v941, 4
      %v944 = vshll.u32 %v737, 16
      %v946 = vrot.slane %v944, 5
      %v947 = vsel %vm765, %v942, %v946
      %v948 = vshrl.u32 %v737, 16
      %v950 = vrot.slane %v948, 4
      %v951 = vor.u32 %v950, %v946
      %v952 = vrot.slane %v951, 4
      %v954 = vshll.u32 %v738, 16
      %v956 = vrot.slane %v954, 5
      %v957 = vsel %vm765, %v952, %v956
      %s958 = scalar_lea.vmem %s6, 2
      %v959 = vld [vmem:[%s958] sm:$0x3]
      %v960 = vunpack.c.l.b16 %v779
      %v961 = vunpack.c.l.b16 %v789
      %v962 = vunpack.c.l.b16 %v803
      %v963 = vunpack.c.l.b16 %v813
      %v964 = vunpack.c.l.b16 %v827
      %v965 = vunpack.c.l.b16 %v837
      %v966 = vunpack.c.l.b16 %v851
      %v967 = vunpack.c.l.b16 %v861
      %v968 = vunpack.c.l.b16 %v875
      %v969 = vunpack.c.l.b16 %v885
      %v970 = vunpack.c.l.b16 %v899
      %v971 = vunpack.c.l.b16 %v909
      %v972 = vunpack.c.l.b16 %v923
      %v973 = vunpack.c.l.b16 %v933
      %v974 = vunpack.c.l.b16 %v947
      %v975 = vunpack.c.l.b16 %v957
      %v976 = vpack.c.b16 %v961, %v960
      %v977 = vpack.c.b16 %v963, %v962
      %v978 = vpack.c.b16 %v965, %v964
      %v979 = vpack.c.b16 %v967, %v966
      %v980 = vpack.c.b16 %v969, %v968
      %v981 = vpack.c.b16 %v971, %v970
      %v982 = vpack.c.b16 %v973, %v972
      %v983 = vpack.c.b16 %v975, %v974
      %vm984 = vcmask 31744
      %v986 = vsel %vm984, %v976, 0
      %v989 = vsel %vm984, %v977, 0
      %v992 = vsel %vm984, %v978, 0
      %v995 = vsel %vm984, %v979, 0
      %v998 = vsel %vm984, %v980, 0
      %v1001 = vsel %vm984, %v981, 0
      %v1004 = vsel %vm984, %v982, 0
      %v1007 = vsel %vm984, %v983, 0
      %vm1009 = vcmask 1041408
      %v1011 = vsel %vm1009, %v959, 0
      %1013 = vmatprep.subr.bf16.mxu0 0
      %1014 = vmatpush1.bf16.msra.mxu0 %v1011
      %1015 = vmatprep.subr.bf16.mxu0 0
      %1016 = vmatpush1.bf16.msra.mxu0 0
      %1017 = vmatprep.subr.bf16.mxu0 0
      %1018 = vmatpush1.bf16.msra.mxu0 0
      %1019 = vmatprep.subr.bf16.mxu0 0
      %1020 = vmatpush1.bf16.msra.mxu0 0
      %1021 = vmatprep.subr.bf16.mxu0 0
      %1022 = vmatpush1.bf16.msra.mxu0 0
      %1023 = vmatprep.subr.bf16.mxu0 0
      %1024 = vmatpush1.bf16.msra.mxu0 0
      %1025 = vmatprep.subr.bf16.mxu0 0
      %1026 = vmatpush1.bf16.msra.mxu0 0
      %1027 = vmatprep.subr.bf16.mxu0 0
      %1028 = vmatpush1.bf16.msra.mxu0 0
      %1029 = vmatprep.subr.bf16.mxu0 0
      %1030 = vmatpush1.bf16.msra.mxu0 0
      %1031 = vmatprep.subr.bf16.mxu0 0
      %1032 = vmatpush1.bf16.msra.mxu0 0
      %1033 = vmatprep.subr.bf16.mxu0 0
      %1034 = vmatpush1.bf16.msra.mxu0 0
      %1035 = vmatprep.subr.bf16.mxu0 0
      %1036 = vmatpush1.bf16.msra.mxu0 0
      %1037 = vmatprep.subr.bf16.mxu0 0
      %1038 = vmatpush1.bf16.msra.mxu0 0
      %1039 = vmatprep.subr.bf16.mxu0 0
      %1040 = vmatpush1.bf16.msra.mxu0 0
      %1041 = vmatprep.subr.bf16.mxu0 0
      %1042 = vmatpush1.bf16.msra.mxu0 0
      %1043 = vmatprep.subr.bf16.mxu0 0
      %1044 = vmatpush1.bf16.msra.mxu0 0
      %1045 = vmatprep.mubr.bf16.mxu0 0
      %1046 = vmatmul.mubr.bf16.gmra.mrb[0].mxu0 %v986
      %v1047 = vpop.f32.mrb[0].mxu0
      %v1048 = vadd.f32 0.0, %v1047
      %v1049 = vpop.f32.mrb[0].mxu0
      %v1050 = vpop.f32.mrb[0].mxu0
      %v1051 = vadd.f32 0.0, %v1050
      %v1052 = vpop.f32.mrb[0].mxu0
      %1053 = vmatprep.mubr.bf16.mxu0 0
      %1054 = vmatmul.mubr.bf16.gmra.mrb[0].mxu0 %v989
      %v1055 = vpop.f32.mrb[0].mxu0
      %v1056 = vadd.f32 0.0, %v1055
      %v1057 = vpop.f32.mrb[0].mxu0
      %v1058 = vpop.f32.mrb[0].mxu0
      %v1059 = vadd.f32 0.0, %v1058
      %v1060 = vpop.f32.mrb[0].mxu0
      %1061 = vmatprep.mubr.bf16.mxu0 0
      %1062 = vmatmul.mubr.bf16.gmra.mrb[0].mxu0 %v992
      %v1063 = vpop.f32.mrb[0].mxu0
      %v1064 = vadd.f32 0.0, %v1063
      %v1065 = vpop.f32.mrb[0].mxu0
      %v1066 = vpop.f32.mrb[0].mxu0
      %v1067 = vadd.f32 0.0, %v1066
      %v1068 = vpop.f32.mrb[0].mxu0
      %1069 = vmatprep.mubr.bf16.mxu0 0
      %1070 = vmatmul.mubr.bf16.gmra.mrb[0].mxu0 %v995
      %v1071 = vpop.f32.mrb[0].mxu0
      %v1072 = vadd.f32 0.0, %v1071
      %v1073 = vpop.f32.mrb[0].mxu0
      %v1074 = vpop.f32.mrb[0].mxu0
      %v1075 = vadd.f32 0.0, %v1074
      %v1076 = vpop.f32.mrb[0].mxu0
      %1077 = vmatprep.mubr.bf16.mxu0 0
      %1078 = vmatmul.mubr.bf16.gmra.mrb[0].mxu0 %v998
      %v1079 = vpop.f32.mrb[0].mxu0
      %v1080 = vadd.f32 0.0, %v1079
      %v1081 = vpop.f32.mrb[0].mxu0
      %v1082 = vpop.f32.mrb[0].mxu0
      %v1083 = vadd.f32 0.0, %v1082
      %v1084 = vpop.f32.mrb[0].mxu0
      %1085 = vmatprep.mubr.bf16.mxu0 0
      %1086 = vmatmul.mubr.bf16.gmra.mrb[0].mxu0 %v1001
      %v1087 = vpop.f32.mrb[0].mxu0
      %v1088 = vadd.f32 0.0, %v1087
      %v1089 = vpop.f32.mrb[0].mxu0
      %v1090 = vpop.f32.mrb[0].mxu0
      %v1091 = vadd.f32 0.0, %v1090
      %v1092 = vpop.f32.mrb[0].mxu0
      %1093 = vmatprep.mubr.bf16.mxu0 0
      %1094 = vmatmul.mubr.bf16.gmra.mrb[0].mxu0 %v1004
      %v1095 = vpop.f32.mrb[0].mxu0
      %v1096 = vadd.f32 0.0, %v1095
      %v1097 = vpop.f32.mrb[0].mxu0
      %v1098 = vpop.f32.mrb[0].mxu0
      %v1099 = vadd.f32 0.0, %v1098
      %v1100 = vpop.f32.mrb[0].mxu0
      %1101 = vmatprep.mubr.bf16.mxu0 0
      %1102 = vmatmul.mubr.bf16.gmra.mrb[0].mxu0 %v1007
      %v1103 = vpop.f32.mrb[0].mxu0
      %v1104 = vadd.f32 0.0, %v1103
      %v1105 = vpop.f32.mrb[0].mxu0
      %v1106 = vpop.f32.mrb[0].mxu0
      %v1107 = vadd.f32 0.0, %v1106
      %v1108 = vpop.f32.mrb[0].mxu0
      %1109 = vdwg.mxu0
      %v1126 = vunpack.c.l.b16 %v749
      %v1127 = vunpack.c.l.b16 %v750
      %v1128 = vunpack.c.l.b16 %v718
      %v1129 = vunpack.c.l.b16 %v719
      %v1130 = vunpack.c.l.b16 %v721
      %v1131 = vunpack.c.l.b16 %v722
      %v1132 = vunpack.c.l.b16 %v724
      %v1133 = vunpack.c.l.b16 %v725
      %v1134 = vunpack.c.l.b16 %v727
      %v1135 = vunpack.c.l.b16 %v728
      %v1136 = vunpack.c.l.b16 %v730
      %v1137 = vunpack.c.l.b16 %v731
      %v1138 = vunpack.c.l.b16 %v733
      %v1139 = vunpack.c.l.b16 %v734
      %v1140 = vunpack.c.l.b16 %v736
      %v1141 = vunpack.c.l.b16 %v737
      %v1142 = vpack.c.b16 %v1127, %v1126
      %v1143 = vpack.c.b16 %v1129, %v1128
      %v1144 = vpack.c.b16 %v1131, %v1130
      %v1145 = vpack.c.b16 %v1133, %v1132
      %v1146 = vpack.c.b16 %v1135, %v1134
      %v1147 = vpack.c.b16 %v1137, %v1136
      %v1148 = vpack.c.b16 %v1139, %v1138
      %v1149 = vpack.c.b16 %v1141, %v1140
      %v1151 = vsel %vm984, %v1142, 0
      %v1154 = vsel %vm984, %v1143, 0
      %v1157 = vsel %vm984, %v1144, 0
      %v1160 = vsel %vm984, %v1145, 0
      %v1163 = vsel %vm984, %v1146, 0
      %v1166 = vsel %vm984, %v1147, 0
      %v1169 = vsel %vm984, %v1148, 0
      %v1172 = vsel %vm984, %v1149, 0
      %v1175 = vsel %vm1009, %v762, 0
      %1177 = vmatprep.subr.bf16.mxu0 0
      %1178 = vmatpush1.bf16.msra.mxu0 %v1175
      %1179 = vmatprep.subr.bf16.mxu0 0
      %1180 = vmatpush1.bf16.msra.mxu0 0
      %1181 = vmatprep.subr.bf16.mxu0 0
      %1182 = vmatpush1.bf16.msra.mxu0 0
      %1183 = vmatprep.subr.bf16.mxu0 0
      %1184 = vmatpush1.bf16.msra.mxu0 0
      %1185 = vmatprep.subr.bf16.mxu0 0
      %1186 = vmatpush1.bf16.msra.mxu0 0
      %1187 = vmatprep.subr.bf16.mxu0 0
      %1188 = vmatpush1.bf16.msra.mxu0 0
      %1189 = vmatprep.subr.bf16.mxu0 0
      %1190 = vmatpush1.bf16.msra.mxu0 0
      %1191 = vmatprep.subr.bf16.mxu0 0
      %1192 = vmatpush1.bf16.msra.mxu0 0
      %1193 = vmatprep.subr.bf16.mxu0 0
      %1194 = vmatpush1.bf16.msra.mxu0 0
      %1195 = vmatprep.subr.bf16.mxu0 0
      %1196 = vmatpush1.bf16.msra.mxu0 0
      %1197 = vmatprep.subr.bf16.mxu0 0
      %1198 = vmatpush1.bf16.msra.mxu0 0
      %1199 = vmatprep.subr.bf16.mxu0 0
      %1200 = vmatpush1.bf16.msra.mxu0 0
      %1201 = vmatprep.subr.bf16.mxu0 0
      %1202 = vmatpush1.bf16.msra.mxu0 0
      %1203 = vmatprep.subr.bf16.mxu0 0
      %1204 = vmatpush1.bf16.msra.mxu0 0
      %1205 = vmatprep.subr.bf16.mxu0 0
      %1206 = vmatpush1.bf16.msra.mxu0 0
      %1207 = vmatprep.subr.bf16.mxu0 0
      %1208 = vmatpush1.bf16.msra.mxu0 0
      %1209 = vmatprep.mubr.bf16.mxu0 0
      %1210 = vmatmul.mubr.bf16.gmra.mrb[0].mxu0 %v1151
      %v1211 = vpop.f32.mrb[0].mxu0
      %v1212 = vadd.f32 %v1048, %v1211
      %v1213 = vpop.f32.mrb[0].mxu0
      %v1214 = vpop.f32.mrb[0].mxu0
      %v1215 = vadd.f32 %v1051, %v1214
      %v1216 = vpop.f32.mrb[0].mxu0
      %1217 = vmatprep.mubr.bf16.mxu0 0
      %1218 = vmatmul.mubr.bf16.gmra.mrb[0].mxu0 %v1154
      %v1219 = vpop.f32.mrb[0].mxu0
      %v1220 = vadd.f32 %v1056, %v1219
      %v1221 = vpop.f32.mrb[0].mxu0
      %v1222 = vpop.f32.mrb[0].mxu0
      %v1223 = vadd.f32 %v1059, %v1222
      %v1224 = vpop.f32.mrb[0].mxu0
      %1225 = vmatprep.mubr.bf16.mxu0 0
      %1226 = vmatmul.mubr.bf16.gmra.mrb[0].mxu0 %v1157
      %v1227 = vpop.f32.mrb[0].mxu0
      %v1228 = vadd.f32 %v1064, %v1227
      %v1229 = vpop.f32.mrb[0].mxu0
      %v1230 = vpop.f32.mrb[0].mxu0
      %v1231 = vadd.f32 %v1067, %v1230
      %v1232 = vpop.f32.mrb[0].mxu0
      %1233 = vmatprep.mubr.bf16.mxu0 0
      %1234 = vmatmul.mubr.bf16.gmra.mrb[0].mxu0 %v1160
      %v1235 = vpop.f32.mrb[0].mxu0
      %v1236 = vadd.f32 %v1072, %v1235
      %v1237 = vpop.f32.mrb[0].mxu0
      %v1238 = vpop.f32.mrb[0].mxu0
      %v1239 = vadd.f32 %v1075, %v1238
      %v1240 = vpop.f32.mrb[0].mxu0
      %1241 = vmatprep.mubr.bf16.mxu0 0
      %1242 = vmatmul.mubr.bf16.gmra.mrb[0].mxu0 %v1163
      %v1243 = vpop.f32.mrb[0].mxu0
      %v1244 = vadd.f32 %v1080, %v1243
      %v1245 = vpop.f32.mrb[0].mxu0
      %v1246 = vpop.f32.mrb[0].mxu0
      %v1247 = vadd.f32 %v1083, %v1246
      %v1248 = vpop.f32.mrb[0].mxu0
      %1249 = vmatprep.mubr.bf16.mxu0 0
      %1250 = vmatmul.mubr.bf16.gmra.mrb[0].mxu0 %v1166
      %v1251 = vpop.f32.mrb[0].mxu0
      %v1252 = vadd.f32 %v1088, %v1251
      %v1253 = vpop.f32.mrb[0].mxu0
      %v1254 = vpop.f32.mrb[0].mxu0
      %v1255 = vadd.f32 %v1091, %v1254
      %v1256 = vpop.f32.mrb[0].mxu0
      %1257 = vmatprep.mubr.bf16.mxu0 0
      %1258 = vmatmul.mubr.bf16.gmra.mrb[0].mxu0 %v1169
      %v1259 = vpop.f32.mrb[0].mxu0
      %v1260 = vadd.f32 %v1096, %v1259
      %v1261 = vpop.f32.mrb[0].mxu0
      %v1262 = vpop.f32.mrb[0].mxu0
      %v1263 = vadd.f32 %v1099, %v1262
      %v1264 = vpop.f32.mrb[0].mxu0
      %1265 = vmatprep.mubr.bf16.mxu0 0
      %1266 = vmatmul.mubr.bf16.gmra.mrb[0].mxu0 %v1172
      %v1267 = vpop.f32.mrb[0].mxu0
      %v1268 = vadd.f32 %v1104, %v1267
      %v1269 = vpop.f32.mrb[0].mxu0
      %v1270 = vpop.f32.mrb[0].mxu0
      %v1271 = vadd.f32 %v1107, %v1270
      %v1272 = vpop.f32.mrb[0].mxu0
      %1273 = vdwg.mxu0
      %vm1282 = vcmask 1042432
      %vm1283 = vcmask 1046532
      %vm1284 = vmor %vm1282, %vm1283
      %v1285 = vrot.slane %v749, 5
      %v1286 = vrot.slane %v1285, 4
      %v1287 = vrot.slane %v750, 5
      %v1288 = vsel %vm1284, %v1286, %v1287
      %v1289 = vrot.slane %v1287, 4
      %v1290 = vrot.slane %v751, 5
      %v1291 = vsel %vm1284, %v1289, %v1290
      %v1292 = vrot.slane %v718, 5
      %v1293 = vrot.slane %v1292, 4
      %v1294 = vrot.slane %v719, 5
      %v1295 = vsel %vm1284, %v1293, %v1294
      %v1296 = vrot.slane %v1294, 4
      %v1297 = vrot.slane %v720, 5
      %v1298 = vsel %vm1284, %v1296, %v1297
      %v1299 = vrot.slane %v721, 5
      %v1300 = vrot.slane %v1299, 4
      %v1301 = vrot.slane %v722, 5
      %v1302 = vsel %vm1284, %v1300, %v1301
      %v1303 = vrot.slane %v1301, 4
      %v1304 = vrot.slane %v723, 5
      %v1305 = vsel %vm1284, %v1303, %v1304
      %v1306 = vrot.slane %v724, 5
      %v1307 = vrot.slane %v1306, 4
      %v1308 = vrot.slane %v725, 5
      %v1309 = vsel %vm1284, %v1307, %v1308
      %v1310 = vrot.slane %v1308, 4
      %v1311 = vrot.slane %v726, 5
      %v1312 = vsel %vm1284, %v1310, %v1311
      %v1313 = vrot.slane %v727, 5
      %v1314 = vrot.slane %v1313, 4
      %v1315 = vrot.slane %v728, 5
      %v1316 = vsel %vm1284, %v1314, %v1315
      %v1317 = vrot.slane %v1315, 4
      %v1318 = vrot.slane %v729, 5
      %v1319 = vsel %vm1284, %v1317, %v1318
      %v1320 = vrot.slane %v730, 5
      %v1321 = vrot.slane %v1320, 4
      %v1322 = vrot.slane %v731, 5
      %v1323 = vsel %vm1284, %v1321, %v1322
      %v1324 = vrot.slane %v1322, 4
      %v1325 = vrot.slane %v732, 5
      %v1326 = vsel %vm1284, %v1324, %v1325
      %v1327 = vrot.slane %v733, 5
      %v1328 = vrot.slane %v1327, 4
      %v1329 = vrot.slane %v734, 5
      %v1330 = vsel %vm1284, %v1328, %v1329
      %v1331 = vrot.slane %v1329, 4
      %v1332 = vrot.slane %v735, 5
      %v1333 = vsel %vm1284, %v1331, %v1332
      %v1334 = vrot.slane %v736, 5
      %v1335 = vrot.slane %v1334, 4
      %v1336 = vrot.slane %v737, 5
      %v1337 = vsel %vm1284, %v1335, %v1336
      %v1338 = vrot.slane %v1336, 4
      %v1339 = vrot.slane %v738, 5
      %v1340 = vsel %vm1284, %v1338, %v1339
      %s1341 = scalar_lea.vmem %s6, 4
      %v1342 = vld [vmem:[%s1341] sm:$0x3]
      %v1343 = vunpack.c.l.b16 %v1288
      %v1344 = vunpack.c.l.b16 %v1291
      %v1345 = vunpack.c.l.b16 %v1295
      %v1346 = vunpack.c.l.b16 %v1298
      %v1347 = vunpack.c.l.b16 %v1302
      %v1348 = vunpack.c.l.b16 %v1305
      %v1349 = vunpack.c.l.b16 %v1309
      %v1350 = vunpack.c.l.b16 %v1312
      %v1351 = vunpack.c.l.b16 %v1316
      %v1352 = vunpack.c.l.b16 %v1319
      %v1353 = vunpack.c.l.b16 %v1323
      %v1354 = vunpack.c.l.b16 %v1326
      %v1355 = vunpack.c.l.b16 %v1330
      %v1356 = vunpack.c.l.b16 %v1333
      %v1357 = vunpack.c.l.b16 %v1337
      %v1358 = vunpack.c.l.b16 %v1340
      %v1359 = vpack.c.b16 %v1344, %v1343
      %v1360 = vpack.c.b16 %v1346, %v1345
      %v1361 = vpack.c.b16 %v1348, %v1347
      %v1362 = vpack.c.b16 %v1350, %v1349
      %v1363 = vpack.c.b16 %v1352, %v1351
      %v1364 = vpack.c.b16 %v1354, %v1353
      %v1365 = vpack.c.b16 %v1356, %v1355
      %v1366 = vpack.c.b16 %v1358, %v1357
      %v1368 = vsel %vm984, %v1359, 0
      %v1371 = vsel %vm984, %v1360, 0
      %v1374 = vsel %vm984, %v1361, 0
      %v1377 = vsel %vm984, %v1362, 0
      %v1380 = vsel %vm984, %v1363, 0
      %v1383 = vsel %vm984, %v1364, 0
      %v1386 = vsel %vm984, %v1365, 0
      %v1389 = vsel %vm984, %v1366, 0
      %v1392 = vsel %vm1009, %v1342, 0
      %1394 = vmatprep.subr.bf16.mxu0 0
      %1395 = vmatpush1.bf16.msra.mxu0 %v1392
      %1396 = vmatprep.subr.bf16.mxu0 0
      %1397 = vmatpush1.bf16.msra.mxu0 0
      %1398 = vmatprep.subr.bf16.mxu0 0
      %1399 = vmatpush1.bf16.msra.mxu0 0
      %1400 = vmatprep.subr.bf16.mxu0 0
      %1401 = vmatpush1.bf16.msra.mxu0 0
      %1402 = vmatprep.subr.bf16.mxu0 0
      %1403 = vmatpush1.bf16.msra.mxu0 0
      %1404 = vmatprep.subr.bf16.mxu0 0
      %1405 = vmatpush1.bf16.msra.mxu0 0
      %1406 = vmatprep.subr.bf16.mxu0 0
      %1407 = vmatpush1.bf16.msra.mxu0 0
      %1408 = vmatprep.subr.bf16.mxu0 0
      %1409 = vmatpush1.bf16.msra.mxu0 0
      %1410 = vmatprep.subr.bf16.mxu0 0
      %1411 = vmatpush1.bf16.msra.mxu0 0
      %1412 = vmatprep.subr.bf16.mxu0 0
      %1413 = vmatpush1.bf16.msra.mxu0 0
      %1414 = vmatprep.subr.bf16.mxu0 0
      %1415 = vmatpush1.bf16.msra.mxu0 0
      %1416 = vmatprep.subr.bf16.mxu0 0
      %1417 = vmatpush1.bf16.msra.mxu0 0
      %1418 = vmatprep.subr.bf16.mxu0 0
      %1419 = vmatpush1.bf16.msra.mxu0 0
      %1420 = vmatprep.subr.bf16.mxu0 0
      %1421 = vmatpush1.bf16.msra.mxu0 0
      %1422 = vmatprep.subr.bf16.mxu0 0
      %1423 = vmatpush1.bf16.msra.mxu0 0
      %1424 = vmatprep.subr.bf16.mxu0 0
      %1425 = vmatpush1.bf16.msra.mxu0 0
      %1426 = vmatprep.mubr.bf16.mxu0 0
      %1427 = vmatmul.mubr.bf16.gmra.mrb[0].mxu0 %v1368
      %v1428 = vpop.f32.mrb[0].mxu0
      %v1429 = vadd.f32 0.0, %v1428
      %v1430 = vpop.f32.mrb[0].mxu0
      %v1431 = vpop.f32.mrb[0].mxu0
      %v1432 = vadd.f32 0.0, %v1431
      %v1433 = vpop.f32.mrb[0].mxu0
      %1434 = vmatprep.mubr.bf16.mxu0 0
      %1435 = vmatmul.mubr.bf16.gmra.mrb[0].mxu0 %v1371
      %v1436 = vpop.f32.mrb[0].mxu0
      %v1437 = vadd.f32 0.0, %v1436
      %v1438 = vpop.f32.mrb[0].mxu0
      %v1439 = vpop.f32.mrb[0].mxu0
      %v1440 = vadd.f32 0.0, %v1439
      %v1441 = vpop.f32.mrb[0].mxu0
      %1442 = vmatprep.mubr.bf16.mxu0 0
      %1443 = vmatmul.mubr.bf16.gmra.mrb[0].mxu0 %v1374
      %v1444 = vpop.f32.mrb[0].mxu0
      %v1445 = vadd.f32 0.0, %v1444
      %v1446 = vpop.f32.mrb[0].mxu0
      %v1447 = vpop.f32.mrb[0].mxu0
      %v1448 = vadd.f32 0.0, %v1447
      %v1449 = vpop.f32.mrb[0].mxu0
      %1450 = vmatprep.mubr.bf16.mxu0 0
      %1451 = vmatmul.mubr.bf16.gmra.mrb[0].mxu0 %v1377
      %v1452 = vpop.f32.mrb[0].mxu0
      %v1453 = vadd.f32 0.0, %v1452
      %v1454 = vpop.f32.mrb[0].mxu0
      %v1455 = vpop.f32.mrb[0].mxu0
      %v1456 = vadd.f32 0.0, %v1455
      %v1457 = vpop.f32.mrb[0].mxu0
      %1458 = vmatprep.mubr.bf16.mxu0 0
      %1459 = vmatmul.mubr.bf16.gmra.mrb[0].mxu0 %v1380
      %v1460 = vpop.f32.mrb[0].mxu0
      %v1461 = vadd.f32 0.0, %v1460
      %v1462 = vpop.f32.mrb[0].mxu0
      %v1463 = vpop.f32.mrb[0].mxu0
      %v1464 = vadd.f32 0.0, %v1463
      %v1465 = vpop.f32.mrb[0].mxu0
      %1466 = vmatprep.mubr.bf16.mxu0 0
      %1467 = vmatmul.mubr.bf16.gmra.mrb[0].mxu0 %v1383
      %v1468 = vpop.f32.mrb[0].mxu0
      %v1469 = vadd.f32 0.0, %v1468
      %v1470 = vpop.f32.mrb[0].mxu0
      %v1471 = vpop.f32.mrb[0].mxu0
      %v1472 = vadd.f32 0.0, %v1471
      %v1473 = vpop.f32.mrb[0].mxu0
      %1474 = vmatprep.mubr.bf16.mxu0 0
      %1475 = vmatmul.mubr.bf16.gmra.mrb[0].mxu0 %v1386
      %v1476 = vpop.f32.mrb[0].mxu0
      %v1477 = vadd.f32 0.0, %v1476
      %v1478 = vpop.f32.mrb[0].mxu0
      %v1479 = vpop.f32.mrb[0].mxu0
      %v1480 = vadd.f32 0.0, %v1479
      %v1481 = vpop.f32.mrb[0].mxu0
      %1482 = vmatprep.mubr.bf16.mxu0 0
      %1483 = vmatmul.mubr.bf16.gmra.mrb[0].mxu0 %v1389
      %v1484 = vpop.f32.mrb[0].mxu0
      %v1485 = vadd.f32 0.0, %v1484
      %v1486 = vpop.f32.mrb[0].mxu0
      %v1487 = vpop.f32.mrb[0].mxu0
      %v1488 = vadd.f32 0.0, %v1487
      %v1489 = vpop.f32.mrb[0].mxu0
      %1490 = vdwg.mxu0
      %v1491 = vadd.f32 %v1212, %v1429
      %v1492 = vadd.f32 %v1215, %v1432
      %v1493 = vadd.f32 %v1220, %v1437
      %v1494 = vadd.f32 %v1223, %v1440
      %v1495 = vadd.f32 %v1228, %v1445
      %v1496 = vadd.f32 %v1231, %v1448
      %v1497 = vadd.f32 %v1236, %v1453
      %v1498 = vadd.f32 %v1239, %v1456
      %v1499 = vadd.f32 %v1244, %v1461
      %v1500 = vadd.f32 %v1247, %v1464
      %v1501 = vadd.f32 %v1252, %v1469
      %v1502 = vadd.f32 %v1255, %v1472
      %v1503 = vadd.f32 %v1260, %v1477
      %v1504 = vadd.f32 %v1263, %v1480
      %v1505 = vadd.f32 %v1268, %v1485
      %v1506 = vadd.f32 %v1271, %v1488
      %s1507 = scalar_lea.vmem %s6, 6
      %v1508 = vld [vmem:[%s1507] sm:$0x3]
      %v1511 = vunpack.c.l.b16 %v739
      %v1512 = vunpack.c.l.b16 %v740
      %v1513 = vpack.c.b16 %v1512, %v1511
      %v1515 = vsel %vm984, %v1513, 0
      %v1518 = vsel %vm1009, %v1508, 0
      %1520 = vmatprep.subr.bf16.mxu0 0
      %1521 = vmatpush1.bf16.msra.mxu0 %v1518
      %1522 = vmatprep.subr.bf16.mxu0 0
      %1523 = vmatpush1.bf16.msra.mxu0 0
      %1524 = vmatprep.subr.bf16.mxu0 0
      %1525 = vmatpush1.bf16.msra.mxu0 0
      %1526 = vmatprep.subr.bf16.mxu0 0
      %1527 = vmatpush1.bf16.msra.mxu0 0
      %1528 = vmatprep.subr.bf16.mxu0 0
      %1529 = vmatpush1.bf16.msra.mxu0 0
      %1530 = vmatprep.subr.bf16.mxu0 0
      %1531 = vmatpush1.bf16.msra.mxu0 0
      %1532 = vmatprep.subr.bf16.mxu0 0
      %1533 = vmatpush1.bf16.msra.mxu0 0
      %1534 = vmatprep.subr.bf16.mxu0 0
      %1535 = vmatpush1.bf16.msra.mxu0 0
      %1536 = vmatprep.subr.bf16.mxu0 0
      %1537 = vmatpush1.bf16.msra.mxu0 0
      %1538 = vmatprep.subr.bf16.mxu0 0
      %1539 = vmatpush1.bf16.msra.mxu0 0
      %1540 = vmatprep.subr.bf16.mxu0 0
      %1541 = vmatpush1.bf16.msra.mxu0 0
      %1542 = vmatprep.subr.bf16.mxu0 0
      %1543 = vmatpush1.bf16.msra.mxu0 0
      %1544 = vmatprep.subr.bf16.mxu0 0
      %1545 = vmatpush1.bf16.msra.mxu0 0
      %1546 = vmatprep.subr.bf16.mxu0 0
      %1547 = vmatpush1.bf16.msra.mxu0 0
      %1548 = vmatprep.subr.bf16.mxu0 0
      %1549 = vmatpush1.bf16.msra.mxu0 0
      %1550 = vmatprep.subr.bf16.mxu0 0
      %1551 = vmatpush1.bf16.msra.mxu0 0
      %1552 = vmatprep.mubr.bf16.mxu0 0
      %1553 = vmatmul.mubr.bf16.gmra.mrb[0].mxu0 %v1154
      %v1554 = vpop.f32.mrb[0].mxu0
      %v1555 = vadd.f32 0.0, %v1554
      %v1556 = vpop.f32.mrb[0].mxu0
      %v1557 = vpop.f32.mrb[0].mxu0
      %v1558 = vadd.f32 0.0, %v1557
      %v1559 = vpop.f32.mrb[0].mxu0
      %1560 = vmatprep.mubr.bf16.mxu0 0
      %1561 = vmatmul.mubr.bf16.gmra.mrb[0].mxu0 %v1157
      %v1562 = vpop.f32.mrb[0].mxu0
      %v1563 = vadd.f32 0.0, %v1562
      %v1564 = vpop.f32.mrb[0].mxu0
      %v1565 = vpop.f32.mrb[0].mxu0
      %v1566 = vadd.f32 0.0, %v1565
      %v1567 = vpop.f32.mrb[0].mxu0
      %1568 = vmatprep.mubr.bf16.mxu0 0
      %1569 = vmatmul.mubr.bf16.gmra.mrb[0].mxu0 %v1160
      %v1570 = vpop.f32.mrb[0].mxu0
      %v1571 = vadd.f32 0.0, %v1570
      %v1572 = vpop.f32.mrb[0].mxu0
      %v1573 = vpop.f32.mrb[0].mxu0
      %v1574 = vadd.f32 0.0, %v1573
      %v1575 = vpop.f32.mrb[0].mxu0
      %1576 = vmatprep.mubr.bf16.mxu0 0
      %1577 = vmatmul.mubr.bf16.gmra.mrb[0].mxu0 %v1163
      %v1578 = vpop.f32.mrb[0].mxu0
      %v1579 = vadd.f32 0.0, %v1578
      %v1580 = vpop.f32.mrb[0].mxu0
      %v1581 = vpop.f32.mrb[0].mxu0
      %v1582 = vadd.f32 0.0, %v1581
      %v1583 = vpop.f32.mrb[0].mxu0
      %1584 = vmatprep.mubr.bf16.mxu0 0
      %1585 = vmatmul.mubr.bf16.gmra.mrb[0].mxu0 %v1166
      %v1586 = vpop.f32.mrb[0].mxu0
      %v1587 = vadd.f32 0.0, %v1586
      %v1588 = vpop.f32.mrb[0].mxu0
      %v1589 = vpop.f32.mrb[0].mxu0
      %v1590 = vadd.f32 0.0, %v1589
      %v1591 = vpop.f32.mrb[0].mxu0
      %1592 = vmatprep.mubr.bf16.mxu0 0
      %1593 = vmatmul.mubr.bf16.gmra.mrb[0].mxu0 %v1169
      %v1594 = vpop.f32.mrb[0].mxu0
      %v1595 = vadd.f32 0.0, %v1594
      %v1596 = vpop.f32.mrb[0].mxu0
      %v1597 = vpop.f32.mrb[0].mxu0
      %v1598 = vadd.f32 0.0, %v1597
      %v1599 = vpop.f32.mrb[0].mxu0
      %1600 = vmatprep.mubr.bf16.mxu0 0
      %1601 = vmatmul.mubr.bf16.gmra.mrb[0].mxu0 %v1172
      %v1602 = vpop.f32.mrb[0].mxu0
      %v1603 = vadd.f32 0.0, %v1602
      %v1604 = vpop.f32.mrb[0].mxu0
      %v1605 = vpop.f32.mrb[0].mxu0
      %v1606 = vadd.f32 0.0, %v1605
      %v1607 = vpop.f32.mrb[0].mxu0
      %1608 = vmatprep.mubr.bf16.mxu0 0
      %1609 = vmatmul.mubr.bf16.gmra.mrb[0].mxu0 %v1515
      %v1610 = vpop.f32.mrb[0].mxu0
      %v1611 = vadd.f32 0.0, %v1610
      %v1612 = vpop.f32.mrb[0].mxu0
      %v1613 = vpop.f32.mrb[0].mxu0
      %v1614 = vadd.f32 0.0, %v1613
      %v1615 = vpop.f32.mrb[0].mxu0
      %1616 = vdwg.mxu0
      %v1617 = vadd.f32 %v1491, %v1555
      %v1618 = vadd.f32 %v1492, %v1558
      %v1619 = vadd.f32 %v1493, %v1563
      %v1620 = vadd.f32 %v1494, %v1566
      %v1621 = vadd.f32 %v1495, %v1571
      %v1622 = vadd.f32 %v1496, %v1574
      %v1623 = vadd.f32 %v1497, %v1579
      %v1624 = vadd.f32 %v1498, %v1582
      %v1625 = vadd.f32 %v1499, %v1587
      %v1626 = vadd.f32 %v1500, %v1590
      %v1627 = vadd.f32 %v1501, %v1595
      %v1628 = vadd.f32 %v1502, %v1598
      %v1629 = vadd.f32 %v1503, %v1603
      %v1630 = vadd.f32 %v1504, %v1606
      %v1631 = vadd.f32 %v1505, %v1611
      %v1632 = vadd.f32 %v1506, %v1614
      %v1634 = vshrl.u32 %v739, 16
      %v1636 = vrot.slane %v1634, 4
      %v1637 = vshll.u32 %v739, 16
      %v1639 = vrot.slane %v1637, 5
      %v1640 = vor.u32 %v1636, %v1639
      %v1641 = vrot.slane %v1640, 4
      %v1643 = vshll.u32 %v740, 16
      %v1645 = vrot.slane %v1643, 5
      %v1646 = vsel %vm765, %v1641, %v1645
      %v1647 = vshrl.u32 %v740, 16
      %v1649 = vrot.slane %v1647, 4
      %v1650 = vor.u32 %v1649, %v1645
      %v1651 = vrot.slane %v1650, 4
      %v1653 = vshll.u32 %v741, 16
      %v1655 = vrot.slane %v1653, 5
      %v1656 = vsel %vm765, %v1651, %v1655
      %s1657 = scalar_lea.vmem %s6, 8
      %v1658 = vld [vmem:[%s1657] sm:$0x3]
      %v1659 = vunpack.c.l.b16 %v1646
      %v1660 = vunpack.c.l.b16 %v1656
      %v1661 = vpack.c.b16 %v1660, %v1659
      %v1663 = vsel %vm984, %v1661, 0
      %v1666 = vsel %vm1009, %v1658, 0
      %1668 = vmatprep.subr.bf16.mxu0 0
      %1669 = vmatpush1.bf16.msra.mxu0 %v1666
      %1670 = vmatprep.subr.bf16.mxu0 0
      %1671 = vmatpush1.bf16.msra.mxu0 0
      %1672 = vmatprep.subr.bf16.mxu0 0
      %1673 = vmatpush1.bf16.msra.mxu0 0
      %1674 = vmatprep.subr.bf16.mxu0 0
      %1675 = vmatpush1.bf16.msra.mxu0 0
      %1676 = vmatprep.subr.bf16.mxu0 0
      %1677 = vmatpush1.bf16.msra.mxu0 0
      %1678 = vmatprep.subr.bf16.mxu0 0
      %1679 = vmatpush1.bf16.msra.mxu0 0
      %1680 = vmatprep.subr.bf16.mxu0 0
      %1681 = vmatpush1.bf16.msra.mxu0 0
      %1682 = vmatprep.subr.bf16.mxu0 0
      %1683 = vmatpush1.bf16.msra.mxu0 0
      %1684 = vmatprep.subr.bf16.mxu0 0
      %1685 = vmatpush1.bf16.msra.mxu0 0
      %1686 = vmatprep.subr.bf16.mxu0 0
      %1687 = vmatpush1.bf16.msra.mxu0 0
      %1688 = vmatprep.subr.bf16.mxu0 0
      %1689 = vmatpush1.bf16.msra.mxu0 0
      %1690 = vmatprep.subr.bf16.mxu0 0
      %1691 = vmatpush1.bf16.msra.mxu0 0
      %1692 = vmatprep.subr.bf16.mxu0 0
      %1693 = vmatpush1.bf16.msra.mxu0 0
      %1694 = vmatprep.subr.bf16.mxu0 0
      %1695 = vmatpush1.bf16.msra.mxu0 0
      %1696 = vmatprep.subr.bf16.mxu0 0
      %1697 = vmatpush1.bf16.msra.mxu0 0
      %1698 = vmatprep.subr.bf16.mxu0 0
      %1699 = vmatpush1.bf16.msra.mxu0 0
      %1700 = vmatprep.mubr.bf16.mxu0 0
      %1701 = vmatmul.mubr.bf16.gmra.mrb[0].mxu0 %v989
      %v1702 = vpop.f32.mrb[0].mxu0
      %v1703 = vadd.f32 0.0, %v1702
      %v1704 = vpop.f32.mrb[0].mxu0
      %v1705 = vpop.f32.mrb[0].mxu0
      %v1706 = vadd.f32 0.0, %v1705
      %v1707 = vpop.f32.mrb[0].mxu0
      %1708 = vmatprep.mubr.bf16.mxu0 0
      %1709 = vmatmul.mubr.bf16.gmra.mrb[0].mxu0 %v992
      %v1710 = vpop.f32.mrb[0].mxu0
      %v1711 = vadd.f32 0.0, %v1710
      %v1712 = vpop.f32.mrb[0].mxu0
      %v1713 = vpop.f32.mrb[0].mxu0
      %v1714 = vadd.f32 0.0, %v1713
      %v1715 = vpop.f32.mrb[0].mxu0
      %1716 = vmatprep.mubr.bf16.mxu0 0
      %1717 = vmatmul.mubr.bf16.gmra.mrb[0].mxu0 %v995
      %v1718 = vpop.f32.mrb[0].mxu0
      %v1719 = vadd.f32 0.0, %v1718
      %v1720 = vpop.f32.mrb[0].mxu0
      %v1721 = vpop.f32.mrb[0].mxu0
      %v1722 = vadd.f32 0.0, %v1721
      %v1723 = vpop.f32.mrb[0].mxu0
      %1724 = vmatprep.mubr.bf16.mxu0 0
      %1725 = vmatmul.mubr.bf16.gmra.mrb[0].mxu0 %v998
      %v1726 = vpop.f32.mrb[0].mxu0
      %v1727 = vadd.f32 0.0, %v1726
      %v1728 = vpop.f32.mrb[0].mxu0
      %v1729 = vpop.f32.mrb[0].mxu0
      %v1730 = vadd.f32 0.0, %v1729
      %v1731 = vpop.f32.mrb[0].mxu0
      %1732 = vmatprep.mubr.bf16.mxu0 0
      %1733 = vmatmul.mubr.bf16.gmra.mrb[0].mxu0 %v1001
      %v1734 = vpop.f32.mrb[0].mxu0
      %v1735 = vadd.f32 0.0, %v1734
      %v1736 = vpop.f32.mrb[0].mxu0
      %v1737 = vpop.f32.mrb[0].mxu0
      %v1738 = vadd.f32 0.0, %v1737
      %v1739 = vpop.f32.mrb[0].mxu0
      %1740 = vmatprep.mubr.bf16.mxu0 0
      %1741 = vmatmul.mubr.bf16.gmra.mrb[0].mxu0 %v1004
      %v1742 = vpop.f32.mrb[0].mxu0
      %v1743 = vadd.f32 0.0, %v1742
      %v1744 = vpop.f32.mrb[0].mxu0
      %v1745 = vpop.f32.mrb[0].mxu0
      %v1746 = vadd.f32 0.0, %v1745
      %v1747 = vpop.f32.mrb[0].mxu0
      %1748 = vmatprep.mubr.bf16.mxu0 0
      %1749 = vmatmul.mubr.bf16.gmra.mrb[0].mxu0 %v1007
      %v1750 = vpop.f32.mrb[0].mxu0
      %v1751 = vadd.f32 0.0, %v1750
      %v1752 = vpop.f32.mrb[0].mxu0
      %v1753 = vpop.f32.mrb[0].mxu0
      %v1754 = vadd.f32 0.0, %v1753
      %v1755 = vpop.f32.mrb[0].mxu0
      %1756 = vmatprep.mubr.bf16.mxu0 0
      %1757 = vmatmul.mubr.bf16.gmra.mrb[0].mxu0 %v1663
      %v1758 = vpop.f32.mrb[0].mxu0
      %v1759 = vadd.f32 0.0, %v1758
      %v1760 = vpop.f32.mrb[0].mxu0
      %v1761 = vpop.f32.mrb[0].mxu0
      %v1762 = vadd.f32 0.0, %v1761
      %v1763 = vpop.f32.mrb[0].mxu0
      %1764 = vdwg.mxu0
      %v1765 = vadd.f32 %v1617, %v1703
      %v1766 = vadd.f32 %v1618, %v1706
      %v1767 = vadd.f32 %v1619, %v1711
      %v1768 = vadd.f32 %v1620, %v1714
      %v1769 = vadd.f32 %v1621, %v1719
      %v1770 = vadd.f32 %v1622, %v1722
      %v1771 = vadd.f32 %v1623, %v1727
      %v1772 = vadd.f32 %v1624, %v1730
      %v1773 = vadd.f32 %v1625, %v1735
      %v1774 = vadd.f32 %v1626, %v1738
      %v1775 = vadd.f32 %v1627, %v1743
      %v1776 = vadd.f32 %v1628, %v1746
      %v1777 = vadd.f32 %v1629, %v1751
      %v1778 = vadd.f32 %v1630, %v1754
      %v1779 = vadd.f32 %v1631, %v1759
      %v1780 = vadd.f32 %v1632, %v1762
      %v1782 = vrot.slane %v739, 5
      %v1783 = vrot.slane %v1782, 4
      %v1784 = vrot.slane %v740, 5
      %v1785 = vsel %vm1284, %v1783, %v1784
      %v1786 = vrot.slane %v1784, 4
      %v1787 = vrot.slane %v741, 5
      %v1788 = vsel %vm1284, %v1786, %v1787
      %s1789 = scalar_lea.vmem %s6, 10
      %v1790 = vld [vmem:[%s1789] sm:$0x3]
      %v1791 = vunpack.c.l.b16 %v1785
      %v1792 = vunpack.c.l.b16 %v1788
      %v1793 = vpack.c.b16 %v1792, %v1791
      %v1795 = vsel %vm984, %v1793, 0
      %v1798 = vsel %vm1009, %v1790, 0
      %1800 = vmatprep.subr.bf16.mxu0 0
      %1801 = vmatpush1.bf16.msra.mxu0 %v1798
      %1802 = vmatprep.subr.bf16.mxu0 0
      %1803 = vmatpush1.bf16.msra.mxu0 0
      %1804 = vmatprep.subr.bf16.mxu0 0
      %1805 = vmatpush1.bf16.msra.mxu0 0
      %1806 = vmatprep.subr.bf16.mxu0 0
      %1807 = vmatpush1.bf16.msra.mxu0 0
      %1808 = vmatprep.subr.bf16.mxu0 0
      %1809 = vmatpush1.bf16.msra.mxu0 0
      %1810 = vmatprep.subr.bf16.mxu0 0
      %1811 = vmatpush1.bf16.msra.mxu0 0
      %1812 = vmatprep.subr.bf16.mxu0 0
      %1813 = vmatpush1.bf16.msra.mxu0 0
      %1814 = vmatprep.subr.bf16.mxu0 0
      %1815 = vmatpush1.bf16.msra.mxu0 0
      %1816 = vmatprep.subr.bf16.mxu0 0
      %1817 = vmatpush1.bf16.msra.mxu0 0
      %1818 = vmatprep.subr.bf16.mxu0 0
      %1819 = vmatpush1.bf16.msra.mxu0 0
      %1820 = vmatprep.subr.bf16.mxu0 0
      %1821 = vmatpush1.bf16.msra.mxu0 0
      %1822 = vmatprep.subr.bf16.mxu0 0
      %1823 = vmatpush1.bf16.msra.mxu0 0
      %1824 = vmatprep.subr.bf16.mxu0 0
      %1825 = vmatpush1.bf16.msra.mxu0 0
      %1826 = vmatprep.subr.bf16.mxu0 0
      %1827 = vmatpush1.bf16.msra.mxu0 0
      %1828 = vmatprep.subr.bf16.mxu0 0
      %1829 = vmatpush1.bf16.msra.mxu0 0
      %1830 = vmatprep.subr.bf16.mxu0 0
      %1831 = vmatpush1.bf16.msra.mxu0 0
      %1832 = vmatprep.mubr.bf16.mxu0 0
      %1833 = vmatmul.mubr.bf16.gmra.mrb[0].mxu0 %v1371
      %v1834 = vpop.f32.mrb[0].mxu0
      %v1835 = vadd.f32 0.0, %v1834
      %v1836 = vpop.f32.mrb[0].mxu0
      %v1837 = vpop.f32.mrb[0].mxu0
      %v1838 = vadd.f32 0.0, %v1837
      %v1839 = vpop.f32.mrb[0].mxu0
      %1840 = vmatprep.mubr.bf16.mxu0 0
      %1841 = vmatmul.mubr.bf16.gmra.mrb[0].mxu0 %v1374
      %v1842 = vpop.f32.mrb[0].mxu0
      %v1843 = vadd.f32 0.0, %v1842
      %v1844 = vpop.f32.mrb[0].mxu0
      %v1845 = vpop.f32.mrb[0].mxu0
      %v1846 = vadd.f32 0.0, %v1845
      %v1847 = vpop.f32.mrb[0].mxu0
      %1848 = vmatprep.mubr.bf16.mxu0 0
      %1849 = vmatmul.mubr.bf16.gmra.mrb[0].mxu0 %v1377
      %v1850 = vpop.f32.mrb[0].mxu0
      %v1851 = vadd.f32 0.0, %v1850
      %v1852 = vpop.f32.mrb[0].mxu0
      %v1853 = vpop.f32.mrb[0].mxu0
      %v1854 = vadd.f32 0.0, %v1853
      %v1855 = vpop.f32.mrb[0].mxu0
      %1856 = vmatprep.mubr.bf16.mxu0 0
      %1857 = vmatmul.mubr.bf16.gmra.mrb[0].mxu0 %v1380
      %v1858 = vpop.f32.mrb[0].mxu0
      %v1859 = vadd.f32 0.0, %v1858
      %v1860 = vpop.f32.mrb[0].mxu0
      %v1861 = vpop.f32.mrb[0].mxu0
      %v1862 = vadd.f32 0.0, %v1861
      %v1863 = vpop.f32.mrb[0].mxu0
      %1864 = vmatprep.mubr.bf16.mxu0 0
      %1865 = vmatmul.mubr.bf16.gmra.mrb[0].mxu0 %v1383
      %v1866 = vpop.f32.mrb[0].mxu0
      %v1867 = vadd.f32 0.0, %v1866
      %v1868 = vpop.f32.mrb[0].mxu0
      %v1869 = vpop.f32.mrb[0].mxu0
      %v1870 = vadd.f32 0.0, %v1869
      %v1871 = vpop.f32.mrb[0].mxu0
      %1872 = vmatprep.mubr.bf16.mxu0 0
      %1873 = vmatmul.mubr.bf16.gmra.mrb[0].mxu0 %v1386
      %v1874 = vpop.f32.mrb[0].mxu0
      %v1875 = vadd.f32 0.0, %v1874
      %v1876 = vpop.f32.mrb[0].mxu0
      %v1877 = vpop.f32.mrb[0].mxu0
      %v1878 = vadd.f32 0.0, %v1877
      %v1879 = vpop.f32.mrb[0].mxu0
      %1880 = vmatprep.mubr.bf16.mxu0 0
      %1881 = vmatmul.mubr.bf16.gmra.mrb[0].mxu0 %v1389
      %v1882 = vpop.f32.mrb[0].mxu0
      %v1883 = vadd.f32 0.0, %v1882
      %v1884 = vpop.f32.mrb[0].mxu0
      %v1885 = vpop.f32.mrb[0].mxu0
      %v1886 = vadd.f32 0.0, %v1885
      %v1887 = vpop.f32.mrb[0].mxu0
      %1888 = vmatprep.mubr.bf16.mxu0 0
      %1889 = vmatmul.mubr.bf16.gmra.mrb[0].mxu0 %v1795
      %v1890 = vpop.f32.mrb[0].mxu0
      %v1891 = vadd.f32 0.0, %v1890
      %v1892 = vpop.f32.mrb[0].mxu0
      %v1893 = vpop.f32.mrb[0].mxu0
      %v1894 = vadd.f32 0.0, %v1893
      %v1895 = vpop.f32.mrb[0].mxu0
      %1896 = vdwg.mxu0
      %v1897 = vadd.f32 %v1765, %v1835
      %v1898 = vadd.f32 %v1766, %v1838
      %v1899 = vadd.f32 %v1767, %v1843
      %v1900 = vadd.f32 %v1768, %v1846
      %v1901 = vadd.f32 %v1769, %v1851
      %v1902 = vadd.f32 %v1770, %v1854
      %v1903 = vadd.f32 %v1771, %v1859
      %v1904 = vadd.f32 %v1772, %v1862
      %v1905 = vadd.f32 %v1773, %v1867
      %v1906 = vadd.f32 %v1774, %v1870
      %v1907 = vadd.f32 %v1775, %v1875
      %v1908 = vadd.f32 %v1776, %v1878
      %v1909 = vadd.f32 %v1777, %v1883
      %v1910 = vadd.f32 %v1778, %v1886
      %v1911 = vadd.f32 %v1779, %v1891
      %v1912 = vadd.f32 %v1780, %v1894
      %s1913 = scalar_lea.vmem %s6, 12
      %v1914 = vld [vmem:[%s1913] sm:$0x3]
      %v1917 = vunpack.c.l.b16 %v759
      %v1918 = vunpack.c.l.b16 %v760
      %v1919 = vpack.c.b16 %v1918, %v1917
      %v1921 = vsel %vm984, %v1919, 0
      %v1924 = vsel %vm1009, %v1914, 0
      %1926 = vmatprep.subr.bf16.mxu0 0
      %1927 = vmatpush1.bf16.msra.mxu0 %v1924
      %1928 = vmatprep.subr.bf16.mxu0 0
      %1929 = vmatpush1.bf16.msra.mxu0 0
      %1930 = vmatprep.subr.bf16.mxu0 0
      %1931 = vmatpush1.bf16.msra.mxu0 0
      %1932 = vmatprep.subr.bf16.mxu0 0
      %1933 = vmatpush1.bf16.msra.mxu0 0
      %1934 = vmatprep.subr.bf16.mxu0 0
      %1935 = vmatpush1.bf16.msra.mxu0 0
      %1936 = vmatprep.subr.bf16.mxu0 0
      %1937 = vmatpush1.bf16.msra.mxu0 0
      %1938 = vmatprep.subr.bf16.mxu0 0
      %1939 = vmatpush1.bf16.msra.mxu0 0
      %1940 = vmatprep.subr.bf16.mxu0 0
      %1941 = vmatpush1.bf16.msra.mxu0 0
      %1942 = vmatprep.subr.bf16.mxu0 0
      %1943 = vmatpush1.bf16.msra.mxu0 0
      %1944 = vmatprep.subr.bf16.mxu0 0
      %1945 = vmatpush1.bf16.msra.mxu0 0
      %1946 = vmatprep.subr.bf16.mxu0 0
      %1947 = vmatpush1.bf16.msra.mxu0 0
      %1948 = vmatprep.subr.bf16.mxu0 0
      %1949 = vmatpush1.bf16.msra.mxu0 0
      %1950 = vmatprep.subr.bf16.mxu0 0
      %1951 = vmatpush1.bf16.msra.mxu0 0
      %1952 = vmatprep.subr.bf16.mxu0 0
      %1953 = vmatpush1.bf16.msra.mxu0 0
      %1954 = vmatprep.subr.bf16.mxu0 0
      %1955 = vmatpush1.bf16.msra.mxu0 0
      %1956 = vmatprep.subr.bf16.mxu0 0
      %1957 = vmatpush1.bf16.msra.mxu0 0
      %1958 = vmatprep.mubr.bf16.mxu0 0
      %1959 = vmatmul.mubr.bf16.gmra.mrb[0].mxu0 %v1157
      %v1960 = vpop.f32.mrb[0].mxu0
      %v1961 = vadd.f32 0.0, %v1960
      %v1962 = vpop.f32.mrb[0].mxu0
      %v1963 = vpop.f32.mrb[0].mxu0
      %v1964 = vadd.f32 0.0, %v1963
      %v1965 = vpop.f32.mrb[0].mxu0
      %1966 = vmatprep.mubr.bf16.mxu0 0
      %1967 = vmatmul.mubr.bf16.gmra.mrb[0].mxu0 %v1160
      %v1968 = vpop.f32.mrb[0].mxu0
      %v1969 = vadd.f32 0.0, %v1968
      %v1970 = vpop.f32.mrb[0].mxu0
      %v1971 = vpop.f32.mrb[0].mxu0
      %v1972 = vadd.f32 0.0, %v1971
      %v1973 = vpop.f32.mrb[0].mxu0
      %1974 = vmatprep.mubr.bf16.mxu0 0
      %1975 = vmatmul.mubr.bf16.gmra.mrb[0].mxu0 %v1163
      %v1976 = vpop.f32.mrb[0].mxu0
      %v1977 = vadd.f32 0.0, %v1976
      %v1978 = vpop.f32.mrb[0].mxu0
      %v1979 = vpop.f32.mrb[0].mxu0
      %v1980 = vadd.f32 0.0, %v1979
      %v1981 = vpop.f32.mrb[0].mxu0
      %1982 = vmatprep.mubr.bf16.mxu0 0
      %1983 = vmatmul.mubr.bf16.gmra.mrb[0].mxu0 %v1166
      %v1984 = vpop.f32.mrb[0].mxu0
      %v1985 = vadd.f32 0.0, %v1984
      %v1986 = vpop.f32.mrb[0].mxu0
      %v1987 = vpop.f32.mrb[0].mxu0
      %v1988 = vadd.f32 0.0, %v1987
      %v1989 = vpop.f32.mrb[0].mxu0
      %1990 = vmatprep.mubr.bf16.mxu0 0
      %1991 = vmatmul.mubr.bf16.gmra.mrb[0].mxu0 %v1169
      %v1992 = vpop.f32.mrb[0].mxu0
      %v1993 = vadd.f32 0.0, %v1992
      %v1994 = vpop.f32.mrb[0].mxu0
      %v1995 = vpop.f32.mrb[0].mxu0
      %v1996 = vadd.f32 0.0, %v1995
      %v1997 = vpop.f32.mrb[0].mxu0
      %1998 = vmatprep.mubr.bf16.mxu0 0
      %1999 = vmatmul.mubr.bf16.gmra.mrb[0].mxu0 %v1172
      %v2000 = vpop.f32.mrb[0].mxu0
      %v2001 = vadd.f32 0.0, %v2000
      %v2002 = vpop.f32.mrb[0].mxu0
      %v2003 = vpop.f32.mrb[0].mxu0
      %v2004 = vadd.f32 0.0, %v2003
      %v2005 = vpop.f32.mrb[0].mxu0
      %2006 = vmatprep.mubr.bf16.mxu0 0
      %2007 = vmatmul.mubr.bf16.gmra.mrb[0].mxu0 %v1515
      %v2008 = vpop.f32.mrb[0].mxu0
      %v2009 = vadd.f32 0.0, %v2008
      %v2010 = vpop.f32.mrb[0].mxu0
      %v2011 = vpop.f32.mrb[0].mxu0
      %v2012 = vadd.f32 0.0, %v2011
      %v2013 = vpop.f32.mrb[0].mxu0
      %2014 = vmatprep.mubr.bf16.mxu0 0
      %2015 = vmatmul.mubr.bf16.gmra.mrb[0].mxu0 %v1921
      %v2016 = vpop.f32.mrb[0].mxu0
      %v2017 = vadd.f32 0.0, %v2016
      %v2018 = vpop.f32.mrb[0].mxu0
      %v2019 = vpop.f32.mrb[0].mxu0
      %v2020 = vadd.f32 0.0, %v2019
      %v2021 = vpop.f32.mrb[0].mxu0
      %2022 = vdwg.mxu0
      %v2023 = vadd.f32 %v1897, %v1961
      %v2024 = vadd.f32 %v1898, %v1964
      %v2025 = vadd.f32 %v1899, %v1969
      %v2026 = vadd.f32 %v1900, %v1972
      %v2027 = vadd.f32 %v1901, %v1977
      %v2028 = vadd.f32 %v1902, %v1980
      %v2029 = vadd.f32 %v1903, %v1985
      %v2030 = vadd.f32 %v1904, %v1988
      %v2031 = vadd.f32 %v1905, %v1993
      %v2032 = vadd.f32 %v1906, %v1996
      %v2033 = vadd.f32 %v1907, %v2001
      %v2034 = vadd.f32 %v1908, %v2004
      %v2035 = vadd.f32 %v1909, %v2009
      %v2036 = vadd.f32 %v1910, %v2012
      %v2037 = vadd.f32 %v1911, %v2017
      %v2038 = vadd.f32 %v1912, %v2020
      %v2040 = vshrl.u32 %v759, 16
      %v2042 = vrot.slane %v2040, 4
      %v2043 = vshll.u32 %v759, 16
      %v2045 = vrot.slane %v2043, 5
      %v2046 = vor.u32 %v2042, %v2045
      %v2047 = vrot.slane %v2046, 4
      %v2049 = vshll.u32 %v760, 16
      %v2051 = vrot.slane %v2049, 5
      %v2052 = vsel %vm765, %v2047, %v2051
      %v2053 = vshrl.u32 %v760, 16
      %v2055 = vrot.slane %v2053, 4
      %v2056 = vor.u32 %v2055, %v2051
      %v2057 = vrot.slane %v2056, 4
      %v2059 = vshll.u32 %v761, 16
      %v2061 = vrot.slane %v2059, 5
      %v2062 = vsel %vm765, %v2057, %v2061
      %s2063 = scalar_lea.vmem %s6, 14
      %v2064 = vld [vmem:[%s2063] sm:$0x3]
      %v2065 = vunpack.c.l.b16 %v2052
      %v2066 = vunpack.c.l.b16 %v2062
      %v2067 = vpack.c.b16 %v2066, %v2065
      %v2069 = vsel %vm984, %v2067, 0
      %v2072 = vsel %vm1009, %v2064, 0
      %2074 = vmatprep.subr.bf16.mxu0 0
      %2075 = vmatpush1.bf16.msra.mxu0 %v2072
      %2076 = vmatprep.subr.bf16.mxu0 0
      %2077 = vmatpush1.bf16.msra.mxu0 0
      %2078 = vmatprep.subr.bf16.mxu0 0
      %2079 = vmatpush1.bf16.msra.mxu0 0
      %2080 = vmatprep.subr.bf16.mxu0 0
      %2081 = vmatpush1.bf16.msra.mxu0 0
      %2082 = vmatprep.subr.bf16.mxu0 0
      %2083 = vmatpush1.bf16.msra.mxu0 0
      %2084 = vmatprep.subr.bf16.mxu0 0
      %2085 = vmatpush1.bf16.msra.mxu0 0
      %2086 = vmatprep.subr.bf16.mxu0 0
      %2087 = vmatpush1.bf16.msra.mxu0 0
      %2088 = vmatprep.subr.bf16.mxu0 0
      %2089 = vmatpush1.bf16.msra.mxu0 0
      %2090 = vmatprep.subr.bf16.mxu0 0
      %2091 = vmatpush1.bf16.msra.mxu0 0
      %2092 = vmatprep.subr.bf16.mxu0 0
      %2093 = vmatpush1.bf16.msra.mxu0 0
      %2094 = vmatprep.subr.bf16.mxu0 0
      %2095 = vmatpush1.bf16.msra.mxu0 0
      %2096 = vmatprep.subr.bf16.mxu0 0
      %2097 = vmatpush1.bf16.msra.mxu0 0
      %2098 = vmatprep.subr.bf16.mxu0 0
      %2099 = vmatpush1.bf16.msra.mxu0 0
      %2100 = vmatprep.subr.bf16.mxu0 0
      %2101 = vmatpush1.bf16.msra.mxu0 0
      %2102 = vmatprep.subr.bf16.mxu0 0
      %2103 = vmatpush1.bf16.msra.mxu0 0
      %2104 = vmatprep.subr.bf16.mxu0 0
      %2105 = vmatpush1.bf16.msra.mxu0 0
      %2106 = vmatprep.mubr.bf16.mxu0 0
      %2107 = vmatmul.mubr.bf16.gmra.mrb[0].mxu0 %v992
      %v2108 = vpop.f32.mrb[0].mxu0
      %v2109 = vadd.f32 0.0, %v2108
      %v2110 = vpop.f32.mrb[0].mxu0
      %v2111 = vpop.f32.mrb[0].mxu0
      %v2112 = vadd.f32 0.0, %v2111
      %v2113 = vpop.f32.mrb[0].mxu0
      %2114 = vmatprep.mubr.bf16.mxu0 0
      %2115 = vmatmul.mubr.bf16.gmra.mrb[0].mxu0 %v995
      %v2116 = vpop.f32.mrb[0].mxu0
      %v2117 = vadd.f32 0.0, %v2116
      %v2118 = vpop.f32.mrb[0].mxu0
      %v2119 = vpop.f32.mrb[0].mxu0
      %v2120 = vadd.f32 0.0, %v2119
      %v2121 = vpop.f32.mrb[0].mxu0
      %2122 = vmatprep.mubr.bf16.mxu0 0
      %2123 = vmatmul.mubr.bf16.gmra.mrb[0].mxu0 %v998
      %v2124 = vpop.f32.mrb[0].mxu0
      %v2125 = vadd.f32 0.0, %v2124
      %v2126 = vpop.f32.mrb[0].mxu0
      %v2127 = vpop.f32.mrb[0].mxu0
      %v2128 = vadd.f32 0.0, %v2127
      %v2129 = vpop.f32.mrb[0].mxu0
      %2130 = vmatprep.mubr.bf16.mxu0 0
      %2131 = vmatmul.mubr.bf16.gmra.mrb[0].mxu0 %v1001
      %v2132 = vpop.f32.mrb[0].mxu0
      %v2133 = vadd.f32 0.0, %v2132
      %v2134 = vpop.f32.mrb[0].mxu0
      %v2135 = vpop.f32.mrb[0].mxu0
      %v2136 = vadd.f32 0.0, %v2135
      %v2137 = vpop.f32.mrb[0].mxu0
      %2138 = vmatprep.mubr.bf16.mxu0 0
      %2139 = vmatmul.mubr.bf16.gmra.mrb[0].mxu0 %v1004
      %v2140 = vpop.f32.mrb[0].mxu0
      %v2141 = vadd.f32 0.0, %v2140
      %v2142 = vpop.f32.mrb[0].mxu0
      %v2143 = vpop.f32.mrb[0].mxu0
      %v2144 = vadd.f32 0.0, %v2143
      %v2145 = vpop.f32.mrb[0].mxu0
      %2146 = vmatprep.mubr.bf16.mxu0 0
      %2147 = vmatmul.mubr.bf16.gmra.mrb[0].mxu0 %v1007
      %v2148 = vpop.f32.mrb[0].mxu0
      %v2149 = vadd.f32 0.0, %v2148
      %v2150 = vpop.f32.mrb[0].mxu0
      %v2151 = vpop.f32.mrb[0].mxu0
      %v2152 = vadd.f32 0.0, %v2151
      %v2153 = vpop.f32.mrb[0].mxu0
      %2154 = vmatprep.mubr.bf16.mxu0 0
      %2155 = vmatmul.mubr.bf16.gmra.mrb[0].mxu0 %v1663
      %v2156 = vpop.f32.mrb[0].mxu0
      %v2157 = vadd.f32 0.0, %v2156
      %v2158 = vpop.f32.mrb[0].mxu0
      %v2159 = vpop.f32.mrb[0].mxu0
      %v2160 = vadd.f32 0.0, %v2159
      %v2161 = vpop.f32.mrb[0].mxu0
      %2162 = vmatprep.mubr.bf16.mxu0 0
      %2163 = vmatmul.mubr.bf16.gmra.mrb[0].mxu0 %v2069
      %v2164 = vpop.f32.mrb[0].mxu0
      %v2165 = vadd.f32 0.0, %v2164
      %v2166 = vpop.f32.mrb[0].mxu0
      %v2167 = vpop.f32.mrb[0].mxu0
      %v2168 = vadd.f32 0.0, %v2167
      %v2169 = vpop.f32.mrb[0].mxu0
      %2170 = vdwg.mxu0
      %v2171 = vadd.f32 %v2023, %v2109
      %v2172 = vadd.f32 %v2024, %v2112
      %v2173 = vadd.f32 %v2025, %v2117
      %v2174 = vadd.f32 %v2026, %v2120
      %v2175 = vadd.f32 %v2027, %v2125
      %v2176 = vadd.f32 %v2028, %v2128
      %v2177 = vadd.f32 %v2029, %v2133
      %v2178 = vadd.f32 %v2030, %v2136
      %v2179 = vadd.f32 %v2031, %v2141
      %v2180 = vadd.f32 %v2032, %v2144
      %v2181 = vadd.f32 %v2033, %v2149
      %v2182 = vadd.f32 %v2034, %v2152
      %v2183 = vadd.f32 %v2035, %v2157
      %v2184 = vadd.f32 %v2036, %v2160
      %v2185 = vadd.f32 %v2037, %v2165
      %v2186 = vadd.f32 %v2038, %v2168
      %v2188 = vrot.slane %v759, 5
      %v2189 = vrot.slane %v2188, 4
      %v2190 = vrot.slane %v760, 5
      %v2191 = vsel %vm1284, %v2189, %v2190
      %v2192 = vrot.slane %v2190, 4
      %v2193 = vrot.slane %v761, 5
      %v2194 = vsel %vm1284, %v2192, %v2193
      %s2195 = scalar_lea.vmem %s6, 16
      %v2196 = vld [vmem:[%s2195] sm:$0x3]
      %v2197 = vunpack.c.l.b16 %v2191
      %v2198 = vunpack.c.l.b16 %v2194
      %v2199 = vpack.c.b16 %v2198, %v2197
      %v2201 = vsel %vm984, %v2199, 0
      %v2204 = vsel %vm1009, %v2196, 0
      %2206 = vmatprep.subr.bf16.mxu0 0
      %2207 = vmatpush1.bf16.msra.mxu0 %v2204
      %2208 = vmatprep.subr.bf16.mxu0 0
      %2209 = vmatpush1.bf16.msra.mxu0 0
      %2210 = vmatprep.subr.bf16.mxu0 0
      %2211 = vmatpush1.bf16.msra.mxu0 0
      %2212 = vmatprep.subr.bf16.mxu0 0
      %2213 = vmatpush1.bf16.msra.mxu0 0
      %2214 = vmatprep.subr.bf16.mxu0 0
      %2215 = vmatpush1.bf16.msra.mxu0 0
      %2216 = vmatprep.subr.bf16.mxu0 0
      %2217 = vmatpush1.bf16.msra.mxu0 0
      %2218 = vmatprep.subr.bf16.mxu0 0
      %2219 = vmatpush1.bf16.msra.mxu0 0
      %2220 = vmatprep.subr.bf16.mxu0 0
      %2221 = vmatpush1.bf16.msra.mxu0 0
      %2222 = vmatprep.subr.bf16.mxu0 0
      %2223 = vmatpush1.bf16.msra.mxu0 0
      %2224 = vmatprep.subr.bf16.mxu0 0
      %2225 = vmatpush1.bf16.msra.mxu0 0
      %2226 = vmatprep.subr.bf16.mxu0 0
      %2227 = vmatpush1.bf16.msra.mxu0 0
      %2228 = vmatprep.subr.bf16.mxu0 0
      %2229 = vmatpush1.bf16.msra.mxu0 0
      %2230 = vmatprep.subr.bf16.mxu0 0
      %2231 = vmatpush1.bf16.msra.mxu0 0
      %2232 = vmatprep.subr.bf16.mxu0 0
      %2233 = vmatpush1.bf16.msra.mxu0 0
      %2234 = vmatprep.subr.bf16.mxu0 0
      %2235 = vmatpush1.bf16.msra.mxu0 0
      %2236 = vmatprep.subr.bf16.mxu0 0
      %2237 = vmatpush1.bf16.msra.mxu0 0
      %2238 = vmatprep.mubr.bf16.mxu0 0
      %2239 = vmatmul.mubr.bf16.gmra.mrb[0].mxu0 %v1374
      %v2240 = vpop.f32.mrb[0].mxu0
      %v2241 = vadd.f32 0.0, %v2240
      %v2242 = vpop.f32.mrb[0].mxu0
      %v2243 = vpop.f32.mrb[0].mxu0
      %v2244 = vadd.f32 0.0, %v2243
      %v2245 = vpop.f32.mrb[0].mxu0
      %2246 = vmatprep.mubr.bf16.mxu0 0
      %2247 = vmatmul.mubr.bf16.gmra.mrb[0].mxu0 %v1377
      %v2248 = vpop.f32.mrb[0].mxu0
      %v2249 = vadd.f32 0.0, %v2248
      %v2250 = vpop.f32.mrb[0].mxu0
      %v2251 = vpop.f32.mrb[0].mxu0
      %v2252 = vadd.f32 0.0, %v2251
      %v2253 = vpop.f32.mrb[0].mxu0
      %2254 = vmatprep.mubr.bf16.mxu0 0
      %2255 = vmatmul.mubr.bf16.gmra.mrb[0].mxu0 %v1380
      %v2256 = vpop.f32.mrb[0].mxu0
      %v2257 = vadd.f32 0.0, %v2256
      %v2258 = vpop.f32.mrb[0].mxu0
      %v2259 = vpop.f32.mrb[0].mxu0
      %v2260 = vadd.f32 0.0, %v2259
      %v2261 = vpop.f32.mrb[0].mxu0
      %2262 = vmatprep.mubr.bf16.mxu0 0
      %2263 = vmatmul.mubr.bf16.gmra.mrb[0].mxu0 %v1383
      %v2264 = vpop.f32.mrb[0].mxu0
      %v2265 = vadd.f32 0.0, %v2264
      %v2266 = vpop.f32.mrb[0].mxu0
      %v2267 = vpop.f32.mrb[0].mxu0
      %v2268 = vadd.f32 0.0, %v2267
      %v2269 = vpop.f32.mrb[0].mxu0
      %2270 = vmatprep.mubr.bf16.mxu0 0
      %2271 = vmatmul.mubr.bf16.gmra.mrb[0].mxu0 %v1386
      %v2272 = vpop.f32.mrb[0].mxu0
      %v2273 = vadd.f32 0.0, %v2272
      %v2274 = vpop.f32.mrb[0].mxu0
      %v2275 = vpop.f32.mrb[0].mxu0
      %v2276 = vadd.f32 0.0, %v2275
      %v2277 = vpop.f32.mrb[0].mxu0
      %2278 = vmatprep.mubr.bf16.mxu0 0
      %2279 = vmatmul.mubr.bf16.gmra.mrb[0].mxu0 %v1389
      %v2280 = vpop.f32.mrb[0].mxu0
      %v2281 = vadd.f32 0.0, %v2280
      %v2282 = vpop.f32.mrb[0].mxu0
      %v2283 = vpop.f32.mrb[0].mxu0
      %v2284 = vadd.f32 0.0, %v2283
      %v2285 = vpop.f32.mrb[0].mxu0
      %2286 = vmatprep.mubr.bf16.mxu0 0
      %2287 = vmatmul.mubr.bf16.gmra.mrb[0].mxu0 %v1795
      %v2288 = vpop.f32.mrb[0].mxu0
      %v2289 = vadd.f32 0.0, %v2288
      %v2290 = vpop.f32.mrb[0].mxu0
      %v2291 = vpop.f32.mrb[0].mxu0
      %v2292 = vadd.f32 0.0, %v2291
      %v2293 = vpop.f32.mrb[0].mxu0
      %2294 = vmatprep.mubr.bf16.mxu0 0
      %2295 = vmatmul.mubr.bf16.gmra.mrb[0].mxu0 %v2201
      %v2296 = vpop.f32.mrb[0].mxu0
      %v2297 = vadd.f32 0.0, %v2296
      %v2298 = vpop.f32.mrb[0].mxu0
      %v2299 = vpop.f32.mrb[0].mxu0
      %v2300 = vadd.f32 0.0, %v2299
      %v2301 = vpop.f32.mrb[0].mxu0
      %2302 = vdwg.mxu0
      %v2303 = vadd.f32 %v2171, %v2241
      %v2304 = vadd.f32 %v2172, %v2244
      %v2305 = vadd.f32 %v2173, %v2249
      %v2306 = vadd.f32 %v2174, %v2252
      %v2307 = vadd.f32 %v2175, %v2257
      %v2308 = vadd.f32 %v2176, %v2260
      %v2309 = vadd.f32 %v2177, %v2265
      %v2310 = vadd.f32 %v2178, %v2268
      %v2311 = vadd.f32 %v2179, %v2273
      %v2312 = vadd.f32 %v2180, %v2276
      %v2313 = vadd.f32 %v2181, %v2281
      %v2314 = vadd.f32 %v2182, %v2284
      %v2315 = vadd.f32 %v2183, %v2289
      %v2316 = vadd.f32 %v2184, %v2292
      %v2317 = vadd.f32 %v2185, %v2297
      %v2318 = vadd.f32 %v2186, %v2300
      %v2319 = vld [vmem:[%s644] sm:$0xf]
      %v2320 = vld [vmem:[%s644 + $0x4] sm:$0xf]
      %v2321 = vld [vmem:[%s644 + $0x8] sm:$0x1]
      %v2322 = vld [vmem:[%s644 + $0xc] sm:$0xf]
      %v2323 = vld [vmem:[%s644 + $0x10] sm:$0xf]
      %v2324 = vld [vmem:[%s644 + $0x14] sm:$0x1]
      %v2325 = vld [vmem:[%s644 + $0x18] sm:$0xf]
      %v2326 = vld [vmem:[%s644 + $0x1c] sm:$0xf]
      %v2327 = vld [vmem:[%s644 + $0x20] sm:$0x1]
      %v2328 = vld [vmem:[%s644 + $0x24] sm:$0xf]
      %v2329 = vld [vmem:[%s644 + $0x28] sm:$0xf]
      %v2330 = vld [vmem:[%s644 + $0x2c] sm:$0x1]
      %v2331 = vld [vmem:[%s644 + $0x30] sm:$0xf]
      %v2332 = vld [vmem:[%s644 + $0x34] sm:$0xf]
      %v2333 = vld [vmem:[%s644 + $0x38] sm:$0x1]
      %v2334 = vld [vmem:[%s644 + $0x3c] sm:$0xf]
      %v2335 = vld [vmem:[%s644 + $0x40] sm:$0xf]
      %v2336 = vld [vmem:[%s644 + $0x44] sm:$0x1]
      %v2337 = vld [vmem:[%s644 + $0x48] sm:$0xf]
      %v2338 = vld [vmem:[%s644 + $0x4c] sm:$0xf]
      %v2339 = vld [vmem:[%s644 + $0x50] sm:$0x1]
      %v2340 = vld [vmem:[%s644 + $0x54] sm:$0xf]
      %v2341 = vld [vmem:[%s644 + $0x58] sm:$0xf]
      %v2342 = vld [vmem:[%s644 + $0x5c] sm:$0x1]
      %v2343 = vld [vmem:[%s658] sm:$0xf]
      %v2344 = vld [vmem:[%s658 + $0x4] sm:$0xf]
      %v2345 = vld [vmem:[%s658 + $0x8] sm:$0x1]
      %v2346 = vmul.bf16 %v2343, %v747
      %v2347 = vmul.bf16 %v2344, %v747
      %v2348 = vmul.bf16 %v2345, %v747
      %v2349 = vld [vmem:[%s675] sm:$0xf]
      %v2350 = vld [vmem:[%s675 + $0x4] sm:$0xf]
      %v2351 = vld [vmem:[%s675 + $0x8] sm:$0x1]
      %v2352 = vmul.bf16 %v2349, %v757
      %v2353 = vmul.bf16 %v2350, %v757
      %v2354 = vmul.bf16 %v2351, %v757
      %v2355 = vld [vmem:[%s7] sm:$0x3]
      %v2372 = vunpack.c.l.b16 %v2346
      %v2373 = vunpack.c.l.b16 %v2347
      %v2374 = vunpack.c.l.b16 %v2319
      %v2375 = vunpack.c.l.b16 %v2320
      %v2376 = vunpack.c.l.b16 %v2322
      %v2377 = vunpack.c.l.b16 %v2323
      %v2378 = vunpack.c.l.b16 %v2325
      %v2379 = vunpack.c.l.b16 %v2326
      %v2380 = vunpack.c.l.b16 %v2328
      %v2381 = vunpack.c.l.b16 %v2329
      %v2382 = vunpack.c.l.b16 %v2331
      %v2383 = vunpack.c.l.b16 %v2332
      %v2384 = vunpack.c.l.b16 %v2334
      %v2385 = vunpack.c.l.b16 %v2335
      %v2386 = vunpack.c.l.b16 %v2337
      %v2387 = vunpack.c.l.b16 %v2338
      %v2388 = vpack.c.b16 %v2373, %v2372
      %v2389 = vpack.c.b16 %v2375, %v2374
      %v2390 = vpack.c.b16 %v2377, %v2376
      %v2391 = vpack.c.b16 %v2379, %v2378
      %v2392 = vpack.c.b16 %v2381, %v2380
      %v2393 = vpack.c.b16 %v2383, %v2382
      %v2394 = vpack.c.b16 %v2385, %v2384
      %v2395 = vpack.c.b16 %v2387, %v2386
      %v2397 = vsel %vm984, %v2388, 0
      %v2400 = vsel %vm984, %v2389, 0
      %v2403 = vsel %vm984, %v2390, 0
      %v2406 = vsel %vm984, %v2391, 0
      %v2409 = vsel %vm984, %v2392, 0
      %v2412 = vsel %vm984, %v2393, 0
      %v2415 = vsel %vm984, %v2394, 0
      %v2418 = vsel %vm984, %v2395, 0
      %v2421 = vsel %vm1009, %v2355, 0
      %2423 = vmatprep.subr.bf16.mxu0 0
      %2424 = vmatpush1.bf16.msra.mxu0 %v2421
      %2425 = vmatprep.subr.bf16.mxu0 0
      %2426 = vmatpush1.bf16.msra.mxu0 0
      %2427 = vmatprep.subr.bf16.mxu0 0
      %2428 = vmatpush1.bf16.msra.mxu0 0
      %2429 = vmatprep.subr.bf16.mxu0 0
      %2430 = vmatpush1.bf16.msra.mxu0 0
      %2431 = vmatprep.subr.bf16.mxu0 0
      %2432 = vmatpush1.bf16.msra.mxu0 0
      %2433 = vmatprep.subr.bf16.mxu0 0
      %2434 = vmatpush1.bf16.msra.mxu0 0
      %2435 = vmatprep.subr.bf16.mxu0 0
      %2436 = vmatpush1.bf16.msra.mxu0 0
      %2437 = vmatprep.subr.bf16.mxu0 0
      %2438 = vmatpush1.bf16.msra.mxu0 0
      %2439 = vmatprep.subr.bf16.mxu0 0
      %2440 = vmatpush1.bf16.msra.mxu0 0
      %2441 = vmatprep.subr.bf16.mxu0 0
      %2442 = vmatpush1.bf16.msra.mxu0 0
      %2443 = vmatprep.subr.bf16.mxu0 0
      %2444 = vmatpush1.bf16.msra.mxu0 0
      %2445 = vmatprep.subr.bf16.mxu0 0
      %2446 = vmatpush1.bf16.msra.mxu0 0
      %2447 = vmatprep.subr.bf16.mxu0 0
      %2448 = vmatpush1.bf16.msra.mxu0 0
      %2449 = vmatprep.subr.bf16.mxu0 0
      %2450 = vmatpush1.bf16.msra.mxu0 0
      %2451 = vmatprep.subr.bf16.mxu0 0
      %2452 = vmatpush1.bf16.msra.mxu0 0
      %2453 = vmatprep.subr.bf16.mxu0 0
      %2454 = vmatpush1.bf16.msra.mxu0 0
      %2455 = vmatprep.mubr.bf16.mxu0 0
      %2456 = vmatmul.mubr.bf16.gmra.mrb[0].mxu0 %v2397
      %v2457 = vpop.f32.mrb[0].mxu0
      %v2458 = vadd.f32 0.0, %v2457
      %v2459 = vpop.f32.mrb[0].mxu0
      %v2460 = vpop.f32.mrb[0].mxu0
      %v2461 = vadd.f32 0.0, %v2460
      %v2462 = vpop.f32.mrb[0].mxu0
      %2463 = vmatprep.mubr.bf16.mxu0 0
      %2464 = vmatmul.mubr.bf16.gmra.mrb[0].mxu0 %v2400
      %v2465 = vpop.f32.mrb[0].mxu0
      %v2466 = vadd.f32 0.0, %v2465
      %v2467 = vpop.f32.mrb[0].mxu0
      %v2468 = vpop.f32.mrb[0].mxu0
      %v2469 = vadd.f32 0.0, %v2468
      %v2470 = vpop.f32.mrb[0].mxu0
      %2471 = vmatprep.mubr.bf16.mxu0 0
      %2472 = vmatmul.mubr.bf16.gmra.mrb[0].mxu0 %v2403
      %v2473 = vpop.f32.mrb[0].mxu0
      %v2474 = vadd.f32 0.0, %v2473
      %v2475 = vpop.f32.mrb[0].mxu0
      %v2476 = vpop.f32.mrb[0].mxu0
      %v2477 = vadd.f32 0.0, %v2476
      %v2478 = vpop.f32.mrb[0].mxu0
      %2479 = vmatprep.mubr.bf16.mxu0 0
      %2480 = vmatmul.mubr.bf16.gmra.mrb[0].mxu0 %v2406
      %v2481 = vpop.f32.mrb[0].mxu0
      %v2482 = vadd.f32 0.0, %v2481
      %v2483 = vpop.f32.mrb[0].mxu0
      %v2484 = vpop.f32.mrb[0].mxu0
      %v2485 = vadd.f32 0.0, %v2484
      %v2486 = vpop.f32.mrb[0].mxu0
      %2487 = vmatprep.mubr.bf16.mxu0 0
      %2488 = vmatmul.mubr.bf16.gmra.mrb[0].mxu0 %v2409
      %v2489 = vpop.f32.mrb[0].mxu0
      %v2490 = vadd.f32 0.0, %v2489
      %v2491 = vpop.f32.mrb[0].mxu0
      %v2492 = vpop.f32.mrb[0].mxu0
      %v2493 = vadd.f32 0.0, %v2492
      %v2494 = vpop.f32.mrb[0].mxu0
      %2495 = vmatprep.mubr.bf16.mxu0 0
      %2496 = vmatmul.mubr.bf16.gmra.mrb[0].mxu0 %v2412
      %v2497 = vpop.f32.mrb[0].mxu0
      %v2498 = vadd.f32 0.0, %v2497
      %v2499 = vpop.f32.mrb[0].mxu0
      %v2500 = vpop.f32.mrb[0].mxu0
      %v2501 = vadd.f32 0.0, %v2500
      %v2502 = vpop.f32.mrb[0].mxu0
      %2503 = vmatprep.mubr.bf16.mxu0 0
      %2504 = vmatmul.mubr.bf16.gmra.mrb[0].mxu0 %v2415
      %v2505 = vpop.f32.mrb[0].mxu0
      %v2506 = vadd.f32 0.0, %v2505
      %v2507 = vpop.f32.mrb[0].mxu0
      %v2508 = vpop.f32.mrb[0].mxu0
      %v2509 = vadd.f32 0.0, %v2508
      %v2510 = vpop.f32.mrb[0].mxu0
      %2511 = vmatprep.mubr.bf16.mxu0 0
      %2512 = vmatmul.mubr.bf16.gmra.mrb[0].mxu0 %v2418
      %v2513 = vpop.f32.mrb[0].mxu0
      %v2514 = vadd.f32 0.0, %v2513
      %v2515 = vpop.f32.mrb[0].mxu0
      %v2516 = vpop.f32.mrb[0].mxu0
      %v2517 = vadd.f32 0.0, %v2516
      %v2518 = vpop.f32.mrb[0].mxu0
      %2519 = vdwg.mxu0
      %v2520 = vadd.f32 %v2303, %v2458
      %v2521 = vadd.f32 %v2304, %v2461
      %v2522 = vadd.f32 %v2305, %v2466
      %v2523 = vadd.f32 %v2306, %v2469
      %v2524 = vadd.f32 %v2307, %v2474
      %v2525 = vadd.f32 %v2308, %v2477
      %v2526 = vadd.f32 %v2309, %v2482
      %v2527 = vadd.f32 %v2310, %v2485
      %v2528 = vadd.f32 %v2311, %v2490
      %v2529 = vadd.f32 %v2312, %v2493
      %v2530 = vadd.f32 %v2313, %v2498
      %v2531 = vadd.f32 %v2314, %v2501
      %v2532 = vadd.f32 %v2315, %v2506
      %v2533 = vadd.f32 %v2316, %v2509
      %v2534 = vadd.f32 %v2317, %v2514
      %v2535 = vadd.f32 %v2318, %v2517
      %v2537 = vshrl.u32 %v2346, 16
      %v2539 = vrot.slane %v2537, 4
      %v2540 = vshll.u32 %v2346, 16
      %v2542 = vrot.slane %v2540, 5
      %v2543 = vor.u32 %v2539, %v2542
      %v2544 = vrot.slane %v2543, 4
      %v2546 = vshll.u32 %v2347, 16
      %v2548 = vrot.slane %v2546, 5
      %v2549 = vsel %vm765, %v2544, %v2548
      %v2550 = vshrl.u32 %v2347, 16
      %v2552 = vrot.slane %v2550, 4
      %v2553 = vor.u32 %v2552, %v2548
      %v2554 = vrot.slane %v2553, 4
      %v2556 = vshll.u32 %v2348, 16
      %v2558 = vrot.slane %v2556, 5
      %v2559 = vsel %vm765, %v2554, %v2558
      %v2561 = vshrl.u32 %v2319, 16
      %v2563 = vrot.slane %v2561, 4
      %v2564 = vshll.u32 %v2319, 16
      %v2566 = vrot.slane %v2564, 5
      %v2567 = vor.u32 %v2563, %v2566
      %v2568 = vrot.slane %v2567, 4
      %v2570 = vshll.u32 %v2320, 16
      %v2572 = vrot.slane %v2570, 5
      %v2573 = vsel %vm765, %v2568, %v2572
      %v2574 = vshrl.u32 %v2320, 16
      %v2576 = vrot.slane %v2574, 4
      %v2577 = vor.u32 %v2576, %v2572
      %v2578 = vrot.slane %v2577, 4
      %v2580 = vshll.u32 %v2321, 16
      %v2582 = vrot.slane %v2580, 5
      %v2583 = vsel %vm765, %v2578, %v2582
      %v2585 = vshrl.u32 %v2322, 16
      %v2587 = vrot.slane %v2585, 4
      %v2588 = vshll.u32 %v2322, 16
      %v2590 = vrot.slane %v2588, 5
      %v2591 = vor.u32 %v2587, %v2590
      %v2592 = vrot.slane %v2591, 4
      %v2594 = vshll.u32 %v2323, 16
      %v2596 = vrot.slane %v2594, 5
      %v2597 = vsel %vm765, %v2592, %v2596
      %v2598 = vshrl.u32 %v2323, 16
      %v2600 = vrot.slane %v2598, 4
      %v2601 = vor.u32 %v2600, %v2596
      %v2602 = vrot.slane %v2601, 4
      %v2604 = vshll.u32 %v2324, 16
      %v2606 = vrot.slane %v2604, 5
      %v2607 = vsel %vm765, %v2602, %v2606
      %v2609 = vshrl.u32 %v2325, 16
      %v2611 = vrot.slane %v2609, 4
      %v2612 = vshll.u32 %v2325, 16
      %v2614 = vrot.slane %v2612, 5
      %v2615 = vor.u32 %v2611, %v2614
      %v2616 = vrot.slane %v2615, 4
      %v2618 = vshll.u32 %v2326, 16
      %v2620 = vrot.slane %v2618, 5
      %v2621 = vsel %vm765, %v2616, %v2620
      %v2622 = vshrl.u32 %v2326, 16
      %v2624 = vrot.slane %v2622, 4
      %v2625 = vor.u32 %v2624, %v2620
      %v2626 = vrot.slane %v2625, 4
      %v2628 = vshll.u32 %v2327, 16
      %v2630 = vrot.slane %v2628, 5
      %v2631 = vsel %vm765, %v2626, %v2630
      %v2633 = vshrl.u32 %v2328, 16
      %v2635 = vrot.slane %v2633, 4
      %v2636 = vshll.u32 %v2328, 16
      %v2638 = vrot.slane %v2636, 5
      %v2639 = vor.u32 %v2635, %v2638
      %v2640 = vrot.slane %v2639, 4
      %v2642 = vshll.u32 %v2329, 16
      %v2644 = vrot.slane %v2642, 5
      %v2645 = vsel %vm765, %v2640, %v2644
      %v2646 = vshrl.u32 %v2329, 16
      %v2648 = vrot.slane %v2646, 4
      %v2649 = vor.u32 %v2648, %v2644
      %v2650 = vrot.slane %v2649, 4
      %v2652 = vshll.u32 %v2330, 16
      %v2654 = vrot.slane %v2652, 5
      %v2655 = vsel %vm765, %v2650, %v2654
      %v2657 = vshrl.u32 %v2331, 16
      %v2659 = vrot.slane %v2657, 4
      %v2660 = vshll.u32 %v2331, 16
      %v2662 = vrot.slane %v2660, 5
      %v2663 = vor.u32 %v2659, %v2662
      %v2664 = vrot.slane %v2663, 4
      %v2666 = vshll.u32 %v2332, 16
      %v2668 = vrot.slane %v2666, 5
      %v2669 = vsel %vm765, %v2664, %v2668
      %v2670 = vshrl.u32 %v2332, 16
      %v2672 = vrot.slane %v2670, 4
      %v2673 = vor.u32 %v2672, %v2668
      %v2674 = vrot.slane %v2673, 4
      %v2676 = vshll.u32 %v2333, 16
      %v2678 = vrot.slane %v2676, 5
      %v2679 = vsel %vm765, %v2674, %v2678
      %v2681 = vshrl.u32 %v2334, 16
      %v2683 = vrot.slane %v2681, 4
      %v2684 = vshll.u32 %v2334, 16
      %v2686 = vrot.slane %v2684, 5
      %v2687 = vor.u32 %v2683, %v2686
      %v2688 = vrot.slane %v2687, 4
      %v2690 = vshll.u32 %v2335, 16
      %v2692 = vrot.slane %v2690, 5
      %v2693 = vsel %vm765, %v2688, %v2692
      %v2694 = vshrl.u32 %v2335, 16
      %v2696 = vrot.slane %v2694, 4
      %v2697 = vor.u32 %v2696, %v2692
      %v2698 = vrot.slane %v2697, 4
      %v2700 = vshll.u32 %v2336, 16
      %v2702 = vrot.slane %v2700, 5
      %v2703 = vsel %vm765, %v2698, %v2702
      %v2705 = vshrl.u32 %v2337, 16
      %v2707 = vrot.slane %v2705, 4
      %v2708 = vshll.u32 %v2337, 16
      %v2710 = vrot.slane %v2708, 5
      %v2711 = vor.u32 %v2707, %v2710
      %v2712 = vrot.slane %v2711, 4
      %v2714 = vshll.u32 %v2338, 16
      %v2716 = vrot.slane %v2714, 5
      %v2717 = vsel %vm765, %v2712, %v2716
      %v2718 = vshrl.u32 %v2338, 16
      %v2720 = vrot.slane %v2718, 4
      %v2721 = vor.u32 %v2720, %v2716
      %v2722 = vrot.slane %v2721, 4
      %v2724 = vshll.u32 %v2339, 16
      %v2726 = vrot.slane %v2724, 5
      %v2727 = vsel %vm765, %v2722, %v2726
      %s2728 = scalar_lea.vmem %s7, 2
      %v2729 = vld [vmem:[%s2728] sm:$0x3]
      %v2730 = vunpack.c.l.b16 %v2549
      %v2731 = vunpack.c.l.b16 %v2559
      %v2732 = vunpack.c.l.b16 %v2573
      %v2733 = vunpack.c.l.b16 %v2583
      %v2734 = vunpack.c.l.b16 %v2597
      %v2735 = vunpack.c.l.b16 %v2607
      %v2736 = vunpack.c.l.b16 %v2621
      %v2737 = vunpack.c.l.b16 %v2631
      %v2738 = vunpack.c.l.b16 %v2645
      %v2739 = vunpack.c.l.b16 %v2655
      %v2740 = vunpack.c.l.b16 %v2669
      %v2741 = vunpack.c.l.b16 %v2679
      %v2742 = vunpack.c.l.b16 %v2693
      %v2743 = vunpack.c.l.b16 %v2703
      %v2744 = vunpack.c.l.b16 %v2717
      %v2745 = vunpack.c.l.b16 %v2727
      %v2746 = vpack.c.b16 %v2731, %v2730
      %v2747 = vpack.c.b16 %v2733, %v2732
      %v2748 = vpack.c.b16 %v2735, %v2734
      %v2749 = vpack.c.b16 %v2737, %v2736
      %v2750 = vpack.c.b16 %v2739, %v2738
      %v2751 = vpack.c.b16 %v2741, %v2740
      %v2752 = vpack.c.b16 %v2743, %v2742
      %v2753 = vpack.c.b16 %v2745, %v2744
      %v2755 = vsel %vm984, %v2746, 0
      %v2758 = vsel %vm984, %v2747, 0
      %v2761 = vsel %vm984, %v2748, 0
      %v2764 = vsel %vm984, %v2749, 0
      %v2767 = vsel %vm984, %v2750, 0
      %v2770 = vsel %vm984, %v2751, 0
      %v2773 = vsel %vm984, %v2752, 0
      %v2776 = vsel %vm984, %v2753, 0
      %v2779 = vsel %vm1009, %v2729, 0
      %2781 = vmatprep.subr.bf16.mxu0 0
      %2782 = vmatpush1.bf16.msra.mxu0 %v2779
      %2783 = vmatprep.subr.bf16.mxu0 0
      %2784 = vmatpush1.bf16.msra.mxu0 0
      %2785 = vmatprep.subr.bf16.mxu0 0
      %2786 = vmatpush1.bf16.msra.mxu0 0
      %2787 = vmatprep.subr.bf16.mxu0 0
      %2788 = vmatpush1.bf16.msra.mxu0 0
      %2789 = vmatprep.subr.bf16.mxu0 0
      %2790 = vmatpush1.bf16.msra.mxu0 0
      %2791 = vmatprep.subr.bf16.mxu0 0
      %2792 = vmatpush1.bf16.msra.mxu0 0
      %2793 = vmatprep.subr.bf16.mxu0 0
      %2794 = vmatpush1.bf16.msra.mxu0 0
      %2795 = vmatprep.subr.bf16.mxu0 0
      %2796 = vmatpush1.bf16.msra.mxu0 0
      %2797 = vmatprep.subr.bf16.mxu0 0
      %2798 = vmatpush1.bf16.msra.mxu0 0
      %2799 = vmatprep.subr.bf16.mxu0 0
      %2800 = vmatpush1.bf16.msra.mxu0 0
      %2801 = vmatprep.subr.bf16.mxu0 0
      %2802 = vmatpush1.bf16.msra.mxu0 0
      %2803 = vmatprep.subr.bf16.mxu0 0
      %2804 = vmatpush1.bf16.msra.mxu0 0
      %2805 = vmatprep.subr.bf16.mxu0 0
      %2806 = vmatpush1.bf16.msra.mxu0 0
      %2807 = vmatprep.subr.bf16.mxu0 0
      %2808 = vmatpush1.bf16.msra.mxu0 0
      %2809 = vmatprep.subr.bf16.mxu0 0
      %2810 = vmatpush1.bf16.msra.mxu0 0
      %2811 = vmatprep.subr.bf16.mxu0 0
      %2812 = vmatpush1.bf16.msra.mxu0 0
      %2813 = vmatprep.mubr.bf16.mxu0 0
      %2814 = vmatmul.mubr.bf16.gmra.mrb[0].mxu0 %v2755
      %v2815 = vpop.f32.mrb[0].mxu0
      %v2816 = vadd.f32 0.0, %v2815
      %v2817 = vpop.f32.mrb[0].mxu0
      %v2818 = vpop.f32.mrb[0].mxu0
      %v2819 = vadd.f32 0.0, %v2818
      %v2820 = vpop.f32.mrb[0].mxu0
      %2821 = vmatprep.mubr.bf16.mxu0 0
      %2822 = vmatmul.mubr.bf16.gmra.mrb[0].mxu0 %v2758
      %v2823 = vpop.f32.mrb[0].mxu0
      %v2824 = vadd.f32 0.0, %v2823
      %v2825 = vpop.f32.mrb[0].mxu0
      %v2826 = vpop.f32.mrb[0].mxu0
      %v2827 = vadd.f32 0.0, %v2826
      %v2828 = vpop.f32.mrb[0].mxu0
      %2829 = vmatprep.mubr.bf16.mxu0 0
      %2830 = vmatmul.mubr.bf16.gmra.mrb[0].mxu0 %v2761
      %v2831 = vpop.f32.mrb[0].mxu0
      %v2832 = vadd.f32 0.0, %v2831
      %v2833 = vpop.f32.mrb[0].mxu0
      %v2834 = vpop.f32.mrb[0].mxu0
      %v2835 = vadd.f32 0.0, %v2834
      %v2836 = vpop.f32.mrb[0].mxu0
      %2837 = vmatprep.mubr.bf16.mxu0 0
      %2838 = vmatmul.mubr.bf16.gmra.mrb[0].mxu0 %v2764
      %v2839 = vpop.f32.mrb[0].mxu0
      %v2840 = vadd.f32 0.0, %v2839
      %v2841 = vpop.f32.mrb[0].mxu0
      %v2842 = vpop.f32.mrb[0].mxu0
      %v2843 = vadd.f32 0.0, %v2842
      %v2844 = vpop.f32.mrb[0].mxu0
      %2845 = vmatprep.mubr.bf16.mxu0 0
      %2846 = vmatmul.mubr.bf16.gmra.mrb[0].mxu0 %v2767
      %v2847 = vpop.f32.mrb[0].mxu0
      %v2848 = vadd.f32 0.0, %v2847
      %v2849 = vpop.f32.mrb[0].mxu0
      %v2850 = vpop.f32.mrb[0].mxu0
      %v2851 = vadd.f32 0.0, %v2850
      %v2852 = vpop.f32.mrb[0].mxu0
      %2853 = vmatprep.mubr.bf16.mxu0 0
      %2854 = vmatmul.mubr.bf16.gmra.mrb[0].mxu0 %v2770
      %v2855 = vpop.f32.mrb[0].mxu0
      %v2856 = vadd.f32 0.0, %v2855
      %v2857 = vpop.f32.mrb[0].mxu0
      %v2858 = vpop.f32.mrb[0].mxu0
      %v2859 = vadd.f32 0.0, %v2858
      %v2860 = vpop.f32.mrb[0].mxu0
      %2861 = vmatprep.mubr.bf16.mxu0 0
      %2862 = vmatmul.mubr.bf16.gmra.mrb[0].mxu0 %v2773
      %v2863 = vpop.f32.mrb[0].mxu0
      %v2864 = vadd.f32 0.0, %v2863
      %v2865 = vpop.f32.mrb[0].mxu0
      %v2866 = vpop.f32.mrb[0].mxu0
      %v2867 = vadd.f32 0.0, %v2866
      %v2868 = vpop.f32.mrb[0].mxu0
      %2869 = vmatprep.mubr.bf16.mxu0 0
      %2870 = vmatmul.mubr.bf16.gmra.mrb[0].mxu0 %v2776
      %v2871 = vpop.f32.mrb[0].mxu0
      %v2872 = vadd.f32 0.0, %v2871
      %v2873 = vpop.f32.mrb[0].mxu0
      %v2874 = vpop.f32.mrb[0].mxu0
      %v2875 = vadd.f32 0.0, %v2874
      %v2876 = vpop.f32.mrb[0].mxu0
      %2877 = vdwg.mxu0
      %v2878 = vadd.f32 %v2520, %v2816
      %v2879 = vadd.f32 %v2521, %v2819
      %v2880 = vadd.f32 %v2522, %v2824
      %v2881 = vadd.f32 %v2523, %v2827
      %v2882 = vadd.f32 %v2524, %v2832
      %v2883 = vadd.f32 %v2525, %v2835
      %v2884 = vadd.f32 %v2526, %v2840
      %v2885 = vadd.f32 %v2527, %v2843
      %v2886 = vadd.f32 %v2528, %v2848
      %v2887 = vadd.f32 %v2529, %v2851
      %v2888 = vadd.f32 %v2530, %v2856
      %v2889 = vadd.f32 %v2531, %v2859
      %v2890 = vadd.f32 %v2532, %v2864
      %v2891 = vadd.f32 %v2533, %v2867
      %v2892 = vadd.f32 %v2534, %v2872
      %v2893 = vadd.f32 %v2535, %v2875
      %v2902 = vrot.slane %v2346, 5
      %v2903 = vrot.slane %v2902, 4
      %v2904 = vrot.slane %v2347, 5
      %v2905 = vsel %vm1284, %v2903, %v2904
      %v2906 = vrot.slane %v2904, 4
      %v2907 = vrot.slane %v2348, 5
      %v2908 = vsel %vm1284, %v2906, %v2907
      %v2909 = vrot.slane %v2319, 5
      %v2910 = vrot.slane %v2909, 4
      %v2911 = vrot.slane %v2320, 5
      %v2912 = vsel %vm1284, %v2910, %v2911
      %v2913 = vrot.slane %v2911, 4
      %v2914 = vrot.slane %v2321, 5
      %v2915 = vsel %vm1284, %v2913, %v2914
      %v2916 = vrot.slane %v2322, 5
      %v2917 = vrot.slane %v2916, 4
      %v2918 = vrot.slane %v2323, 5
      %v2919 = vsel %vm1284, %v2917, %v2918
      %v2920 = vrot.slane %v2918, 4
      %v2921 = vrot.slane %v2324, 5
      %v2922 = vsel %vm1284, %v2920, %v2921
      %v2923 = vrot.slane %v2325, 5
      %v2924 = vrot.slane %v2923, 4
      %v2925 = vrot.slane %v2326, 5
      %v2926 = vsel %vm1284, %v2924, %v2925
      %v2927 = vrot.slane %v2925, 4
      %v2928 = vrot.slane %v2327, 5
      %v2929 = vsel %vm1284, %v2927, %v2928
      %v2930 = vrot.slane %v2328, 5
      %v2931 = vrot.slane %v2930, 4
      %v2932 = vrot.slane %v2329, 5
      %v2933 = vsel %vm1284, %v2931, %v2932
      %v2934 = vrot.slane %v2932, 4
      %v2935 = vrot.slane %v2330, 5
      %v2936 = vsel %vm1284, %v2934, %v2935
      %v2937 = vrot.slane %v2331, 5
      %v2938 = vrot.slane %v2937, 4
      %v2939 = vrot.slane %v2332, 5
      %v2940 = vsel %vm1284, %v2938, %v2939
      %v2941 = vrot.slane %v2939, 4
      %v2942 = vrot.slane %v2333, 5
      %v2943 = vsel %vm1284, %v2941, %v2942
      %v2944 = vrot.slane %v2334, 5
      %v2945 = vrot.slane %v2944, 4
      %v2946 = vrot.slane %v2335, 5
      %v2947 = vsel %vm1284, %v2945, %v2946
      %v2948 = vrot.slane %v2946, 4
      %v2949 = vrot.slane %v2336, 5
      %v2950 = vsel %vm1284, %v2948, %v2949
      %v2951 = vrot.slane %v2337, 5
      %v2952 = vrot.slane %v2951, 4
      %v2953 = vrot.slane %v2338, 5
      %v2954 = vsel %vm1284, %v2952, %v2953
      %v2955 = vrot.slane %v2953, 4
      %v2956 = vrot.slane %v2339, 5
      %v2957 = vsel %vm1284, %v2955, %v2956
      %s2958 = scalar_lea.vmem %s7, 4
      %v2959 = vld [vmem:[%s2958] sm:$0x3]
      %v2960 = vunpack.c.l.b16 %v2905
      %v2961 = vunpack.c.l.b16 %v2908
      %v2962 = vunpack.c.l.b16 %v2912
      %v2963 = vunpack.c.l.b16 %v2915
      %v2964 = vunpack.c.l.b16 %v2919
      %v2965 = vunpack.c.l.b16 %v2922
      %v2966 = vunpack.c.l.b16 %v2926
      %v2967 = vunpack.c.l.b16 %v2929
      %v2968 = vunpack.c.l.b16 %v2933
      %v2969 = vunpack.c.l.b16 %v2936
      %v2970 = vunpack.c.l.b16 %v2940
      %v2971 = vunpack.c.l.b16 %v2943
      %v2972 = vunpack.c.l.b16 %v2947
      %v2973 = vunpack.c.l.b16 %v2950
      %v2974 = vunpack.c.l.b16 %v2954
      %v2975 = vunpack.c.l.b16 %v2957
      %v2976 = vpack.c.b16 %v2961, %v2960
      %v2977 = vpack.c.b16 %v2963, %v2962
      %v2978 = vpack.c.b16 %v2965, %v2964
      %v2979 = vpack.c.b16 %v2967, %v2966
      %v2980 = vpack.c.b16 %v2969, %v2968
      %v2981 = vpack.c.b16 %v2971, %v2970
      %v2982 = vpack.c.b16 %v2973, %v2972
      %v2983 = vpack.c.b16 %v2975, %v2974
      %v2985 = vsel %vm984, %v2976, 0
      %v2988 = vsel %vm984, %v2977, 0
      %v2991 = vsel %vm984, %v2978, 0
      %v2994 = vsel %vm984, %v2979, 0
      %v2997 = vsel %vm984, %v2980, 0
      %v3000 = vsel %vm984, %v2981, 0
      %v3003 = vsel %vm984, %v2982, 0
      %v3006 = vsel %vm984, %v2983, 0
      %v3009 = vsel %vm1009, %v2959, 0
      %3011 = vmatprep.subr.bf16.mxu0 0
      %3012 = vmatpush1.bf16.msra.mxu0 %v3009
      %3013 = vmatprep.subr.bf16.mxu0 0
      %3014 = vmatpush1.bf16.msra.mxu0 0
      %3015 = vmatprep.subr.bf16.mxu0 0
      %3016 = vmatpush1.bf16.msra.mxu0 0
      %3017 = vmatprep.subr.bf16.mxu0 0
      %3018 = vmatpush1.bf16.msra.mxu0 0
      %3019 = vmatprep.subr.bf16.mxu0 0
      %3020 = vmatpush1.bf16.msra.mxu0 0
      %3021 = vmatprep.subr.bf16.mxu0 0
      %3022 = vmatpush1.bf16.msra.mxu0 0
      %3023 = vmatprep.subr.bf16.mxu0 0
      %3024 = vmatpush1.bf16.msra.mxu0 0
      %3025 = vmatprep.subr.bf16.mxu0 0
      %3026 = vmatpush1.bf16.msra.mxu0 0
      %3027 = vmatprep.subr.bf16.mxu0 0
      %3028 = vmatpush1.bf16.msra.mxu0 0
      %3029 = vmatprep.subr.bf16.mxu0 0
      %3030 = vmatpush1.bf16.msra.mxu0 0
      %3031 = vmatprep.subr.bf16.mxu0 0
      %3032 = vmatpush1.bf16.msra.mxu0 0
      %3033 = vmatprep.subr.bf16.mxu0 0
      %3034 = vmatpush1.bf16.msra.mxu0 0
      %3035 = vmatprep.subr.bf16.mxu0 0
      %3036 = vmatpush1.bf16.msra.mxu0 0
      %3037 = vmatprep.subr.bf16.mxu0 0
      %3038 = vmatpush1.bf16.msra.mxu0 0
      %3039 = vmatprep.subr.bf16.mxu0 0
      %3040 = vmatpush1.bf16.msra.mxu0 0
      %3041 = vmatprep.subr.bf16.mxu0 0
      %3042 = vmatpush1.bf16.msra.mxu0 0
      %3043 = vmatprep.mubr.bf16.mxu0 0
      %3044 = vmatmul.mubr.bf16.gmra.mrb[0].mxu0 %v2985
      %v3045 = vpop.f32.mrb[0].mxu0
      %v3046 = vadd.f32 0.0, %v3045
      %v3047 = vpop.f32.mrb[0].mxu0
      %v3048 = vpop.f32.mrb[0].mxu0
      %v3049 = vadd.f32 0.0, %v3048
      %v3050 = vpop.f32.mrb[0].mxu0
      %3051 = vmatprep.mubr.bf16.mxu0 0
      %3052 = vmatmul.mubr.bf16.gmra.mrb[0].mxu0 %v2988
      %v3053 = vpop.f32.mrb[0].mxu0
      %v3054 = vadd.f32 0.0, %v3053
      %v3055 = vpop.f32.mrb[0].mxu0
      %v3056 = vpop.f32.mrb[0].mxu0
      %v3057 = vadd.f32 0.0, %v3056
      %v3058 = vpop.f32.mrb[0].mxu0
      %3059 = vmatprep.mubr.bf16.mxu0 0
      %3060 = vmatmul.mubr.bf16.gmra.mrb[0].mxu0 %v2991
      %v3061 = vpop.f32.mrb[0].mxu0
      %v3062 = vadd.f32 0.0, %v3061
      %v3063 = vpop.f32.mrb[0].mxu0
      %v3064 = vpop.f32.mrb[0].mxu0
      %v3065 = vadd.f32 0.0, %v3064
      %v3066 = vpop.f32.mrb[0].mxu0
      %3067 = vmatprep.mubr.bf16.mxu0 0
      %3068 = vmatmul.mubr.bf16.gmra.mrb[0].mxu0 %v2994
      %v3069 = vpop.f32.mrb[0].mxu0
      %v3070 = vadd.f32 0.0, %v3069
      %v3071 = vpop.f32.mrb[0].mxu0
      %v3072 = vpop.f32.mrb[0].mxu0
      %v3073 = vadd.f32 0.0, %v3072
      %v3074 = vpop.f32.mrb[0].mxu0
      %3075 = vmatprep.mubr.bf16.mxu0 0
      %3076 = vmatmul.mubr.bf16.gmra.mrb[0].mxu0 %v2997
      %v3077 = vpop.f32.mrb[0].mxu0
      %v3078 = vadd.f32 0.0, %v3077
      %v3079 = vpop.f32.mrb[0].mxu0
      %v3080 = vpop.f32.mrb[0].mxu0
      %v3081 = vadd.f32 0.0, %v3080
      %v3082 = vpop.f32.mrb[0].mxu0
      %3083 = vmatprep.mubr.bf16.mxu0 0
      %3084 = vmatmul.mubr.bf16.gmra.mrb[0].mxu0 %v3000
      %v3085 = vpop.f32.mrb[0].mxu0
      %v3086 = vadd.f32 0.0, %v3085
      %v3087 = vpop.f32.mrb[0].mxu0
      %v3088 = vpop.f32.mrb[0].mxu0
      %v3089 = vadd.f32 0.0, %v3088
      %v3090 = vpop.f32.mrb[0].mxu0
      %3091 = vmatprep.mubr.bf16.mxu0 0
      %3092 = vmatmul.mubr.bf16.gmra.mrb[0].mxu0 %v3003
      %v3093 = vpop.f32.mrb[0].mxu0
      %v3094 = vadd.f32 0.0, %v3093
      %v3095 = vpop.f32.mrb[0].mxu0
      %v3096 = vpop.f32.mrb[0].mxu0
      %v3097 = vadd.f32 0.0, %v3096
      %v3098 = vpop.f32.mrb[0].mxu0
      %3099 = vmatprep.mubr.bf16.mxu0 0
      %3100 = vmatmul.mubr.bf16.gmra.mrb[0].mxu0 %v3006
      %v3101 = vpop.f32.mrb[0].mxu0
      %v3102 = vadd.f32 0.0, %v3101
      %v3103 = vpop.f32.mrb[0].mxu0
      %v3104 = vpop.f32.mrb[0].mxu0
      %v3105 = vadd.f32 0.0, %v3104
      %v3106 = vpop.f32.mrb[0].mxu0
      %3107 = vdwg.mxu0
      %v3108 = vadd.f32 %v2878, %v3046
      %v3109 = vadd.f32 %v2879, %v3049
      %v3110 = vadd.f32 %v2880, %v3054
      %v3111 = vadd.f32 %v2881, %v3057
      %v3112 = vadd.f32 %v2882, %v3062
      %v3113 = vadd.f32 %v2883, %v3065
      %v3114 = vadd.f32 %v2884, %v3070
      %v3115 = vadd.f32 %v2885, %v3073
      %v3116 = vadd.f32 %v2886, %v3078
      %v3117 = vadd.f32 %v2887, %v3081
      %v3118 = vadd.f32 %v2888, %v3086
      %v3119 = vadd.f32 %v2889, %v3089
      %v3120 = vadd.f32 %v2890, %v3094
      %v3121 = vadd.f32 %v2891, %v3097
      %v3122 = vadd.f32 %v2892, %v3102
      %v3123 = vadd.f32 %v2893, %v3105
      %s3124 = scalar_lea.vmem %s7, 6
      %v3125 = vld [vmem:[%s3124] sm:$0x3]
      %v3128 = vunpack.c.l.b16 %v2340
      %v3129 = vunpack.c.l.b16 %v2341
      %v3130 = vpack.c.b16 %v3129, %v3128
      %v3132 = vsel %vm984, %v3130, 0
      %v3135 = vsel %vm1009, %v3125, 0
      %3137 = vmatprep.subr.bf16.mxu0 0
      %3138 = vmatpush1.bf16.msra.mxu0 %v3135
      %3139 = vmatprep.subr.bf16.mxu0 0
      %3140 = vmatpush1.bf16.msra.mxu0 0
      %3141 = vmatprep.subr.bf16.mxu0 0
      %3142 = vmatpush1.bf16.msra.mxu0 0
      %3143 = vmatprep.subr.bf16.mxu0 0
      %3144 = vmatpush1.bf16.msra.mxu0 0
      %3145 = vmatprep.subr.bf16.mxu0 0
      %3146 = vmatpush1.bf16.msra.mxu0 0
      %3147 = vmatprep.subr.bf16.mxu0 0
      %3148 = vmatpush1.bf16.msra.mxu0 0
      %3149 = vmatprep.subr.bf16.mxu0 0
      %3150 = vmatpush1.bf16.msra.mxu0 0
      %3151 = vmatprep.subr.bf16.mxu0 0
      %3152 = vmatpush1.bf16.msra.mxu0 0
      %3153 = vmatprep.subr.bf16.mxu0 0
      %3154 = vmatpush1.bf16.msra.mxu0 0
      %3155 = vmatprep.subr.bf16.mxu0 0
      %3156 = vmatpush1.bf16.msra.mxu0 0
      %3157 = vmatprep.subr.bf16.mxu0 0
      %3158 = vmatpush1.bf16.msra.mxu0 0
      %3159 = vmatprep.subr.bf16.mxu0 0
      %3160 = vmatpush1.bf16.msra.mxu0 0
      %3161 = vmatprep.subr.bf16.mxu0 0
      %3162 = vmatpush1.bf16.msra.mxu0 0
      %3163 = vmatprep.subr.bf16.mxu0 0
      %3164 = vmatpush1.bf16.msra.mxu0 0
      %3165 = vmatprep.subr.bf16.mxu0 0
      %3166 = vmatpush1.bf16.msra.mxu0 0
      %3167 = vmatprep.subr.bf16.mxu0 0
      %3168 = vmatpush1.bf16.msra.mxu0 0
      %3169 = vmatprep.mubr.bf16.mxu0 0
      %3170 = vmatmul.mubr.bf16.gmra.mrb[0].mxu0 %v2400
      %v3171 = vpop.f32.mrb[0].mxu0
      %v3172 = vadd.f32 0.0, %v3171
      %v3173 = vpop.f32.mrb[0].mxu0
      %v3174 = vpop.f32.mrb[0].mxu0
      %v3175 = vadd.f32 0.0, %v3174
      %v3176 = vpop.f32.mrb[0].mxu0
      %3177 = vmatprep.mubr.bf16.mxu0 0
      %3178 = vmatmul.mubr.bf16.gmra.mrb[0].mxu0 %v2403
      %v3179 = vpop.f32.mrb[0].mxu0
      %v3180 = vadd.f32 0.0, %v3179
      %v3181 = vpop.f32.mrb[0].mxu0
      %v3182 = vpop.f32.mrb[0].mxu0
      %v3183 = vadd.f32 0.0, %v3182
      %v3184 = vpop.f32.mrb[0].mxu0
      %3185 = vmatprep.mubr.bf16.mxu0 0
      %3186 = vmatmul.mubr.bf16.gmra.mrb[0].mxu0 %v2406
      %v3187 = vpop.f32.mrb[0].mxu0
      %v3188 = vadd.f32 0.0, %v3187
      %v3189 = vpop.f32.mrb[0].mxu0
      %v3190 = vpop.f32.mrb[0].mxu0
      %v3191 = vadd.f32 0.0, %v3190
      %v3192 = vpop.f32.mrb[0].mxu0
      %3193 = vmatprep.mubr.bf16.mxu0 0
      %3194 = vmatmul.mubr.bf16.gmra.mrb[0].mxu0 %v2409
      %v3195 = vpop.f32.mrb[0].mxu0
      %v3196 = vadd.f32 0.0, %v3195
      %v3197 = vpop.f32.mrb[0].mxu0
      %v3198 = vpop.f32.mrb[0].mxu0
      %v3199 = vadd.f32 0.0, %v3198
      %v3200 = vpop.f32.mrb[0].mxu0
      %3201 = vmatprep.mubr.bf16.mxu0 0
      %3202 = vmatmul.mubr.bf16.gmra.mrb[0].mxu0 %v2412
      %v3203 = vpop.f32.mrb[0].mxu0
      %v3204 = vadd.f32 0.0, %v3203
      %v3205 = vpop.f32.mrb[0].mxu0
      %v3206 = vpop.f32.mrb[0].mxu0
      %v3207 = vadd.f32 0.0, %v3206
      %v3208 = vpop.f32.mrb[0].mxu0
      %3209 = vmatprep.mubr.bf16.mxu0 0
      %3210 = vmatmul.mubr.bf16.gmra.mrb[0].mxu0 %v2415
      %v3211 = vpop.f32.mrb[0].mxu0
      %v3212 = vadd.f32 0.0, %v3211
      %v3213 = vpop.f32.mrb[0].mxu0
      %v3214 = vpop.f32.mrb[0].mxu0
      %v3215 = vadd.f32 0.0, %v3214
      %v3216 = vpop.f32.mrb[0].mxu0
      %3217 = vmatprep.mubr.bf16.mxu0 0
      %3218 = vmatmul.mubr.bf16.gmra.mrb[0].mxu0 %v2418
      %v3219 = vpop.f32.mrb[0].mxu0
      %v3220 = vadd.f32 0.0, %v3219
      %v3221 = vpop.f32.mrb[0].mxu0
      %v3222 = vpop.f32.mrb[0].mxu0
      %v3223 = vadd.f32 0.0, %v3222
      %v3224 = vpop.f32.mrb[0].mxu0
      %3225 = vmatprep.mubr.bf16.mxu0 0
      %3226 = vmatmul.mubr.bf16.gmra.mrb[0].mxu0 %v3132
      %v3227 = vpop.f32.mrb[0].mxu0
      %v3228 = vadd.f32 0.0, %v3227
      %v3229 = vpop.f32.mrb[0].mxu0
      %v3230 = vpop.f32.mrb[0].mxu0
      %v3231 = vadd.f32 0.0, %v3230
      %v3232 = vpop.f32.mrb[0].mxu0
      %3233 = vdwg.mxu0
      %v3234 = vadd.f32 %v3108, %v3172
      %v3235 = vadd.f32 %v3109, %v3175
      %v3236 = vadd.f32 %v3110, %v3180
      %v3237 = vadd.f32 %v3111, %v3183
      %v3238 = vadd.f32 %v3112, %v3188
      %v3239 = vadd.f32 %v3113, %v3191
      %v3240 = vadd.f32 %v3114, %v3196
      %v3241 = vadd.f32 %v3115, %v3199
      %v3242 = vadd.f32 %v3116, %v3204
      %v3243 = vadd.f32 %v3117, %v3207
      %v3244 = vadd.f32 %v3118, %v3212
      %v3245 = vadd.f32 %v3119, %v3215
      %v3246 = vadd.f32 %v3120, %v3220
      %v3247 = vadd.f32 %v3121, %v3223
      %v3248 = vadd.f32 %v3122, %v3228
      %v3249 = vadd.f32 %v3123, %v3231
      %v3251 = vshrl.u32 %v2340, 16
      %v3253 = vrot.slane %v3251, 4
      %v3254 = vshll.u32 %v2340, 16
      %v3256 = vrot.slane %v3254, 5
      %v3257 = vor.u32 %v3253, %v3256
      %v3258 = vrot.slane %v3257, 4
      %v3260 = vshll.u32 %v2341, 16
      %v3262 = vrot.slane %v3260, 5
      %v3263 = vsel %vm765, %v3258, %v3262
      %v3264 = vshrl.u32 %v2341, 16
      %v3266 = vrot.slane %v3264, 4
      %v3267 = vor.u32 %v3266, %v3262
      %v3268 = vrot.slane %v3267, 4
      %v3270 = vshll.u32 %v2342, 16
      %v3272 = vrot.slane %v3270, 5
      %v3273 = vsel %vm765, %v3268, %v3272
      %s3274 = scalar_lea.vmem %s7, 8
      %v3275 = vld [vmem:[%s3274] sm:$0x3]
      %v3276 = vunpack.c.l.b16 %v3263
      %v3277 = vunpack.c.l.b16 %v3273
      %v3278 = vpack.c.b16 %v3277, %v3276
      %v3280 = vsel %vm984, %v3278, 0
      %v3283 = vsel %vm1009, %v3275, 0
      %3285 = vmatprep.subr.bf16.mxu0 0
      %3286 = vmatpush1.bf16.msra.mxu0 %v3283
      %3287 = vmatprep.subr.bf16.mxu0 0
      %3288 = vmatpush1.bf16.msra.mxu0 0
      %3289 = vmatprep.subr.bf16.mxu0 0
      %3290 = vmatpush1.bf16.msra.mxu0 0
      %3291 = vmatprep.subr.bf16.mxu0 0
      %3292 = vmatpush1.bf16.msra.mxu0 0
      %3293 = vmatprep.subr.bf16.mxu0 0
      %3294 = vmatpush1.bf16.msra.mxu0 0
      %3295 = vmatprep.subr.bf16.mxu0 0
      %3296 = vmatpush1.bf16.msra.mxu0 0
      %3297 = vmatprep.subr.bf16.mxu0 0
      %3298 = vmatpush1.bf16.msra.mxu0 0
      %3299 = vmatprep.subr.bf16.mxu0 0
      %3300 = vmatpush1.bf16.msra.mxu0 0
      %3301 = vmatprep.subr.bf16.mxu0 0
      %3302 = vmatpush1.bf16.msra.mxu0 0
      %3303 = vmatprep.subr.bf16.mxu0 0
      %3304 = vmatpush1.bf16.msra.mxu0 0
      %3305 = vmatprep.subr.bf16.mxu0 0
      %3306 = vmatpush1.bf16.msra.mxu0 0
      %3307 = vmatprep.subr.bf16.mxu0 0
      %3308 = vmatpush1.bf16.msra.mxu0 0
      %3309 = vmatprep.subr.bf16.mxu0 0
      %3310 = vmatpush1.bf16.msra.mxu0 0
      %3311 = vmatprep.subr.bf16.mxu0 0
      %3312 = vmatpush1.bf16.msra.mxu0 0
      %3313 = vmatprep.subr.bf16.mxu0 0
      %3314 = vmatpush1.bf16.msra.mxu0 0
      %3315 = vmatprep.subr.bf16.mxu0 0
      %3316 = vmatpush1.bf16.msra.mxu0 0
      %3317 = vmatprep.mubr.bf16.mxu0 0
      %3318 = vmatmul.mubr.bf16.gmra.mrb[0].mxu0 %v2758
      %v3319 = vpop.f32.mrb[0].mxu0
      %v3320 = vadd.f32 0.0, %v3319
      %v3321 = vpop.f32.mrb[0].mxu0
      %v3322 = vpop.f32.mrb[0].mxu0
      %v3323 = vadd.f32 0.0, %v3322
      %v3324 = vpop.f32.mrb[0].mxu0
      %3325 = vmatprep.mubr.bf16.mxu0 0
      %3326 = vmatmul.mubr.bf16.gmra.mrb[0].mxu0 %v2761
      %v3327 = vpop.f32.mrb[0].mxu0
      %v3328 = vadd.f32 0.0, %v3327
      %v3329 = vpop.f32.mrb[0].mxu0
      %v3330 = vpop.f32.mrb[0].mxu0
      %v3331 = vadd.f32 0.0, %v3330
      %v3332 = vpop.f32.mrb[0].mxu0
      %3333 = vmatprep.mubr.bf16.mxu0 0
      %3334 = vmatmul.mubr.bf16.gmra.mrb[0].mxu0 %v2764
      %v3335 = vpop.f32.mrb[0].mxu0
      %v3336 = vadd.f32 0.0, %v3335
      %v3337 = vpop.f32.mrb[0].mxu0
      %v3338 = vpop.f32.mrb[0].mxu0
      %v3339 = vadd.f32 0.0, %v3338
      %v3340 = vpop.f32.mrb[0].mxu0
      %3341 = vmatprep.mubr.bf16.mxu0 0
      %3342 = vmatmul.mubr.bf16.gmra.mrb[0].mxu0 %v2767
      %v3343 = vpop.f32.mrb[0].mxu0
      %v3344 = vadd.f32 0.0, %v3343
      %v3345 = vpop.f32.mrb[0].mxu0
      %v3346 = vpop.f32.mrb[0].mxu0
      %v3347 = vadd.f32 0.0, %v3346
      %v3348 = vpop.f32.mrb[0].mxu0
      %3349 = vmatprep.mubr.bf16.mxu0 0
      %3350 = vmatmul.mubr.bf16.gmra.mrb[0].mxu0 %v2770
      %v3351 = vpop.f32.mrb[0].mxu0
      %v3352 = vadd.f32 0.0, %v3351
      %v3353 = vpop.f32.mrb[0].mxu0
      %v3354 = vpop.f32.mrb[0].mxu0
      %v3355 = vadd.f32 0.0, %v3354
      %v3356 = vpop.f32.mrb[0].mxu0
      %3357 = vmatprep.mubr.bf16.mxu0 0
      %3358 = vmatmul.mubr.bf16.gmra.mrb[0].mxu0 %v2773
      %v3359 = vpop.f32.mrb[0].mxu0
      %v3360 = vadd.f32 0.0, %v3359
      %v3361 = vpop.f32.mrb[0].mxu0
      %v3362 = vpop.f32.mrb[0].mxu0
      %v3363 = vadd.f32 0.0, %v3362
      %v3364 = vpop.f32.mrb[0].mxu0
      %3365 = vmatprep.mubr.bf16.mxu0 0
      %3366 = vmatmul.mubr.bf16.gmra.mrb[0].mxu0 %v2776
      %v3367 = vpop.f32.mrb[0].mxu0
      %v3368 = vadd.f32 0.0, %v3367
      %v3369 = vpop.f32.mrb[0].mxu0
      %v3370 = vpop.f32.mrb[0].mxu0
      %v3371 = vadd.f32 0.0, %v3370
      %v3372 = vpop.f32.mrb[0].mxu0
      %3373 = vmatprep.mubr.bf16.mxu0 0
      %3374 = vmatmul.mubr.bf16.gmra.mrb[0].mxu0 %v3280
      %v3375 = vpop.f32.mrb[0].mxu0
      %v3376 = vadd.f32 0.0, %v3375
      %v3377 = vpop.f32.mrb[0].mxu0
      %v3378 = vpop.f32.mrb[0].mxu0
      %v3379 = vadd.f32 0.0, %v3378
      %v3380 = vpop.f32.mrb[0].mxu0
      %3381 = vdwg.mxu0
      %v3382 = vadd.f32 %v3234, %v3320
      %v3383 = vadd.f32 %v3235, %v3323
      %v3384 = vadd.f32 %v3236, %v3328
      %v3385 = vadd.f32 %v3237, %v3331
      %v3386 = vadd.f32 %v3238, %v3336
      %v3387 = vadd.f32 %v3239, %v3339
      %v3388 = vadd.f32 %v3240, %v3344
      %v3389 = vadd.f32 %v3241, %v3347
      %v3390 = vadd.f32 %v3242, %v3352
      %v3391 = vadd.f32 %v3243, %v3355
      %v3392 = vadd.f32 %v3244, %v3360
      %v3393 = vadd.f32 %v3245, %v3363
      %v3394 = vadd.f32 %v3246, %v3368
      %v3395 = vadd.f32 %v3247, %v3371
      %v3396 = vadd.f32 %v3248, %v3376
      %v3397 = vadd.f32 %v3249, %v3379
      %v3399 = vrot.slane %v2340, 5
      %v3400 = vrot.slane %v3399, 4
      %v3401 = vrot.slane %v2341, 5
      %v3402 = vsel %vm1284, %v3400, %v3401
      %v3403 = vrot.slane %v3401, 4
      %v3404 = vrot.slane %v2342, 5
      %v3405 = vsel %vm1284, %v3403, %v3404
      %s3406 = scalar_lea.vmem %s7, 10
      %v3407 = vld [vmem:[%s3406] sm:$0x3]
      %v3408 = vunpack.c.l.b16 %v3402
      %v3409 = vunpack.c.l.b16 %v3405
      %v3410 = vpack.c.b16 %v3409, %v3408
      %v3412 = vsel %vm984, %v3410, 0
      %v3415 = vsel %vm1009, %v3407, 0
      %3417 = vmatprep.subr.bf16.mxu0 0
      %3418 = vmatpush1.bf16.msra.mxu0 %v3415
      %3419 = vmatprep.subr.bf16.mxu0 0
      %3420 = vmatpush1.bf16.msra.mxu0 0
      %3421 = vmatprep.subr.bf16.mxu0 0
      %3422 = vmatpush1.bf16.msra.mxu0 0
      %3423 = vmatprep.subr.bf16.mxu0 0
      %3424 = vmatpush1.bf16.msra.mxu0 0
      %3425 = vmatprep.subr.bf16.mxu0 0
      %3426 = vmatpush1.bf16.msra.mxu0 0
      %3427 = vmatprep.subr.bf16.mxu0 0
      %3428 = vmatpush1.bf16.msra.mxu0 0
      %3429 = vmatprep.subr.bf16.mxu0 0
      %3430 = vmatpush1.bf16.msra.mxu0 0
      %3431 = vmatprep.subr.bf16.mxu0 0
      %3432 = vmatpush1.bf16.msra.mxu0 0
      %3433 = vmatprep.subr.bf16.mxu0 0
      %3434 = vmatpush1.bf16.msra.mxu0 0
      %3435 = vmatprep.subr.bf16.mxu0 0
      %3436 = vmatpush1.bf16.msra.mxu0 0
      %3437 = vmatprep.subr.bf16.mxu0 0
      %3438 = vmatpush1.bf16.msra.mxu0 0
      %3439 = vmatprep.subr.bf16.mxu0 0
      %3440 = vmatpush1.bf16.msra.mxu0 0
      %3441 = vmatprep.subr.bf16.mxu0 0
      %3442 = vmatpush1.bf16.msra.mxu0 0
      %3443 = vmatprep.subr.bf16.mxu0 0
      %3444 = vmatpush1.bf16.msra.mxu0 0
      %3445 = vmatprep.subr.bf16.mxu0 0
      %3446 = vmatpush1.bf16.msra.mxu0 0
      %3447 = vmatprep.subr.bf16.mxu0 0
      %3448 = vmatpush1.bf16.msra.mxu0 0
      %3449 = vmatprep.mubr.bf16.mxu0 0
      %3450 = vmatmul.mubr.bf16.gmra.mrb[0].mxu0 %v2988
      %v3451 = vpop.f32.mrb[0].mxu0
      %v3452 = vadd.f32 0.0, %v3451
      %v3453 = vpop.f32.mrb[0].mxu0
      %v3454 = vpop.f32.mrb[0].mxu0
      %v3455 = vadd.f32 0.0, %v3454
      %v3456 = vpop.f32.mrb[0].mxu0
      %3457 = vmatprep.mubr.bf16.mxu0 0
      %3458 = vmatmul.mubr.bf16.gmra.mrb[0].mxu0 %v2991
      %v3459 = vpop.f32.mrb[0].mxu0
      %v3460 = vadd.f32 0.0, %v3459
      %v3461 = vpop.f32.mrb[0].mxu0
      %v3462 = vpop.f32.mrb[0].mxu0
      %v3463 = vadd.f32 0.0, %v3462
      %v3464 = vpop.f32.mrb[0].mxu0
      %3465 = vmatprep.mubr.bf16.mxu0 0
      %3466 = vmatmul.mubr.bf16.gmra.mrb[0].mxu0 %v2994
      %v3467 = vpop.f32.mrb[0].mxu0
      %v3468 = vadd.f32 0.0, %v3467
      %v3469 = vpop.f32.mrb[0].mxu0
      %v3470 = vpop.f32.mrb[0].mxu0
      %v3471 = vadd.f32 0.0, %v3470
      %v3472 = vpop.f32.mrb[0].mxu0
      %3473 = vmatprep.mubr.bf16.mxu0 0
      %3474 = vmatmul.mubr.bf16.gmra.mrb[0].mxu0 %v2997
      %v3475 = vpop.f32.mrb[0].mxu0
      %v3476 = vadd.f32 0.0, %v3475
      %v3477 = vpop.f32.mrb[0].mxu0
      %v3478 = vpop.f32.mrb[0].mxu0
      %v3479 = vadd.f32 0.0, %v3478
      %v3480 = vpop.f32.mrb[0].mxu0
      %3481 = vmatprep.mubr.bf16.mxu0 0
      %3482 = vmatmul.mubr.bf16.gmra.mrb[0].mxu0 %v3000
      %v3483 = vpop.f32.mrb[0].mxu0
      %v3484 = vadd.f32 0.0, %v3483
      %v3485 = vpop.f32.mrb[0].mxu0
      %v3486 = vpop.f32.mrb[0].mxu0
      %v3487 = vadd.f32 0.0, %v3486
      %v3488 = vpop.f32.mrb[0].mxu0
      %3489 = vmatprep.mubr.bf16.mxu0 0
      %3490 = vmatmul.mubr.bf16.gmra.mrb[0].mxu0 %v3003
      %v3491 = vpop.f32.mrb[0].mxu0
      %v3492 = vadd.f32 0.0, %v3491
      %v3493 = vpop.f32.mrb[0].mxu0
      %v3494 = vpop.f32.mrb[0].mxu0
      %v3495 = vadd.f32 0.0, %v3494
      %v3496 = vpop.f32.mrb[0].mxu0
      %3497 = vmatprep.mubr.bf16.mxu0 0
      %3498 = vmatmul.mubr.bf16.gmra.mrb[0].mxu0 %v3006
      %v3499 = vpop.f32.mrb[0].mxu0
      %v3500 = vadd.f32 0.0, %v3499
      %v3501 = vpop.f32.mrb[0].mxu0
      %v3502 = vpop.f32.mrb[0].mxu0
      %v3503 = vadd.f32 0.0, %v3502
      %v3504 = vpop.f32.mrb[0].mxu0
      %3505 = vmatprep.mubr.bf16.mxu0 0
      %3506 = vmatmul.mubr.bf16.gmra.mrb[0].mxu0 %v3412
      %v3507 = vpop.f32.mrb[0].mxu0
      %v3508 = vadd.f32 0.0, %v3507
      %v3509 = vpop.f32.mrb[0].mxu0
      %v3510 = vpop.f32.mrb[0].mxu0
      %v3511 = vadd.f32 0.0, %v3510
      %v3512 = vpop.f32.mrb[0].mxu0
      %3513 = vdwg.mxu0
      %v3514 = vadd.f32 %v3382, %v3452
      %v3515 = vadd.f32 %v3383, %v3455
      %v3516 = vadd.f32 %v3384, %v3460
      %v3517 = vadd.f32 %v3385, %v3463
      %v3518 = vadd.f32 %v3386, %v3468
      %v3519 = vadd.f32 %v3387, %v3471
      %v3520 = vadd.f32 %v3388, %v3476
      %v3521 = vadd.f32 %v3389, %v3479
      %v3522 = vadd.f32 %v3390, %v3484
      %v3523 = vadd.f32 %v3391, %v3487
      %v3524 = vadd.f32 %v3392, %v3492
      %v3525 = vadd.f32 %v3393, %v3495
      %v3526 = vadd.f32 %v3394, %v3500
      %v3527 = vadd.f32 %v3395, %v3503
      %v3528 = vadd.f32 %v3396, %v3508
      %v3529 = vadd.f32 %v3397, %v3511
      %s3530 = scalar_lea.vmem %s7, 12
      %v3531 = vld [vmem:[%s3530] sm:$0x3]
      %v3534 = vunpack.c.l.b16 %v2352
      %v3535 = vunpack.c.l.b16 %v2353
      %v3536 = vpack.c.b16 %v3535, %v3534
      %v3538 = vsel %vm984, %v3536, 0
      %v3541 = vsel %vm1009, %v3531, 0
      %3543 = vmatprep.subr.bf16.mxu0 0
      %3544 = vmatpush1.bf16.msra.mxu0 %v3541
      %3545 = vmatprep.subr.bf16.mxu0 0
      %3546 = vmatpush1.bf16.msra.mxu0 0
      %3547 = vmatprep.subr.bf16.mxu0 0
      %3548 = vmatpush1.bf16.msra.mxu0 0
      %3549 = vmatprep.subr.bf16.mxu0 0
      %3550 = vmatpush1.bf16.msra.mxu0 0
      %3551 = vmatprep.subr.bf16.mxu0 0
      %3552 = vmatpush1.bf16.msra.mxu0 0
      %3553 = vmatprep.subr.bf16.mxu0 0
      %3554 = vmatpush1.bf16.msra.mxu0 0
      %3555 = vmatprep.subr.bf16.mxu0 0
      %3556 = vmatpush1.bf16.msra.mxu0 0
      %3557 = vmatprep.subr.bf16.mxu0 0
      %3558 = vmatpush1.bf16.msra.mxu0 0
      %3559 = vmatprep.subr.bf16.mxu0 0
      %3560 = vmatpush1.bf16.msra.mxu0 0
      %3561 = vmatprep.subr.bf16.mxu0 0
      %3562 = vmatpush1.bf16.msra.mxu0 0
      %3563 = vmatprep.subr.bf16.mxu0 0
      %3564 = vmatpush1.bf16.msra.mxu0 0
      %3565 = vmatprep.subr.bf16.mxu0 0
      %3566 = vmatpush1.bf16.msra.mxu0 0
      %3567 = vmatprep.subr.bf16.mxu0 0
      %3568 = vmatpush1.bf16.msra.mxu0 0
      %3569 = vmatprep.subr.bf16.mxu0 0
      %3570 = vmatpush1.bf16.msra.mxu0 0
      %3571 = vmatprep.subr.bf16.mxu0 0
      %3572 = vmatpush1.bf16.msra.mxu0 0
      %3573 = vmatprep.subr.bf16.mxu0 0
      %3574 = vmatpush1.bf16.msra.mxu0 0
      %3575 = vmatprep.mubr.bf16.mxu0 0
      %3576 = vmatmul.mubr.bf16.gmra.mrb[0].mxu0 %v2403
      %v3577 = vpop.f32.mrb[0].mxu0
      %v3578 = vadd.f32 0.0, %v3577
      %v3579 = vpop.f32.mrb[0].mxu0
      %v3580 = vpop.f32.mrb[0].mxu0
      %v3581 = vadd.f32 0.0, %v3580
      %v3582 = vpop.f32.mrb[0].mxu0
      %3583 = vmatprep.mubr.bf16.mxu0 0
      %3584 = vmatmul.mubr.bf16.gmra.mrb[0].mxu0 %v2406
      %v3585 = vpop.f32.mrb[0].mxu0
      %v3586 = vadd.f32 0.0, %v3585
      %v3587 = vpop.f32.mrb[0].mxu0
      %v3588 = vpop.f32.mrb[0].mxu0
      %v3589 = vadd.f32 0.0, %v3588
      %v3590 = vpop.f32.mrb[0].mxu0
      %3591 = vmatprep.mubr.bf16.mxu0 0
      %3592 = vmatmul.mubr.bf16.gmra.mrb[0].mxu0 %v2409
      %v3593 = vpop.f32.mrb[0].mxu0
      %v3594 = vadd.f32 0.0, %v3593
      %v3595 = vpop.f32.mrb[0].mxu0
      %v3596 = vpop.f32.mrb[0].mxu0
      %v3597 = vadd.f32 0.0, %v3596
      %v3598 = vpop.f32.mrb[0].mxu0
      %3599 = vmatprep.mubr.bf16.mxu0 0
      %3600 = vmatmul.mubr.bf16.gmra.mrb[0].mxu0 %v2412
      %v3601 = vpop.f32.mrb[0].mxu0
      %v3602 = vadd.f32 0.0, %v3601
      %v3603 = vpop.f32.mrb[0].mxu0
      %v3604 = vpop.f32.mrb[0].mxu0
      %v3605 = vadd.f32 0.0, %v3604
      %v3606 = vpop.f32.mrb[0].mxu0
      %3607 = vmatprep.mubr.bf16.mxu0 0
      %3608 = vmatmul.mubr.bf16.gmra.mrb[0].mxu0 %v2415
      %v3609 = vpop.f32.mrb[0].mxu0
      %v3610 = vadd.f32 0.0, %v3609
      %v3611 = vpop.f32.mrb[0].mxu0
      %v3612 = vpop.f32.mrb[0].mxu0
      %v3613 = vadd.f32 0.0, %v3612
      %v3614 = vpop.f32.mrb[0].mxu0
      %3615 = vmatprep.mubr.bf16.mxu0 0
      %3616 = vmatmul.mubr.bf16.gmra.mrb[0].mxu0 %v2418
      %v3617 = vpop.f32.mrb[0].mxu0
      %v3618 = vadd.f32 0.0, %v3617
      %v3619 = vpop.f32.mrb[0].mxu0
      %v3620 = vpop.f32.mrb[0].mxu0
      %v3621 = vadd.f32 0.0, %v3620
      %v3622 = vpop.f32.mrb[0].mxu0
      %3623 = vmatprep.mubr.bf16.mxu0 0
      %3624 = vmatmul.mubr.bf16.gmra.mrb[0].mxu0 %v3132
      %v3625 = vpop.f32.mrb[0].mxu0
      %v3626 = vadd.f32 0.0, %v3625
      %v3627 = vpop.f32.mrb[0].mxu0
      %v3628 = vpop.f32.mrb[0].mxu0
      %v3629 = vadd.f32 0.0, %v3628
      %v3630 = vpop.f32.mrb[0].mxu0
      %3631 = vmatprep.mubr.bf16.mxu0 0
      %3632 = vmatmul.mubr.bf16.gmra.mrb[0].mxu0 %v3538
      %v3633 = vpop.f32.mrb[0].mxu0
      %v3634 = vadd.f32 0.0, %v3633
      %v3635 = vpop.f32.mrb[0].mxu0
      %v3636 = vpop.f32.mrb[0].mxu0
      %v3637 = vadd.f32 0.0, %v3636
      %v3638 = vpop.f32.mrb[0].mxu0
      %3639 = vdwg.mxu0
      %v3640 = vadd.f32 %v3514, %v3578
      %v3641 = vadd.f32 %v3515, %v3581
      %v3642 = vadd.f32 %v3516, %v3586
      %v3643 = vadd.f32 %v3517, %v3589
      %v3644 = vadd.f32 %v3518, %v3594
      %v3645 = vadd.f32 %v3519, %v3597
      %v3646 = vadd.f32 %v3520, %v3602
      %v3647 = vadd.f32 %v3521, %v3605
      %v3648 = vadd.f32 %v3522, %v3610
      %v3649 = vadd.f32 %v3523, %v3613
      %v3650 = vadd.f32 %v3524, %v3618
      %v3651 = vadd.f32 %v3525, %v3621
      %v3652 = vadd.f32 %v3526, %v3626
      %v3653 = vadd.f32 %v3527, %v3629
      %v3654 = vadd.f32 %v3528, %v3634
      %v3655 = vadd.f32 %v3529, %v3637
      %v3657 = vshrl.u32 %v2352, 16
      %v3659 = vrot.slane %v3657, 4
      %v3660 = vshll.u32 %v2352, 16
      %v3662 = vrot.slane %v3660, 5
      %v3663 = vor.u32 %v3659, %v3662
      %v3664 = vrot.slane %v3663, 4
      %v3666 = vshll.u32 %v2353, 16
      %v3668 = vrot.slane %v3666, 5
      %v3669 = vsel %vm765, %v3664, %v3668
      %v3670 = vshrl.u32 %v2353, 16
      %v3672 = vrot.slane %v3670, 4
      %v3673 = vor.u32 %v3672, %v3668
      %v3674 = vrot.slane %v3673, 4
      %v3676 = vshll.u32 %v2354, 16
      %v3678 = vrot.slane %v3676, 5
      %v3679 = vsel %vm765, %v3674, %v3678
      %s3680 = scalar_lea.vmem %s7, 14
      %v3681 = vld [vmem:[%s3680] sm:$0x3]
      %v3682 = vunpack.c.l.b16 %v3669
      %v3683 = vunpack.c.l.b16 %v3679
      %v3684 = vpack.c.b16 %v3683, %v3682
      %v3686 = vsel %vm984, %v3684, 0
      %v3689 = vsel %vm1009, %v3681, 0
      %3691 = vmatprep.subr.bf16.mxu0 0
      %3692 = vmatpush1.bf16.msra.mxu0 %v3689
      %3693 = vmatprep.subr.bf16.mxu0 0
      %3694 = vmatpush1.bf16.msra.mxu0 0
      %3695 = vmatprep.subr.bf16.mxu0 0
      %3696 = vmatpush1.bf16.msra.mxu0 0
      %3697 = vmatprep.subr.bf16.mxu0 0
      %3698 = vmatpush1.bf16.msra.mxu0 0
      %3699 = vmatprep.subr.bf16.mxu0 0
      %3700 = vmatpush1.bf16.msra.mxu0 0
      %3701 = vmatprep.subr.bf16.mxu0 0
      %3702 = vmatpush1.bf16.msra.mxu0 0
      %3703 = vmatprep.subr.bf16.mxu0 0
      %3704 = vmatpush1.bf16.msra.mxu0 0
      %3705 = vmatprep.subr.bf16.mxu0 0
      %3706 = vmatpush1.bf16.msra.mxu0 0
      %3707 = vmatprep.subr.bf16.mxu0 0
      %3708 = vmatpush1.bf16.msra.mxu0 0
      %3709 = vmatprep.subr.bf16.mxu0 0
      %3710 = vmatpush1.bf16.msra.mxu0 0
      %3711 = vmatprep.subr.bf16.mxu0 0
      %3712 = vmatpush1.bf16.msra.mxu0 0
      %3713 = vmatprep.subr.bf16.mxu0 0
      %3714 = vmatpush1.bf16.msra.mxu0 0
      %3715 = vmatprep.subr.bf16.mxu0 0
      %3716 = vmatpush1.bf16.msra.mxu0 0
      %3717 = vmatprep.subr.bf16.mxu0 0
      %3718 = vmatpush1.bf16.msra.mxu0 0
      %3719 = vmatprep.subr.bf16.mxu0 0
      %3720 = vmatpush1.bf16.msra.mxu0 0
      %3721 = vmatprep.subr.bf16.mxu0 0
      %3722 = vmatpush1.bf16.msra.mxu0 0
      %3723 = vmatprep.mubr.bf16.mxu0 0
      %3724 = vmatmul.mubr.bf16.gmra.mrb[0].mxu0 %v2761
      %v3725 = vpop.f32.mrb[0].mxu0
      %v3726 = vadd.f32 0.0, %v3725
      %v3727 = vpop.f32.mrb[0].mxu0
      %v3728 = vpop.f32.mrb[0].mxu0
      %v3729 = vadd.f32 0.0, %v3728
      %v3730 = vpop.f32.mrb[0].mxu0
      %3731 = vmatprep.mubr.bf16.mxu0 0
      %3732 = vmatmul.mubr.bf16.gmra.mrb[0].mxu0 %v2764
      %v3733 = vpop.f32.mrb[0].mxu0
      %v3734 = vadd.f32 0.0, %v3733
      %v3735 = vpop.f32.mrb[0].mxu0
      %v3736 = vpop.f32.mrb[0].mxu0
      %v3737 = vadd.f32 0.0, %v3736
      %v3738 = vpop.f32.mrb[0].mxu0
      %3739 = vmatprep.mubr.bf16.mxu0 0
      %3740 = vmatmul.mubr.bf16.gmra.mrb[0].mxu0 %v2767
      %v3741 = vpop.f32.mrb[0].mxu0
      %v3742 = vadd.f32 0.0, %v3741
      %v3743 = vpop.f32.mrb[0].mxu0
      %v3744 = vpop.f32.mrb[0].mxu0
      %v3745 = vadd.f32 0.0, %v3744
      %v3746 = vpop.f32.mrb[0].mxu0
      %3747 = vmatprep.mubr.bf16.mxu0 0
      %3748 = vmatmul.mubr.bf16.gmra.mrb[0].mxu0 %v2770
      %v3749 = vpop.f32.mrb[0].mxu0
      %v3750 = vadd.f32 0.0, %v3749
      %v3751 = vpop.f32.mrb[0].mxu0
      %v3752 = vpop.f32.mrb[0].mxu0
      %v3753 = vadd.f32 0.0, %v3752
      %v3754 = vpop.f32.mrb[0].mxu0
      %3755 = vmatprep.mubr.bf16.mxu0 0
      %3756 = vmatmul.mubr.bf16.gmra.mrb[0].mxu0 %v2773
      %v3757 = vpop.f32.mrb[0].mxu0
      %v3758 = vadd.f32 0.0, %v3757
      %v3759 = vpop.f32.mrb[0].mxu0
      %v3760 = vpop.f32.mrb[0].mxu0
      %v3761 = vadd.f32 0.0, %v3760
      %v3762 = vpop.f32.mrb[0].mxu0
      %3763 = vmatprep.mubr.bf16.mxu0 0
      %3764 = vmatmul.mubr.bf16.gmra.mrb[0].mxu0 %v2776
      %v3765 = vpop.f32.mrb[0].mxu0
      %v3766 = vadd.f32 0.0, %v3765
      %v3767 = vpop.f32.mrb[0].mxu0
      %v3768 = vpop.f32.mrb[0].mxu0
      %v3769 = vadd.f32 0.0, %v3768
      %v3770 = vpop.f32.mrb[0].mxu0
      %3771 = vmatprep.mubr.bf16.mxu0 0
      %3772 = vmatmul.mubr.bf16.gmra.mrb[0].mxu0 %v3280
      %v3773 = vpop.f32.mrb[0].mxu0
      %v3774 = vadd.f32 0.0, %v3773
      %v3775 = vpop.f32.mrb[0].mxu0
      %v3776 = vpop.f32.mrb[0].mxu0
      %v3777 = vadd.f32 0.0, %v3776
      %v3778 = vpop.f32.mrb[0].mxu0
      %3779 = vmatprep.mubr.bf16.mxu0 0
      %3780 = vmatmul.mubr.bf16.gmra.mrb[0].mxu0 %v3686
      %v3781 = vpop.f32.mrb[0].mxu0
      %v3782 = vadd.f32 0.0, %v3781
      %v3783 = vpop.f32.mrb[0].mxu0
      %v3784 = vpop.f32.mrb[0].mxu0
      %v3785 = vadd.f32 0.0, %v3784
      %v3786 = vpop.f32.mrb[0].mxu0
      %3787 = vdwg.mxu0
      %v3788 = vadd.f32 %v3640, %v3726
      %v3789 = vadd.f32 %v3641, %v3729
      %v3790 = vadd.f32 %v3642, %v3734
      %v3791 = vadd.f32 %v3643, %v3737
      %v3792 = vadd.f32 %v3644, %v3742
      %v3793 = vadd.f32 %v3645, %v3745
      %v3794 = vadd.f32 %v3646, %v3750
      %v3795 = vadd.f32 %v3647, %v3753
      %v3796 = vadd.f32 %v3648, %v3758
      %v3797 = vadd.f32 %v3649, %v3761
      %v3798 = vadd.f32 %v3650, %v3766
      %v3799 = vadd.f32 %v3651, %v3769
      %v3800 = vadd.f32 %v3652, %v3774
      %v3801 = vadd.f32 %v3653, %v3777
      %v3802 = vadd.f32 %v3654, %v3782
      %v3803 = vadd.f32 %v3655, %v3785
      %v3805 = vrot.slane %v2352, 5
      %v3806 = vrot.slane %v3805, 4
      %v3807 = vrot.slane %v2353, 5
      %v3808 = vsel %vm1284, %v3806, %v3807
      %v3809 = vrot.slane %v3807, 4
      %v3810 = vrot.slane %v2354, 5
      %v3811 = vsel %vm1284, %v3809, %v3810
      %s3812 = scalar_lea.vmem %s7, 16
      %v3813 = vld [vmem:[%s3812] sm:$0x3]
      %v3814 = vunpack.c.l.b16 %v3808
      %v3815 = vunpack.c.l.b16 %v3811
      %v3816 = vpack.c.b16 %v3815, %v3814
      %v3818 = vsel %vm984, %v3816, 0
      %v3821 = vsel %vm1009, %v3813, 0
      %3823 = vmatprep.subr.bf16.mxu0 0
      %3824 = vmatpush1.bf16.msra.mxu0 %v3821
      %3825 = vmatprep.subr.bf16.mxu0 0
      %3826 = vmatpush1.bf16.msra.mxu0 0
      %3827 = vmatprep.subr.bf16.mxu0 0
      %3828 = vmatpush1.bf16.msra.mxu0 0
      %3829 = vmatprep.subr.bf16.mxu0 0
      %3830 = vmatpush1.bf16.msra.mxu0 0
      %3831 = vmatprep.subr.bf16.mxu0 0
      %3832 = vmatpush1.bf16.msra.mxu0 0
      %3833 = vmatprep.subr.bf16.mxu0 0
      %3834 = vmatpush1.bf16.msra.mxu0 0
      %3835 = vmatprep.subr.bf16.mxu0 0
      %3836 = vmatpush1.bf16.msra.mxu0 0
      %3837 = vmatprep.subr.bf16.mxu0 0
      %3838 = vmatpush1.bf16.msra.mxu0 0
      %3839 = vmatprep.subr.bf16.mxu0 0
      %3840 = vmatpush1.bf16.msra.mxu0 0
      %3841 = vmatprep.subr.bf16.mxu0 0
      %3842 = vmatpush1.bf16.msra.mxu0 0
      %3843 = vmatprep.subr.bf16.mxu0 0
      %3844 = vmatpush1.bf16.msra.mxu0 0
      %3845 = vmatprep.subr.bf16.mxu0 0
      %3846 = vmatpush1.bf16.msra.mxu0 0
      %3847 = vmatprep.subr.bf16.mxu0 0
      %3848 = vmatpush1.bf16.msra.mxu0 0
      %3849 = vmatprep.subr.bf16.mxu0 0
      %3850 = vmatpush1.bf16.msra.mxu0 0
      %3851 = vmatprep.subr.bf16.mxu0 0
      %3852 = vmatpush1.bf16.msra.mxu0 0
      %3853 = vmatprep.subr.bf16.mxu0 0
      %3854 = vmatpush1.bf16.msra.mxu0 0
      %3855 = vmatprep.mubr.bf16.mxu0 0
      %3856 = vmatmul.mubr.bf16.gmra.mrb[0].mxu0 %v2991
      %v3857 = vpop.f32.mrb[0].mxu0
      %v3858 = vadd.f32 0.0, %v3857
      %v3859 = vpop.f32.mrb[0].mxu0
      %v3860 = vpop.f32.mrb[0].mxu0
      %v3861 = vadd.f32 0.0, %v3860
      %v3862 = vpop.f32.mrb[0].mxu0
      %3863 = vmatprep.mubr.bf16.mxu0 0
      %3864 = vmatmul.mubr.bf16.gmra.mrb[0].mxu0 %v2994
      %v3865 = vpop.f32.mrb[0].mxu0
      %v3866 = vadd.f32 0.0, %v3865
      %v3867 = vpop.f32.mrb[0].mxu0
      %v3868 = vpop.f32.mrb[0].mxu0
      %v3869 = vadd.f32 0.0, %v3868
      %v3870 = vpop.f32.mrb[0].mxu0
      %3871 = vmatprep.mubr.bf16.mxu0 0
      %3872 = vmatmul.mubr.bf16.gmra.mrb[0].mxu0 %v2997
      %v3873 = vpop.f32.mrb[0].mxu0
      %v3874 = vadd.f32 0.0, %v3873
      %v3875 = vpop.f32.mrb[0].mxu0
      %v3876 = vpop.f32.mrb[0].mxu0
      %v3877 = vadd.f32 0.0, %v3876
      %v3878 = vpop.f32.mrb[0].mxu0
      %3879 = vmatprep.mubr.bf16.mxu0 0
      %3880 = vmatmul.mubr.bf16.gmra.mrb[0].mxu0 %v3000
      %v3881 = vpop.f32.mrb[0].mxu0
      %v3882 = vadd.f32 0.0, %v3881
      %v3883 = vpop.f32.mrb[0].mxu0
      %v3884 = vpop.f32.mrb[0].mxu0
      %v3885 = vadd.f32 0.0, %v3884
      %v3886 = vpop.f32.mrb[0].mxu0
      %3887 = vmatprep.mubr.bf16.mxu0 0
      %3888 = vmatmul.mubr.bf16.gmra.mrb[0].mxu0 %v3003
      %v3889 = vpop.f32.mrb[0].mxu0
      %v3890 = vadd.f32 0.0, %v3889
      %v3891 = vpop.f32.mrb[0].mxu0
      %v3892 = vpop.f32.mrb[0].mxu0
      %v3893 = vadd.f32 0.0, %v3892
      %v3894 = vpop.f32.mrb[0].mxu0
      %3895 = vmatprep.mubr.bf16.mxu0 0
      %3896 = vmatmul.mubr.bf16.gmra.mrb[0].mxu0 %v3006
      %v3897 = vpop.f32.mrb[0].mxu0
      %v3898 = vadd.f32 0.0, %v3897
      %v3899 = vpop.f32.mrb[0].mxu0
      %v3900 = vpop.f32.mrb[0].mxu0
      %v3901 = vadd.f32 0.0, %v3900
      %v3902 = vpop.f32.mrb[0].mxu0
      %3903 = vmatprep.mubr.bf16.mxu0 0
      %3904 = vmatmul.mubr.bf16.gmra.mrb[0].mxu0 %v3412
      %v3905 = vpop.f32.mrb[0].mxu0
      %v3906 = vadd.f32 0.0, %v3905
      %v3907 = vpop.f32.mrb[0].mxu0
      %v3908 = vpop.f32.mrb[0].mxu0
      %v3909 = vadd.f32 0.0, %v3908
      %v3910 = vpop.f32.mrb[0].mxu0
      %3911 = vmatprep.mubr.bf16.mxu0 0
      %3912 = vmatmul.mubr.bf16.gmra.mrb[0].mxu0 %v3818
      %v3913 = vpop.f32.mrb[0].mxu0
      %v3914 = vadd.f32 0.0, %v3913
      %v3915 = vpop.f32.mrb[0].mxu0
      %v3916 = vpop.f32.mrb[0].mxu0
      %v3917 = vadd.f32 0.0, %v3916
      %v3918 = vpop.f32.mrb[0].mxu0
      %3919 = vdwg.mxu0
      %v3920 = vadd.f32 %v3788, %v3858
      %v3921 = vadd.f32 %v3789, %v3861
      %v3922 = vadd.f32 %v3790, %v3866
      %v3923 = vadd.f32 %v3791, %v3869
      %v3924 = vadd.f32 %v3792, %v3874
      %v3925 = vadd.f32 %v3793, %v3877
      %v3926 = vadd.f32 %v3794, %v3882
      %v3927 = vadd.f32 %v3795, %v3885
      %v3928 = vadd.f32 %v3796, %v3890
      %v3929 = vadd.f32 %v3797, %v3893
      %v3930 = vadd.f32 %v3798, %v3898
      %v3931 = vadd.f32 %v3799, %v3901
      %v3932 = vadd.f32 %v3800, %v3906
      %v3933 = vadd.f32 %v3801, %v3909
      %v3934 = vadd.f32 %v3802, %v3914
      %v3935 = vadd.f32 %v3803, %v3917
      %v3936 = vld [vmem:[%s8] sm:$0x1]
      %v3938 = vlaneseq
      %v3939 = vshrl.u32 %v3938, 7
      %v3940 = vsub.s32 0, %v3939
      %v3941 = vrot.slane %v3936, %v3940
      %v3943 = vmul.f32 %v3920, %v3941
      %v3944 = vmul.f32 %v3921, %v3941
      %v3945 = vmul.f32 %v3922, %v3941
      %v3946 = vmul.f32 %v3923, %v3941
      %v3947 = vmul.f32 %v3924, %v3941
      %v3948 = vmul.f32 %v3925, %v3941
      %v3949 = vmul.f32 %v3926, %v3941
      %v3950 = vmul.f32 %v3927, %v3941
      %v3951 = vmul.f32 %v3928, %v3941
      %v3952 = vmul.f32 %v3929, %v3941
      %v3953 = vmul.f32 %v3930, %v3941
      %v3954 = vmul.f32 %v3931, %v3941
      %v3955 = vmul.f32 %v3932, %v3941
      %v3956 = vmul.f32 %v3933, %v3941
      %v3957 = vmul.f32 %v3934, %v3941
      %v3958 = vmul.f32 %v3935, %v3941
      %v3959 = vld [vmem:[%s9] sm:$0x1]
      %v3961 = vlaneseq
      %v3962 = vshrl.u32 %v3961, 7
      %v3963 = vsub.s32 0, %v3962
      %v3964 = vrot.slane %v3959, %v3963
      %v3966 = vadd.f32 %v3943, %v3964
      %v3967 = vadd.f32 %v3944, %v3964
      %v3968 = vadd.f32 %v3945, %v3964
      %v3969 = vadd.f32 %v3946, %v3964
      %v3970 = vadd.f32 %v3947, %v3964
      %v3971 = vadd.f32 %v3948, %v3964
      %v3972 = vadd.f32 %v3949, %v3964
      %v3973 = vadd.f32 %v3950, %v3964
      %v3974 = vadd.f32 %v3951, %v3964
      %v3975 = vadd.f32 %v3952, %v3964
      %v3976 = vadd.f32 %v3953, %v3964
      %v3977 = vadd.f32 %v3954, %v3964
      %v3978 = vadd.f32 %v3955, %v3964
      %v3979 = vadd.f32 %v3956, %v3964
      %v3980 = vadd.f32 %v3957, %v3964
      %v3981 = vadd.f32 %v3958, %v3964
      %v3982 = vmax.f32 %v3966, 0.0
      %v3983 = vmax.f32 %v3967, 0.0
      %v3984 = vmax.f32 %v3968, 0.0
      %v3985 = vmax.f32 %v3969, 0.0
      %v3986 = vmax.f32 %v3970, 0.0
      %v3987 = vmax.f32 %v3971, 0.0
      %v3988 = vmax.f32 %v3972, 0.0
      %v3989 = vmax.f32 %v3973, 0.0
      %v3990 = vmax.f32 %v3974, 0.0
      %v3991 = vmax.f32 %v3975, 0.0
      %v3992 = vmax.f32 %v3976, 0.0
      %v3993 = vmax.f32 %v3977, 0.0
      %v3994 = vmax.f32 %v3978, 0.0
      %v3995 = vmax.f32 %v3979, 0.0
      %v3996 = vmax.f32 %v3980, 0.0
      %v3997 = vmax.f32 %v3981, 0.0
      %v3998 = vpack.c.bf16 %v3983, %v3982
      %v3999 = vpack.c.bf16 %v3985, %v3984
      %v4000 = vpack.c.bf16 %v3987, %v3986
      %v4001 = vpack.c.bf16 %v3989, %v3988
      %v4002 = vpack.c.bf16 %v3991, %v3990
      %v4003 = vpack.c.bf16 %v3993, %v3992
      %v4004 = vpack.c.bf16 %v3995, %v3994
      %v4005 = vpack.c.bf16 %v3997, %v3996
      %v4014 = vunpack.c.l.b16 %v3998
      %v4015 = vunpack.c.h.b16 %v3998
      %v4016 = vunpack.c.l.b16 %v3999
      %v4017 = vunpack.c.h.b16 %v3999
      %v4018 = vunpack.c.l.b16 %v4000
      %v4019 = vunpack.c.h.b16 %v4000
      %v4020 = vunpack.c.l.b16 %v4001
      %v4021 = vunpack.c.h.b16 %v4001
      %v4022 = vunpack.c.l.b16 %v4002
      %v4023 = vunpack.c.h.b16 %v4002
      %v4024 = vunpack.c.l.b16 %v4003
      %v4025 = vunpack.c.h.b16 %v4003
      %v4026 = vunpack.c.l.b16 %v4004
      %v4027 = vunpack.c.h.b16 %v4004
      %v4028 = vunpack.c.l.b16 %v4005
      %v4029 = vunpack.c.h.b16 %v4005
      %v4030 = vpack.c.b16 %v4014, %v4014
      %v4031 = vpack.c.b16 %v4015, %v4015
      %v4032 = vpack.c.b16 %v4016, %v4016
      %v4033 = vpack.c.b16 %v4017, %v4017
      %v4034 = vpack.c.b16 %v4018, %v4018
      %v4035 = vpack.c.b16 %v4019, %v4019
      %v4036 = vpack.c.b16 %v4020, %v4020
      %v4037 = vpack.c.b16 %v4021, %v4021
      %v4038 = vpack.c.b16 %v4022, %v4022
      %v4039 = vpack.c.b16 %v4023, %v4023
      %v4040 = vpack.c.b16 %v4024, %v4024
      %v4041 = vpack.c.b16 %v4025, %v4025
      %v4042 = vpack.c.b16 %v4026, %v4026
      %v4043 = vpack.c.b16 %v4027, %v4027
      %v4044 = vpack.c.b16 %v4028, %v4028
      %v4045 = vpack.c.b16 %v4029, %v4029
      %vm4062 = vcmask 27648
      %4063 = vst.msk [vmem:[%s689] sm:$0xf] %vm4062, %v4030
      %4064 = vst.msk [vmem:[%s689 + $0x4] sm:$0xf] %vm4062, %v4031
      %4065 = vst.msk [vmem:[%s689 + $0x8] sm:$0xf] %vm4062, %v4032
      %4066 = vst.msk [vmem:[%s689 + $0xc] sm:$0xf] %vm4062, %v4033
      %4067 = vst.msk [vmem:[%s689 + $0x10] sm:$0xf] %vm4062, %v4034
      %4068 = vst.msk [vmem:[%s689 + $0x14] sm:$0xf] %vm4062, %v4035
      %4069 = vst.msk [vmem:[%s689 + $0x18] sm:$0xf] %vm4062, %v4036
      %4070 = vst.msk [vmem:[%s689 + $0x1c] sm:$0xf] %vm4062, %v4037
      %4071 = vst.msk [vmem:[%s689 + $0x20] sm:$0xf] %vm4062, %v4038
      %4072 = vst.msk [vmem:[%s689 + $0x24] sm:$0xf] %vm4062, %v4039
      %4073 = vst.msk [vmem:[%s689 + $0x28] sm:$0xf] %vm4062, %v4040
      %4074 = vst.msk [vmem:[%s689 + $0x2c] sm:$0xf] %vm4062, %v4041
      %4075 = vst.msk [vmem:[%s689 + $0x30] sm:$0xf] %vm4062, %v4042
      %4076 = vst.msk [vmem:[%s689 + $0x34] sm:$0xf] %vm4062, %v4043
      %4077 = vst.msk [vmem:[%s689 + $0x38] sm:$0xf] %vm4062, %v4044
      %4078 = vst.msk [vmem:[%s689 + $0x3c] sm:$0xf] %vm4062, %v4045
      %s4079 = smul.u32 8, %s26
      %p4080 = scmp.lt.s32.totalorder %s25, 1
      %s4081 = scalar_select %p4080, %s25, 1
      %p4082 = scmp.lt.s32.totalorder %s4079, 15
      %s4083 = scalar_select %p4082, %s4079, 15
      %s4084 = smul.addr %s4083, 2
      %s4085 = smul.addr %s4081, 32
      %s4086 = sadd.s32 %s4084, %s4085
      %s4087 = smul.addr %s4086, 4
      %s4088 = scalar_lea.vmem %s10, %s4087
      // Predicated region
      $region61: #{_lambda_.4} parent=59 // pred_check
        %p4089 = pneg %p337
      $region62: #{_lambda_.4} parent=59 // pred_check_branch
        %4091 = sbr.rel (%p4089) target = $region64
      $region63: #{_lambda_.4} parent=59 // pred_region
        %s4092 = smul.u32 8, %s26
      $region64: #{_lambda_.4} parent=59 // pred_fallthru
        _
    $region60: #{_lambda_.4} parent=5 // pred_fallthru
      _
    %p4093 = scmp.le.s32.totalorder 2, %s16
    // Predicated region
    $region65: #{_lambda_.4} parent=5 // pred_check
      %p4094 = pneg %p4093
    $region66: #{_lambda_.4} parent=5 // pred_check_branch
      %4096 = sbr.rel (%p4094) target = $region68
    $region67: #{_lambda_.4} parent=5 // pred_region
      %s4097 = ssub.s32 %s16, 2
      // Predicated region
      $region69: #{_lambda_.4} parent=67 // pred_check
        %p4098 = pneg %p343
      $region70: #{_lambda_.4} parent=67 // pred_check_branch
        %4100 = sbr.rel (%p4098) target = $region72
      $region71: #{_lambda_.4} parent=67 // pred_region
        %s4101 = smul.u32 8, %s28
        %p4102 = scmp.lt.s32.totalorder %s27, 1
        %s4103 = scalar_select %p4102, %s27, 1
        %p4104 = scmp.lt.s32.totalorder %s4101, 15
        %s4105 = scalar_select %p4104, %s4101, 15
        %s4106 = smul.addr %s4105, 2
        %s4107 = smul.addr %s4103, 32
        %s4108 = sadd.s32 %s4106, %s4107
        %s4109 = smul.addr %s4108, 4
        %s4110 = scalar_lea.vmem %s10, %s4109
      $region72: #{_lambda_.4} parent=67 // pred_fallthru
        _
    $region68: #{_lambda_.4} parent=5 // pred_fallthru
      _
  $region6: #{_lambda_.4} parent=0 // loop_footer
    %s20 = sadd.s32 1, %s16
  $region7: #{_lambda_.4} parent=0 // loop_footer_branch
    %15 = sbr.rel target = $region3
  $region8: #{_lambda_.4} parent=0 // loop_exit
    _

</llo_original>
